<compile_context>
chip_gen: v6e
topology: v6e:2x2x1
jax: 0.10.0
libtpu: 0.0.40
codegen_flags: <defaults>
</compile_context>

<pallas_src>
import numpy as np
import jax
import jax.numpy as jnp
from jax import lax
from jax.experimental import pallas as pl
from jax.experimental.pallas import tpu as pltpu

# Small, module-consistent configuration (original module used IMG_SIZE=128;
# the kernel only requires IMG_SIZE % 4 == 0 and works unchanged at 128).
IMG_SIZE = 16
CNN_CHANNELS = (4, 8)
FC_HIDDEN = (32, 16)
N_CLASSES = 2
BN_EPS = 1e-5

# Set to jnp.bfloat16 on v6e/v7x (halves MXU operand traffic, f32 accumulation
# kept).  Left at f32 so the numeric self-test is architecture independent and
# the v5e VPU epilogue stays f32 as recommended.
MXU_DTYPE = jnp.float32


# ---------------------------------------------------------------------------
# Fused Pallas kernel
# ---------------------------------------------------------------------------
def _tap_offset(phase, d, mod):
    """Phase/offset decomposition of the logical tap offset u = phase + d - 1.

    Returns (residual phase r, padded coarse-grid offset q+1) with u = mod*q + r.
    """
    u = phase + d - 1
    r = u % mod
    q = (u - r) // mod
    return r, q + 1


def fused_cnn_kernel(xp_ref, w1_ref, s1_ref, b1_ref,
                     w2_ref, s2_ref, b2_ref,
                     wf1_ref, sf1_ref, bf1_ref,
                     wf2_ref, sf2_ref, bf2_ref,
                     wo_ref, bo_ref,
                     out_ref,
                     y1p_ref, feat_ref):
    """Entire DogsVsCatsCNN forward on VMEM-resident data.

    Shapes (g = IMG_SIZE // 4 coarse grid, n = batch):
      xp_ref   : (16, g+2, (g+2)*n, c0)  input, space-to-depth by 4, zero padded
                 layout [r*4+s, i_pad, j_pad*n + batch, cin]
      w1_ref   : (9, c0, c1)  conv1 taps (dy*3+dx major);  s1/b1: (1, c1) folded BN
      w2_ref   : (9, c1, c2)  conv2 taps;                  s2/b2: (1, c2)
      wf1_ref  : (g*g*c2, f1) FC1, rows permuted to kernel feature order (i,j,c)
      wf2_ref  : (f1, f2); wo_ref: (f2, n_classes)
      y1p_ref  : (4, g+2, (g+2)*n, c1) scratch: pooled conv1 output, /2 phases, padded
      feat_ref : (n, g*g*c2)           scratch: lane-dense flattened features
    """
    gp2 = xp_ref.shape[1]
    g = gp2 - 2
    c0 = xp_ref.shape[3]
    n = xp_ref.shape[2] // gp2
    c1 = w1_ref.shape[2]
    c2 = w2_ref.shape[2]
    rows = g * g * n                      # rows per phase, ordered (i, j, batch)

    def conv_accumulate(src_ref, w_ref, phases, mod):
        """Sum over the 9 taps of (concat of per-phase input blocks) @ w_tap."""
        acc = jnp.zeros((len(phases) * rows, w_ref.shape[2]), jnp.float32)
        for dy in range(3):
            for dx in range(3):
                pieces = []
                for (py, px) in phases:
                    ry, oy = _tap_offset(py, dy, mod)
                    rx, ox = _tap_offset(px, dx, mod)
                    blk = src_ref[ry * mod + rx,
                                  oy:oy + g,
                                  ox * n:(ox + g) * n, :]       # (g, g*n, cin)
                    pieces.append(blk.reshape(rows, blk.shape[-1]))
                lhs = jnp.concatenate(pieces, axis=0).astype(MXU_DTYPE)
                w_tap = w_ref[dy * 3 + dx].astype(MXU_DTYPE)     # (cin, cout)
                acc = acc + jnp.dot(lhs, w_tap,
                                    preferred_element_type=jnp.float32)
        return acc

    # ---- conv1 + folded BN + ReLU over the 16 phases of the /4 decomposition --
    phases1 = [(a, b) for a in range(4) for b in range(4)]
    z1 = conv_accumulate(xp_ref, w1_ref, phases1, 4)             # (16*rows, c1)
    z1 = jnp.maximum(z1 * s1_ref[...] + b1_ref[...], 0.0)

    # ---- maxpool 2x2 -> /2-phase decomposed, zero-padded scratch ---------------
    y1p_ref[...] = jnp.zeros(y1p_ref.shape, y1p_ref.dtype)
    for e in range(2):
        for f in range(2):
            pooled = None
            for p in range(2):
                for q in range(2):
                    ph = (2 * e + p) * 4 + (2 * f + q)
                    blk = z1[ph * rows:(ph + 1) * rows, :]       # (rows, c1)
                    pooled = blk if pooled is None else jnp.maximum(pooled, blk)
            ef = e * 2 + f
            for i in range(g):                                   # interior rows only
                y1p_ref[ef, i + 1, n:(g + 1) * n, :] = (
                    pooled[i * g * n:(i + 1) * g * n, :])

    # ---- conv2 + folded BN + ReLU over the 4 phases of the /2 decomposition ----
    phases2 = [(e, f) for e in range(2) for f in range(2)]
    z2 = conv_accumulate(y1p_ref, w2_ref, phases2, 2)            # (4*rows, c2)
    z2 = jnp.maximum(z2 * s2_ref[...] + b2_ref[...], 0.0)

    # ---- maxpool 2x2 -> final (g x g) feature map (rows ordered (i, j, batch)) --
    y2 = None
    for ph in range(4):
        blk = z2[ph * rows:(ph + 1) * rows, :]
        y2 = blk if y2 is None else jnp.maximum(y2, blk)         # (rows, c2)

    # ---- flatten into lane-dense (n, g*g*c2); feature order (i, j, c) ----------
    for p in range(g * g):
        feat_ref[:, p * c2:(p + 1) * c2] = y2[p * n:(p + 1) * n, :]

    # ---- FC1 + BN + ReLU, FC2 + BN + ReLU, output layer -------------------------
    feat = feat_ref[...].astype(MXU_DTYPE)
    h = jnp.dot(feat, wf1_ref[...].astype(MXU_DTYPE),
                preferred_element_type=jnp.float32)
    h = jnp.maximum(h * sf1_ref[...] + bf1_ref[...], 0.0)
    h = jnp.dot(h.astype(MXU_DTYPE), wf2_ref[...].astype(MXU_DTYPE),
                preferred_element_type=jnp.float32)
    h = jnp.maximum(h * sf2_ref[...] + bf2_ref[...], 0.0)
    logits = jnp.dot(h.astype(MXU_DTYPE), wo_ref[...].astype(MXU_DTYPE),
                     preferred_element_type=jnp.float32) + bo_ref[...]
    out_ref[...] = logits.astype(out_ref.dtype)


# ---------------------------------------------------------------------------
# Wrapper: input rearrangement + single pallas_call
# ---------------------------------------------------------------------------
def prepare_inputs(x_nchw):
    """NCHW -> space-to-depth by 4, zero padded: (16, g+2, (g+2)*n, cin)."""
    n, c0, img, _ = x_nchw.shape
    g = img // 4
    x = jnp.transpose(x_nchw, (0, 2, 3, 1))            # NHWC
    x = x.reshape(n, g, 4, g, 4, c0)                   # [n, i, r, j, s, c]
    x = jnp.transpose(x, (2, 4, 1, 3, 0, 5))           # [r, s, i, j, n, c]
    x = x.reshape(16, g, g * n, c0)                    # [(r,s), i, (j,n), c]
    return jnp.pad(x, ((0, 0), (1, 1), (n, n), (0, 0)))


def forward_pallas(x_nchw, kp):
    n, _, img, _ = x_nchw.shape
    g = img // 4
    c1, c2 = CNN_CHANNELS
    xp = prepare_inputs(x_nchw)

    (w1, s1, b1), (w2, s2, b2) = kp["conv"]
    (wf1, sf1, bf1), (wf2, sf2, bf2) = kp["fc"]
    wo, bo = kp["out"]
    operands = (xp, w1, s1, b1, w2, s2, b2,
                wf1, sf1, bf1, wf2, sf2, bf2, wo, bo)

    def full_spec(a):
        nd = a.ndim
        return pl.BlockSpec(a.shape, lambda i, nd=nd: (0,) * nd)

    # TODO(synk): for large batches, tile the batch over the grid with
    # dimension_semantics=("parallel",) so v7x's two TensorCores split the work;
    # unnecessary at N=2 where a single whole-batch step minimizes overhead.
    return pl.pallas_call(
        fused_cnn_kernel,
        out_shape=jax.ShapeDtypeStruct((n, N_CLASSES), jnp.float32),
        grid=(1,),
        in_specs=[full_spec(a) for a in operands],
        out_specs=pl.BlockSpec((n, N_CLASSES), lambda i: (0, 0)),
        scratch_shapes=[
            pltpu.VMEM((4, g + 2, (g + 2) * n, c1), jnp.float32),  # padded pool1
            pltpu.VMEM((n, g * g * c2), jnp.float32),              # flat features
        ],
        compiler_params=pltpu.CompilerParams(
            dimension_semantics=("arbitrary",)),
    )(*operands)


# ---------------------------------------------------------------------------
# Parameters: synthetic init (PyTorch-style) + one-time kernel preparation
# ---------------------------------------------------------------------------
def init_params(key):
    params = {"conv": [], "fc": [], "out": None}
    in_c = 3
    for out_c in CNN_CHANNELS:
        key, k1, k2, k3, k4, k5, k6 = jax.random.split(key, 7)
        w = 0.2 * jax.random.normal(k1, (3, 3, in_c, out_c), jnp.float32)  # HWIO
        b = 0.1 * jax.random.normal(k2, (out_c,), jnp.float32)
        gamma = 1.0 + 0.1 * jax.random.normal(k3, (out_c,), jnp.float32)
        beta = 0.1 * jax.random.normal(k4, (out_c,), jnp.float32)
        mean = 0.1 * jax.random.normal(k5, (out_c,), jnp.float32)
        var = jax.random.uniform(k6, (out_c,), jnp.float32, 0.5, 1.5)
        params["conv"].append((w, b, gamma, beta, mean, var))
        in_c = out_c

    fin = CNN_CHANNELS[-1] * (IMG_SIZE // 2 ** len(CNN_CHANNELS)) ** 2
    for fout in FC_HIDDEN:
        key, k1, k2, k3, k4, k5, k6 = jax.random.split(key, 7)
        w = jax.random.normal(k1, (fin, fout), jnp.float32) / np.sqrt(fin)
        b = 0.1 * jax.random.normal(k2, (fout,), jnp.float32)
        gamma = 1.0 + 0.1 * jax.random.normal(k3, (fout,), jnp.float32)
        beta = 0.1 * jax.random.normal(k4, (fout,), jnp.float32)
        mean = 0.1 * jax.random.normal(k5, (fout,), jnp.float32)
        var = jax.random.uniform(k6, (fout,), jnp.float32, 0.5, 1.5)
        params["fc"].append((w, b, gamma, beta, mean, var))
        fin = fout

    key, k1, k2 = jax.random.split(key, 3)
    w = jax.random.normal(k1, (fin, N_CLASSES), jnp.float32) / np.sqrt(fin)
    b = 0.1 * jax.random.normal(k2, (N_CLASSES,), jnp.float32)
    params["out"] = (w, b)
    return params


def prepare_params(params, img_size):
    """One-time folding of BN into affine epilogues and weight re-layouts."""
    g = img_size // 4
    conv_p = []
    for (w_hwio, b, gamma, beta, mean, var) in params["conv"]:
        cin, cout = w_hwio.shape[2], w_hwio.shape[3]
        s = gamma / jnp.sqrt(var + BN_EPS)
        conv_p.append((w_hwio.reshape(9, cin, cout),          # tap-major weights
                       s.reshape(1, cout),
                       ((b - mean) * s + beta).reshape(1, cout)))

    fc_p = []
    for li, (w, b, gamma, beta, mean, var) in enumerate(params["fc"]):
        fout = w.shape[1]
        s = gamma / jnp.sqrt(var + BN_EPS)
        if li == 0:
            # Permute FC1 rows so it consumes the kernel's (i, j, c) flatten order
            # instead of PyTorch's NCHW view(N, -1) order (c, i, j).
            c2 = CNN_CHANNELS[-1]
            p_spatial = g * g
            idx = np.arange(c2 * p_spatial)
            perm = (idx % c2) * p_spatial + (idx // c2)
            w = w[perm, :]
        fc_p.append((w, s.reshape(1, fout),
                     ((b - mean) * s + beta).reshape(1, fout)))

    wo, bo = params["out"]
    return {"conv": conv_p, "fc": fc_p, "out": (wo, bo.reshape(1, -1))}


# ---------------------------------------------------------------------------
# Pure-JAX (XLA) reference matching the PyTorch eval-mode forward
# ---------------------------------------------------------------------------
def forward_reference(x_nchw, params):
    x = x_nchw
    for (w_hwio, b, g, be, m, v) in params["conv"]:
        w_oihw = jnp.transpose(w_hwio, (3, 2, 0, 1))
        z = lax.conv_general_dilated(
            x, w_oihw, (1, 1), "SAME",
            dimension_numbers=("NCHW", "OIHW", "NCHW"),
            precision=lax.Precision.HIGHEST)
        z = z + b[None, :, None, None]
        z = ((z - m[None, :, None, None])
             / jnp.sqrt(v[None, :, None, None] + BN_EPS)
             * g[None, :, None, None] + be[None, :, None, None])
        z = jnp.maximum(z, 0.0)
        x = lax.reduce_window(z, -jnp.inf, lax.max,
                              (1, 1, 2, 2), (1, 1, 2, 2), "VALID")
    n = x.shape[0]
    x = x.reshape(n, -1)
    for (w, b, g, be, m, v) in params["fc"]:
        z = jnp.dot(x, w, precision=lax.Precision.HIGHEST) + b
        z = (z - m) / jnp.sqrt(v + BN_EPS) * g + be
        x = jnp.maximum(z, 0.0)
    w, b = params["out"]
    return jnp.dot(x, w, precision=lax.Precision.HIGHEST) + b


# ---------------------------------------------------------------------------
if __name__ == "__main__":
    key = jax.random.PRNGKey(0)
    key, kx = jax.random.split(key)
    x = jax.random.normal(kx, (2, 3, IMG_SIZE, IMG_SIZE), jnp.float32)
    params = init_params(key)
    kparams = prepare_params(params, IMG_SIZE)

    logits = jax.block_until_ready(forward_pallas(x, kparams))
    ref = jax.block_until_ready(forward_reference(x, params))

    assert logits.shape == (2, N_CLASSES)
    np.testing.assert_allclose(np.asarray(logits), np.asarray(ref),
                               rtol=2e-2, atol=2e-2)
    print("KERNEL_OK")
</pallas_src>

<mosaic_0001>
module attributes {stable_mosaic.version = 11 : i64} {
  func.func @fused_cnn_kernel(%arg0: i32, %arg1: memref<16x6x12x3xf32, #tpu.memory_space<vmem>>, %arg2: memref<9x3x4xf32, #tpu.memory_space<vmem>>, %arg3: memref<1x4xf32, #tpu.memory_space<vmem>>, %arg4: memref<1x4xf32, #tpu.memory_space<vmem>>, %arg5: memref<9x4x8xf32, #tpu.memory_space<vmem>>, %arg6: memref<1x8xf32, #tpu.memory_space<vmem>>, %arg7: memref<1x8xf32, #tpu.memory_space<vmem>>, %arg8: memref<128x32xf32, #tpu.memory_space<vmem>>, %arg9: memref<1x32xf32, #tpu.memory_space<vmem>>, %arg10: memref<1x32xf32, #tpu.memory_space<vmem>>, %arg11: memref<32x16xf32, #tpu.memory_space<vmem>>, %arg12: memref<1x16xf32, #tpu.memory_space<vmem>>, %arg13: memref<1x16xf32, #tpu.memory_space<vmem>>, %arg14: memref<16x2xf32, #tpu.memory_space<vmem>>, %arg15: memref<1x2xf32, #tpu.memory_space<vmem>>, %arg16: memref<2x2xf32, #tpu.memory_space<vmem>>, %arg17: memref<4x6x12x4xf32, #tpu.memory_space<vmem>>, %arg18: memref<2x128xf32, #tpu.memory_space<vmem>>) attributes {dimension_semantics = [#tpu.dimension_semantics<arbitrary>], iteration_bounds = array<i64: 1>, scalar_prefetch = 0 : i64, scratch_operands = 2 : i64, tpu.core_type = #tpu.core_type<tc>, window_params = [{pipeline_mode = #tpu.pipeline_mode<synchronous>, transform_indices = @transform_0, window_bounds = array<i64: 16, 6, 12, 3>}, {pipeline_mode = #tpu.pipeline_mode<synchronous>, transform_indices = @transform_1, window_bounds = array<i64: 9, 3, 4>}, {pipeline_mode = #tpu.pipeline_mode<synchronous>, transform_indices = @transform_2, window_bounds = array<i64: 1, 4>}, {pipeline_mode = #tpu.pipeline_mode<synchronous>, transform_indices = @transform_3, window_bounds = array<i64: 1, 4>}, {pipeline_mode = #tpu.pipeline_mode<synchronous>, transform_indices = @transform_4, window_bounds = array<i64: 9, 4, 8>}, {pipeline_mode = #tpu.pipeline_mode<synchronous>, transform_indices = @transform_5, window_bounds = array<i64: 1, 8>}, {pipeline_mode = #tpu.pipeline_mode<synchronous>, transform_indices = @transform_6, window_bounds = array<i64: 1, 8>}, {pipeline_mode = #tpu.pipeline_mode<synchronous>, transform_indices = @transform_7, window_bounds = array<i64: 128, 32>}, {pipeline_mode = #tpu.pipeline_mode<synchronous>, transform_indices = @transform_8, window_bounds = array<i64: 1, 32>}, {pipeline_mode = #tpu.pipeline_mode<synchronous>, transform_indices = @transform_9, window_bounds = array<i64: 1, 32>}, {pipeline_mode = #tpu.pipeline_mode<synchronous>, transform_indices = @transform_10, window_bounds = array<i64: 32, 16>}, {pipeline_mode = #tpu.pipeline_mode<synchronous>, transform_indices = @transform_11, window_bounds = array<i64: 1, 16>}, {pipeline_mode = #tpu.pipeline_mode<synchronous>, transform_indices = @transform_12, window_bounds = array<i64: 1, 16>}, {pipeline_mode = #tpu.pipeline_mode<synchronous>, transform_indices = @transform_13, window_bounds = array<i64: 16, 2>}, {pipeline_mode = #tpu.pipeline_mode<synchronous>, transform_indices = @transform_14, window_bounds = array<i64: 1, 2>}, {pipeline_mode = #tpu.pipeline_mode<synchronous>, transform_indices = @transform_15, window_bounds = array<i64: 2, 2>}]} {
    %cst = arith.constant 0.000000e+00 : f32
    %0 = vector.broadcast %cst : f32 to vector<512x4xf32>
    %c15 = arith.constant 15 : index
    %c0 = arith.constant 0 : index
    %c0_0 = arith.constant 0 : index
    %c0_1 = arith.constant 0 : index
    %1 = vector.load %arg1[%c15, %c0, %c0_0, %c0_1] : memref<16x6x12x3xf32, #tpu.memory_space<vmem>>, vector<1x4x8x3xf32>
    %2 = vector.shape_cast %1 : vector<1x4x8x3xf32> to vector<4x8x3xf32>
    %3 = vector.shape_cast %2 : vector<4x8x3xf32> to vector<32x3xf32>
    %c12 = arith.constant 12 : index
    %c0_2 = arith.constant 0 : index
    %c2 = arith.constant 2 : index
    %c0_3 = arith.constant 0 : index
    %4 = vector.load %arg1[%c12, %c0_2, %c2, %c0_3] : memref<16x6x12x3xf32, #tpu.memory_space<vmem>>, vector<1x4x8x3xf32>
    %5 = vector.shape_cast %4 : vector<1x4x8x3xf32> to vector<4x8x3xf32>
    %6 = vector.shape_cast %5 : vector<4x8x3xf32> to vector<32x3xf32>
    %c13 = arith.constant 13 : index
    %c0_4 = arith.constant 0 : index
    %c2_5 = arith.constant 2 : index
    %c0_6 = arith.constant 0 : index
    %7 = vector.load %arg1[%c13, %c0_4, %c2_5, %c0_6] : memref<16x6x12x3xf32, #tpu.memory_space<vmem>>, vector<1x4x8x3xf32>
    %8 = vector.shape_cast %7 : vector<1x4x8x3xf32> to vector<4x8x3xf32>
    %9 = vector.shape_cast %8 : vector<4x8x3xf32> to vector<32x3xf32>
    %c14 = arith.constant 14 : index
    %c0_7 = arith.constant 0 : index
    %c2_8 = arith.constant 2 : index
    %c0_9 = arith.constant 0 : index
    %10 = vector.load %arg1[%c14, %c0_7, %c2_8, %c0_9] : memref<16x6x12x3xf32, #tpu.memory_space<vmem>>, vector<1x4x8x3xf32>
    %11 = vector.shape_cast %10 : vector<1x4x8x3xf32> to vector<4x8x3xf32>
    %12 = vector.shape_cast %11 : vector<4x8x3xf32> to vector<32x3xf32>
    %c3 = arith.constant 3 : index
    %c1 = arith.constant 1 : index
    %c0_10 = arith.constant 0 : index
    %c0_11 = arith.constant 0 : index
    %13 = vector.load %arg1[%c3, %c1, %c0_10, %c0_11] : memref<16x6x12x3xf32, #tpu.memory_space<vmem>>, vector<1x4x8x3xf32>
    %14 = vector.shape_cast %13 : vector<1x4x8x3xf32> to vector<4x8x3xf32>
    %15 = vector.shape_cast %14 : vector<4x8x3xf32> to vector<32x3xf32>
    %c0_12 = arith.constant 0 : index
    %c1_13 = arith.constant 1 : index
    %c2_14 = arith.constant 2 : index
    %c0_15 = arith.constant 0 : index
    %16 = vector.load %arg1[%c0_12, %c1_13, %c2_14, %c0_15] : memref<16x6x12x3xf32, #tpu.memory_space<vmem>>, vector<1x4x8x3xf32>
    %17 = vector.shape_cast %16 : vector<1x4x8x3xf32> to vector<4x8x3xf32>
    %18 = vector.shape_cast %17 : vector<4x8x3xf32> to vector<32x3xf32>
    %c1_16 = arith.constant 1 : index
    %c1_17 = arith.constant 1 : index
    %c2_18 = arith.constant 2 : index
    %c0_19 = arith.constant 0 : index
    %19 = vector.load %arg1[%c1_16, %c1_17, %c2_18, %c0_19] : memref<16x6x12x3xf32, #tpu.memory_space<vmem>>, vector<1x4x8x3xf32>
    %20 = vector.shape_cast %19 : vector<1x4x8x3xf32> to vector<4x8x3xf32>
    %21 = vector.shape_cast %20 : vector<4x8x3xf32> to vector<32x3xf32>
    %c2_20 = arith.constant 2 : index
    %c1_21 = arith.constant 1 : index
    %c2_22 = arith.constant 2 : index
    %c0_23 = arith.constant 0 : index
    %22 = vector.load %arg1[%c2_20, %c1_21, %c2_22, %c0_23] : memref<16x6x12x3xf32, #tpu.memory_space<vmem>>, vector<1x4x8x3xf32>
    %23 = vector.shape_cast %22 : vector<1x4x8x3xf32> to vector<4x8x3xf32>
    %24 = vector.shape_cast %23 : vector<4x8x3xf32> to vector<32x3xf32>
    %c7 = arith.constant 7 : index
    %c1_24 = arith.constant 1 : index
    %c0_25 = arith.constant 0 : index
    %c0_26 = arith.constant 0 : index
    %25 = vector.load %arg1[%c7, %c1_24, %c0_25, %c0_26] : memref<16x6x12x3xf32, #tpu.memory_space<vmem>>, vector<1x4x8x3xf32>
    %26 = vector.shape_cast %25 : vector<1x4x8x3xf32> to vector<4x8x3xf32>
    %27 = vector.shape_cast %26 : vector<4x8x3xf32> to vector<32x3xf32>
    %c4 = arith.constant 4 : index
    %c1_27 = arith.constant 1 : index
    %c2_28 = arith.constant 2 : index
    %c0_29 = arith.constant 0 : index
    %28 = vector.load %arg1[%c4, %c1_27, %c2_28, %c0_29] : memref<16x6x12x3xf32, #tpu.memory_space<vmem>>, vector<1x4x8x3xf32>
    %29 = vector.shape_cast %28 : vector<1x4x8x3xf32> to vector<4x8x3xf32>
    %30 = vector.shape_cast %29 : vector<4x8x3xf32> to vector<32x3xf32>
    %c5 = arith.constant 5 : index
    %c1_30 = arith.constant 1 : index
    %c2_31 = arith.constant 2 : index
    %c0_32 = arith.constant 0 : index
    %31 = vector.load %arg1[%c5, %c1_30, %c2_31, %c0_32] : memref<16x6x12x3xf32, #tpu.memory_space<vmem>>, vector<1x4x8x3xf32>
    %32 = vector.shape_cast %31 : vector<1x4x8x3xf32> to vector<4x8x3xf32>
    %33 = vector.shape_cast %32 : vector<4x8x3xf32> to vector<32x3xf32>
    %c6 = arith.constant 6 : index
    %c1_33 = arith.constant 1 : index
    %c2_34 = arith.constant 2 : index
    %c0_35 = arith.constant 0 : index
    %34 = vector.load %arg1[%c6, %c1_33, %c2_34, %c0_35] : memref<16x6x12x3xf32, #tpu.memory_space<vmem>>, vector<1x4x8x3xf32>
    %35 = vector.shape_cast %34 : vector<1x4x8x3xf32> to vector<4x8x3xf32>
    %36 = vector.shape_cast %35 : vector<4x8x3xf32> to vector<32x3xf32>
    %c11 = arith.constant 11 : index
    %c1_36 = arith.constant 1 : index
    %c0_37 = arith.constant 0 : index
    %c0_38 = arith.constant 0 : index
    %37 = vector.load %arg1[%c11, %c1_36, %c0_37, %c0_38] : memref<16x6x12x3xf32, #tpu.memory_space<vmem>>, vector<1x4x8x3xf32>
    %38 = vector.shape_cast %37 : vector<1x4x8x3xf32> to vector<4x8x3xf32>
    %39 = vector.shape_cast %38 : vector<4x8x3xf32> to vector<32x3xf32>
    %c8 = arith.constant 8 : index
    %c1_39 = arith.constant 1 : index
    %c2_40 = arith.constant 2 : index
    %c0_41 = arith.constant 0 : index
    %40 = vector.load %arg1[%c8, %c1_39, %c2_40, %c0_41] : memref<16x6x12x3xf32, #tpu.memory_space<vmem>>, vector<1x4x8x3xf32>
    %41 = vector.shape_cast %40 : vector<1x4x8x3xf32> to vector<4x8x3xf32>
    %42 = vector.shape_cast %41 : vector<4x8x3xf32> to vector<32x3xf32>
    %c9 = arith.constant 9 : index
    %c1_42 = arith.constant 1 : index
    %c2_43 = arith.constant 2 : index
    %c0_44 = arith.constant 0 : index
    %43 = vector.load %arg1[%c9, %c1_42, %c2_43, %c0_44] : memref<16x6x12x3xf32, #tpu.memory_space<vmem>>, vector<1x4x8x3xf32>
    %44 = vector.shape_cast %43 : vector<1x4x8x3xf32> to vector<4x8x3xf32>
    %45 = vector.shape_cast %44 : vector<4x8x3xf32> to vector<32x3xf32>
    %c10 = arith.constant 10 : index
    %c1_45 = arith.constant 1 : index
    %c2_46 = arith.constant 2 : index
    %c0_47 = arith.constant 0 : index
    %46 = vector.load %arg1[%c10, %c1_45, %c2_46, %c0_47] : memref<16x6x12x3xf32, #tpu.memory_space<vmem>>, vector<1x4x8x3xf32>
    %47 = vector.shape_cast %46 : vector<1x4x8x3xf32> to vector<4x8x3xf32>
    %48 = vector.shape_cast %47 : vector<4x8x3xf32> to vector<32x3xf32>
    %49 = tpu.concatenate %3, %6, %9, %12, %15, %18, %21, %24, %27, %30, %33, %36, %39, %42, %45, %48 in 0 : vector<32x3xf32>, vector<32x3xf32>, vector<32x3xf32>, vector<32x3xf32>, vector<32x3xf32>, vector<32x3xf32>, vector<32x3xf32>, vector<32x3xf32>, vector<32x3xf32>, vector<32x3xf32>, vector<32x3xf32>, vector<32x3xf32>, vector<32x3xf32>, vector<32x3xf32>, vector<32x3xf32>, vector<32x3xf32> -> vector<512x3xf32>
    %c0_48 = arith.constant 0 : index
    %c0_49 = arith.constant 0 : index
    %c0_50 = arith.constant 0 : index
    %50 = vector.load %arg2[%c0_48, %c0_49, %c0_50] : memref<9x3x4xf32, #tpu.memory_space<vmem>>, vector<1x3x4xf32>
    %51 = vector.shape_cast %50 : vector<1x3x4xf32> to vector<3x4xf32>
    %cst_51 = arith.constant dense<0.000000e+00> : vector<512x4xf32>
    %52 = tpu.matmul %49, %51, %cst_51 {dimension_numbers = #tpu.dot_dimension_numbers<[1], [0], [0], [1], [0, 0, 1, 1], [], []>} : vector<512x3xf32>, vector<3x4xf32>, vector<512x4xf32> -> vector<512x4xf32>
    %53 = arith.addf %0, %52 : vector<512x4xf32>
    %c12_52 = arith.constant 12 : index
    %c0_53 = arith.constant 0 : index
    %c2_54 = arith.constant 2 : index
    %c0_55 = arith.constant 0 : index
    %54 = vector.load %arg1[%c12_52, %c0_53, %c2_54, %c0_55] : memref<16x6x12x3xf32, #tpu.memory_space<vmem>>, vector<1x4x8x3xf32>
    %55 = vector.shape_cast %54 : vector<1x4x8x3xf32> to vector<4x8x3xf32>
    %56 = vector.shape_cast %55 : vector<4x8x3xf32> to vector<32x3xf32>
    %c13_56 = arith.constant 13 : index
    %c0_57 = arith.constant 0 : index
    %c2_58 = arith.constant 2 : index
    %c0_59 = arith.constant 0 : index
    %57 = vector.load %arg1[%c13_56, %c0_57, %c2_58, %c0_59] : memref<16x6x12x3xf32, #tpu.memory_space<vmem>>, vector<1x4x8x3xf32>
    %58 = vector.shape_cast %57 : vector<1x4x8x3xf32> to vector<4x8x3xf32>
    %59 = vector.shape_cast %58 : vector<4x8x3xf32> to vector<32x3xf32>
    %c14_60 = arith.constant 14 : index
    %c0_61 = arith.constant 0 : index
    %c2_62 = arith.constant 2 : index
    %c0_63 = arith.constant 0 : index
    %60 = vector.load %arg1[%c14_60, %c0_61, %c2_62, %c0_63] : memref<16x6x12x3xf32, #tpu.memory_space<vmem>>, vector<1x4x8x3xf32>
    %61 = vector.shape_cast %60 : vector<1x4x8x3xf32> to vector<4x8x3xf32>
    %62 = vector.shape_cast %61 : vector<4x8x3xf32> to vector<32x3xf32>
    %c15_64 = arith.constant 15 : index
    %c0_65 = arith.constant 0 : index
    %c2_66 = arith.constant 2 : index
    %c0_67 = arith.constant 0 : index
    %63 = vector.load %arg1[%c15_64, %c0_65, %c2_66, %c0_67] : memref<16x6x12x3xf32, #tpu.memory_space<vmem>>, vector<1x4x8x3xf32>
    %64 = vector.shape_cast %63 : vector<1x4x8x3xf32> to vector<4x8x3xf32>
    %65 = vector.shape_cast %64 : vector<4x8x3xf32> to vector<32x3xf32>
    %c0_68 = arith.constant 0 : index
    %c1_69 = arith.constant 1 : index
    %c2_70 = arith.constant 2 : index
    %c0_71 = arith.constant 0 : index
    %66 = vector.load %arg1[%c0_68, %c1_69, %c2_70, %c0_71] : memref<16x6x12x3xf32, #tpu.memory_space<vmem>>, vector<1x4x8x3xf32>
    %67 = vector.shape_cast %66 : vector<1x4x8x3xf32> to vector<4x8x3xf32>
    %68 = vector.shape_cast %67 : vector<4x8x3xf32> to vector<32x3xf32>
    %c1_72 = arith.constant 1 : index
    %c1_73 = arith.constant 1 : index
    %c2_74 = arith.constant 2 : index
    %c0_75 = arith.constant 0 : index
    %69 = vector.load %arg1[%c1_72, %c1_73, %c2_74, %c0_75] : memref<16x6x12x3xf32, #tpu.memory_space<vmem>>, vector<1x4x8x3xf32>
    %70 = vector.shape_cast %69 : vector<1x4x8x3xf32> to vector<4x8x3xf32>
    %71 = vector.shape_cast %70 : vector<4x8x3xf32> to vector<32x3xf32>
    %c2_76 = arith.constant 2 : index
    %c1_77 = arith.constant 1 : index
    %c2_78 = arith.constant 2 : index
    %c0_79 = arith.constant 0 : index
    %72 = vector.load %arg1[%c2_76, %c1_77, %c2_78, %c0_79] : memref<16x6x12x3xf32, #tpu.memory_space<vmem>>, vector<1x4x8x3xf32>
    %73 = vector.shape_cast %72 : vector<1x4x8x3xf32> to vector<4x8x3xf32>
    %74 = vector.shape_cast %73 : vector<4x8x3xf32> to vector<32x3xf32>
    %c3_80 = arith.constant 3 : index
    %c1_81 = arith.constant 1 : index
    %c2_82 = arith.constant 2 : index
    %c0_83 = arith.constant 0 : index
    %75 = vector.load %arg1[%c3_80, %c1_81, %c2_82, %c0_83] : memref<16x6x12x3xf32, #tpu.memory_space<vmem>>, vector<1x4x8x3xf32>
    %76 = vector.shape_cast %75 : vector<1x4x8x3xf32> to vector<4x8x3xf32>
    %77 = vector.shape_cast %76 : vector<4x8x3xf32> to vector<32x3xf32>
    %c4_84 = arith.constant 4 : index
    %c1_85 = arith.constant 1 : index
    %c2_86 = arith.constant 2 : index
    %c0_87 = arith.constant 0 : index
    %78 = vector.load %arg1[%c4_84, %c1_85, %c2_86, %c0_87] : memref<16x6x12x3xf32, #tpu.memory_space<vmem>>, vector<1x4x8x3xf32>
    %79 = vector.shape_cast %78 : vector<1x4x8x3xf32> to vector<4x8x3xf32>
    %80 = vector.shape_cast %79 : vector<4x8x3xf32> to vector<32x3xf32>
    %c5_88 = arith.constant 5 : index
    %c1_89 = arith.constant 1 : index
    %c2_90 = arith.constant 2 : index
    %c0_91 = arith.constant 0 : index
    %81 = vector.load %arg1[%c5_88, %c1_89, %c2_90, %c0_91] : memref<16x6x12x3xf32, #tpu.memory_space<vmem>>, vector<1x4x8x3xf32>
    %82 = vector.shape_cast %81 : vector<1x4x8x3xf32> to vector<4x8x3xf32>
    %83 = vector.shape_cast %82 : vector<4x8x3xf32> to vector<32x3xf32>
    %c6_92 = arith.constant 6 : index
    %c1_93 = arith.constant 1 : index
    %c2_94 = arith.constant 2 : index
    %c0_95 = arith.constant 0 : index
    %84 = vector.load %arg1[%c6_92, %c1_93, %c2_94, %c0_95] : memref<16x6x12x3xf32, #tpu.memory_space<vmem>>, vector<1x4x8x3xf32>
    %85 = vector.shape_cast %84 : vector<1x4x8x3xf32> to vector<4x8x3xf32>
    %86 = vector.shape_cast %85 : vector<4x8x3xf32> to vector<32x3xf32>
    %c7_96 = arith.constant 7 : index
    %c1_97 = arith.constant 1 : index
    %c2_98 = arith.constant 2 : index
    %c0_99 = arith.constant 0 : index
    %87 = vector.load %arg1[%c7_96, %c1_97, %c2_98, %c0_99] : memref<16x6x12x3xf32, #tpu.memory_space<vmem>>, vector<1x4x8x3xf32>
    %88 = vector.shape_cast %87 : vector<1x4x8x3xf32> to vector<4x8x3xf32>
    %89 = vector.shape_cast %88 : vector<4x8x3xf32> to vector<32x3xf32>
    %c8_100 = arith.constant 8 : index
    %c1_101 = arith.constant 1 : index
    %c2_102 = arith.constant 2 : index
    %c0_103 = arith.constant 0 : index
    %90 = vector.load %arg1[%c8_100, %c1_101, %c2_102, %c0_103] : memref<16x6x12x3xf32, #tpu.memory_space<vmem>>, vector<1x4x8x3xf32>
    %91 = vector.shape_cast %90 : vector<1x4x8x3xf32> to vector<4x8x3xf32>
    %92 = vector.shape_cast %91 : vector<4x8x3xf32> to vector<32x3xf32>
    %c9_104 = arith.constant 9 : index
    %c1_105 = arith.constant 1 : index
    %c2_106 = arith.constant 2 : index
    %c0_107 = arith.constant 0 : index
    %93 = vector.load %arg1[%c9_104, %c1_105, %c2_106, %c0_107] : memref<16x6x12x3xf32, #tpu.memory_space<vmem>>, vector<1x4x8x3xf32>
    %94 = vector.shape_cast %93 : vector<1x4x8x3xf32> to vector<4x8x3xf32>
    %95 = vector.shape_cast %94 : vector<4x8x3xf32> to vector<32x3xf32>
    %c10_108 = arith.constant 10 : index
    %c1_109 = arith.constant 1 : index
    %c2_110 = arith.constant 2 : index
    %c0_111 = arith.constant 0 : index
    %96 = vector.load %arg1[%c10_108, %c1_109, %c2_110, %c0_111] : memref<16x6x12x3xf32, #tpu.memory_space<vmem>>, vector<1x4x8x3xf32>
    %97 = vector.shape_cast %96 : vector<1x4x8x3xf32> to vector<4x8x3xf32>
    %98 = vector.shape_cast %97 : vector<4x8x3xf32> to vector<32x3xf32>
    %c11_112 = arith.constant 11 : index
    %c1_113 = arith.constant 1 : index
    %c2_114 = arith.constant 2 : index
    %c0_115 = arith.constant 0 : index
    %99 = vector.load %arg1[%c11_112, %c1_113, %c2_114, %c0_115] : memref<16x6x12x3xf32, #tpu.memory_space<vmem>>, vector<1x4x8x3xf32>
    %100 = vector.shape_cast %99 : vector<1x4x8x3xf32> to vector<4x8x3xf32>
    %101 = vector.shape_cast %100 : vector<4x8x3xf32> to vector<32x3xf32>
    %102 = tpu.concatenate %56, %59, %62, %65, %68, %71, %74, %77, %80, %83, %86, %89, %92, %95, %98, %101 in 0 : vector<32x3xf32>, vector<32x3xf32>, vector<32x3xf32>, vector<32x3xf32>, vector<32x3xf32>, vector<32x3xf32>, vector<32x3xf32>, vector<32x3xf32>, vector<32x3xf32>, vector<32x3xf32>, vector<32x3xf32>, vector<32x3xf32>, vector<32x3xf32>, vector<32x3xf32>, vector<32x3xf32>, vector<32x3xf32> -> vector<512x3xf32>
    %c1_116 = arith.constant 1 : index
    %c0_117 = arith.constant 0 : index
    %c0_118 = arith.constant 0 : index
    %103 = vector.load %arg2[%c1_116, %c0_117, %c0_118] : memref<9x3x4xf32, #tpu.memory_space<vmem>>, vector<1x3x4xf32>
    %104 = vector.shape_cast %103 : vector<1x3x4xf32> to vector<3x4xf32>
    %cst_119 = arith.constant dense<0.000000e+00> : vector<512x4xf32>
    %105 = tpu.matmul %102, %104, %cst_119 {dimension_numbers = #tpu.dot_dimension_numbers<[1], [0], [0], [1], [0, 0, 1, 1], [], []>} : vector<512x3xf32>, vector<3x4xf32>, vector<512x4xf32> -> vector<512x4xf32>
    %106 = arith.addf %53, %105 : vector<512x4xf32>
    %c13_120 = arith.constant 13 : index
    %c0_121 = arith.constant 0 : index
    %c2_122 = arith.constant 2 : index
    %c0_123 = arith.constant 0 : index
    %107 = vector.load %arg1[%c13_120, %c0_121, %c2_122, %c0_123] : memref<16x6x12x3xf32, #tpu.memory_space<vmem>>, vector<1x4x8x3xf32>
    %108 = vector.shape_cast %107 : vector<1x4x8x3xf32> to vector<4x8x3xf32>
    %109 = vector.shape_cast %108 : vector<4x8x3xf32> to vector<32x3xf32>
    %c14_124 = arith.constant 14 : index
    %c0_125 = arith.constant 0 : index
    %c2_126 = arith.constant 2 : index
    %c0_127 = arith.constant 0 : index
    %110 = vector.load %arg1[%c14_124, %c0_125, %c2_126, %c0_127] : memref<16x6x12x3xf32, #tpu.memory_space<vmem>>, vector<1x4x8x3xf32>
    %111 = vector.shape_cast %110 : vector<1x4x8x3xf32> to vector<4x8x3xf32>
    %112 = vector.shape_cast %111 : vector<4x8x3xf32> to vector<32x3xf32>
    %c15_128 = arith.constant 15 : index
    %c0_129 = arith.constant 0 : index
    %c2_130 = arith.constant 2 : index
    %c0_131 = arith.constant 0 : index
    %113 = vector.load %arg1[%c15_128, %c0_129, %c2_130, %c0_131] : memref<16x6x12x3xf32, #tpu.memory_space<vmem>>, vector<1x4x8x3xf32>
    %114 = vector.shape_cast %113 : vector<1x4x8x3xf32> to vector<4x8x3xf32>
    %115 = vector.shape_cast %114 : vector<4x8x3xf32> to vector<32x3xf32>
    %c12_132 = arith.constant 12 : index
    %c0_133 = arith.constant 0 : index
    %c4_134 = arith.constant 4 : index
    %c0_135 = arith.constant 0 : index
    %116 = vector.load %arg1[%c12_132, %c0_133, %c4_134, %c0_135] : memref<16x6x12x3xf32, #tpu.memory_space<vmem>>, vector<1x4x8x3xf32>
    %117 = vector.shape_cast %116 : vector<1x4x8x3xf32> to vector<4x8x3xf32>
    %118 = vector.shape_cast %117 : vector<4x8x3xf32> to vector<32x3xf32>
    %c1_136 = arith.constant 1 : index
    %c1_137 = arith.constant 1 : index
    %c2_138 = arith.constant 2 : index
    %c0_139 = arith.constant 0 : index
    %119 = vector.load %arg1[%c1_136, %c1_137, %c2_138, %c0_139] : memref<16x6x12x3xf32, #tpu.memory_space<vmem>>, vector<1x4x8x3xf32>
    %120 = vector.shape_cast %119 : vector<1x4x8x3xf32> to vector<4x8x3xf32>
    %121 = vector.shape_cast %120 : vector<4x8x3xf32> to vector<32x3xf32>
    %c2_140 = arith.constant 2 : index
    %c1_141 = arith.constant 1 : index
    %c2_142 = arith.constant 2 : index
    %c0_143 = arith.constant 0 : index
    %122 = vector.load %arg1[%c2_140, %c1_141, %c2_142, %c0_143] : memref<16x6x12x3xf32, #tpu.memory_space<vmem>>, vector<1x4x8x3xf32>
    %123 = vector.shape_cast %122 : vector<1x4x8x3xf32> to vector<4x8x3xf32>
    %124 = vector.shape_cast %123 : vector<4x8x3xf32> to vector<32x3xf32>
    %c3_144 = arith.constant 3 : index
    %c1_145 = arith.constant 1 : index
    %c2_146 = arith.constant 2 : index
    %c0_147 = arith.constant 0 : index
    %125 = vector.load %arg1[%c3_144, %c1_145, %c2_146, %c0_147] : memref<16x6x12x3xf32, #tpu.memory_space<vmem>>, vector<1x4x8x3xf32>
    %126 = vector.shape_cast %125 : vector<1x4x8x3xf32> to vector<4x8x3xf32>
    %127 = vector.shape_cast %126 : vector<4x8x3xf32> to vector<32x3xf32>
    %c0_148 = arith.constant 0 : index
    %c1_149 = arith.constant 1 : index
    %c4_150 = arith.constant 4 : index
    %c0_151 = arith.constant 0 : index
    %128 = vector.load %arg1[%c0_148, %c1_149, %c4_150, %c0_151] : memref<16x6x12x3xf32, #tpu.memory_space<vmem>>, vector<1x4x8x3xf32>
    %129 = vector.shape_cast %128 : vector<1x4x8x3xf32> to vector<4x8x3xf32>
    %130 = vector.shape_cast %129 : vector<4x8x3xf32> to vector<32x3xf32>
    %c5_152 = arith.constant 5 : index
    %c1_153 = arith.constant 1 : index
    %c2_154 = arith.constant 2 : index
    %c0_155 = arith.constant 0 : index
    %131 = vector.load %arg1[%c5_152, %c1_153, %c2_154, %c0_155] : memref<16x6x12x3xf32, #tpu.memory_space<vmem>>, vector<1x4x8x3xf32>
    %132 = vector.shape_cast %131 : vector<1x4x8x3xf32> to vector<4x8x3xf32>
    %133 = vector.shape_cast %132 : vector<4x8x3xf32> to vector<32x3xf32>
    %c6_156 = arith.constant 6 : index
    %c1_157 = arith.constant 1 : index
    %c2_158 = arith.constant 2 : index
    %c0_159 = arith.constant 0 : index
    %134 = vector.load %arg1[%c6_156, %c1_157, %c2_158, %c0_159] : memref<16x6x12x3xf32, #tpu.memory_space<vmem>>, vector<1x4x8x3xf32>
    %135 = vector.shape_cast %134 : vector<1x4x8x3xf32> to vector<4x8x3xf32>
    %136 = vector.shape_cast %135 : vector<4x8x3xf32> to vector<32x3xf32>
    %c7_160 = arith.constant 7 : index
    %c1_161 = arith.constant 1 : index
    %c2_162 = arith.constant 2 : index
    %c0_163 = arith.constant 0 : index
    %137 = vector.load %arg1[%c7_160, %c1_161, %c2_162, %c0_163] : memref<16x6x12x3xf32, #tpu.memory_space<vmem>>, vector<1x4x8x3xf32>
    %138 = vector.shape_cast %137 : vector<1x4x8x3xf32> to vector<4x8x3xf32>
    %139 = vector.shape_cast %138 : vector<4x8x3xf32> to vector<32x3xf32>
    %c4_164 = arith.constant 4 : index
    %c1_165 = arith.constant 1 : index
    %c4_166 = arith.constant 4 : index
    %c0_167 = arith.constant 0 : index
    %140 = vector.load %arg1[%c4_164, %c1_165, %c4_166, %c0_167] : memref<16x6x12x3xf32, #tpu.memory_space<vmem>>, vector<1x4x8x3xf32>
    %141 = vector.shape_cast %140 : vector<1x4x8x3xf32> to vector<4x8x3xf32>
    %142 = vector.shape_cast %141 : vector<4x8x3xf32> to vector<32x3xf32>
    %c9_168 = arith.constant 9 : index
    %c1_169 = arith.constant 1 : index
    %c2_170 = arith.constant 2 : index
    %c0_171 = arith.constant 0 : index
    %143 = vector.load %arg1[%c9_168, %c1_169, %c2_170, %c0_171] : memref<16x6x12x3xf32, #tpu.memory_space<vmem>>, vector<1x4x8x3xf32>
    %144 = vector.shape_cast %143 : vector<1x4x8x3xf32> to vector<4x8x3xf32>
    %145 = vector.shape_cast %144 : vector<4x8x3xf32> to vector<32x3xf32>
    %c10_172 = arith.constant 10 : index
    %c1_173 = arith.constant 1 : index
    %c2_174 = arith.constant 2 : index
    %c0_175 = arith.constant 0 : index
    %146 = vector.load %arg1[%c10_172, %c1_173, %c2_174, %c0_175] : memref<16x6x12x3xf32, #tpu.memory_space<vmem>>, vector<1x4x8x3xf32>
    %147 = vector.shape_cast %146 : vector<1x4x8x3xf32> to vector<4x8x3xf32>
    %148 = vector.shape_cast %147 : vector<4x8x3xf32> to vector<32x3xf32>
    %c11_176 = arith.constant 11 : index
    %c1_177 = arith.constant 1 : index
    %c2_178 = arith.constant 2 : index
    %c0_179 = arith.constant 0 : index
    %149 = vector.load %arg1[%c11_176, %c1_177, %c2_178, %c0_179] : memref<16x6x12x3xf32, #tpu.memory_space<vmem>>, vector<1x4x8x3xf32>
    %150 = vector.shape_cast %149 : vector<1x4x8x3xf32> to vector<4x8x3xf32>
    %151 = vector.shape_cast %150 : vector<4x8x3xf32> to vector<32x3xf32>
    %c8_180 = arith.constant 8 : index
    %c1_181 = arith.constant 1 : index
    %c4_182 = arith.constant 4 : index
    %c0_183 = arith.constant 0 : index
    %152 = vector.load %arg1[%c8_180, %c1_181, %c4_182, %c0_183] : memref<16x6x12x3xf32, #tpu.memory_space<vmem>>, vector<1x4x8x3xf32>
    %153 = vector.shape_cast %152 : vector<1x4x8x3xf32> to vector<4x8x3xf32>
    %154 = vector.shape_cast %153 : vector<4x8x3xf32> to vector<32x3xf32>
    %155 = tpu.concatenate %109, %112, %115, %118, %121, %124, %127, %130, %133, %136, %139, %142, %145, %148, %151, %154 in 0 : vector<32x3xf32>, vector<32x3xf32>, vector<32x3xf32>, vector<32x3xf32>, vector<32x3xf32>, vector<32x3xf32>, vector<32x3xf32>, vector<32x3xf32>, vector<32x3xf32>, vector<32x3xf32>, vector<32x3xf32>, vector<32x3xf32>, vector<32x3xf32>, vector<32x3xf32>, vector<32x3xf32>, vector<32x3xf32> -> vector<512x3xf32>
    %c2_184 = arith.constant 2 : index
    %c0_185 = arith.constant 0 : index
    %c0_186 = arith.constant 0 : index
    %156 = vector.load %arg2[%c2_184, %c0_185, %c0_186] : memref<9x3x4xf32, #tpu.memory_space<vmem>>, vector<1x3x4xf32>
    %157 = vector.shape_cast %156 : vector<1x3x4xf32> to vector<3x4xf32>
    %cst_187 = arith.constant dense<0.000000e+00> : vector<512x4xf32>
    %158 = tpu.matmul %155, %157, %cst_187 {dimension_numbers = #tpu.dot_dimension_numbers<[1], [0], [0], [1], [0, 0, 1, 1], [], []>} : vector<512x3xf32>, vector<3x4xf32>, vector<512x4xf32> -> vector<512x4xf32>
    %159 = arith.addf %106, %158 : vector<512x4xf32>
    %c3_188 = arith.constant 3 : index
    %c1_189 = arith.constant 1 : index
    %c0_190 = arith.constant 0 : index
    %c0_191 = arith.constant 0 : index
    %160 = vector.load %arg1[%c3_188, %c1_189, %c0_190, %c0_191] : memref<16x6x12x3xf32, #tpu.memory_space<vmem>>, vector<1x4x8x3xf32>
    %161 = vector.shape_cast %160 : vector<1x4x8x3xf32> to vector<4x8x3xf32>
    %162 = vector.shape_cast %161 : vector<4x8x3xf32> to vector<32x3xf32>
    %c0_192 = arith.constant 0 : index
    %c1_193 = arith.constant 1 : index
    %c2_194 = arith.constant 2 : index
    %c0_195 = arith.constant 0 : index
    %163 = vector.load %arg1[%c0_192, %c1_193, %c2_194, %c0_195] : memref<16x6x12x3xf32, #tpu.memory_space<vmem>>, vector<1x4x8x3xf32>
    %164 = vector.shape_cast %163 : vector<1x4x8x3xf32> to vector<4x8x3xf32>
    %165 = vector.shape_cast %164 : vector<4x8x3xf32> to vector<32x3xf32>
    %c1_196 = arith.constant 1 : index
    %c1_197 = arith.constant 1 : index
    %c2_198 = arith.constant 2 : index
    %c0_199 = arith.constant 0 : index
    %166 = vector.load %arg1[%c1_196, %c1_197, %c2_198, %c0_199] : memref<16x6x12x3xf32, #tpu.memory_space<vmem>>, vector<1x4x8x3xf32>
    %167 = vector.shape_cast %166 : vector<1x4x8x3xf32> to vector<4x8x3xf32>
    %168 = vector.shape_cast %167 : vector<4x8x3xf32> to vector<32x3xf32>
    %c2_200 = arith.constant 2 : index
    %c1_201 = arith.constant 1 : index
    %c2_202 = arith.constant 2 : index
    %c0_203 = arith.constant 0 : index
    %169 = vector.load %arg1[%c2_200, %c1_201, %c2_202, %c0_203] : memref<16x6x12x3xf32, #tpu.memory_space<vmem>>, vector<1x4x8x3xf32>
    %170 = vector.shape_cast %169 : vector<1x4x8x3xf32> to vector<4x8x3xf32>
    %171 = vector.shape_cast %170 : vector<4x8x3xf32> to vector<32x3xf32>
    %c7_204 = arith.constant 7 : index
    %c1_205 = arith.constant 1 : index
    %c0_206 = arith.constant 0 : index
    %c0_207 = arith.constant 0 : index
    %172 = vector.load %arg1[%c7_204, %c1_205, %c0_206, %c0_207] : memref<16x6x12x3xf32, #tpu.memory_space<vmem>>, vector<1x4x8x3xf32>
    %173 = vector.shape_cast %172 : vector<1x4x8x3xf32> to vector<4x8x3xf32>
    %174 = vector.shape_cast %173 : vector<4x8x3xf32> to vector<32x3xf32>
    %c4_208 = arith.constant 4 : index
    %c1_209 = arith.constant 1 : index
    %c2_210 = arith.constant 2 : index
    %c0_211 = arith.constant 0 : index
    %175 = vector.load %arg1[%c4_208, %c1_209, %c2_210, %c0_211] : memref<16x6x12x3xf32, #tpu.memory_space<vmem>>, vector<1x4x8x3xf32>
    %176 = vector.shape_cast %175 : vector<1x4x8x3xf32> to vector<4x8x3xf32>
    %177 = vector.shape_cast %176 : vector<4x8x3xf32> to vector<32x3xf32>
    %c5_212 = arith.constant 5 : index
    %c1_213 = arith.constant 1 : index
    %c2_214 = arith.constant 2 : index
    %c0_215 = arith.constant 0 : index
    %178 = vector.load %arg1[%c5_212, %c1_213, %c2_214, %c0_215] : memref<16x6x12x3xf32, #tpu.memory_space<vmem>>, vector<1x4x8x3xf32>
    %179 = vector.shape_cast %178 : vector<1x4x8x3xf32> to vector<4x8x3xf32>
    %180 = vector.shape_cast %179 : vector<4x8x3xf32> to vector<32x3xf32>
    %c6_216 = arith.constant 6 : index
    %c1_217 = arith.constant 1 : index
    %c2_218 = arith.constant 2 : index
    %c0_219 = arith.constant 0 : index
    %181 = vector.load %arg1[%c6_216, %c1_217, %c2_218, %c0_219] : memref<16x6x12x3xf32, #tpu.memory_space<vmem>>, vector<1x4x8x3xf32>
    %182 = vector.shape_cast %181 : vector<1x4x8x3xf32> to vector<4x8x3xf32>
    %183 = vector.shape_cast %182 : vector<4x8x3xf32> to vector<32x3xf32>
    %c11_220 = arith.constant 11 : index
    %c1_221 = arith.constant 1 : index
    %c0_222 = arith.constant 0 : index
    %c0_223 = arith.constant 0 : index
    %184 = vector.load %arg1[%c11_220, %c1_221, %c0_222, %c0_223] : memref<16x6x12x3xf32, #tpu.memory_space<vmem>>, vector<1x4x8x3xf32>
    %185 = vector.shape_cast %184 : vector<1x4x8x3xf32> to vector<4x8x3xf32>
    %186 = vector.shape_cast %185 : vector<4x8x3xf32> to vector<32x3xf32>
    %c8_224 = arith.constant 8 : index
    %c1_225 = arith.constant 1 : index
    %c2_226 = arith.constant 2 : index
    %c0_227 = arith.constant 0 : index
    %187 = vector.load %arg1[%c8_224, %c1_225, %c2_226, %c0_227] : memref<16x6x12x3xf32, #tpu.memory_space<vmem>>, vector<1x4x8x3xf32>
    %188 = vector.shape_cast %187 : vector<1x4x8x3xf32> to vector<4x8x3xf32>
    %189 = vector.shape_cast %188 : vector<4x8x3xf32> to vector<32x3xf32>
    %c9_228 = arith.constant 9 : index
    %c1_229 = arith.constant 1 : index
    %c2_230 = arith.constant 2 : index
    %c0_231 = arith.constant 0 : index
    %190 = vector.load %arg1[%c9_228, %c1_229, %c2_230, %c0_231] : memref<16x6x12x3xf32, #tpu.memory_space<vmem>>, vector<1x4x8x3xf32>
    %191 = vector.shape_cast %190 : vector<1x4x8x3xf32> to vector<4x8x3xf32>
    %192 = vector.shape_cast %191 : vector<4x8x3xf32> to vector<32x3xf32>
    %c10_232 = arith.constant 10 : index
    %c1_233 = arith.constant 1 : index
    %c2_234 = arith.constant 2 : index
    %c0_235 = arith.constant 0 : index
    %193 = vector.load %arg1[%c10_232, %c1_233, %c2_234, %c0_235] : memref<16x6x12x3xf32, #tpu.memory_space<vmem>>, vector<1x4x8x3xf32>
    %194 = vector.shape_cast %193 : vector<1x4x8x3xf32> to vector<4x8x3xf32>
    %195 = vector.shape_cast %194 : vector<4x8x3xf32> to vector<32x3xf32>
    %c15_236 = arith.constant 15 : index
    %c1_237 = arith.constant 1 : index
    %c0_238 = arith.constant 0 : index
    %c0_239 = arith.constant 0 : index
    %196 = vector.load %arg1[%c15_236, %c1_237, %c0_238, %c0_239] : memref<16x6x12x3xf32, #tpu.memory_space<vmem>>, vector<1x4x8x3xf32>
    %197 = vector.shape_cast %196 : vector<1x4x8x3xf32> to vector<4x8x3xf32>
    %198 = vector.shape_cast %197 : vector<4x8x3xf32> to vector<32x3xf32>
    %c12_240 = arith.constant 12 : index
    %c1_241 = arith.constant 1 : index
    %c2_242 = arith.constant 2 : index
    %c0_243 = arith.constant 0 : index
    %199 = vector.load %arg1[%c12_240, %c1_241, %c2_242, %c0_243] : memref<16x6x12x3xf32, #tpu.memory_space<vmem>>, vector<1x4x8x3xf32>
    %200 = vector.shape_cast %199 : vector<1x4x8x3xf32> to vector<4x8x3xf32>
    %201 = vector.shape_cast %200 : vector<4x8x3xf32> to vector<32x3xf32>
    %c13_244 = arith.constant 13 : index
    %c1_245 = arith.constant 1 : index
    %c2_246 = arith.constant 2 : index
    %c0_247 = arith.constant 0 : index
    %202 = vector.load %arg1[%c13_244, %c1_245, %c2_246, %c0_247] : memref<16x6x12x3xf32, #tpu.memory_space<vmem>>, vector<1x4x8x3xf32>
    %203 = vector.shape_cast %202 : vector<1x4x8x3xf32> to vector<4x8x3xf32>
    %204 = vector.shape_cast %203 : vector<4x8x3xf32> to vector<32x3xf32>
    %c14_248 = arith.constant 14 : index
    %c1_249 = arith.constant 1 : index
    %c2_250 = arith.constant 2 : index
    %c0_251 = arith.constant 0 : index
    %205 = vector.load %arg1[%c14_248, %c1_249, %c2_250, %c0_251] : memref<16x6x12x3xf32, #tpu.memory_space<vmem>>, vector<1x4x8x3xf32>
    %206 = vector.shape_cast %205 : vector<1x4x8x3xf32> to vector<4x8x3xf32>
    %207 = vector.shape_cast %206 : vector<4x8x3xf32> to vector<32x3xf32>
    %208 = tpu.concatenate %162, %165, %168, %171, %174, %177, %180, %183, %186, %189, %192, %195, %198, %201, %204, %207 in 0 : vector<32x3xf32>, vector<32x3xf32>, vector<32x3xf32>, vector<32x3xf32>, vector<32x3xf32>, vector<32x3xf32>, vector<32x3xf32>, vector<32x3xf32>, vector<32x3xf32>, vector<32x3xf32>, vector<32x3xf32>, vector<32x3xf32>, vector<32x3xf32>, vector<32x3xf32>, vector<32x3xf32>, vector<32x3xf32> -> vector<512x3xf32>
    %c3_252 = arith.constant 3 : index
    %c0_253 = arith.constant 0 : index
    %c0_254 = arith.constant 0 : index
    %209 = vector.load %arg2[%c3_252, %c0_253, %c0_254] : memref<9x3x4xf32, #tpu.memory_space<vmem>>, vector<1x3x4xf32>
    %210 = vector.shape_cast %209 : vector<1x3x4xf32> to vector<3x4xf32>
    %cst_255 = arith.constant dense<0.000000e+00> : vector<512x4xf32>
    %211 = tpu.matmul %208, %210, %cst_255 {dimension_numbers = #tpu.dot_dimension_numbers<[1], [0], [0], [1], [0, 0, 1, 1], [], []>} : vector<512x3xf32>, vector<3x4xf32>, vector<512x4xf32> -> vector<512x4xf32>
    %212 = arith.addf %159, %211 : vector<512x4xf32>
    %c0_256 = arith.constant 0 : index
    %c1_257 = arith.constant 1 : index
    %c2_258 = arith.constant 2 : index
    %c0_259 = arith.constant 0 : index
    %213 = vector.load %arg1[%c0_256, %c1_257, %c2_258, %c0_259] : memref<16x6x12x3xf32, #tpu.memory_space<vmem>>, vector<1x4x8x3xf32>
    %214 = vector.shape_cast %213 : vector<1x4x8x3xf32> to vector<4x8x3xf32>
    %215 = vector.shape_cast %214 : vector<4x8x3xf32> to vector<32x3xf32>
    %c1_260 = arith.constant 1 : index
    %c1_261 = arith.constant 1 : index
    %c2_262 = arith.constant 2 : index
    %c0_263 = arith.constant 0 : index
    %216 = vector.load %arg1[%c1_260, %c1_261, %c2_262, %c0_263] : memref<16x6x12x3xf32, #tpu.memory_space<vmem>>, vector<1x4x8x3xf32>
    %217 = vector.shape_cast %216 : vector<1x4x8x3xf32> to vector<4x8x3xf32>
    %218 = vector.shape_cast %217 : vector<4x8x3xf32> to vector<32x3xf32>
    %c2_264 = arith.constant 2 : index
    %c1_265 = arith.constant 1 : index
    %c2_266 = arith.constant 2 : index
    %c0_267 = arith.constant 0 : index
    %219 = vector.load %arg1[%c2_264, %c1_265, %c2_266, %c0_267] : memref<16x6x12x3xf32, #tpu.memory_space<vmem>>, vector<1x4x8x3xf32>
    %220 = vector.shape_cast %219 : vector<1x4x8x3xf32> to vector<4x8x3xf32>
    %221 = vector.shape_cast %220 : vector<4x8x3xf32> to vector<32x3xf32>
    %c3_268 = arith.constant 3 : index
    %c1_269 = arith.constant 1 : index
    %c2_270 = arith.constant 2 : index
    %c0_271 = arith.constant 0 : index
    %222 = vector.load %arg1[%c3_268, %c1_269, %c2_270, %c0_271] : memref<16x6x12x3xf32, #tpu.memory_space<vmem>>, vector<1x4x8x3xf32>
    %223 = vector.shape_cast %222 : vector<1x4x8x3xf32> to vector<4x8x3xf32>
    %224 = vector.shape_cast %223 : vector<4x8x3xf32> to vector<32x3xf32>
    %c4_272 = arith.constant 4 : index
    %c1_273 = arith.constant 1 : index
    %c2_274 = arith.constant 2 : index
    %c0_275 = arith.constant 0 : index
    %225 = vector.load %arg1[%c4_272, %c1_273, %c2_274, %c0_275] : memref<16x6x12x3xf32, #tpu.memory_space<vmem>>, vector<1x4x8x3xf32>
    %226 = vector.shape_cast %225 : vector<1x4x8x3xf32> to vector<4x8x3xf32>
    %227 = vector.shape_cast %226 : vector<4x8x3xf32> to vector<32x3xf32>
    %c5_276 = arith.constant 5 : index
    %c1_277 = arith.constant 1 : index
    %c2_278 = arith.constant 2 : index
    %c0_279 = arith.constant 0 : index
    %228 = vector.load %arg1[%c5_276, %c1_277, %c2_278, %c0_279] : memref<16x6x12x3xf32, #tpu.memory_space<vmem>>, vector<1x4x8x3xf32>
    %229 = vector.shape_cast %228 : vector<1x4x8x3xf32> to vector<4x8x3xf32>
    %230 = vector.shape_cast %229 : vector<4x8x3xf32> to vector<32x3xf32>
    %c6_280 = arith.constant 6 : index
    %c1_281 = arith.constant 1 : index
    %c2_282 = arith.constant 2 : index
    %c0_283 = arith.constant 0 : index
    %231 = vector.load %arg1[%c6_280, %c1_281, %c2_282, %c0_283] : memref<16x6x12x3xf32, #tpu.memory_space<vmem>>, vector<1x4x8x3xf32>
    %232 = vector.shape_cast %231 : vector<1x4x8x3xf32> to vector<4x8x3xf32>
    %233 = vector.shape_cast %232 : vector<4x8x3xf32> to vector<32x3xf32>
    %c7_284 = arith.constant 7 : index
    %c1_285 = arith.constant 1 : index
    %c2_286 = arith.constant 2 : index
    %c0_287 = arith.constant 0 : index
    %234 = vector.load %arg1[%c7_284, %c1_285, %c2_286, %c0_287] : memref<16x6x12x3xf32, #tpu.memory_space<vmem>>, vector<1x4x8x3xf32>
    %235 = vector.shape_cast %234 : vector<1x4x8x3xf32> to vector<4x8x3xf32>
    %236 = vector.shape_cast %235 : vector<4x8x3xf32> to vector<32x3xf32>
    %c8_288 = arith.constant 8 : index
    %c1_289 = arith.constant 1 : index
    %c2_290 = arith.constant 2 : index
    %c0_291 = arith.constant 0 : index
    %237 = vector.load %arg1[%c8_288, %c1_289, %c2_290, %c0_291] : memref<16x6x12x3xf32, #tpu.memory_space<vmem>>, vector<1x4x8x3xf32>
    %238 = vector.shape_cast %237 : vector<1x4x8x3xf32> to vector<4x8x3xf32>
    %239 = vector.shape_cast %238 : vector<4x8x3xf32> to vector<32x3xf32>
    %c9_292 = arith.constant 9 : index
    %c1_293 = arith.constant 1 : index
    %c2_294 = arith.constant 2 : index
    %c0_295 = arith.constant 0 : index
    %240 = vector.load %arg1[%c9_292, %c1_293, %c2_294, %c0_295] : memref<16x6x12x3xf32, #tpu.memory_space<vmem>>, vector<1x4x8x3xf32>
    %241 = vector.shape_cast %240 : vector<1x4x8x3xf32> to vector<4x8x3xf32>
    %242 = vector.shape_cast %241 : vector<4x8x3xf32> to vector<32x3xf32>
    %c10_296 = arith.constant 10 : index
    %c1_297 = arith.constant 1 : index
    %c2_298 = arith.constant 2 : index
    %c0_299 = arith.constant 0 : index
    %243 = vector.load %arg1[%c10_296, %c1_297, %c2_298, %c0_299] : memref<16x6x12x3xf32, #tpu.memory_space<vmem>>, vector<1x4x8x3xf32>
    %244 = vector.shape_cast %243 : vector<1x4x8x3xf32> to vector<4x8x3xf32>
    %245 = vector.shape_cast %244 : vector<4x8x3xf32> to vector<32x3xf32>
    %c11_300 = arith.constant 11 : index
    %c1_301 = arith.constant 1 : index
    %c2_302 = arith.constant 2 : index
    %c0_303 = arith.constant 0 : index
    %246 = vector.load %arg1[%c11_300, %c1_301, %c2_302, %c0_303] : memref<16x6x12x3xf32, #tpu.memory_space<vmem>>, vector<1x4x8x3xf32>
    %247 = vector.shape_cast %246 : vector<1x4x8x3xf32> to vector<4x8x3xf32>
    %248 = vector.shape_cast %247 : vector<4x8x3xf32> to vector<32x3xf32>
    %c12_304 = arith.constant 12 : index
    %c1_305 = arith.constant 1 : index
    %c2_306 = arith.constant 2 : index
    %c0_307 = arith.constant 0 : index
    %249 = vector.load %arg1[%c12_304, %c1_305, %c2_306, %c0_307] : memref<16x6x12x3xf32, #tpu.memory_space<vmem>>, vector<1x4x8x3xf32>
    %250 = vector.shape_cast %249 : vector<1x4x8x3xf32> to vector<4x8x3xf32>
    %251 = vector.shape_cast %250 : vector<4x8x3xf32> to vector<32x3xf32>
    %c13_308 = arith.constant 13 : index
    %c1_309 = arith.constant 1 : index
    %c2_310 = arith.constant 2 : index
    %c0_311 = arith.constant 0 : index
    %252 = vector.load %arg1[%c13_308, %c1_309, %c2_310, %c0_311] : memref<16x6x12x3xf32, #tpu.memory_space<vmem>>, vector<1x4x8x3xf32>
    %253 = vector.shape_cast %252 : vector<1x4x8x3xf32> to vector<4x8x3xf32>
    %254 = vector.shape_cast %253 : vector<4x8x3xf32> to vector<32x3xf32>
    %c14_312 = arith.constant 14 : index
    %c1_313 = arith.constant 1 : index
    %c2_314 = arith.constant 2 : index
    %c0_315 = arith.constant 0 : index
    %255 = vector.load %arg1[%c14_312, %c1_313, %c2_314, %c0_315] : memref<16x6x12x3xf32, #tpu.memory_space<vmem>>, vector<1x4x8x3xf32>
    %256 = vector.shape_cast %255 : vector<1x4x8x3xf32> to vector<4x8x3xf32>
    %257 = vector.shape_cast %256 : vector<4x8x3xf32> to vector<32x3xf32>
    %c15_316 = arith.constant 15 : index
    %c1_317 = arith.constant 1 : index
    %c2_318 = arith.constant 2 : index
    %c0_319 = arith.constant 0 : index
    %258 = vector.load %arg1[%c15_316, %c1_317, %c2_318, %c0_319] : memref<16x6x12x3xf32, #tpu.memory_space<vmem>>, vector<1x4x8x3xf32>
    %259 = vector.shape_cast %258 : vector<1x4x8x3xf32> to vector<4x8x3xf32>
    %260 = vector.shape_cast %259 : vector<4x8x3xf32> to vector<32x3xf32>
    %261 = tpu.concatenate %215, %218, %221, %224, %227, %230, %233, %236, %239, %242, %245, %248, %251, %254, %257, %260 in 0 : vector<32x3xf32>, vector<32x3xf32>, vector<32x3xf32>, vector<32x3xf32>, vector<32x3xf32>, vector<32x3xf32>, vector<32x3xf32>, vector<32x3xf32>, vector<32x3xf32>, vector<32x3xf32>, vector<32x3xf32>, vector<32x3xf32>, vector<32x3xf32>, vector<32x3xf32>, vector<32x3xf32>, vector<32x3xf32> -> vector<512x3xf32>
    %c4_320 = arith.constant 4 : index
    %c0_321 = arith.constant 0 : index
    %c0_322 = arith.constant 0 : index
    %262 = vector.load %arg2[%c4_320, %c0_321, %c0_322] : memref<9x3x4xf32, #tpu.memory_space<vmem>>, vector<1x3x4xf32>
    %263 = vector.shape_cast %262 : vector<1x3x4xf32> to vector<3x4xf32>
    %cst_323 = arith.constant dense<0.000000e+00> : vector<512x4xf32>
    %264 = tpu.matmul %261, %263, %cst_323 {dimension_numbers = #tpu.dot_dimension_numbers<[1], [0], [0], [1], [0, 0, 1, 1], [], []>} : vector<512x3xf32>, vector<3x4xf32>, vector<512x4xf32> -> vector<512x4xf32>
    %265 = arith.addf %212, %264 : vector<512x4xf32>
    %c1_324 = arith.constant 1 : index
    %c1_325 = arith.constant 1 : index
    %c2_326 = arith.constant 2 : index
    %c0_327 = arith.constant 0 : index
    %266 = vector.load %arg1[%c1_324, %c1_325, %c2_326, %c0_327] : memref<16x6x12x3xf32, #tpu.memory_space<vmem>>, vector<1x4x8x3xf32>
    %267 = vector.shape_cast %266 : vector<1x4x8x3xf32> to vector<4x8x3xf32>
    %268 = vector.shape_cast %267 : vector<4x8x3xf32> to vector<32x3xf32>
    %c2_328 = arith.constant 2 : index
    %c1_329 = arith.constant 1 : index
    %c2_330 = arith.constant 2 : index
    %c0_331 = arith.constant 0 : index
    %269 = vector.load %arg1[%c2_328, %c1_329, %c2_330, %c0_331] : memref<16x6x12x3xf32, #tpu.memory_space<vmem>>, vector<1x4x8x3xf32>
    %270 = vector.shape_cast %269 : vector<1x4x8x3xf32> to vector<4x8x3xf32>
    %271 = vector.shape_cast %270 : vector<4x8x3xf32> to vector<32x3xf32>
    %c3_332 = arith.constant 3 : index
    %c1_333 = arith.constant 1 : index
    %c2_334 = arith.constant 2 : index
    %c0_335 = arith.constant 0 : index
    %272 = vector.load %arg1[%c3_332, %c1_333, %c2_334, %c0_335] : memref<16x6x12x3xf32, #tpu.memory_space<vmem>>, vector<1x4x8x3xf32>
    %273 = vector.shape_cast %272 : vector<1x4x8x3xf32> to vector<4x8x3xf32>
    %274 = vector.shape_cast %273 : vector<4x8x3xf32> to vector<32x3xf32>
    %c0_336 = arith.constant 0 : index
    %c1_337 = arith.constant 1 : index
    %c4_338 = arith.constant 4 : index
    %c0_339 = arith.constant 0 : index
    %275 = vector.load %arg1[%c0_336, %c1_337, %c4_338, %c0_339] : memref<16x6x12x3xf32, #tpu.memory_space<vmem>>, vector<1x4x8x3xf32>
    %276 = vector.shape_cast %275 : vector<1x4x8x3xf32> to vector<4x8x3xf32>
    %277 = vector.shape_cast %276 : vector<4x8x3xf32> to vector<32x3xf32>
    %c5_340 = arith.constant 5 : index
    %c1_341 = arith.constant 1 : index
    %c2_342 = arith.constant 2 : index
    %c0_343 = arith.constant 0 : index
    %278 = vector.load %arg1[%c5_340, %c1_341, %c2_342, %c0_343] : memref<16x6x12x3xf32, #tpu.memory_space<vmem>>, vector<1x4x8x3xf32>
    %279 = vector.shape_cast %278 : vector<1x4x8x3xf32> to vector<4x8x3xf32>
    %280 = vector.shape_cast %279 : vector<4x8x3xf32> to vector<32x3xf32>
    %c6_344 = arith.constant 6 : index
    %c1_345 = arith.constant 1 : index
    %c2_346 = arith.constant 2 : index
    %c0_347 = arith.constant 0 : index
    %281 = vector.load %arg1[%c6_344, %c1_345, %c2_346, %c0_347] : memref<16x6x12x3xf32, #tpu.memory_space<vmem>>, vector<1x4x8x3xf32>
    %282 = vector.shape_cast %281 : vector<1x4x8x3xf32> to vector<4x8x3xf32>
    %283 = vector.shape_cast %282 : vector<4x8x3xf32> to vector<32x3xf32>
    %c7_348 = arith.constant 7 : index
    %c1_349 = arith.constant 1 : index
    %c2_350 = arith.constant 2 : index
    %c0_351 = arith.constant 0 : index
    %284 = vector.load %arg1[%c7_348, %c1_349, %c2_350, %c0_351] : memref<16x6x12x3xf32, #tpu.memory_space<vmem>>, vector<1x4x8x3xf32>
    %285 = vector.shape_cast %284 : vector<1x4x8x3xf32> to vector<4x8x3xf32>
    %286 = vector.shape_cast %285 : vector<4x8x3xf32> to vector<32x3xf32>
    %c4_352 = arith.constant 4 : index
    %c1_353 = arith.constant 1 : index
    %c4_354 = arith.constant 4 : index
    %c0_355 = arith.constant 0 : index
    %287 = vector.load %arg1[%c4_352, %c1_353, %c4_354, %c0_355] : memref<16x6x12x3xf32, #tpu.memory_space<vmem>>, vector<1x4x8x3xf32>
    %288 = vector.shape_cast %287 : vector<1x4x8x3xf32> to vector<4x8x3xf32>
    %289 = vector.shape_cast %288 : vector<4x8x3xf32> to vector<32x3xf32>
    %c9_356 = arith.constant 9 : index
    %c1_357 = arith.constant 1 : index
    %c2_358 = arith.constant 2 : index
    %c0_359 = arith.constant 0 : index
    %290 = vector.load %arg1[%c9_356, %c1_357, %c2_358, %c0_359] : memref<16x6x12x3xf32, #tpu.memory_space<vmem>>, vector<1x4x8x3xf32>
    %291 = vector.shape_cast %290 : vector<1x4x8x3xf32> to vector<4x8x3xf32>
    %292 = vector.shape_cast %291 : vector<4x8x3xf32> to vector<32x3xf32>
    %c10_360 = arith.constant 10 : index
    %c1_361 = arith.constant 1 : index
    %c2_362 = arith.constant 2 : index
    %c0_363 = arith.constant 0 : index
    %293 = vector.load %arg1[%c10_360, %c1_361, %c2_362, %c0_363] : memref<16x6x12x3xf32, #tpu.memory_space<vmem>>, vector<1x4x8x3xf32>
    %294 = vector.shape_cast %293 : vector<1x4x8x3xf32> to vector<4x8x3xf32>
    %295 = vector.shape_cast %294 : vector<4x8x3xf32> to vector<32x3xf32>
    %c11_364 = arith.constant 11 : index
    %c1_365 = arith.constant 1 : index
    %c2_366 = arith.constant 2 : index
    %c0_367 = arith.constant 0 : index
    %296 = vector.load %arg1[%c11_364, %c1_365, %c2_366, %c0_367] : memref<16x6x12x3xf32, #tpu.memory_space<vmem>>, vector<1x4x8x3xf32>
    %297 = vector.shape_cast %296 : vector<1x4x8x3xf32> to vector<4x8x3xf32>
    %298 = vector.shape_cast %297 : vector<4x8x3xf32> to vector<32x3xf32>
    %c8_368 = arith.constant 8 : index
    %c1_369 = arith.constant 1 : index
    %c4_370 = arith.constant 4 : index
    %c0_371 = arith.constant 0 : index
    %299 = vector.load %arg1[%c8_368, %c1_369, %c4_370, %c0_371] : memref<16x6x12x3xf32, #tpu.memory_space<vmem>>, vector<1x4x8x3xf32>
    %300 = vector.shape_cast %299 : vector<1x4x8x3xf32> to vector<4x8x3xf32>
    %301 = vector.shape_cast %300 : vector<4x8x3xf32> to vector<32x3xf32>
    %c13_372 = arith.constant 13 : index
    %c1_373 = arith.constant 1 : index
    %c2_374 = arith.constant 2 : index
    %c0_375 = arith.constant 0 : index
    %302 = vector.load %arg1[%c13_372, %c1_373, %c2_374, %c0_375] : memref<16x6x12x3xf32, #tpu.memory_space<vmem>>, vector<1x4x8x3xf32>
    %303 = vector.shape_cast %302 : vector<1x4x8x3xf32> to vector<4x8x3xf32>
    %304 = vector.shape_cast %303 : vector<4x8x3xf32> to vector<32x3xf32>
    %c14_376 = arith.constant 14 : index
    %c1_377 = arith.constant 1 : index
    %c2_378 = arith.constant 2 : index
    %c0_379 = arith.constant 0 : index
    %305 = vector.load %arg1[%c14_376, %c1_377, %c2_378, %c0_379] : memref<16x6x12x3xf32, #tpu.memory_space<vmem>>, vector<1x4x8x3xf32>
    %306 = vector.shape_cast %305 : vector<1x4x8x3xf32> to vector<4x8x3xf32>
    %307 = vector.shape_cast %306 : vector<4x8x3xf32> to vector<32x3xf32>
    %c15_380 = arith.constant 15 : index
    %c1_381 = arith.constant 1 : index
    %c2_382 = arith.constant 2 : index
    %c0_383 = arith.constant 0 : index
    %308 = vector.load %arg1[%c15_380, %c1_381, %c2_382, %c0_383] : memref<16x6x12x3xf32, #tpu.memory_space<vmem>>, vector<1x4x8x3xf32>
    %309 = vector.shape_cast %308 : vector<1x4x8x3xf32> to vector<4x8x3xf32>
    %310 = vector.shape_cast %309 : vector<4x8x3xf32> to vector<32x3xf32>
    %c12_384 = arith.constant 12 : index
    %c1_385 = arith.constant 1 : index
    %c4_386 = arith.constant 4 : index
    %c0_387 = arith.constant 0 : index
    %311 = vector.load %arg1[%c12_384, %c1_385, %c4_386, %c0_387] : memref<16x6x12x3xf32, #tpu.memory_space<vmem>>, vector<1x4x8x3xf32>
    %312 = vector.shape_cast %311 : vector<1x4x8x3xf32> to vector<4x8x3xf32>
    %313 = vector.shape_cast %312 : vector<4x8x3xf32> to vector<32x3xf32>
    %314 = tpu.concatenate %268, %271, %274, %277, %280, %283, %286, %289, %292, %295, %298, %301, %304, %307, %310, %313 in 0 : vector<32x3xf32>, vector<32x3xf32>, vector<32x3xf32>, vector<32x3xf32>, vector<32x3xf32>, vector<32x3xf32>, vector<32x3xf32>, vector<32x3xf32>, vector<32x3xf32>, vector<32x3xf32>, vector<32x3xf32>, vector<32x3xf32>, vector<32x3xf32>, vector<32x3xf32>, vector<32x3xf32>, vector<32x3xf32> -> vector<512x3xf32>
    %c5_388 = arith.constant 5 : index
    %c0_389 = arith.constant 0 : index
    %c0_390 = arith.constant 0 : index
    %315 = vector.load %arg2[%c5_388, %c0_389, %c0_390] : memref<9x3x4xf32, #tpu.memory_space<vmem>>, vector<1x3x4xf32>
    %316 = vector.shape_cast %315 : vector<1x3x4xf32> to vector<3x4xf32>
    %cst_391 = arith.constant dense<0.000000e+00> : vector<512x4xf32>
    %317 = tpu.matmul %314, %316, %cst_391 {dimension_numbers = #tpu.dot_dimension_numbers<[1], [0], [0], [1], [0, 0, 1, 1], [], []>} : vector<512x3xf32>, vector<3x4xf32>, vector<512x4xf32> -> vector<512x4xf32>
    %318 = arith.addf %265, %317 : vector<512x4xf32>
    %c7_392 = arith.constant 7 : index
    %c1_393 = arith.constant 1 : index
    %c0_394 = arith.constant 0 : index
    %c0_395 = arith.constant 0 : index
    %319 = vector.load %arg1[%c7_392, %c1_393, %c0_394, %c0_395] : memref<16x6x12x3xf32, #tpu.memory_space<vmem>>, vector<1x4x8x3xf32>
    %320 = vector.shape_cast %319 : vector<1x4x8x3xf32> to vector<4x8x3xf32>
    %321 = vector.shape_cast %320 : vector<4x8x3xf32> to vector<32x3xf32>
    %c4_396 = arith.constant 4 : index
    %c1_397 = arith.constant 1 : index
    %c2_398 = arith.constant 2 : index
    %c0_399 = arith.constant 0 : index
    %322 = vector.load %arg1[%c4_396, %c1_397, %c2_398, %c0_399] : memref<16x6x12x3xf32, #tpu.memory_space<vmem>>, vector<1x4x8x3xf32>
    %323 = vector.shape_cast %322 : vector<1x4x8x3xf32> to vector<4x8x3xf32>
    %324 = vector.shape_cast %323 : vector<4x8x3xf32> to vector<32x3xf32>
    %c5_400 = arith.constant 5 : index
    %c1_401 = arith.constant 1 : index
    %c2_402 = arith.constant 2 : index
    %c0_403 = arith.constant 0 : index
    %325 = vector.load %arg1[%c5_400, %c1_401, %c2_402, %c0_403] : memref<16x6x12x3xf32, #tpu.memory_space<vmem>>, vector<1x4x8x3xf32>
    %326 = vector.shape_cast %325 : vector<1x4x8x3xf32> to vector<4x8x3xf32>
    %327 = vector.shape_cast %326 : vector<4x8x3xf32> to vector<32x3xf32>
    %c6_404 = arith.constant 6 : index
    %c1_405 = arith.constant 1 : index
    %c2_406 = arith.constant 2 : index
    %c0_407 = arith.constant 0 : index
    %328 = vector.load %arg1[%c6_404, %c1_405, %c2_406, %c0_407] : memref<16x6x12x3xf32, #tpu.memory_space<vmem>>, vector<1x4x8x3xf32>
    %329 = vector.shape_cast %328 : vector<1x4x8x3xf32> to vector<4x8x3xf32>
    %330 = vector.shape_cast %329 : vector<4x8x3xf32> to vector<32x3xf32>
    %c11_408 = arith.constant 11 : index
    %c1_409 = arith.constant 1 : index
    %c0_410 = arith.constant 0 : index
    %c0_411 = arith.constant 0 : index
    %331 = vector.load %arg1[%c11_408, %c1_409, %c0_410, %c0_411] : memref<16x6x12x3xf32, #tpu.memory_space<vmem>>, vector<1x4x8x3xf32>
    %332 = vector.shape_cast %331 : vector<1x4x8x3xf32> to vector<4x8x3xf32>
    %333 = vector.shape_cast %332 : vector<4x8x3xf32> to vector<32x3xf32>
    %c8_412 = arith.constant 8 : index
    %c1_413 = arith.constant 1 : index
    %c2_414 = arith.constant 2 : index
    %c0_415 = arith.constant 0 : index
    %334 = vector.load %arg1[%c8_412, %c1_413, %c2_414, %c0_415] : memref<16x6x12x3xf32, #tpu.memory_space<vmem>>, vector<1x4x8x3xf32>
    %335 = vector.shape_cast %334 : vector<1x4x8x3xf32> to vector<4x8x3xf32>
    %336 = vector.shape_cast %335 : vector<4x8x3xf32> to vector<32x3xf32>
    %c9_416 = arith.constant 9 : index
    %c1_417 = arith.constant 1 : index
    %c2_418 = arith.constant 2 : index
    %c0_419 = arith.constant 0 : index
    %337 = vector.load %arg1[%c9_416, %c1_417, %c2_418, %c0_419] : memref<16x6x12x3xf32, #tpu.memory_space<vmem>>, vector<1x4x8x3xf32>
    %338 = vector.shape_cast %337 : vector<1x4x8x3xf32> to vector<4x8x3xf32>
    %339 = vector.shape_cast %338 : vector<4x8x3xf32> to vector<32x3xf32>
    %c10_420 = arith.constant 10 : index
    %c1_421 = arith.constant 1 : index
    %c2_422 = arith.constant 2 : index
    %c0_423 = arith.constant 0 : index
    %340 = vector.load %arg1[%c10_420, %c1_421, %c2_422, %c0_423] : memref<16x6x12x3xf32, #tpu.memory_space<vmem>>, vector<1x4x8x3xf32>
    %341 = vector.shape_cast %340 : vector<1x4x8x3xf32> to vector<4x8x3xf32>
    %342 = vector.shape_cast %341 : vector<4x8x3xf32> to vector<32x3xf32>
    %c15_424 = arith.constant 15 : index
    %c1_425 = arith.constant 1 : index
    %c0_426 = arith.constant 0 : index
    %c0_427 = arith.constant 0 : index
    %343 = vector.load %arg1[%c15_424, %c1_425, %c0_426, %c0_427] : memref<16x6x12x3xf32, #tpu.memory_space<vmem>>, vector<1x4x8x3xf32>
    %344 = vector.shape_cast %343 : vector<1x4x8x3xf32> to vector<4x8x3xf32>
    %345 = vector.shape_cast %344 : vector<4x8x3xf32> to vector<32x3xf32>
    %c12_428 = arith.constant 12 : index
    %c1_429 = arith.constant 1 : index
    %c2_430 = arith.constant 2 : index
    %c0_431 = arith.constant 0 : index
    %346 = vector.load %arg1[%c12_428, %c1_429, %c2_430, %c0_431] : memref<16x6x12x3xf32, #tpu.memory_space<vmem>>, vector<1x4x8x3xf32>
    %347 = vector.shape_cast %346 : vector<1x4x8x3xf32> to vector<4x8x3xf32>
    %348 = vector.shape_cast %347 : vector<4x8x3xf32> to vector<32x3xf32>
    %c13_432 = arith.constant 13 : index
    %c1_433 = arith.constant 1 : index
    %c2_434 = arith.constant 2 : index
    %c0_435 = arith.constant 0 : index
    %349 = vector.load %arg1[%c13_432, %c1_433, %c2_434, %c0_435] : memref<16x6x12x3xf32, #tpu.memory_space<vmem>>, vector<1x4x8x3xf32>
    %350 = vector.shape_cast %349 : vector<1x4x8x3xf32> to vector<4x8x3xf32>
    %351 = vector.shape_cast %350 : vector<4x8x3xf32> to vector<32x3xf32>
    %c14_436 = arith.constant 14 : index
    %c1_437 = arith.constant 1 : index
    %c2_438 = arith.constant 2 : index
    %c0_439 = arith.constant 0 : index
    %352 = vector.load %arg1[%c14_436, %c1_437, %c2_438, %c0_439] : memref<16x6x12x3xf32, #tpu.memory_space<vmem>>, vector<1x4x8x3xf32>
    %353 = vector.shape_cast %352 : vector<1x4x8x3xf32> to vector<4x8x3xf32>
    %354 = vector.shape_cast %353 : vector<4x8x3xf32> to vector<32x3xf32>
    %c3_440 = arith.constant 3 : index
    %c2_441 = arith.constant 2 : index
    %c0_442 = arith.constant 0 : index
    %c0_443 = arith.constant 0 : index
    %355 = vector.load %arg1[%c3_440, %c2_441, %c0_442, %c0_443] : memref<16x6x12x3xf32, #tpu.memory_space<vmem>>, vector<1x4x8x3xf32>
    %356 = vector.shape_cast %355 : vector<1x4x8x3xf32> to vector<4x8x3xf32>
    %357 = vector.shape_cast %356 : vector<4x8x3xf32> to vector<32x3xf32>
    %c0_444 = arith.constant 0 : index
    %c2_445 = arith.constant 2 : index
    %c2_446 = arith.constant 2 : index
    %c0_447 = arith.constant 0 : index
    %358 = vector.load %arg1[%c0_444, %c2_445, %c2_446, %c0_447] : memref<16x6x12x3xf32, #tpu.memory_space<vmem>>, vector<1x4x8x3xf32>
    %359 = vector.shape_cast %358 : vector<1x4x8x3xf32> to vector<4x8x3xf32>
    %360 = vector.shape_cast %359 : vector<4x8x3xf32> to vector<32x3xf32>
    %c1_448 = arith.constant 1 : index
    %c2_449 = arith.constant 2 : index
    %c2_450 = arith.constant 2 : index
    %c0_451 = arith.constant 0 : index
    %361 = vector.load %arg1[%c1_448, %c2_449, %c2_450, %c0_451] : memref<16x6x12x3xf32, #tpu.memory_space<vmem>>, vector<1x4x8x3xf32>
    %362 = vector.shape_cast %361 : vector<1x4x8x3xf32> to vector<4x8x3xf32>
    %363 = vector.shape_cast %362 : vector<4x8x3xf32> to vector<32x3xf32>
    %c2_452 = arith.constant 2 : index
    %c2_453 = arith.constant 2 : index
    %c2_454 = arith.constant 2 : index
    %c0_455 = arith.constant 0 : index
    %364 = vector.load %arg1[%c2_452, %c2_453, %c2_454, %c0_455] : memref<16x6x12x3xf32, #tpu.memory_space<vmem>>, vector<1x4x8x3xf32>
    %365 = vector.shape_cast %364 : vector<1x4x8x3xf32> to vector<4x8x3xf32>
    %366 = vector.shape_cast %365 : vector<4x8x3xf32> to vector<32x3xf32>
    %367 = tpu.concatenate %321, %324, %327, %330, %333, %336, %339, %342, %345, %348, %351, %354, %357, %360, %363, %366 in 0 : vector<32x3xf32>, vector<32x3xf32>, vector<32x3xf32>, vector<32x3xf32>, vector<32x3xf32>, vector<32x3xf32>, vector<32x3xf32>, vector<32x3xf32>, vector<32x3xf32>, vector<32x3xf32>, vector<32x3xf32>, vector<32x3xf32>, vector<32x3xf32>, vector<32x3xf32>, vector<32x3xf32>, vector<32x3xf32> -> vector<512x3xf32>
    %c6_456 = arith.constant 6 : index
    %c0_457 = arith.constant 0 : index
    %c0_458 = arith.constant 0 : index
    %368 = vector.load %arg2[%c6_456, %c0_457, %c0_458] : memref<9x3x4xf32, #tpu.memory_space<vmem>>, vector<1x3x4xf32>
    %369 = vector.shape_cast %368 : vector<1x3x4xf32> to vector<3x4xf32>
    %cst_459 = arith.constant dense<0.000000e+00> : vector<512x4xf32>
    %370 = tpu.matmul %367, %369, %cst_459 {dimension_numbers = #tpu.dot_dimension_numbers<[1], [0], [0], [1], [0, 0, 1, 1], [], []>} : vector<512x3xf32>, vector<3x4xf32>, vector<512x4xf32> -> vector<512x4xf32>
    %371 = arith.addf %318, %370 : vector<512x4xf32>
    %c4_460 = arith.constant 4 : index
    %c1_461 = arith.constant 1 : index
    %c2_462 = arith.constant 2 : index
    %c0_463 = arith.constant 0 : index
    %372 = vector.load %arg1[%c4_460, %c1_461, %c2_462, %c0_463] : memref<16x6x12x3xf32, #tpu.memory_space<vmem>>, vector<1x4x8x3xf32>
    %373 = vector.shape_cast %372 : vector<1x4x8x3xf32> to vector<4x8x3xf32>
    %374 = vector.shape_cast %373 : vector<4x8x3xf32> to vector<32x3xf32>
    %c5_464 = arith.constant 5 : index
    %c1_465 = arith.constant 1 : index
    %c2_466 = arith.constant 2 : index
    %c0_467 = arith.constant 0 : index
    %375 = vector.load %arg1[%c5_464, %c1_465, %c2_466, %c0_467] : memref<16x6x12x3xf32, #tpu.memory_space<vmem>>, vector<1x4x8x3xf32>
    %376 = vector.shape_cast %375 : vector<1x4x8x3xf32> to vector<4x8x3xf32>
    %377 = vector.shape_cast %376 : vector<4x8x3xf32> to vector<32x3xf32>
    %c6_468 = arith.constant 6 : index
    %c1_469 = arith.constant 1 : index
    %c2_470 = arith.constant 2 : index
    %c0_471 = arith.constant 0 : index
    %378 = vector.load %arg1[%c6_468, %c1_469, %c2_470, %c0_471] : memref<16x6x12x3xf32, #tpu.memory_space<vmem>>, vector<1x4x8x3xf32>
    %379 = vector.shape_cast %378 : vector<1x4x8x3xf32> to vector<4x8x3xf32>
    %380 = vector.shape_cast %379 : vector<4x8x3xf32> to vector<32x3xf32>
    %c7_472 = arith.constant 7 : index
    %c1_473 = arith.constant 1 : index
    %c2_474 = arith.constant 2 : index
    %c0_475 = arith.constant 0 : index
    %381 = vector.load %arg1[%c7_472, %c1_473, %c2_474, %c0_475] : memref<16x6x12x3xf32, #tpu.memory_space<vmem>>, vector<1x4x8x3xf32>
    %382 = vector.shape_cast %381 : vector<1x4x8x3xf32> to vector<4x8x3xf32>
    %383 = vector.shape_cast %382 : vector<4x8x3xf32> to vector<32x3xf32>
    %c8_476 = arith.constant 8 : index
    %c1_477 = arith.constant 1 : index
    %c2_478 = arith.constant 2 : index
    %c0_479 = arith.constant 0 : index
    %384 = vector.load %arg1[%c8_476, %c1_477, %c2_478, %c0_479] : memref<16x6x12x3xf32, #tpu.memory_space<vmem>>, vector<1x4x8x3xf32>
    %385 = vector.shape_cast %384 : vector<1x4x8x3xf32> to vector<4x8x3xf32>
    %386 = vector.shape_cast %385 : vector<4x8x3xf32> to vector<32x3xf32>
    %c9_480 = arith.constant 9 : index
    %c1_481 = arith.constant 1 : index
    %c2_482 = arith.constant 2 : index
    %c0_483 = arith.constant 0 : index
    %387 = vector.load %arg1[%c9_480, %c1_481, %c2_482, %c0_483] : memref<16x6x12x3xf32, #tpu.memory_space<vmem>>, vector<1x4x8x3xf32>
    %388 = vector.shape_cast %387 : vector<1x4x8x3xf32> to vector<4x8x3xf32>
    %389 = vector.shape_cast %388 : vector<4x8x3xf32> to vector<32x3xf32>
    %c10_484 = arith.constant 10 : index
    %c1_485 = arith.constant 1 : index
    %c2_486 = arith.constant 2 : index
    %c0_487 = arith.constant 0 : index
    %390 = vector.load %arg1[%c10_484, %c1_485, %c2_486, %c0_487] : memref<16x6x12x3xf32, #tpu.memory_space<vmem>>, vector<1x4x8x3xf32>
    %391 = vector.shape_cast %390 : vector<1x4x8x3xf32> to vector<4x8x3xf32>
    %392 = vector.shape_cast %391 : vector<4x8x3xf32> to vector<32x3xf32>
    %c11_488 = arith.constant 11 : index
    %c1_489 = arith.constant 1 : index
    %c2_490 = arith.constant 2 : index
    %c0_491 = arith.constant 0 : index
    %393 = vector.load %arg1[%c11_488, %c1_489, %c2_490, %c0_491] : memref<16x6x12x3xf32, #tpu.memory_space<vmem>>, vector<1x4x8x3xf32>
    %394 = vector.shape_cast %393 : vector<1x4x8x3xf32> to vector<4x8x3xf32>
    %395 = vector.shape_cast %394 : vector<4x8x3xf32> to vector<32x3xf32>
    %c12_492 = arith.constant 12 : index
    %c1_493 = arith.constant 1 : index
    %c2_494 = arith.constant 2 : index
    %c0_495 = arith.constant 0 : index
    %396 = vector.load %arg1[%c12_492, %c1_493, %c2_494, %c0_495] : memref<16x6x12x3xf32, #tpu.memory_space<vmem>>, vector<1x4x8x3xf32>
    %397 = vector.shape_cast %396 : vector<1x4x8x3xf32> to vector<4x8x3xf32>
    %398 = vector.shape_cast %397 : vector<4x8x3xf32> to vector<32x3xf32>
    %c13_496 = arith.constant 13 : index
    %c1_497 = arith.constant 1 : index
    %c2_498 = arith.constant 2 : index
    %c0_499 = arith.constant 0 : index
    %399 = vector.load %arg1[%c13_496, %c1_497, %c2_498, %c0_499] : memref<16x6x12x3xf32, #tpu.memory_space<vmem>>, vector<1x4x8x3xf32>
    %400 = vector.shape_cast %399 : vector<1x4x8x3xf32> to vector<4x8x3xf32>
    %401 = vector.shape_cast %400 : vector<4x8x3xf32> to vector<32x3xf32>
    %c14_500 = arith.constant 14 : index
    %c1_501 = arith.constant 1 : index
    %c2_502 = arith.constant 2 : index
    %c0_503 = arith.constant 0 : index
    %402 = vector.load %arg1[%c14_500, %c1_501, %c2_502, %c0_503] : memref<16x6x12x3xf32, #tpu.memory_space<vmem>>, vector<1x4x8x3xf32>
    %403 = vector.shape_cast %402 : vector<1x4x8x3xf32> to vector<4x8x3xf32>
    %404 = vector.shape_cast %403 : vector<4x8x3xf32> to vector<32x3xf32>
    %c15_504 = arith.constant 15 : index
    %c1_505 = arith.constant 1 : index
    %c2_506 = arith.constant 2 : index
    %c0_507 = arith.constant 0 : index
    %405 = vector.load %arg1[%c15_504, %c1_505, %c2_506, %c0_507] : memref<16x6x12x3xf32, #tpu.memory_space<vmem>>, vector<1x4x8x3xf32>
    %406 = vector.shape_cast %405 : vector<1x4x8x3xf32> to vector<4x8x3xf32>
    %407 = vector.shape_cast %406 : vector<4x8x3xf32> to vector<32x3xf32>
    %c0_508 = arith.constant 0 : index
    %c2_509 = arith.constant 2 : index
    %c2_510 = arith.constant 2 : index
    %c0_511 = arith.constant 0 : index
    %408 = vector.load %arg1[%c0_508, %c2_509, %c2_510, %c0_511] : memref<16x6x12x3xf32, #tpu.memory_space<vmem>>, vector<1x4x8x3xf32>
    %409 = vector.shape_cast %408 : vector<1x4x8x3xf32> to vector<4x8x3xf32>
    %410 = vector.shape_cast %409 : vector<4x8x3xf32> to vector<32x3xf32>
    %c1_512 = arith.constant 1 : index
    %c2_513 = arith.constant 2 : index
    %c2_514 = arith.constant 2 : index
    %c0_515 = arith.constant 0 : index
    %411 = vector.load %arg1[%c1_512, %c2_513, %c2_514, %c0_515] : memref<16x6x12x3xf32, #tpu.memory_space<vmem>>, vector<1x4x8x3xf32>
    %412 = vector.shape_cast %411 : vector<1x4x8x3xf32> to vector<4x8x3xf32>
    %413 = vector.shape_cast %412 : vector<4x8x3xf32> to vector<32x3xf32>
    %c2_516 = arith.constant 2 : index
    %c2_517 = arith.constant 2 : index
    %c2_518 = arith.constant 2 : index
    %c0_519 = arith.constant 0 : index
    %414 = vector.load %arg1[%c2_516, %c2_517, %c2_518, %c0_519] : memref<16x6x12x3xf32, #tpu.memory_space<vmem>>, vector<1x4x8x3xf32>
    %415 = vector.shape_cast %414 : vector<1x4x8x3xf32> to vector<4x8x3xf32>
    %416 = vector.shape_cast %415 : vector<4x8x3xf32> to vector<32x3xf32>
    %c3_520 = arith.constant 3 : index
    %c2_521 = arith.constant 2 : index
    %c2_522 = arith.constant 2 : index
    %c0_523 = arith.constant 0 : index
    %417 = vector.load %arg1[%c3_520, %c2_521, %c2_522, %c0_523] : memref<16x6x12x3xf32, #tpu.memory_space<vmem>>, vector<1x4x8x3xf32>
    %418 = vector.shape_cast %417 : vector<1x4x8x3xf32> to vector<4x8x3xf32>
    %419 = vector.shape_cast %418 : vector<4x8x3xf32> to vector<32x3xf32>
    %420 = tpu.concatenate %374, %377, %380, %383, %386, %389, %392, %395, %398, %401, %404, %407, %410, %413, %416, %419 in 0 : vector<32x3xf32>, vector<32x3xf32>, vector<32x3xf32>, vector<32x3xf32>, vector<32x3xf32>, vector<32x3xf32>, vector<32x3xf32>, vector<32x3xf32>, vector<32x3xf32>, vector<32x3xf32>, vector<32x3xf32>, vector<32x3xf32>, vector<32x3xf32>, vector<32x3xf32>, vector<32x3xf32>, vector<32x3xf32> -> vector<512x3xf32>
    %c7_524 = arith.constant 7 : index
    %c0_525 = arith.constant 0 : index
    %c0_526 = arith.constant 0 : index
    %421 = vector.load %arg2[%c7_524, %c0_525, %c0_526] : memref<9x3x4xf32, #tpu.memory_space<vmem>>, vector<1x3x4xf32>
    %422 = vector.shape_cast %421 : vector<1x3x4xf32> to vector<3x4xf32>
    %cst_527 = arith.constant dense<0.000000e+00> : vector<512x4xf32>
    %423 = tpu.matmul %420, %422, %cst_527 {dimension_numbers = #tpu.dot_dimension_numbers<[1], [0], [0], [1], [0, 0, 1, 1], [], []>} : vector<512x3xf32>, vector<3x4xf32>, vector<512x4xf32> -> vector<512x4xf32>
    %424 = arith.addf %371, %423 : vector<512x4xf32>
    %c5_528 = arith.constant 5 : index
    %c1_529 = arith.constant 1 : index
    %c2_530 = arith.constant 2 : index
    %c0_531 = arith.constant 0 : index
    %425 = vector.load %arg1[%c5_528, %c1_529, %c2_530, %c0_531] : memref<16x6x12x3xf32, #tpu.memory_space<vmem>>, vector<1x4x8x3xf32>
    %426 = vector.shape_cast %425 : vector<1x4x8x3xf32> to vector<4x8x3xf32>
    %427 = vector.shape_cast %426 : vector<4x8x3xf32> to vector<32x3xf32>
    %c6_532 = arith.constant 6 : index
    %c1_533 = arith.constant 1 : index
    %c2_534 = arith.constant 2 : index
    %c0_535 = arith.constant 0 : index
    %428 = vector.load %arg1[%c6_532, %c1_533, %c2_534, %c0_535] : memref<16x6x12x3xf32, #tpu.memory_space<vmem>>, vector<1x4x8x3xf32>
    %429 = vector.shape_cast %428 : vector<1x4x8x3xf32> to vector<4x8x3xf32>
    %430 = vector.shape_cast %429 : vector<4x8x3xf32> to vector<32x3xf32>
    %c7_536 = arith.constant 7 : index
    %c1_537 = arith.constant 1 : index
    %c2_538 = arith.constant 2 : index
    %c0_539 = arith.constant 0 : index
    %431 = vector.load %arg1[%c7_536, %c1_537, %c2_538, %c0_539] : memref<16x6x12x3xf32, #tpu.memory_space<vmem>>, vector<1x4x8x3xf32>
    %432 = vector.shape_cast %431 : vector<1x4x8x3xf32> to vector<4x8x3xf32>
    %433 = vector.shape_cast %432 : vector<4x8x3xf32> to vector<32x3xf32>
    %c4_540 = arith.constant 4 : index
    %c1_541 = arith.constant 1 : index
    %c4_542 = arith.constant 4 : index
    %c0_543 = arith.constant 0 : index
    %434 = vector.load %arg1[%c4_540, %c1_541, %c4_542, %c0_543] : memref<16x6x12x3xf32, #tpu.memory_space<vmem>>, vector<1x4x8x3xf32>
    %435 = vector.shape_cast %434 : vector<1x4x8x3xf32> to vector<4x8x3xf32>
    %436 = vector.shape_cast %435 : vector<4x8x3xf32> to vector<32x3xf32>
    %c9_544 = arith.constant 9 : index
    %c1_545 = arith.constant 1 : index
    %c2_546 = arith.constant 2 : index
    %c0_547 = arith.constant 0 : index
    %437 = vector.load %arg1[%c9_544, %c1_545, %c2_546, %c0_547] : memref<16x6x12x3xf32, #tpu.memory_space<vmem>>, vector<1x4x8x3xf32>
    %438 = vector.shape_cast %437 : vector<1x4x8x3xf32> to vector<4x8x3xf32>
    %439 = vector.shape_cast %438 : vector<4x8x3xf32> to vector<32x3xf32>
    %c10_548 = arith.constant 10 : index
    %c1_549 = arith.constant 1 : index
    %c2_550 = arith.constant 2 : index
    %c0_551 = arith.constant 0 : index
    %440 = vector.load %arg1[%c10_548, %c1_549, %c2_550, %c0_551] : memref<16x6x12x3xf32, #tpu.memory_space<vmem>>, vector<1x4x8x3xf32>
    %441 = vector.shape_cast %440 : vector<1x4x8x3xf32> to vector<4x8x3xf32>
    %442 = vector.shape_cast %441 : vector<4x8x3xf32> to vector<32x3xf32>
    %c11_552 = arith.constant 11 : index
    %c1_553 = arith.constant 1 : index
    %c2_554 = arith.constant 2 : index
    %c0_555 = arith.constant 0 : index
    %443 = vector.load %arg1[%c11_552, %c1_553, %c2_554, %c0_555] : memref<16x6x12x3xf32, #tpu.memory_space<vmem>>, vector<1x4x8x3xf32>
    %444 = vector.shape_cast %443 : vector<1x4x8x3xf32> to vector<4x8x3xf32>
    %445 = vector.shape_cast %444 : vector<4x8x3xf32> to vector<32x3xf32>
    %c8_556 = arith.constant 8 : index
    %c1_557 = arith.constant 1 : index
    %c4_558 = arith.constant 4 : index
    %c0_559 = arith.constant 0 : index
    %446 = vector.load %arg1[%c8_556, %c1_557, %c4_558, %c0_559] : memref<16x6x12x3xf32, #tpu.memory_space<vmem>>, vector<1x4x8x3xf32>
    %447 = vector.shape_cast %446 : vector<1x4x8x3xf32> to vector<4x8x3xf32>
    %448 = vector.shape_cast %447 : vector<4x8x3xf32> to vector<32x3xf32>
    %c13_560 = arith.constant 13 : index
    %c1_561 = arith.constant 1 : index
    %c2_562 = arith.constant 2 : index
    %c0_563 = arith.constant 0 : index
    %449 = vector.load %arg1[%c13_560, %c1_561, %c2_562, %c0_563] : memref<16x6x12x3xf32, #tpu.memory_space<vmem>>, vector<1x4x8x3xf32>
    %450 = vector.shape_cast %449 : vector<1x4x8x3xf32> to vector<4x8x3xf32>
    %451 = vector.shape_cast %450 : vector<4x8x3xf32> to vector<32x3xf32>
    %c14_564 = arith.constant 14 : index
    %c1_565 = arith.constant 1 : index
    %c2_566 = arith.constant 2 : index
    %c0_567 = arith.constant 0 : index
    %452 = vector.load %arg1[%c14_564, %c1_565, %c2_566, %c0_567] : memref<16x6x12x3xf32, #tpu.memory_space<vmem>>, vector<1x4x8x3xf32>
    %453 = vector.shape_cast %452 : vector<1x4x8x3xf32> to vector<4x8x3xf32>
    %454 = vector.shape_cast %453 : vector<4x8x3xf32> to vector<32x3xf32>
    %c15_568 = arith.constant 15 : index
    %c1_569 = arith.constant 1 : index
    %c2_570 = arith.constant 2 : index
    %c0_571 = arith.constant 0 : index
    %455 = vector.load %arg1[%c15_568, %c1_569, %c2_570, %c0_571] : memref<16x6x12x3xf32, #tpu.memory_space<vmem>>, vector<1x4x8x3xf32>
    %456 = vector.shape_cast %455 : vector<1x4x8x3xf32> to vector<4x8x3xf32>
    %457 = vector.shape_cast %456 : vector<4x8x3xf32> to vector<32x3xf32>
    %c12_572 = arith.constant 12 : index
    %c1_573 = arith.constant 1 : index
    %c4_574 = arith.constant 4 : index
    %c0_575 = arith.constant 0 : index
    %458 = vector.load %arg1[%c12_572, %c1_573, %c4_574, %c0_575] : memref<16x6x12x3xf32, #tpu.memory_space<vmem>>, vector<1x4x8x3xf32>
    %459 = vector.shape_cast %458 : vector<1x4x8x3xf32> to vector<4x8x3xf32>
    %460 = vector.shape_cast %459 : vector<4x8x3xf32> to vector<32x3xf32>
    %c1_576 = arith.constant 1 : index
    %c2_577 = arith.constant 2 : index
    %c2_578 = arith.constant 2 : index
    %c0_579 = arith.constant 0 : index
    %461 = vector.load %arg1[%c1_576, %c2_577, %c2_578, %c0_579] : memref<16x6x12x3xf32, #tpu.memory_space<vmem>>, vector<1x4x8x3xf32>
    %462 = vector.shape_cast %461 : vector<1x4x8x3xf32> to vector<4x8x3xf32>
    %463 = vector.shape_cast %462 : vector<4x8x3xf32> to vector<32x3xf32>
    %c2_580 = arith.constant 2 : index
    %c2_581 = arith.constant 2 : index
    %c2_582 = arith.constant 2 : index
    %c0_583 = arith.constant 0 : index
    %464 = vector.load %arg1[%c2_580, %c2_581, %c2_582, %c0_583] : memref<16x6x12x3xf32, #tpu.memory_space<vmem>>, vector<1x4x8x3xf32>
    %465 = vector.shape_cast %464 : vector<1x4x8x3xf32> to vector<4x8x3xf32>
    %466 = vector.shape_cast %465 : vector<4x8x3xf32> to vector<32x3xf32>
    %c3_584 = arith.constant 3 : index
    %c2_585 = arith.constant 2 : index
    %c2_586 = arith.constant 2 : index
    %c0_587 = arith.constant 0 : index
    %467 = vector.load %arg1[%c3_584, %c2_585, %c2_586, %c0_587] : memref<16x6x12x3xf32, #tpu.memory_space<vmem>>, vector<1x4x8x3xf32>
    %468 = vector.shape_cast %467 : vector<1x4x8x3xf32> to vector<4x8x3xf32>
    %469 = vector.shape_cast %468 : vector<4x8x3xf32> to vector<32x3xf32>
    %c0_588 = arith.constant 0 : index
    %c2_589 = arith.constant 2 : index
    %c4_590 = arith.constant 4 : index
    %c0_591 = arith.constant 0 : index
    %470 = vector.load %arg1[%c0_588, %c2_589, %c4_590, %c0_591] : memref<16x6x12x3xf32, #tpu.memory_space<vmem>>, vector<1x4x8x3xf32>
    %471 = vector.shape_cast %470 : vector<1x4x8x3xf32> to vector<4x8x3xf32>
    %472 = vector.shape_cast %471 : vector<4x8x3xf32> to vector<32x3xf32>
    %473 = tpu.concatenate %427, %430, %433, %436, %439, %442, %445, %448, %451, %454, %457, %460, %463, %466, %469, %472 in 0 : vector<32x3xf32>, vector<32x3xf32>, vector<32x3xf32>, vector<32x3xf32>, vector<32x3xf32>, vector<32x3xf32>, vector<32x3xf32>, vector<32x3xf32>, vector<32x3xf32>, vector<32x3xf32>, vector<32x3xf32>, vector<32x3xf32>, vector<32x3xf32>, vector<32x3xf32>, vector<32x3xf32>, vector<32x3xf32> -> vector<512x3xf32>
    %c8_592 = arith.constant 8 : index
    %c0_593 = arith.constant 0 : index
    %c0_594 = arith.constant 0 : index
    %474 = vector.load %arg2[%c8_592, %c0_593, %c0_594] : memref<9x3x4xf32, #tpu.memory_space<vmem>>, vector<1x3x4xf32>
    %475 = vector.shape_cast %474 : vector<1x3x4xf32> to vector<3x4xf32>
    %cst_595 = arith.constant dense<0.000000e+00> : vector<512x4xf32>
    %476 = tpu.matmul %473, %475, %cst_595 {dimension_numbers = #tpu.dot_dimension_numbers<[1], [0], [0], [1], [0, 0, 1, 1], [], []>} : vector<512x3xf32>, vector<3x4xf32>, vector<512x4xf32> -> vector<512x4xf32>
    %477 = arith.addf %424, %476 : vector<512x4xf32>
    %c0_596 = arith.constant 0 : index
    %c0_597 = arith.constant 0 : index
    %478 = vector.load %arg3[%c0_596, %c0_597] : memref<1x4xf32, #tpu.memory_space<vmem>>, vector<1x4xf32>
    %479 = vector.broadcast %478 : vector<1x4xf32> to vector<512x4xf32>
    %480 = arith.mulf %477, %479 : vector<512x4xf32>
    %c0_598 = arith.constant 0 : index
    %c0_599 = arith.constant 0 : index
    %481 = vector.load %arg4[%c0_598, %c0_599] : memref<1x4xf32, #tpu.memory_space<vmem>>, vector<1x4xf32>
    %482 = vector.broadcast %481 : vector<1x4xf32> to vector<512x4xf32>
    %483 = arith.addf %480, %482 : vector<512x4xf32>
    %cst_600 = arith.constant 0.000000e+00 : f32
    %484 = vector.broadcast %cst_600 : f32 to vector<512x4xf32>
    %485 = arith.maximumf %483, %484 : vector<512x4xf32>
    %cst_601 = arith.constant 0.000000e+00 : f32
    %486 = vector.broadcast %cst_601 : f32 to vector<4x6x12x4xf32>
    %c0_602 = arith.constant 0 : index
    %c0_603 = arith.constant 0 : index
    %c0_604 = arith.constant 0 : index
    %c0_605 = arith.constant 0 : index
    %487 = vector.load %arg17[%c0_602, %c0_603, %c0_604, %c0_605] : memref<4x6x12x4xf32, #tpu.memory_space<vmem>>, vector<4x6x12x4xf32>
    tpu.vector_store %arg17[%c0_602, %c0_603, %c0_604, %c0_605], %486 {strides = array<i32>} : memref<4x6x12x4xf32, #tpu.memory_space<vmem>>, vector<4x6x12x4xf32>,
    %488 = vector.extract_strided_slice %485 {offsets = [0, 0], sizes = [32, 4], strides = [1, 1]} : vector<512x4xf32> to vector<32x4xf32>
    %489 = vector.extract_strided_slice %485 {offsets = [32, 0], sizes = [32, 4], strides = [1, 1]} : vector<512x4xf32> to vector<32x4xf32>
    %490 = arith.maximumf %488, %489 : vector<32x4xf32>
    %491 = vector.extract_strided_slice %485 {offsets = [128, 0], sizes = [32, 4], strides = [1, 1]} : vector<512x4xf32> to vector<32x4xf32>
    %492 = arith.maximumf %490, %491 : vector<32x4xf32>
    %493 = vector.extract_strided_slice %485 {offsets = [160, 0], sizes = [32, 4], strides = [1, 1]} : vector<512x4xf32> to vector<32x4xf32>
    %494 = arith.maximumf %492, %493 : vector<32x4xf32>
    %495 = vector.extract_strided_slice %494 {offsets = [0, 0], sizes = [8, 4], strides = [1, 1]} : vector<32x4xf32> to vector<8x4xf32>
    %c0_606 = arith.constant 0 : index
    %c1_607 = arith.constant 1 : index
    %c2_608 = arith.constant 2 : index
    %c0_609 = arith.constant 0 : index
    %496 = vector.load %arg17[%c0_606, %c1_607, %c2_608, %c0_609] : memref<4x6x12x4xf32, #tpu.memory_space<vmem>>, vector<1x1x8x4xf32>
    %497 = vector.shape_cast %496 : vector<1x1x8x4xf32> to vector<8x4xf32>
    %498 = vector.shape_cast %495 : vector<8x4xf32> to vector<1x1x8x4xf32>
    tpu.vector_store %arg17[%c0_606, %c1_607, %c2_608, %c0_609], %498 {strides = array<i32>} : memref<4x6x12x4xf32, #tpu.memory_space<vmem>>, vector<1x1x8x4xf32>,
    %499 = vector.extract_strided_slice %494 {offsets = [8, 0], sizes = [8, 4], strides = [1, 1]} : vector<32x4xf32> to vector<8x4xf32>
    %c0_610 = arith.constant 0 : index
    %c2_611 = arith.constant 2 : index
    %c2_612 = arith.constant 2 : index
    %c0_613 = arith.constant 0 : index
    %500 = vector.load %arg17[%c0_610, %c2_611, %c2_612, %c0_613] : memref<4x6x12x4xf32, #tpu.memory_space<vmem>>, vector<1x1x8x4xf32>
    %501 = vector.shape_cast %500 : vector<1x1x8x4xf32> to vector<8x4xf32>
    %502 = vector.shape_cast %499 : vector<8x4xf32> to vector<1x1x8x4xf32>
    tpu.vector_store %arg17[%c0_610, %c2_611, %c2_612, %c0_613], %502 {strides = array<i32>} : memref<4x6x12x4xf32, #tpu.memory_space<vmem>>, vector<1x1x8x4xf32>,
    %503 = vector.extract_strided_slice %494 {offsets = [16, 0], sizes = [8, 4], strides = [1, 1]} : vector<32x4xf32> to vector<8x4xf32>
    %c0_614 = arith.constant 0 : index
    %c3_615 = arith.constant 3 : index
    %c2_616 = arith.constant 2 : index
    %c0_617 = arith.constant 0 : index
    %504 = vector.load %arg17[%c0_614, %c3_615, %c2_616, %c0_617] : memref<4x6x12x4xf32, #tpu.memory_space<vmem>>, vector<1x1x8x4xf32>
    %505 = vector.shape_cast %504 : vector<1x1x8x4xf32> to vector<8x4xf32>
    %506 = vector.shape_cast %503 : vector<8x4xf32> to vector<1x1x8x4xf32>
    tpu.vector_store %arg17[%c0_614, %c3_615, %c2_616, %c0_617], %506 {strides = array<i32>} : memref<4x6x12x4xf32, #tpu.memory_space<vmem>>, vector<1x1x8x4xf32>,
    %507 = vector.extract_strided_slice %494 {offsets = [24, 0], sizes = [8, 4], strides = [1, 1]} : vector<32x4xf32> to vector<8x4xf32>
    %c0_618 = arith.constant 0 : index
    %c4_619 = arith.constant 4 : index
    %c2_620 = arith.constant 2 : index
    %c0_621 = arith.constant 0 : index
    %508 = vector.load %arg17[%c0_618, %c4_619, %c2_620, %c0_621] : memref<4x6x12x4xf32, #tpu.memory_space<vmem>>, vector<1x1x8x4xf32>
    %509 = vector.shape_cast %508 : vector<1x1x8x4xf32> to vector<8x4xf32>
    %510 = vector.shape_cast %507 : vector<8x4xf32> to vector<1x1x8x4xf32>
    tpu.vector_store %arg17[%c0_618, %c4_619, %c2_620, %c0_621], %510 {strides = array<i32>} : memref<4x6x12x4xf32, #tpu.memory_space<vmem>>, vector<1x1x8x4xf32>,
    %511 = vector.extract_strided_slice %485 {offsets = [64, 0], sizes = [32, 4], strides = [1, 1]} : vector<512x4xf32> to vector<32x4xf32>
    %512 = vector.extract_strided_slice %485 {offsets = [96, 0], sizes = [32, 4], strides = [1, 1]} : vector<512x4xf32> to vector<32x4xf32>
    %513 = arith.maximumf %511, %512 : vector<32x4xf32>
    %514 = vector.extract_strided_slice %485 {offsets = [192, 0], sizes = [32, 4], strides = [1, 1]} : vector<512x4xf32> to vector<32x4xf32>
    %515 = arith.maximumf %513, %514 : vector<32x4xf32>
    %516 = vector.extract_strided_slice %485 {offsets = [224, 0], sizes = [32, 4], strides = [1, 1]} : vector<512x4xf32> to vector<32x4xf32>
    %517 = arith.maximumf %515, %516 : vector<32x4xf32>
    %518 = vector.extract_strided_slice %517 {offsets = [0, 0], sizes = [8, 4], strides = [1, 1]} : vector<32x4xf32> to vector<8x4xf32>
    %c1_622 = arith.constant 1 : index
    %c1_623 = arith.constant 1 : index
    %c2_624 = arith.constant 2 : index
    %c0_625 = arith.constant 0 : index
    %519 = vector.load %arg17[%c1_622, %c1_623, %c2_624, %c0_625] : memref<4x6x12x4xf32, #tpu.memory_space<vmem>>, vector<1x1x8x4xf32>
    %520 = vector.shape_cast %519 : vector<1x1x8x4xf32> to vector<8x4xf32>
    %521 = vector.shape_cast %518 : vector<8x4xf32> to vector<1x1x8x4xf32>
    tpu.vector_store %arg17[%c1_622, %c1_623, %c2_624, %c0_625], %521 {strides = array<i32>} : memref<4x6x12x4xf32, #tpu.memory_space<vmem>>, vector<1x1x8x4xf32>,
    %522 = vector.extract_strided_slice %517 {offsets = [8, 0], sizes = [8, 4], strides = [1, 1]} : vector<32x4xf32> to vector<8x4xf32>
    %c1_626 = arith.constant 1 : index
    %c2_627 = arith.constant 2 : index
    %c2_628 = arith.constant 2 : index
    %c0_629 = arith.constant 0 : index
    %523 = vector.load %arg17[%c1_626, %c2_627, %c2_628, %c0_629] : memref<4x6x12x4xf32, #tpu.memory_space<vmem>>, vector<1x1x8x4xf32>
    %524 = vector.shape_cast %523 : vector<1x1x8x4xf32> to vector<8x4xf32>
    %525 = vector.shape_cast %522 : vector<8x4xf32> to vector<1x1x8x4xf32>
    tpu.vector_store %arg17[%c1_626, %c2_627, %c2_628, %c0_629], %525 {strides = array<i32>} : memref<4x6x12x4xf32, #tpu.memory_space<vmem>>, vector<1x1x8x4xf32>,
    %526 = vector.extract_strided_slice %517 {offsets = [16, 0], sizes = [8, 4], strides = [1, 1]} : vector<32x4xf32> to vector<8x4xf32>
    %c1_630 = arith.constant 1 : index
    %c3_631 = arith.constant 3 : index
    %c2_632 = arith.constant 2 : index
    %c0_633 = arith.constant 0 : index
    %527 = vector.load %arg17[%c1_630, %c3_631, %c2_632, %c0_633] : memref<4x6x12x4xf32, #tpu.memory_space<vmem>>, vector<1x1x8x4xf32>
    %528 = vector.shape_cast %527 : vector<1x1x8x4xf32> to vector<8x4xf32>
    %529 = vector.shape_cast %526 : vector<8x4xf32> to vector<1x1x8x4xf32>
    tpu.vector_store %arg17[%c1_630, %c3_631, %c2_632, %c0_633], %529 {strides = array<i32>} : memref<4x6x12x4xf32, #tpu.memory_space<vmem>>, vector<1x1x8x4xf32>,
    %530 = vector.extract_strided_slice %517 {offsets = [24, 0], sizes = [8, 4], strides = [1, 1]} : vector<32x4xf32> to vector<8x4xf32>
    %c1_634 = arith.constant 1 : index
    %c4_635 = arith.constant 4 : index
    %c2_636 = arith.constant 2 : index
    %c0_637 = arith.constant 0 : index
    %531 = vector.load %arg17[%c1_634, %c4_635, %c2_636, %c0_637] : memref<4x6x12x4xf32, #tpu.memory_space<vmem>>, vector<1x1x8x4xf32>
    %532 = vector.shape_cast %531 : vector<1x1x8x4xf32> to vector<8x4xf32>
    %533 = vector.shape_cast %530 : vector<8x4xf32> to vector<1x1x8x4xf32>
    tpu.vector_store %arg17[%c1_634, %c4_635, %c2_636, %c0_637], %533 {strides = array<i32>} : memref<4x6x12x4xf32, #tpu.memory_space<vmem>>, vector<1x1x8x4xf32>,
    %534 = vector.extract_strided_slice %485 {offsets = [256, 0], sizes = [32, 4], strides = [1, 1]} : vector<512x4xf32> to vector<32x4xf32>
    %535 = vector.extract_strided_slice %485 {offsets = [288, 0], sizes = [32, 4], strides = [1, 1]} : vector<512x4xf32> to vector<32x4xf32>
    %536 = arith.maximumf %534, %535 : vector<32x4xf32>
    %537 = vector.extract_strided_slice %485 {offsets = [384, 0], sizes = [32, 4], strides = [1, 1]} : vector<512x4xf32> to vector<32x4xf32>
    %538 = arith.maximumf %536, %537 : vector<32x4xf32>
    %539 = vector.extract_strided_slice %485 {offsets = [416, 0], sizes = [32, 4], strides = [1, 1]} : vector<512x4xf32> to vector<32x4xf32>
    %540 = arith.maximumf %538, %539 : vector<32x4xf32>
    %541 = vector.extract_strided_slice %540 {offsets = [0, 0], sizes = [8, 4], strides = [1, 1]} : vector<32x4xf32> to vector<8x4xf32>
    %c2_638 = arith.constant 2 : index
    %c1_639 = arith.constant 1 : index
    %c2_640 = arith.constant 2 : index
    %c0_641 = arith.constant 0 : index
    %542 = vector.load %arg17[%c2_638, %c1_639, %c2_640, %c0_641] : memref<4x6x12x4xf32, #tpu.memory_space<vmem>>, vector<1x1x8x4xf32>
    %543 = vector.shape_cast %542 : vector<1x1x8x4xf32> to vector<8x4xf32>
    %544 = vector.shape_cast %541 : vector<8x4xf32> to vector<1x1x8x4xf32>
    tpu.vector_store %arg17[%c2_638, %c1_639, %c2_640, %c0_641], %544 {strides = array<i32>} : memref<4x6x12x4xf32, #tpu.memory_space<vmem>>, vector<1x1x8x4xf32>,
    %545 = vector.extract_strided_slice %540 {offsets = [8, 0], sizes = [8, 4], strides = [1, 1]} : vector<32x4xf32> to vector<8x4xf32>
    %c2_642 = arith.constant 2 : index
    %c2_643 = arith.constant 2 : index
    %c2_644 = arith.constant 2 : index
    %c0_645 = arith.constant 0 : index
    %546 = vector.load %arg17[%c2_642, %c2_643, %c2_644, %c0_645] : memref<4x6x12x4xf32, #tpu.memory_space<vmem>>, vector<1x1x8x4xf32>
    %547 = vector.shape_cast %546 : vector<1x1x8x4xf32> to vector<8x4xf32>
    %548 = vector.shape_cast %545 : vector<8x4xf32> to vector<1x1x8x4xf32>
    tpu.vector_store %arg17[%c2_642, %c2_643, %c2_644, %c0_645], %548 {strides = array<i32>} : memref<4x6x12x4xf32, #tpu.memory_space<vmem>>, vector<1x1x8x4xf32>,
    %549 = vector.extract_strided_slice %540 {offsets = [16, 0], sizes = [8, 4], strides = [1, 1]} : vector<32x4xf32> to vector<8x4xf32>
    %c2_646 = arith.constant 2 : index
    %c3_647 = arith.constant 3 : index
    %c2_648 = arith.constant 2 : index
    %c0_649 = arith.constant 0 : index
    %550 = vector.load %arg17[%c2_646, %c3_647, %c2_648, %c0_649] : memref<4x6x12x4xf32, #tpu.memory_space<vmem>>, vector<1x1x8x4xf32>
    %551 = vector.shape_cast %550 : vector<1x1x8x4xf32> to vector<8x4xf32>
    %552 = vector.shape_cast %549 : vector<8x4xf32> to vector<1x1x8x4xf32>
    tpu.vector_store %arg17[%c2_646, %c3_647, %c2_648, %c0_649], %552 {strides = array<i32>} : memref<4x6x12x4xf32, #tpu.memory_space<vmem>>, vector<1x1x8x4xf32>,
    %553 = vector.extract_strided_slice %540 {offsets = [24, 0], sizes = [8, 4], strides = [1, 1]} : vector<32x4xf32> to vector<8x4xf32>
    %c2_650 = arith.constant 2 : index
    %c4_651 = arith.constant 4 : index
    %c2_652 = arith.constant 2 : index
    %c0_653 = arith.constant 0 : index
    %554 = vector.load %arg17[%c2_650, %c4_651, %c2_652, %c0_653] : memref<4x6x12x4xf32, #tpu.memory_space<vmem>>, vector<1x1x8x4xf32>
    %555 = vector.shape_cast %554 : vector<1x1x8x4xf32> to vector<8x4xf32>
    %556 = vector.shape_cast %553 : vector<8x4xf32> to vector<1x1x8x4xf32>
    tpu.vector_store %arg17[%c2_650, %c4_651, %c2_652, %c0_653], %556 {strides = array<i32>} : memref<4x6x12x4xf32, #tpu.memory_space<vmem>>, vector<1x1x8x4xf32>,
    %557 = vector.extract_strided_slice %485 {offsets = [320, 0], sizes = [32, 4], strides = [1, 1]} : vector<512x4xf32> to vector<32x4xf32>
    %558 = vector.extract_strided_slice %485 {offsets = [352, 0], sizes = [32, 4], strides = [1, 1]} : vector<512x4xf32> to vector<32x4xf32>
    %559 = arith.maximumf %557, %558 : vector<32x4xf32>
    %560 = vector.extract_strided_slice %485 {offsets = [448, 0], sizes = [32, 4], strides = [1, 1]} : vector<512x4xf32> to vector<32x4xf32>
    %561 = arith.maximumf %559, %560 : vector<32x4xf32>
    %562 = vector.extract_strided_slice %485 {offsets = [480, 0], sizes = [32, 4], strides = [1, 1]} : vector<512x4xf32> to vector<32x4xf32>
    %563 = arith.maximumf %561, %562 : vector<32x4xf32>
    %564 = vector.extract_strided_slice %563 {offsets = [0, 0], sizes = [8, 4], strides = [1, 1]} : vector<32x4xf32> to vector<8x4xf32>
    %c3_654 = arith.constant 3 : index
    %c1_655 = arith.constant 1 : index
    %c2_656 = arith.constant 2 : index
    %c0_657 = arith.constant 0 : index
    %565 = vector.load %arg17[%c3_654, %c1_655, %c2_656, %c0_657] : memref<4x6x12x4xf32, #tpu.memory_space<vmem>>, vector<1x1x8x4xf32>
    %566 = vector.shape_cast %565 : vector<1x1x8x4xf32> to vector<8x4xf32>
    %567 = vector.shape_cast %564 : vector<8x4xf32> to vector<1x1x8x4xf32>
    tpu.vector_store %arg17[%c3_654, %c1_655, %c2_656, %c0_657], %567 {strides = array<i32>} : memref<4x6x12x4xf32, #tpu.memory_space<vmem>>, vector<1x1x8x4xf32>,
    %568 = vector.extract_strided_slice %563 {offsets = [8, 0], sizes = [8, 4], strides = [1, 1]} : vector<32x4xf32> to vector<8x4xf32>
    %c3_658 = arith.constant 3 : index
    %c2_659 = arith.constant 2 : index
    %c2_660 = arith.constant 2 : index
    %c0_661 = arith.constant 0 : index
    %569 = vector.load %arg17[%c3_658, %c2_659, %c2_660, %c0_661] : memref<4x6x12x4xf32, #tpu.memory_space<vmem>>, vector<1x1x8x4xf32>
    %570 = vector.shape_cast %569 : vector<1x1x8x4xf32> to vector<8x4xf32>
    %571 = vector.shape_cast %568 : vector<8x4xf32> to vector<1x1x8x4xf32>
    tpu.vector_store %arg17[%c3_658, %c2_659, %c2_660, %c0_661], %571 {strides = array<i32>} : memref<4x6x12x4xf32, #tpu.memory_space<vmem>>, vector<1x1x8x4xf32>,
    %572 = vector.extract_strided_slice %563 {offsets = [16, 0], sizes = [8, 4], strides = [1, 1]} : vector<32x4xf32> to vector<8x4xf32>
    %c3_662 = arith.constant 3 : index
    %c3_663 = arith.constant 3 : index
    %c2_664 = arith.constant 2 : index
    %c0_665 = arith.constant 0 : index
    %573 = vector.load %arg17[%c3_662, %c3_663, %c2_664, %c0_665] : memref<4x6x12x4xf32, #tpu.memory_space<vmem>>, vector<1x1x8x4xf32>
    %574 = vector.shape_cast %573 : vector<1x1x8x4xf32> to vector<8x4xf32>
    %575 = vector.shape_cast %572 : vector<8x4xf32> to vector<1x1x8x4xf32>
    tpu.vector_store %arg17[%c3_662, %c3_663, %c2_664, %c0_665], %575 {strides = array<i32>} : memref<4x6x12x4xf32, #tpu.memory_space<vmem>>, vector<1x1x8x4xf32>,
    %576 = vector.extract_strided_slice %563 {offsets = [24, 0], sizes = [8, 4], strides = [1, 1]} : vector<32x4xf32> to vector<8x4xf32>
    %c3_666 = arith.constant 3 : index
    %c4_667 = arith.constant 4 : index
    %c2_668 = arith.constant 2 : index
    %c0_669 = arith.constant 0 : index
    %577 = vector.load %arg17[%c3_666, %c4_667, %c2_668, %c0_669] : memref<4x6x12x4xf32, #tpu.memory_space<vmem>>, vector<1x1x8x4xf32>
    %578 = vector.shape_cast %577 : vector<1x1x8x4xf32> to vector<8x4xf32>
    %579 = vector.shape_cast %576 : vector<8x4xf32> to vector<1x1x8x4xf32>
    tpu.vector_store %arg17[%c3_666, %c4_667, %c2_668, %c0_669], %579 {strides = array<i32>} : memref<4x6x12x4xf32, #tpu.memory_space<vmem>>, vector<1x1x8x4xf32>,
    %cst_670 = arith.constant 0.000000e+00 : f32
    %580 = vector.broadcast %cst_670 : f32 to vector<128x8xf32>
    %c3_671 = arith.constant 3 : index
    %c0_672 = arith.constant 0 : index
    %c0_673 = arith.constant 0 : index
    %c0_674 = arith.constant 0 : index
    %581 = vector.load %arg17[%c3_671, %c0_672, %c0_673, %c0_674] : memref<4x6x12x4xf32, #tpu.memory_space<vmem>>, vector<1x4x8x4xf32>
    %582 = vector.shape_cast %581 : vector<1x4x8x4xf32> to vector<4x8x4xf32>
    %583 = vector.shape_cast %582 : vector<4x8x4xf32> to vector<32x4xf32>
    %c2_675 = arith.constant 2 : index
    %c0_676 = arith.constant 0 : index
    %c2_677 = arith.constant 2 : index
    %c0_678 = arith.constant 0 : index
    %584 = vector.load %arg17[%c2_675, %c0_676, %c2_677, %c0_678] : memref<4x6x12x4xf32, #tpu.memory_space<vmem>>, vector<1x4x8x4xf32>
    %585 = vector.shape_cast %584 : vector<1x4x8x4xf32> to vector<4x8x4xf32>
    %586 = vector.shape_cast %585 : vector<4x8x4xf32> to vector<32x4xf32>
    %c1_679 = arith.constant 1 : index
    %c1_680 = arith.constant 1 : index
    %c0_681 = arith.constant 0 : index
    %c0_682 = arith.constant 0 : index
    %587 = vector.load %arg17[%c1_679, %c1_680, %c0_681, %c0_682] : memref<4x6x12x4xf32, #tpu.memory_space<vmem>>, vector<1x4x8x4xf32>
    %588 = vector.shape_cast %587 : vector<1x4x8x4xf32> to vector<4x8x4xf32>
    %589 = vector.shape_cast %588 : vector<4x8x4xf32> to vector<32x4xf32>
    %c0_683 = arith.constant 0 : index
    %c1_684 = arith.constant 1 : index
    %c2_685 = arith.constant 2 : index
    %c0_686 = arith.constant 0 : index
    %590 = vector.load %arg17[%c0_683, %c1_684, %c2_685, %c0_686] : memref<4x6x12x4xf32, #tpu.memory_space<vmem>>, vector<1x4x8x4xf32>
    %591 = vector.shape_cast %590 : vector<1x4x8x4xf32> to vector<4x8x4xf32>
    %592 = vector.shape_cast %591 : vector<4x8x4xf32> to vector<32x4xf32>
    %593 = tpu.concatenate %583, %586, %589, %592 in 0 : vector<32x4xf32>, vector<32x4xf32>, vector<32x4xf32>, vector<32x4xf32> -> vector<128x4xf32>
    %c0_687 = arith.constant 0 : index
    %c0_688 = arith.constant 0 : index
    %c0_689 = arith.constant 0 : index
    %594 = vector.load %arg5[%c0_687, %c0_688, %c0_689] : memref<9x4x8xf32, #tpu.memory_space<vmem>>, vector<1x4x8xf32>
    %595 = vector.shape_cast %594 : vector<1x4x8xf32> to vector<4x8xf32>
    %cst_690 = arith.constant dense<0.000000e+00> : vector<128x8xf32>
    %596 = tpu.matmul %593, %595, %cst_690 {dimension_numbers = #tpu.dot_dimension_numbers<[1], [0], [0], [1], [0, 0, 1, 1], [], []>} : vector<128x4xf32>, vector<4x8xf32>, vector<128x8xf32> -> vector<128x8xf32>
    %597 = arith.addf %580, %596 : vector<128x8xf32>
    %c2_691 = arith.constant 2 : index
    %c0_692 = arith.constant 0 : index
    %c2_693 = arith.constant 2 : index
    %c0_694 = arith.constant 0 : index
    %598 = vector.load %arg17[%c2_691, %c0_692, %c2_693, %c0_694] : memref<4x6x12x4xf32, #tpu.memory_space<vmem>>, vector<1x4x8x4xf32>
    %599 = vector.shape_cast %598 : vector<1x4x8x4xf32> to vector<4x8x4xf32>
    %600 = vector.shape_cast %599 : vector<4x8x4xf32> to vector<32x4xf32>
    %c3_695 = arith.constant 3 : index
    %c0_696 = arith.constant 0 : index
    %c2_697 = arith.constant 2 : index
    %c0_698 = arith.constant 0 : index
    %601 = vector.load %arg17[%c3_695, %c0_696, %c2_697, %c0_698] : memref<4x6x12x4xf32, #tpu.memory_space<vmem>>, vector<1x4x8x4xf32>
    %602 = vector.shape_cast %601 : vector<1x4x8x4xf32> to vector<4x8x4xf32>
    %603 = vector.shape_cast %602 : vector<4x8x4xf32> to vector<32x4xf32>
    %c0_699 = arith.constant 0 : index
    %c1_700 = arith.constant 1 : index
    %c2_701 = arith.constant 2 : index
    %c0_702 = arith.constant 0 : index
    %604 = vector.load %arg17[%c0_699, %c1_700, %c2_701, %c0_702] : memref<4x6x12x4xf32, #tpu.memory_space<vmem>>, vector<1x4x8x4xf32>
    %605 = vector.shape_cast %604 : vector<1x4x8x4xf32> to vector<4x8x4xf32>
    %606 = vector.shape_cast %605 : vector<4x8x4xf32> to vector<32x4xf32>
    %c1_703 = arith.constant 1 : index
    %c1_704 = arith.constant 1 : index
    %c2_705 = arith.constant 2 : index
    %c0_706 = arith.constant 0 : index
    %607 = vector.load %arg17[%c1_703, %c1_704, %c2_705, %c0_706] : memref<4x6x12x4xf32, #tpu.memory_space<vmem>>, vector<1x4x8x4xf32>
    %608 = vector.shape_cast %607 : vector<1x4x8x4xf32> to vector<4x8x4xf32>
    %609 = vector.shape_cast %608 : vector<4x8x4xf32> to vector<32x4xf32>
    %610 = tpu.concatenate %600, %603, %606, %609 in 0 : vector<32x4xf32>, vector<32x4xf32>, vector<32x4xf32>, vector<32x4xf32> -> vector<128x4xf32>
    %c1_707 = arith.constant 1 : index
    %c0_708 = arith.constant 0 : index
    %c0_709 = arith.constant 0 : index
    %611 = vector.load %arg5[%c1_707, %c0_708, %c0_709] : memref<9x4x8xf32, #tpu.memory_space<vmem>>, vector<1x4x8xf32>
    %612 = vector.shape_cast %611 : vector<1x4x8xf32> to vector<4x8xf32>
    %cst_710 = arith.constant dense<0.000000e+00> : vector<128x8xf32>
    %613 = tpu.matmul %610, %612, %cst_710 {dimension_numbers = #tpu.dot_dimension_numbers<[1], [0], [0], [1], [0, 0, 1, 1], [], []>} : vector<128x4xf32>, vector<4x8xf32>, vector<128x8xf32> -> vector<128x8xf32>
    %614 = arith.addf %597, %613 : vector<128x8xf32>
    %c3_711 = arith.constant 3 : index
    %c0_712 = arith.constant 0 : index
    %c2_713 = arith.constant 2 : index
    %c0_714 = arith.constant 0 : index
    %615 = vector.load %arg17[%c3_711, %c0_712, %c2_713, %c0_714] : memref<4x6x12x4xf32, #tpu.memory_space<vmem>>, vector<1x4x8x4xf32>
    %616 = vector.shape_cast %615 : vector<1x4x8x4xf32> to vector<4x8x4xf32>
    %617 = vector.shape_cast %616 : vector<4x8x4xf32> to vector<32x4xf32>
    %c2_715 = arith.constant 2 : index
    %c0_716 = arith.constant 0 : index
    %c4_717 = arith.constant 4 : index
    %c0_718 = arith.constant 0 : index
    %618 = vector.load %arg17[%c2_715, %c0_716, %c4_717, %c0_718] : memref<4x6x12x4xf32, #tpu.memory_space<vmem>>, vector<1x4x8x4xf32>
    %619 = vector.shape_cast %618 : vector<1x4x8x4xf32> to vector<4x8x4xf32>
    %620 = vector.shape_cast %619 : vector<4x8x4xf32> to vector<32x4xf32>
    %c1_719 = arith.constant 1 : index
    %c1_720 = arith.constant 1 : index
    %c2_721 = arith.constant 2 : index
    %c0_722 = arith.constant 0 : index
    %621 = vector.load %arg17[%c1_719, %c1_720, %c2_721, %c0_722] : memref<4x6x12x4xf32, #tpu.memory_space<vmem>>, vector<1x4x8x4xf32>
    %622 = vector.shape_cast %621 : vector<1x4x8x4xf32> to vector<4x8x4xf32>
    %623 = vector.shape_cast %622 : vector<4x8x4xf32> to vector<32x4xf32>
    %c0_723 = arith.constant 0 : index
    %c1_724 = arith.constant 1 : index
    %c4_725 = arith.constant 4 : index
    %c0_726 = arith.constant 0 : index
    %624 = vector.load %arg17[%c0_723, %c1_724, %c4_725, %c0_726] : memref<4x6x12x4xf32, #tpu.memory_space<vmem>>, vector<1x4x8x4xf32>
    %625 = vector.shape_cast %624 : vector<1x4x8x4xf32> to vector<4x8x4xf32>
    %626 = vector.shape_cast %625 : vector<4x8x4xf32> to vector<32x4xf32>
    %627 = tpu.concatenate %617, %620, %623, %626 in 0 : vector<32x4xf32>, vector<32x4xf32>, vector<32x4xf32>, vector<32x4xf32> -> vector<128x4xf32>
    %c2_727 = arith.constant 2 : index
    %c0_728 = arith.constant 0 : index
    %c0_729 = arith.constant 0 : index
    %628 = vector.load %arg5[%c2_727, %c0_728, %c0_729] : memref<9x4x8xf32, #tpu.memory_space<vmem>>, vector<1x4x8xf32>
    %629 = vector.shape_cast %628 : vector<1x4x8xf32> to vector<4x8xf32>
    %cst_730 = arith.constant dense<0.000000e+00> : vector<128x8xf32>
    %630 = tpu.matmul %627, %629, %cst_730 {dimension_numbers = #tpu.dot_dimension_numbers<[1], [0], [0], [1], [0, 0, 1, 1], [], []>} : vector<128x4xf32>, vector<4x8xf32>, vector<128x8xf32> -> vector<128x8xf32>
    %631 = arith.addf %614, %630 : vector<128x8xf32>
    %c1_731 = arith.constant 1 : index
    %c1_732 = arith.constant 1 : index
    %c0_733 = arith.constant 0 : index
    %c0_734 = arith.constant 0 : index
    %632 = vector.load %arg17[%c1_731, %c1_732, %c0_733, %c0_734] : memref<4x6x12x4xf32, #tpu.memory_space<vmem>>, vector<1x4x8x4xf32>
    %633 = vector.shape_cast %632 : vector<1x4x8x4xf32> to vector<4x8x4xf32>
    %634 = vector.shape_cast %633 : vector<4x8x4xf32> to vector<32x4xf32>
    %c0_735 = arith.constant 0 : index
    %c1_736 = arith.constant 1 : index
    %c2_737 = arith.constant 2 : index
    %c0_738 = arith.constant 0 : index
    %635 = vector.load %arg17[%c0_735, %c1_736, %c2_737, %c0_738] : memref<4x6x12x4xf32, #tpu.memory_space<vmem>>, vector<1x4x8x4xf32>
    %636 = vector.shape_cast %635 : vector<1x4x8x4xf32> to vector<4x8x4xf32>
    %637 = vector.shape_cast %636 : vector<4x8x4xf32> to vector<32x4xf32>
    %c3_739 = arith.constant 3 : index
    %c1_740 = arith.constant 1 : index
    %c0_741 = arith.constant 0 : index
    %c0_742 = arith.constant 0 : index
    %638 = vector.load %arg17[%c3_739, %c1_740, %c0_741, %c0_742] : memref<4x6x12x4xf32, #tpu.memory_space<vmem>>, vector<1x4x8x4xf32>
    %639 = vector.shape_cast %638 : vector<1x4x8x4xf32> to vector<4x8x4xf32>
    %640 = vector.shape_cast %639 : vector<4x8x4xf32> to vector<32x4xf32>
    %c2_743 = arith.constant 2 : index
    %c1_744 = arith.constant 1 : index
    %c2_745 = arith.constant 2 : index
    %c0_746 = arith.constant 0 : index
    %641 = vector.load %arg17[%c2_743, %c1_744, %c2_745, %c0_746] : memref<4x6x12x4xf32, #tpu.memory_space<vmem>>, vector<1x4x8x4xf32>
    %642 = vector.shape_cast %641 : vector<1x4x8x4xf32> to vector<4x8x4xf32>
    %643 = vector.shape_cast %642 : vector<4x8x4xf32> to vector<32x4xf32>
    %644 = tpu.concatenate %634, %637, %640, %643 in 0 : vector<32x4xf32>, vector<32x4xf32>, vector<32x4xf32>, vector<32x4xf32> -> vector<128x4xf32>
    %c3_747 = arith.constant 3 : index
    %c0_748 = arith.constant 0 : index
    %c0_749 = arith.constant 0 : index
    %645 = vector.load %arg5[%c3_747, %c0_748, %c0_749] : memref<9x4x8xf32, #tpu.memory_space<vmem>>, vector<1x4x8xf32>
    %646 = vector.shape_cast %645 : vector<1x4x8xf32> to vector<4x8xf32>
    %cst_750 = arith.constant dense<0.000000e+00> : vector<128x8xf32>
    %647 = tpu.matmul %644, %646, %cst_750 {dimension_numbers = #tpu.dot_dimension_numbers<[1], [0], [0], [1], [0, 0, 1, 1], [], []>} : vector<128x4xf32>, vector<4x8xf32>, vector<128x8xf32> -> vector<128x8xf32>
    %648 = arith.addf %631, %647 : vector<128x8xf32>
    %c0_751 = arith.constant 0 : index
    %c1_752 = arith.constant 1 : index
    %c2_753 = arith.constant 2 : index
    %c0_754 = arith.constant 0 : index
    %649 = vector.load %arg17[%c0_751, %c1_752, %c2_753, %c0_754] : memref<4x6x12x4xf32, #tpu.memory_space<vmem>>, vector<1x4x8x4xf32>
    %650 = vector.shape_cast %649 : vector<1x4x8x4xf32> to vector<4x8x4xf32>
    %651 = vector.shape_cast %650 : vector<4x8x4xf32> to vector<32x4xf32>
    %c1_755 = arith.constant 1 : index
    %c1_756 = arith.constant 1 : index
    %c2_757 = arith.constant 2 : index
    %c0_758 = arith.constant 0 : index
    %652 = vector.load %arg17[%c1_755, %c1_756, %c2_757, %c0_758] : memref<4x6x12x4xf32, #tpu.memory_space<vmem>>, vector<1x4x8x4xf32>
    %653 = vector.shape_cast %652 : vector<1x4x8x4xf32> to vector<4x8x4xf32>
    %654 = vector.shape_cast %653 : vector<4x8x4xf32> to vector<32x4xf32>
    %c2_759 = arith.constant 2 : index
    %c1_760 = arith.constant 1 : index
    %c2_761 = arith.constant 2 : index
    %c0_762 = arith.constant 0 : index
    %655 = vector.load %arg17[%c2_759, %c1_760, %c2_761, %c0_762] : memref<4x6x12x4xf32, #tpu.memory_space<vmem>>, vector<1x4x8x4xf32>
    %656 = vector.shape_cast %655 : vector<1x4x8x4xf32> to vector<4x8x4xf32>
    %657 = vector.shape_cast %656 : vector<4x8x4xf32> to vector<32x4xf32>
    %c3_763 = arith.constant 3 : index
    %c1_764 = arith.constant 1 : index
    %c2_765 = arith.constant 2 : index
    %c0_766 = arith.constant 0 : index
    %658 = vector.load %arg17[%c3_763, %c1_764, %c2_765, %c0_766] : memref<4x6x12x4xf32, #tpu.memory_space<vmem>>, vector<1x4x8x4xf32>
    %659 = vector.shape_cast %658 : vector<1x4x8x4xf32> to vector<4x8x4xf32>
    %660 = vector.shape_cast %659 : vector<4x8x4xf32> to vector<32x4xf32>
    %661 = tpu.concatenate %651, %654, %657, %660 in 0 : vector<32x4xf32>, vector<32x4xf32>, vector<32x4xf32>, vector<32x4xf32> -> vector<128x4xf32>
    %c4_767 = arith.constant 4 : index
    %c0_768 = arith.constant 0 : index
    %c0_769 = arith.constant 0 : index
    %662 = vector.load %arg5[%c4_767, %c0_768, %c0_769] : memref<9x4x8xf32, #tpu.memory_space<vmem>>, vector<1x4x8xf32>
    %663 = vector.shape_cast %662 : vector<1x4x8xf32> to vector<4x8xf32>
    %cst_770 = arith.constant dense<0.000000e+00> : vector<128x8xf32>
    %664 = tpu.matmul %661, %663, %cst_770 {dimension_numbers = #tpu.dot_dimension_numbers<[1], [0], [0], [1], [0, 0, 1, 1], [], []>} : vector<128x4xf32>, vector<4x8xf32>, vector<128x8xf32> -> vector<128x8xf32>
    %665 = arith.addf %648, %664 : vector<128x8xf32>
    %c1_771 = arith.constant 1 : index
    %c1_772 = arith.constant 1 : index
    %c2_773 = arith.constant 2 : index
    %c0_774 = arith.constant 0 : index
    %666 = vector.load %arg17[%c1_771, %c1_772, %c2_773, %c0_774] : memref<4x6x12x4xf32, #tpu.memory_space<vmem>>, vector<1x4x8x4xf32>
    %667 = vector.shape_cast %666 : vector<1x4x8x4xf32> to vector<4x8x4xf32>
    %668 = vector.shape_cast %667 : vector<4x8x4xf32> to vector<32x4xf32>
    %c0_775 = arith.constant 0 : index
    %c1_776 = arith.constant 1 : index
    %c4_777 = arith.constant 4 : index
    %c0_778 = arith.constant 0 : index
    %669 = vector.load %arg17[%c0_775, %c1_776, %c4_777, %c0_778] : memref<4x6x12x4xf32, #tpu.memory_space<vmem>>, vector<1x4x8x4xf32>
    %670 = vector.shape_cast %669 : vector<1x4x8x4xf32> to vector<4x8x4xf32>
    %671 = vector.shape_cast %670 : vector<4x8x4xf32> to vector<32x4xf32>
    %c3_779 = arith.constant 3 : index
    %c1_780 = arith.constant 1 : index
    %c2_781 = arith.constant 2 : index
    %c0_782 = arith.constant 0 : index
    %672 = vector.load %arg17[%c3_779, %c1_780, %c2_781, %c0_782] : memref<4x6x12x4xf32, #tpu.memory_space<vmem>>, vector<1x4x8x4xf32>
    %673 = vector.shape_cast %672 : vector<1x4x8x4xf32> to vector<4x8x4xf32>
    %674 = vector.shape_cast %673 : vector<4x8x4xf32> to vector<32x4xf32>
    %c2_783 = arith.constant 2 : index
    %c1_784 = arith.constant 1 : index
    %c4_785 = arith.constant 4 : index
    %c0_786 = arith.constant 0 : index
    %675 = vector.load %arg17[%c2_783, %c1_784, %c4_785, %c0_786] : memref<4x6x12x4xf32, #tpu.memory_space<vmem>>, vector<1x4x8x4xf32>
    %676 = vector.shape_cast %675 : vector<1x4x8x4xf32> to vector<4x8x4xf32>
    %677 = vector.shape_cast %676 : vector<4x8x4xf32> to vector<32x4xf32>
    %678 = tpu.concatenate %668, %671, %674, %677 in 0 : vector<32x4xf32>, vector<32x4xf32>, vector<32x4xf32>, vector<32x4xf32> -> vector<128x4xf32>
    %c5_787 = arith.constant 5 : index
    %c0_788 = arith.constant 0 : index
    %c0_789 = arith.constant 0 : index
    %679 = vector.load %arg5[%c5_787, %c0_788, %c0_789] : memref<9x4x8xf32, #tpu.memory_space<vmem>>, vector<1x4x8xf32>
    %680 = vector.shape_cast %679 : vector<1x4x8xf32> to vector<4x8xf32>
    %cst_790 = arith.constant dense<0.000000e+00> : vector<128x8xf32>
    %681 = tpu.matmul %678, %680, %cst_790 {dimension_numbers = #tpu.dot_dimension_numbers<[1], [0], [0], [1], [0, 0, 1, 1], [], []>} : vector<128x4xf32>, vector<4x8xf32>, vector<128x8xf32> -> vector<128x8xf32>
    %682 = arith.addf %665, %681 : vector<128x8xf32>
    %c3_791 = arith.constant 3 : index
    %c1_792 = arith.constant 1 : index
    %c0_793 = arith.constant 0 : index
    %c0_794 = arith.constant 0 : index
    %683 = vector.load %arg17[%c3_791, %c1_792, %c0_793, %c0_794] : memref<4x6x12x4xf32, #tpu.memory_space<vmem>>, vector<1x4x8x4xf32>
    %684 = vector.shape_cast %683 : vector<1x4x8x4xf32> to vector<4x8x4xf32>
    %685 = vector.shape_cast %684 : vector<4x8x4xf32> to vector<32x4xf32>
    %c2_795 = arith.constant 2 : index
    %c1_796 = arith.constant 1 : index
    %c2_797 = arith.constant 2 : index
    %c0_798 = arith.constant 0 : index
    %686 = vector.load %arg17[%c2_795, %c1_796, %c2_797, %c0_798] : memref<4x6x12x4xf32, #tpu.memory_space<vmem>>, vector<1x4x8x4xf32>
    %687 = vector.shape_cast %686 : vector<1x4x8x4xf32> to vector<4x8x4xf32>
    %688 = vector.shape_cast %687 : vector<4x8x4xf32> to vector<32x4xf32>
    %c1_799 = arith.constant 1 : index
    %c2_800 = arith.constant 2 : index
    %c0_801 = arith.constant 0 : index
    %c0_802 = arith.constant 0 : index
    %689 = vector.load %arg17[%c1_799, %c2_800, %c0_801, %c0_802] : memref<4x6x12x4xf32, #tpu.memory_space<vmem>>, vector<1x4x8x4xf32>
    %690 = vector.shape_cast %689 : vector<1x4x8x4xf32> to vector<4x8x4xf32>
    %691 = vector.shape_cast %690 : vector<4x8x4xf32> to vector<32x4xf32>
    %c0_803 = arith.constant 0 : index
    %c2_804 = arith.constant 2 : index
    %c2_805 = arith.constant 2 : index
    %c0_806 = arith.constant 0 : index
    %692 = vector.load %arg17[%c0_803, %c2_804, %c2_805, %c0_806] : memref<4x6x12x4xf32, #tpu.memory_space<vmem>>, vector<1x4x8x4xf32>
    %693 = vector.shape_cast %692 : vector<1x4x8x4xf32> to vector<4x8x4xf32>
    %694 = vector.shape_cast %693 : vector<4x8x4xf32> to vector<32x4xf32>
    %695 = tpu.concatenate %685, %688, %691, %694 in 0 : vector<32x4xf32>, vector<32x4xf32>, vector<32x4xf32>, vector<32x4xf32> -> vector<128x4xf32>
    %c6_807 = arith.constant 6 : index
    %c0_808 = arith.constant 0 : index
    %c0_809 = arith.constant 0 : index
    %696 = vector.load %arg5[%c6_807, %c0_808, %c0_809] : memref<9x4x8xf32, #tpu.memory_space<vmem>>, vector<1x4x8xf32>
    %697 = vector.shape_cast %696 : vector<1x4x8xf32> to vector<4x8xf32>
    %cst_810 = arith.constant dense<0.000000e+00> : vector<128x8xf32>
    %698 = tpu.matmul %695, %697, %cst_810 {dimension_numbers = #tpu.dot_dimension_numbers<[1], [0], [0], [1], [0, 0, 1, 1], [], []>} : vector<128x4xf32>, vector<4x8xf32>, vector<128x8xf32> -> vector<128x8xf32>
    %699 = arith.addf %682, %698 : vector<128x8xf32>
    %c2_811 = arith.constant 2 : index
    %c1_812 = arith.constant 1 : index
    %c2_813 = arith.constant 2 : index
    %c0_814 = arith.constant 0 : index
    %700 = vector.load %arg17[%c2_811, %c1_812, %c2_813, %c0_814] : memref<4x6x12x4xf32, #tpu.memory_space<vmem>>, vector<1x4x8x4xf32>
    %701 = vector.shape_cast %700 : vector<1x4x8x4xf32> to vector<4x8x4xf32>
    %702 = vector.shape_cast %701 : vector<4x8x4xf32> to vector<32x4xf32>
    %c3_815 = arith.constant 3 : index
    %c1_816 = arith.constant 1 : index
    %c2_817 = arith.constant 2 : index
    %c0_818 = arith.constant 0 : index
    %703 = vector.load %arg17[%c3_815, %c1_816, %c2_817, %c0_818] : memref<4x6x12x4xf32, #tpu.memory_space<vmem>>, vector<1x4x8x4xf32>
    %704 = vector.shape_cast %703 : vector<1x4x8x4xf32> to vector<4x8x4xf32>
    %705 = vector.shape_cast %704 : vector<4x8x4xf32> to vector<32x4xf32>
    %c0_819 = arith.constant 0 : index
    %c2_820 = arith.constant 2 : index
    %c2_821 = arith.constant 2 : index
    %c0_822 = arith.constant 0 : index
    %706 = vector.load %arg17[%c0_819, %c2_820, %c2_821, %c0_822] : memref<4x6x12x4xf32, #tpu.memory_space<vmem>>, vector<1x4x8x4xf32>
    %707 = vector.shape_cast %706 : vector<1x4x8x4xf32> to vector<4x8x4xf32>
    %708 = vector.shape_cast %707 : vector<4x8x4xf32> to vector<32x4xf32>
    %c1_823 = arith.constant 1 : index
    %c2_824 = arith.constant 2 : index
    %c2_825 = arith.constant 2 : index
    %c0_826 = arith.constant 0 : index
    %709 = vector.load %arg17[%c1_823, %c2_824, %c2_825, %c0_826] : memref<4x6x12x4xf32, #tpu.memory_space<vmem>>, vector<1x4x8x4xf32>
    %710 = vector.shape_cast %709 : vector<1x4x8x4xf32> to vector<4x8x4xf32>
    %711 = vector.shape_cast %710 : vector<4x8x4xf32> to vector<32x4xf32>
    %712 = tpu.concatenate %702, %705, %708, %711 in 0 : vector<32x4xf32>, vector<32x4xf32>, vector<32x4xf32>, vector<32x4xf32> -> vector<128x4xf32>
    %c7_827 = arith.constant 7 : index
    %c0_828 = arith.constant 0 : index
    %c0_829 = arith.constant 0 : index
    %713 = vector.load %arg5[%c7_827, %c0_828, %c0_829] : memref<9x4x8xf32, #tpu.memory_space<vmem>>, vector<1x4x8xf32>
    %714 = vector.shape_cast %713 : vector<1x4x8xf32> to vector<4x8xf32>
    %cst_830 = arith.constant dense<0.000000e+00> : vector<128x8xf32>
    %715 = tpu.matmul %712, %714, %cst_830 {dimension_numbers = #tpu.dot_dimension_numbers<[1], [0], [0], [1], [0, 0, 1, 1], [], []>} : vector<128x4xf32>, vector<4x8xf32>, vector<128x8xf32> -> vector<128x8xf32>
    %716 = arith.addf %699, %715 : vector<128x8xf32>
    %c3_831 = arith.constant 3 : index
    %c1_832 = arith.constant 1 : index
    %c2_833 = arith.constant 2 : index
    %c0_834 = arith.constant 0 : index
    %717 = vector.load %arg17[%c3_831, %c1_832, %c2_833, %c0_834] : memref<4x6x12x4xf32, #tpu.memory_space<vmem>>, vector<1x4x8x4xf32>
    %718 = vector.shape_cast %717 : vector<1x4x8x4xf32> to vector<4x8x4xf32>
    %719 = vector.shape_cast %718 : vector<4x8x4xf32> to vector<32x4xf32>
    %c2_835 = arith.constant 2 : index
    %c1_836 = arith.constant 1 : index
    %c4_837 = arith.constant 4 : index
    %c0_838 = arith.constant 0 : index
    %720 = vector.load %arg17[%c2_835, %c1_836, %c4_837, %c0_838] : memref<4x6x12x4xf32, #tpu.memory_space<vmem>>, vector<1x4x8x4xf32>
    %721 = vector.shape_cast %720 : vector<1x4x8x4xf32> to vector<4x8x4xf32>
    %722 = vector.shape_cast %721 : vector<4x8x4xf32> to vector<32x4xf32>
    %c1_839 = arith.constant 1 : index
    %c2_840 = arith.constant 2 : index
    %c2_841 = arith.constant 2 : index
    %c0_842 = arith.constant 0 : index
    %723 = vector.load %arg17[%c1_839, %c2_840, %c2_841, %c0_842] : memref<4x6x12x4xf32, #tpu.memory_space<vmem>>, vector<1x4x8x4xf32>
    %724 = vector.shape_cast %723 : vector<1x4x8x4xf32> to vector<4x8x4xf32>
    %725 = vector.shape_cast %724 : vector<4x8x4xf32> to vector<32x4xf32>
    %c0_843 = arith.constant 0 : index
    %c2_844 = arith.constant 2 : index
    %c4_845 = arith.constant 4 : index
    %c0_846 = arith.constant 0 : index
    %726 = vector.load %arg17[%c0_843, %c2_844, %c4_845, %c0_846] : memref<4x6x12x4xf32, #tpu.memory_space<vmem>>, vector<1x4x8x4xf32>
    %727 = vector.shape_cast %726 : vector<1x4x8x4xf32> to vector<4x8x4xf32>
    %728 = vector.shape_cast %727 : vector<4x8x4xf32> to vector<32x4xf32>
    %729 = tpu.concatenate %719, %722, %725, %728 in 0 : vector<32x4xf32>, vector<32x4xf32>, vector<32x4xf32>, vector<32x4xf32> -> vector<128x4xf32>
    %c8_847 = arith.constant 8 : index
    %c0_848 = arith.constant 0 : index
    %c0_849 = arith.constant 0 : index
    %730 = vector.load %arg5[%c8_847, %c0_848, %c0_849] : memref<9x4x8xf32, #tpu.memory_space<vmem>>, vector<1x4x8xf32>
    %731 = vector.shape_cast %730 : vector<1x4x8xf32> to vector<4x8xf32>
    %cst_850 = arith.constant dense<0.000000e+00> : vector<128x8xf32>
    %732 = tpu.matmul %729, %731, %cst_850 {dimension_numbers = #tpu.dot_dimension_numbers<[1], [0], [0], [1], [0, 0, 1, 1], [], []>} : vector<128x4xf32>, vector<4x8xf32>, vector<128x8xf32> -> vector<128x8xf32>
    %733 = arith.addf %716, %732 : vector<128x8xf32>
    %c0_851 = arith.constant 0 : index
    %c0_852 = arith.constant 0 : index
    %734 = vector.load %arg6[%c0_851, %c0_852] : memref<1x8xf32, #tpu.memory_space<vmem>>, vector<1x8xf32>
    %735 = vector.broadcast %734 : vector<1x8xf32> to vector<128x8xf32>
    %736 = arith.mulf %733, %735 : vector<128x8xf32>
    %c0_853 = arith.constant 0 : index
    %c0_854 = arith.constant 0 : index
    %737 = vector.load %arg7[%c0_853, %c0_854] : memref<1x8xf32, #tpu.memory_space<vmem>>, vector<1x8xf32>
    %738 = vector.broadcast %737 : vector<1x8xf32> to vector<128x8xf32>
    %739 = arith.addf %736, %738 : vector<128x8xf32>
    %cst_855 = arith.constant 0.000000e+00 : f32
    %740 = vector.broadcast %cst_855 : f32 to vector<128x8xf32>
    %741 = arith.maximumf %739, %740 : vector<128x8xf32>
    %742 = vector.extract_strided_slice %741 {offsets = [0, 0], sizes = [32, 8], strides = [1, 1]} : vector<128x8xf32> to vector<32x8xf32>
    %743 = vector.extract_strided_slice %741 {offsets = [32, 0], sizes = [32, 8], strides = [1, 1]} : vector<128x8xf32> to vector<32x8xf32>
    %744 = arith.maximumf %742, %743 : vector<32x8xf32>
    %745 = vector.extract_strided_slice %741 {offsets = [64, 0], sizes = [32, 8], strides = [1, 1]} : vector<128x8xf32> to vector<32x8xf32>
    %746 = arith.maximumf %744, %745 : vector<32x8xf32>
    %747 = vector.extract_strided_slice %741 {offsets = [96, 0], sizes = [32, 8], strides = [1, 1]} : vector<128x8xf32> to vector<32x8xf32>
    %748 = arith.maximumf %746, %747 : vector<32x8xf32>
    %749 = vector.extract_strided_slice %748 {offsets = [0, 0], sizes = [2, 8], strides = [1, 1]} : vector<32x8xf32> to vector<2x8xf32>
    %c0_856 = arith.constant 0 : index
    %c0_857 = arith.constant 0 : index
    %750 = vector.load %arg18[%c0_856, %c0_857] : memref<2x128xf32, #tpu.memory_space<vmem>>, vector<2x8xf32>
    tpu.vector_store %arg18[%c0_856, %c0_857], %749 {strides = array<i32>} : memref<2x128xf32, #tpu.memory_space<vmem>>, vector<2x8xf32>,
    %751 = vector.extract_strided_slice %748 {offsets = [2, 0], sizes = [2, 8], strides = [1, 1]} : vector<32x8xf32> to vector<2x8xf32>
    %c0_858 = arith.constant 0 : index
    %c8_859 = arith.constant 8 : index
    %752 = vector.load %arg18[%c0_858, %c8_859] : memref<2x128xf32, #tpu.memory_space<vmem>>, vector<2x8xf32>
    tpu.vector_store %arg18[%c0_858, %c8_859], %751 {strides = array<i32>} : memref<2x128xf32, #tpu.memory_space<vmem>>, vector<2x8xf32>,
    %753 = vector.extract_strided_slice %748 {offsets = [4, 0], sizes = [2, 8], strides = [1, 1]} : vector<32x8xf32> to vector<2x8xf32>
    %c0_860 = arith.constant 0 : index
    %c16 = arith.constant 16 : index
    %754 = vector.load %arg18[%c0_860, %c16] : memref<2x128xf32, #tpu.memory_space<vmem>>, vector<2x8xf32>
    tpu.vector_store %arg18[%c0_860, %c16], %753 {strides = array<i32>} : memref<2x128xf32, #tpu.memory_space<vmem>>, vector<2x8xf32>,
    %755 = vector.extract_strided_slice %748 {offsets = [6, 0], sizes = [2, 8], strides = [1, 1]} : vector<32x8xf32> to vector<2x8xf32>
    %c0_861 = arith.constant 0 : index
    %c24 = arith.constant 24 : index
    %756 = vector.load %arg18[%c0_861, %c24] : memref<2x128xf32, #tpu.memory_space<vmem>>, vector<2x8xf32>
    tpu.vector_store %arg18[%c0_861, %c24], %755 {strides = array<i32>} : memref<2x128xf32, #tpu.memory_space<vmem>>, vector<2x8xf32>,
    %757 = vector.extract_strided_slice %748 {offsets = [8, 0], sizes = [2, 8], strides = [1, 1]} : vector<32x8xf32> to vector<2x8xf32>
    %c0_862 = arith.constant 0 : index
    %c32 = arith.constant 32 : index
    %758 = vector.load %arg18[%c0_862, %c32] : memref<2x128xf32, #tpu.memory_space<vmem>>, vector<2x8xf32>
    tpu.vector_store %arg18[%c0_862, %c32], %757 {strides = array<i32>} : memref<2x128xf32, #tpu.memory_space<vmem>>, vector<2x8xf32>,
    %759 = vector.extract_strided_slice %748 {offsets = [10, 0], sizes = [2, 8], strides = [1, 1]} : vector<32x8xf32> to vector<2x8xf32>
    %c0_863 = arith.constant 0 : index
    %c40 = arith.constant 40 : index
    %760 = vector.load %arg18[%c0_863, %c40] : memref<2x128xf32, #tpu.memory_space<vmem>>, vector<2x8xf32>
    tpu.vector_store %arg18[%c0_863, %c40], %759 {strides = array<i32>} : memref<2x128xf32, #tpu.memory_space<vmem>>, vector<2x8xf32>,
    %761 = vector.extract_strided_slice %748 {offsets = [12, 0], sizes = [2, 8], strides = [1, 1]} : vector<32x8xf32> to vector<2x8xf32>
    %c0_864 = arith.constant 0 : index
    %c48 = arith.constant 48 : index
    %762 = vector.load %arg18[%c0_864, %c48] : memref<2x128xf32, #tpu.memory_space<vmem>>, vector<2x8xf32>
    tpu.vector_store %arg18[%c0_864, %c48], %761 {strides = array<i32>} : memref<2x128xf32, #tpu.memory_space<vmem>>, vector<2x8xf32>,
    %763 = vector.extract_strided_slice %748 {offsets = [14, 0], sizes = [2, 8], strides = [1, 1]} : vector<32x8xf32> to vector<2x8xf32>
    %c0_865 = arith.constant 0 : index
    %c56 = arith.constant 56 : index
    %764 = vector.load %arg18[%c0_865, %c56] : memref<2x128xf32, #tpu.memory_space<vmem>>, vector<2x8xf32>
    tpu.vector_store %arg18[%c0_865, %c56], %763 {strides = array<i32>} : memref<2x128xf32, #tpu.memory_space<vmem>>, vector<2x8xf32>,
    %765 = vector.extract_strided_slice %748 {offsets = [16, 0], sizes = [2, 8], strides = [1, 1]} : vector<32x8xf32> to vector<2x8xf32>
    %c0_866 = arith.constant 0 : index
    %c64 = arith.constant 64 : index
    %766 = vector.load %arg18[%c0_866, %c64] : memref<2x128xf32, #tpu.memory_space<vmem>>, vector<2x8xf32>
    tpu.vector_store %arg18[%c0_866, %c64], %765 {strides = array<i32>} : memref<2x128xf32, #tpu.memory_space<vmem>>, vector<2x8xf32>,
    %767 = vector.extract_strided_slice %748 {offsets = [18, 0], sizes = [2, 8], strides = [1, 1]} : vector<32x8xf32> to vector<2x8xf32>
    %c0_867 = arith.constant 0 : index
    %c72 = arith.constant 72 : index
    %768 = vector.load %arg18[%c0_867, %c72] : memref<2x128xf32, #tpu.memory_space<vmem>>, vector<2x8xf32>
    tpu.vector_store %arg18[%c0_867, %c72], %767 {strides = array<i32>} : memref<2x128xf32, #tpu.memory_space<vmem>>, vector<2x8xf32>,
    %769 = vector.extract_strided_slice %748 {offsets = [20, 0], sizes = [2, 8], strides = [1, 1]} : vector<32x8xf32> to vector<2x8xf32>
    %c0_868 = arith.constant 0 : index
    %c80 = arith.constant 80 : index
    %770 = vector.load %arg18[%c0_868, %c80] : memref<2x128xf32, #tpu.memory_space<vmem>>, vector<2x8xf32>
    tpu.vector_store %arg18[%c0_868, %c80], %769 {strides = array<i32>} : memref<2x128xf32, #tpu.memory_space<vmem>>, vector<2x8xf32>,
    %771 = vector.extract_strided_slice %748 {offsets = [22, 0], sizes = [2, 8], strides = [1, 1]} : vector<32x8xf32> to vector<2x8xf32>
    %c0_869 = arith.constant 0 : index
    %c88 = arith.constant 88 : index
    %772 = vector.load %arg18[%c0_869, %c88] : memref<2x128xf32, #tpu.memory_space<vmem>>, vector<2x8xf32>
    tpu.vector_store %arg18[%c0_869, %c88], %771 {strides = array<i32>} : memref<2x128xf32, #tpu.memory_space<vmem>>, vector<2x8xf32>,
    %773 = vector.extract_strided_slice %748 {offsets = [24, 0], sizes = [2, 8], strides = [1, 1]} : vector<32x8xf32> to vector<2x8xf32>
    %c0_870 = arith.constant 0 : index
    %c96 = arith.constant 96 : index
    %774 = vector.load %arg18[%c0_870, %c96] : memref<2x128xf32, #tpu.memory_space<vmem>>, vector<2x8xf32>
    tpu.vector_store %arg18[%c0_870, %c96], %773 {strides = array<i32>} : memref<2x128xf32, #tpu.memory_space<vmem>>, vector<2x8xf32>,
    %775 = vector.extract_strided_slice %748 {offsets = [26, 0], sizes = [2, 8], strides = [1, 1]} : vector<32x8xf32> to vector<2x8xf32>
    %c0_871 = arith.constant 0 : index
    %c104 = arith.constant 104 : index
    %776 = vector.load %arg18[%c0_871, %c104] : memref<2x128xf32, #tpu.memory_space<vmem>>, vector<2x8xf32>
    tpu.vector_store %arg18[%c0_871, %c104], %775 {strides = array<i32>} : memref<2x128xf32, #tpu.memory_space<vmem>>, vector<2x8xf32>,
    %777 = vector.extract_strided_slice %748 {offsets = [28, 0], sizes = [2, 8], strides = [1, 1]} : vector<32x8xf32> to vector<2x8xf32>
    %c0_872 = arith.constant 0 : index
    %c112 = arith.constant 112 : index
    %778 = vector.load %arg18[%c0_872, %c112] : memref<2x128xf32, #tpu.memory_space<vmem>>, vector<2x8xf32>
    tpu.vector_store %arg18[%c0_872, %c112], %777 {strides = array<i32>} : memref<2x128xf32, #tpu.memory_space<vmem>>, vector<2x8xf32>,
    %779 = vector.extract_strided_slice %748 {offsets = [30, 0], sizes = [2, 8], strides = [1, 1]} : vector<32x8xf32> to vector<2x8xf32>
    %c0_873 = arith.constant 0 : index
    %c120 = arith.constant 120 : index
    %780 = vector.load %arg18[%c0_873, %c120] : memref<2x128xf32, #tpu.memory_space<vmem>>, vector<2x8xf32>
    tpu.vector_store %arg18[%c0_873, %c120], %779 {strides = array<i32>} : memref<2x128xf32, #tpu.memory_space<vmem>>, vector<2x8xf32>,
    %c0_874 = arith.constant 0 : index
    %c0_875 = arith.constant 0 : index
    %781 = vector.load %arg18[%c0_874, %c0_875] : memref<2x128xf32, #tpu.memory_space<vmem>>, vector<2x128xf32>
    %c0_876 = arith.constant 0 : index
    %c0_877 = arith.constant 0 : index
    %782 = vector.load %arg8[%c0_876, %c0_877] : memref<128x32xf32, #tpu.memory_space<vmem>>, vector<128x32xf32>
    %cst_878 = arith.constant dense<0.000000e+00> : vector<2x32xf32>
    %783 = tpu.matmul %781, %782, %cst_878 {dimension_numbers = #tpu.dot_dimension_numbers<[1], [0], [0], [1], [0, 0, 1, 1], [], []>} : vector<2x128xf32>, vector<128x32xf32>, vector<2x32xf32> -> vector<2x32xf32>
    %c0_879 = arith.constant 0 : index
    %c0_880 = arith.constant 0 : index
    %784 = vector.load %arg9[%c0_879, %c0_880] : memref<1x32xf32, #tpu.memory_space<vmem>>, vector<1x32xf32>
    %785 = vector.broadcast %784 : vector<1x32xf32> to vector<2x32xf32>
    %786 = arith.mulf %783, %785 : vector<2x32xf32>
    %c0_881 = arith.constant 0 : index
    %c0_882 = arith.constant 0 : index
    %787 = vector.load %arg10[%c0_881, %c0_882] : memref<1x32xf32, #tpu.memory_space<vmem>>, vector<1x32xf32>
    %788 = vector.broadcast %787 : vector<1x32xf32> to vector<2x32xf32>
    %789 = arith.addf %786, %788 : vector<2x32xf32>
    %cst_883 = arith.constant 0.000000e+00 : f32
    %790 = vector.broadcast %cst_883 : f32 to vector<2x32xf32>
    %791 = arith.maximumf %789, %790 : vector<2x32xf32>
    %c0_884 = arith.constant 0 : index
    %c0_885 = arith.constant 0 : index
    %792 = vector.load %arg11[%c0_884, %c0_885] : memref<32x16xf32, #tpu.memory_space<vmem>>, vector<32x16xf32>
    %cst_886 = arith.constant dense<0.000000e+00> : vector<2x16xf32>
    %793 = tpu.matmul %791, %792, %cst_886 {dimension_numbers = #tpu.dot_dimension_numbers<[1], [0], [0], [1], [0, 0, 1, 1], [], []>} : vector<2x32xf32>, vector<32x16xf32>, vector<2x16xf32> -> vector<2x16xf32>
    %c0_887 = arith.constant 0 : index
    %c0_888 = arith.constant 0 : index
    %794 = vector.load %arg12[%c0_887, %c0_888] : memref<1x16xf32, #tpu.memory_space<vmem>>, vector<1x16xf32>
    %795 = vector.broadcast %794 : vector<1x16xf32> to vector<2x16xf32>
    %796 = arith.mulf %793, %795 : vector<2x16xf32>
    %c0_889 = arith.constant 0 : index
    %c0_890 = arith.constant 0 : index
    %797 = vector.load %arg13[%c0_889, %c0_890] : memref<1x16xf32, #tpu.memory_space<vmem>>, vector<1x16xf32>
    %798 = vector.broadcast %797 : vector<1x16xf32> to vector<2x16xf32>
    %799 = arith.addf %796, %798 : vector<2x16xf32>
    %cst_891 = arith.constant 0.000000e+00 : f32
    %800 = vector.broadcast %cst_891 : f32 to vector<2x16xf32>
    %801 = arith.maximumf %799, %800 : vector<2x16xf32>
    %c0_892 = arith.constant 0 : index
    %c0_893 = arith.constant 0 : index
    %802 = vector.load %arg14[%c0_892, %c0_893] : memref<16x2xf32, #tpu.memory_space<vmem>>, vector<16x2xf32>
    %cst_894 = arith.constant dense<0.000000e+00> : vector<2x2xf32>
    %803 = tpu.matmul %801, %802, %cst_894 {dimension_numbers = #tpu.dot_dimension_numbers<[1], [0], [0], [1], [0, 0, 1, 1], [], []>} : vector<2x16xf32>, vector<16x2xf32>, vector<2x2xf32> -> vector<2x2xf32>
    %c0_895 = arith.constant 0 : index
    %c0_896 = arith.constant 0 : index
    %804 = vector.load %arg15[%c0_895, %c0_896] : memref<1x2xf32, #tpu.memory_space<vmem>>, vector<1x2xf32>
    %805 = vector.broadcast %804 : vector<1x2xf32> to vector<2x2xf32>
    %806 = arith.addf %803, %805 : vector<2x2xf32>
    %c0_897 = arith.constant 0 : index
    %c0_898 = arith.constant 0 : index
    %807 = vector.load %arg16[%c0_897, %c0_898] : memref<2x2xf32, #tpu.memory_space<vmem>>, vector<2x2xf32>
    tpu.vector_store %arg16[%c0_897, %c0_898], %806 {strides = array<i32>} : memref<2x2xf32, #tpu.memory_space<vmem>>, vector<2x2xf32>,
    return
  }
  func.func @transform_0(%arg0: i32) -> (i32, i32, i32, i32) {
    %c0_i32 = arith.constant 0 : i32
    %c0_i32_0 = arith.constant 0 : i32
    %c0_i32_1 = arith.constant 0 : i32
    %c0_i32_2 = arith.constant 0 : i32
    %c0_i32_3 = arith.constant 0 : i32
    return %c0_i32, %c0_i32_0, %c0_i32_1, %c0_i32_2 : i32, i32, i32, i32
  }
  func.func @transform_1(%arg0: i32) -> (i32, i32, i32) {
    %c0_i32 = arith.constant 0 : i32
    %c0_i32_0 = arith.constant 0 : i32
    %c0_i32_1 = arith.constant 0 : i32
    %c0_i32_2 = arith.constant 0 : i32
    return %c0_i32, %c0_i32_0, %c0_i32_1 : i32, i32, i32
  }
  func.func @transform_2(%arg0: i32) -> (i32, i32) {
    %c0_i32 = arith.constant 0 : i32
    %c0_i32_0 = arith.constant 0 : i32
    %c0_i32_1 = arith.constant 0 : i32
    return %c0_i32, %c0_i32_0 : i32, i32
  }
  func.func @transform_3(%arg0: i32) -> (i32, i32) {
    %c0_i32 = arith.constant 0 : i32
    %c0_i32_0 = arith.constant 0 : i32
    %c0_i32_1 = arith.constant 0 : i32
    return %c0_i32, %c0_i32_0 : i32, i32
  }
  func.func @transform_4(%arg0: i32) -> (i32, i32, i32) {
    %c0_i32 = arith.constant 0 : i32
    %c0_i32_0 = arith.constant 0 : i32
    %c0_i32_1 = arith.constant 0 : i32
    %c0_i32_2 = arith.constant 0 : i32
    return %c0_i32, %c0_i32_0, %c0_i32_1 : i32, i32, i32
  }
  func.func @transform_5(%arg0: i32) -> (i32, i32) {
    %c0_i32 = arith.constant 0 : i32
    %c0_i32_0 = arith.constant 0 : i32
    %c0_i32_1 = arith.constant 0 : i32
    return %c0_i32, %c0_i32_0 : i32, i32
  }
  func.func @transform_6(%arg0: i32) -> (i32, i32) {
    %c0_i32 = arith.constant 0 : i32
    %c0_i32_0 = arith.constant 0 : i32
    %c0_i32_1 = arith.constant 0 : i32
    return %c0_i32, %c0_i32_0 : i32, i32
  }
  func.func @transform_7(%arg0: i32) -> (i32, i32) {
    %c0_i32 = arith.constant 0 : i32
    %c0_i32_0 = arith.constant 0 : i32
    %c0_i32_1 = arith.constant 0 : i32
    return %c0_i32, %c0_i32_0 : i32, i32
  }
  func.func @transform_8(%arg0: i32) -> (i32, i32) {
    %c0_i32 = arith.constant 0 : i32
    %c0_i32_0 = arith.constant 0 : i32
    %c0_i32_1 = arith.constant 0 : i32
    return %c0_i32, %c0_i32_0 : i32, i32
  }
  func.func @transform_9(%arg0: i32) -> (i32, i32) {
    %c0_i32 = arith.constant 0 : i32
    %c0_i32_0 = arith.constant 0 : i32
    %c0_i32_1 = arith.constant 0 : i32
    return %c0_i32, %c0_i32_0 : i32, i32
  }
  func.func @transform_10(%arg0: i32) -> (i32, i32) {
    %c0_i32 = arith.constant 0 : i32
    %c0_i32_0 = arith.constant 0 : i32
    %c0_i32_1 = arith.constant 0 : i32
    return %c0_i32, %c0_i32_0 : i32, i32
  }
  func.func @transform_11(%arg0: i32) -> (i32, i32) {
    %c0_i32 = arith.constant 0 : i32
    %c0_i32_0 = arith.constant 0 : i32
    %c0_i32_1 = arith.constant 0 : i32
    return %c0_i32, %c0_i32_0 : i32, i32
  }
  func.func @transform_12(%arg0: i32) -> (i32, i32) {
    %c0_i32 = arith.constant 0 : i32
    %c0_i32_0 = arith.constant 0 : i32
    %c0_i32_1 = arith.constant 0 : i32
    return %c0_i32, %c0_i32_0 : i32, i32
  }
  func.func @transform_13(%arg0: i32) -> (i32, i32) {
    %c0_i32 = arith.constant 0 : i32
    %c0_i32_0 = arith.constant 0 : i32
    %c0_i32_1 = arith.constant 0 : i32
    return %c0_i32, %c0_i32_0 : i32, i32
  }
  func.func @transform_14(%arg0: i32) -> (i32, i32) {
    %c0_i32 = arith.constant 0 : i32
    %c0_i32_0 = arith.constant 0 : i32
    %c0_i32_1 = arith.constant 0 : i32
    return %c0_i32, %c0_i32_0 : i32, i32
  }
  func.func @transform_15(%arg0: i32) -> (i32, i32) {
    %c0_i32 = arith.constant 0 : i32
    %c0_i32_0 = arith.constant 0 : i32
    %c0_i32_1 = arith.constant 0 : i32
    return %c0_i32, %c0_i32_0 : i32, i32
  }
}

</mosaic_0001>

<llo_original>
// kernel: tpu_custom_call.1
$region0: #{tpu_custom_call.1}
  #allocation0 [shape = 'u32[]', space=smem, size = 0x4, offset = 0x4, fixed_abs, tag = 'smem constant byte address 0x4 - core index']
  #allocation1 [shape = 'u32[144,128]{1,0:T(1,128)}', space=vmem, size = 0x12000, scoped, tag = 'internal scratch']
  #allocation2 [shape = 'f32[4,6,12,4]{3,2,1,0:T(8,128)}', space=vmem, size = 0x30000, scoped, tag = 'scratch operand']
  #allocation3 [shape = 'f32[2,128]{1,0:T(2,128)}', space=vmem, size = 0x400, scoped, tag = 'scratch operand']
  %s0 = inlined_call_operand.vmem [shape: f32[16,6,12,3], index: 0, kind: input, shape index: {}]
  %s1 = inlined_call_operand.vmem [shape: f32[9,3,4], index: 1, kind: input, shape index: {}]
  %s2 = inlined_call_operand.vmem [shape: f32[1,4], index: 2, kind: input, shape index: {}]
  %s3 = inlined_call_operand.vmem [shape: f32[1,4], index: 3, kind: input, shape index: {}]
  %s4 = inlined_call_operand.vmem [shape: f32[9,4,8], index: 4, kind: input, shape index: {}]
  %s5 = inlined_call_operand.vmem [shape: f32[1,8], index: 5, kind: input, shape index: {}]
  %s6 = inlined_call_operand.vmem [shape: f32[1,8], index: 6, kind: input, shape index: {}]
  %s7 = inlined_call_operand.vmem [shape: f32[128,32], index: 7, kind: input, shape index: {}]
  %s8 = inlined_call_operand.vmem [shape: f32[1,32], index: 8, kind: input, shape index: {}]
  %s9 = inlined_call_operand.vmem [shape: f32[1,32], index: 9, kind: input, shape index: {}]
  %s10 = inlined_call_operand.vmem [shape: f32[32,16], index: 10, kind: input, shape index: {}]
  %s11 = inlined_call_operand.vmem [shape: f32[1,16], index: 11, kind: input, shape index: {}]
  %s12 = inlined_call_operand.vmem [shape: f32[1,16], index: 12, kind: input, shape index: {}]
  %s13 = inlined_call_operand.vmem [shape: f32[16,2], index: 13, kind: input, shape index: {}]
  %s14 = inlined_call_operand.vmem [shape: f32[1,2], index: 14, kind: input, shape index: {}]
  %s15 = inlined_call_operand.hbm [shape: f32[2,2], index: 15, kind: output, shape index: {}]
  %s16 = sld [smem:[#allocation0]]
  $region70: #{tpu_custom_call.1} parent=0
    _
  %s18 = ssub.s32 1, %s16
  %s19 = scalar_select 0, %s18, %s16
  $region1: #{tpu_custom_call.1} parent=0
    #allocation4 [shape = 'u8[1024]{0}', space=vmem, size = 0x400, scoped, tag = 'output window, operand 0, single buffered']
    #allocation5 [shape = 's32[1]{0}', space=sflag, size = 0x4, scoped, tag = 'scoped memory for tpu_custom_call.1']
    %20 = vsyncpa [#allocation5], 0
    // Predicated region
    $region2: #{tpu_custom_call.1} parent=1 // pred_check
      _
    $region3: #{tpu_custom_call.1} parent=1 // pred_check_branch
      %22 = sbr.rel (0) target = $region5
    $region4: #{tpu_custom_call.1} parent=1 // pred_region
      _
    $region5: #{tpu_custom_call.1} parent=1 // pred_fallthru
      _
    // Predicated region
    $region6: #{tpu_custom_call.1} parent=1 // pred_check
      _
    $region7: #{tpu_custom_call.1} parent=1 // pred_check_branch
      %24 = sbr.rel (0) target = $region9
    $region8: #{tpu_custom_call.1} parent=1 // pred_region
      _
    $region9: #{tpu_custom_call.1} parent=1 // pred_fallthru
      _
    // Predicated region
    $region10: #{tpu_custom_call.1} parent=1 // pred_check
      _
    $region11: #{tpu_custom_call.1} parent=1 // pred_check_branch
      %26 = sbr.rel (0) target = $region13
    $region12: #{tpu_custom_call.1} parent=1 // pred_region
      _
    $region13: #{tpu_custom_call.1} parent=1 // pred_fallthru
      _
    // Predicated region
    $region14: #{tpu_custom_call.1} parent=1 // pred_check
      _
    $region15: #{tpu_custom_call.1} parent=1 // pred_check_branch
      %28 = sbr.rel (0) target = $region17
    $region16: #{tpu_custom_call.1} parent=1 // pred_region
      _
    $region17: #{tpu_custom_call.1} parent=1 // pred_fallthru
      _
    // Predicated region
    $region18: #{tpu_custom_call.1} parent=1 // pred_check
      _
    $region19: #{tpu_custom_call.1} parent=1 // pred_check_branch
      %30 = sbr.rel (0) target = $region21
    $region20: #{tpu_custom_call.1} parent=1 // pred_region
      _
    $region21: #{tpu_custom_call.1} parent=1 // pred_fallthru
      _
    // Predicated region
    $region22: #{tpu_custom_call.1} parent=1 // pred_check
      _
    $region23: #{tpu_custom_call.1} parent=1 // pred_check_branch
      %32 = sbr.rel (0) target = $region25
    $region24: #{tpu_custom_call.1} parent=1 // pred_region
      _
    $region25: #{tpu_custom_call.1} parent=1 // pred_fallthru
      _
    // Predicated region
    $region26: #{tpu_custom_call.1} parent=1 // pred_check
      _
    $region27: #{tpu_custom_call.1} parent=1 // pred_check_branch
      %34 = sbr.rel (0) target = $region29
    $region28: #{tpu_custom_call.1} parent=1 // pred_region
      _
    $region29: #{tpu_custom_call.1} parent=1 // pred_fallthru
      _
    // Predicated region
    $region30: #{tpu_custom_call.1} parent=1 // pred_check
      _
    $region31: #{tpu_custom_call.1} parent=1 // pred_check_branch
      %36 = sbr.rel (0) target = $region33
    $region32: #{tpu_custom_call.1} parent=1 // pred_region
      _
    $region33: #{tpu_custom_call.1} parent=1 // pred_fallthru
      _
    // Predicated region
    $region34: #{tpu_custom_call.1} parent=1 // pred_check
      _
    $region35: #{tpu_custom_call.1} parent=1 // pred_check_branch
      %38 = sbr.rel (0) target = $region37
    $region36: #{tpu_custom_call.1} parent=1 // pred_region
      _
    $region37: #{tpu_custom_call.1} parent=1 // pred_fallthru
      _
    // Predicated region
    $region38: #{tpu_custom_call.1} parent=1 // pred_check
      _
    $region39: #{tpu_custom_call.1} parent=1 // pred_check_branch
      %40 = sbr.rel (0) target = $region41
    $region40: #{tpu_custom_call.1} parent=1 // pred_region
      _
    $region41: #{tpu_custom_call.1} parent=1 // pred_fallthru
      _
    // Predicated region
    $region42: #{tpu_custom_call.1} parent=1 // pred_check
      _
    $region43: #{tpu_custom_call.1} parent=1 // pred_check_branch
      %42 = sbr.rel (0) target = $region45
    $region44: #{tpu_custom_call.1} parent=1 // pred_region
      _
    $region45: #{tpu_custom_call.1} parent=1 // pred_fallthru
      _
    // Predicated region
    $region46: #{tpu_custom_call.1} parent=1 // pred_check
      _
    $region47: #{tpu_custom_call.1} parent=1 // pred_check_branch
      %44 = sbr.rel (0) target = $region49
    $region48: #{tpu_custom_call.1} parent=1 // pred_region
      _
    $region49: #{tpu_custom_call.1} parent=1 // pred_fallthru
      _
    // Predicated region
    $region50: #{tpu_custom_call.1} parent=1 // pred_check
      _
    $region51: #{tpu_custom_call.1} parent=1 // pred_check_branch
      %46 = sbr.rel (0) target = $region53
    $region52: #{tpu_custom_call.1} parent=1 // pred_region
      _
    $region53: #{tpu_custom_call.1} parent=1 // pred_fallthru
      _
    // Predicated region
    $region54: #{tpu_custom_call.1} parent=1 // pred_check
      _
    $region55: #{tpu_custom_call.1} parent=1 // pred_check_branch
      %48 = sbr.rel (0) target = $region57
    $region56: #{tpu_custom_call.1} parent=1 // pred_region
      _
    $region57: #{tpu_custom_call.1} parent=1 // pred_fallthru
      _
    // Predicated region
    $region58: #{tpu_custom_call.1} parent=1 // pred_check
      _
    $region59: #{tpu_custom_call.1} parent=1 // pred_check_branch
      %50 = sbr.rel (0) target = $region61
    $region60: #{tpu_custom_call.1} parent=1 // pred_region
      _
    $region61: #{tpu_custom_call.1} parent=1 // pred_fallthru
      _
    %s51 = scalar_lea.vmem %s0, 1440
    %v52 = vld [vmem:[%s51] sm:$0xff]
    %v53 = vld [vmem:[%s51 + $0x10] sm:$0xff]
    %v54 = vld [vmem:[%s51 + $0x20] sm:$0xff]
    %v55 = vld [vmem:[%s51 + $0x30] sm:$0xff]
    %s56 = scalar_lea.vmem %s0, 1152
    %v57 = vld [vmem:[%s56 + $0x2] sm:$0xff]
    %v58 = vld [vmem:[%s56 + $0x12] sm:$0xff]
    %v59 = vld [vmem:[%s56 + $0x22] sm:$0xff]
    %v60 = vld [vmem:[%s56 + $0x32] sm:$0xff]
    %s61 = scalar_lea.vmem %s0, 1248
    %v62 = vld [vmem:[%s61 + $0x2] sm:$0xff]
    %v63 = vld [vmem:[%s61 + $0x12] sm:$0xff]
    %v64 = vld [vmem:[%s61 + $0x22] sm:$0xff]
    %v65 = vld [vmem:[%s61 + $0x32] sm:$0xff]
    %s66 = scalar_lea.vmem %s0, 1344
    %v67 = vld [vmem:[%s66 + $0x2] sm:$0xff]
    %v68 = vld [vmem:[%s66 + $0x12] sm:$0xff]
    %v69 = vld [vmem:[%s66 + $0x22] sm:$0xff]
    %v70 = vld [vmem:[%s66 + $0x32] sm:$0xff]
    %s71 = scalar_lea.vmem %s0, 304
    %v72 = vld [vmem:[%s71] sm:$0xff]
    %v73 = vld [vmem:[%s71 + $0x10] sm:$0xff]
    %v74 = vld [vmem:[%s71 + $0x20] sm:$0xff]
    %v75 = vld [vmem:[%s71 + $0x30] sm:$0xff]
    %s76 = scalar_lea.vmem %s0, 16
    %v77 = vld [vmem:[%s76 + $0x2] sm:$0xff]
    %v78 = vld [vmem:[%s76 + $0x12] sm:$0xff]
    %v79 = vld [vmem:[%s76 + $0x22] sm:$0xff]
    %v80 = vld [vmem:[%s76 + $0x32] sm:$0xff]
    %s81 = scalar_lea.vmem %s0, 112
    %v82 = vld [vmem:[%s81 + $0x2] sm:$0xff]
    %v83 = vld [vmem:[%s81 + $0x12] sm:$0xff]
    %v84 = vld [vmem:[%s81 + $0x22] sm:$0xff]
    %v85 = vld [vmem:[%s81 + $0x32] sm:$0xff]
    %s86 = scalar_lea.vmem %s0, 208
    %v87 = vld [vmem:[%s86 + $0x2] sm:$0xff]
    %v88 = vld [vmem:[%s86 + $0x12] sm:$0xff]
    %v89 = vld [vmem:[%s86 + $0x22] sm:$0xff]
    %v90 = vld [vmem:[%s86 + $0x32] sm:$0xff]
    %s91 = scalar_lea.vmem %s0, 688
    %v92 = vld [vmem:[%s91] sm:$0xff]
    %v93 = vld [vmem:[%s91 + $0x10] sm:$0xff]
    %v94 = vld [vmem:[%s91 + $0x20] sm:$0xff]
    %v95 = vld [vmem:[%s91 + $0x30] sm:$0xff]
    %s96 = scalar_lea.vmem %s0, 400
    %v97 = vld [vmem:[%s96 + $0x2] sm:$0xff]
    %v98 = vld [vmem:[%s96 + $0x12] sm:$0xff]
    %v99 = vld [vmem:[%s96 + $0x22] sm:$0xff]
    %v100 = vld [vmem:[%s96 + $0x32] sm:$0xff]
    %s101 = scalar_lea.vmem %s0, 496
    %v102 = vld [vmem:[%s101 + $0x2] sm:$0xff]
    %v103 = vld [vmem:[%s101 + $0x12] sm:$0xff]
    %v104 = vld [vmem:[%s101 + $0x22] sm:$0xff]
    %v105 = vld [vmem:[%s101 + $0x32] sm:$0xff]
    %s106 = scalar_lea.vmem %s0, 592
    %v107 = vld [vmem:[%s106 + $0x2] sm:$0xff]
    %v108 = vld [vmem:[%s106 + $0x12] sm:$0xff]
    %v109 = vld [vmem:[%s106 + $0x22] sm:$0xff]
    %v110 = vld [vmem:[%s106 + $0x32] sm:$0xff]
    %s111 = scalar_lea.vmem %s0, 1072
    %v112 = vld [vmem:[%s111] sm:$0xff]
    %v113 = vld [vmem:[%s111 + $0x10] sm:$0xff]
    %v114 = vld [vmem:[%s111 + $0x20] sm:$0xff]
    %v115 = vld [vmem:[%s111 + $0x30] sm:$0xff]
    %s116 = scalar_lea.vmem %s0, 784
    %v117 = vld [vmem:[%s116 + $0x2] sm:$0xff]
    %v118 = vld [vmem:[%s116 + $0x12] sm:$0xff]
    %v119 = vld [vmem:[%s116 + $0x22] sm:$0xff]
    %v120 = vld [vmem:[%s116 + $0x32] sm:$0xff]
    %s121 = scalar_lea.vmem %s0, 880
    %v122 = vld [vmem:[%s121 + $0x2] sm:$0xff]
    %v123 = vld [vmem:[%s121 + $0x12] sm:$0xff]
    %v124 = vld [vmem:[%s121 + $0x22] sm:$0xff]
    %v125 = vld [vmem:[%s121 + $0x32] sm:$0xff]
    %s126 = scalar_lea.vmem %s0, 976
    %v127 = vld [vmem:[%s126 + $0x2] sm:$0xff]
    %v128 = vld [vmem:[%s126 + $0x12] sm:$0xff]
    %v129 = vld [vmem:[%s126 + $0x22] sm:$0xff]
    %v130 = vld [vmem:[%s126 + $0x32] sm:$0xff]
    %v131 = vld [vmem:[%s1] sm:$0x7]
    %v132 = vld [vmem:[%s51 + $0x2] sm:$0xff]
    %v133 = vld [vmem:[%s51 + $0x12] sm:$0xff]
    %v134 = vld [vmem:[%s51 + $0x22] sm:$0xff]
    %v135 = vld [vmem:[%s51 + $0x32] sm:$0xff]
    %v136 = vld [vmem:[%s71 + $0x2] sm:$0xff]
    %v137 = vld [vmem:[%s71 + $0x12] sm:$0xff]
    %v138 = vld [vmem:[%s71 + $0x22] sm:$0xff]
    %v139 = vld [vmem:[%s71 + $0x32] sm:$0xff]
    %v140 = vld [vmem:[%s91 + $0x2] sm:$0xff]
    %v141 = vld [vmem:[%s91 + $0x12] sm:$0xff]
    %v142 = vld [vmem:[%s91 + $0x22] sm:$0xff]
    %v143 = vld [vmem:[%s91 + $0x32] sm:$0xff]
    %v144 = vld [vmem:[%s111 + $0x2] sm:$0xff]
    %v145 = vld [vmem:[%s111 + $0x12] sm:$0xff]
    %v146 = vld [vmem:[%s111 + $0x22] sm:$0xff]
    %v147 = vld [vmem:[%s111 + $0x32] sm:$0xff]
    %s148 = scalar_lea.vmem %s1, 4
    %v149 = vld [vmem:[%s148] sm:$0x7]
    %vm150 = vcmask 23552
    %v152 = vsel %vm150, %v57, 0
    %v155 = vsel %vm150, %v58, 0
    %v158 = vsel %vm150, %v59, 0
    %v161 = vsel %vm150, %v60, 0
    %v164 = vsel %vm150, %v62, 0
    %v167 = vsel %vm150, %v63, 0
    %v170 = vsel %vm150, %v64, 0
    %v173 = vsel %vm150, %v65, 0
    %v176 = vsel %vm150, %v67, 0
    %v179 = vsel %vm150, %v68, 0
    %v182 = vsel %vm150, %v69, 0
    %v185 = vsel %vm150, %v70, 0
    %v188 = vsel %vm150, %v132, 0
    %v191 = vsel %vm150, %v133, 0
    %v194 = vsel %vm150, %v134, 0
    %v197 = vsel %vm150, %v135, 0
    %v200 = vsel %vm150, %v77, 0
    %v203 = vsel %vm150, %v78, 0
    %v206 = vsel %vm150, %v79, 0
    %v209 = vsel %vm150, %v80, 0
    %v212 = vsel %vm150, %v82, 0
    %v215 = vsel %vm150, %v83, 0
    %v218 = vsel %vm150, %v84, 0
    %v221 = vsel %vm150, %v85, 0
    %v224 = vsel %vm150, %v87, 0
    %v227 = vsel %vm150, %v88, 0
    %v230 = vsel %vm150, %v89, 0
    %v233 = vsel %vm150, %v90, 0
    %v236 = vsel %vm150, %v136, 0
    %v239 = vsel %vm150, %v137, 0
    %v242 = vsel %vm150, %v138, 0
    %v245 = vsel %vm150, %v139, 0
    %v248 = vsel %vm150, %v97, 0
    %v251 = vsel %vm150, %v98, 0
    %v254 = vsel %vm150, %v99, 0
    %v257 = vsel %vm150, %v100, 0
    %v260 = vsel %vm150, %v102, 0
    %v263 = vsel %vm150, %v103, 0
    %v266 = vsel %vm150, %v104, 0
    %v269 = vsel %vm150, %v105, 0
    %v272 = vsel %vm150, %v107, 0
    %v275 = vsel %vm150, %v108, 0
    %v278 = vsel %vm150, %v109, 0
    %v281 = vsel %vm150, %v110, 0
    %v284 = vsel %vm150, %v140, 0
    %v287 = vsel %vm150, %v141, 0
    %v290 = vsel %vm150, %v142, 0
    %v293 = vsel %vm150, %v143, 0
    %v296 = vsel %vm150, %v117, 0
    %v299 = vsel %vm150, %v118, 0
    %v302 = vsel %vm150, %v119, 0
    %v305 = vsel %vm150, %v120, 0
    %v308 = vsel %vm150, %v122, 0
    %v311 = vsel %vm150, %v123, 0
    %v314 = vsel %vm150, %v124, 0
    %v317 = vsel %vm150, %v125, 0
    %v320 = vsel %vm150, %v127, 0
    %v323 = vsel %vm150, %v128, 0
    %v326 = vsel %vm150, %v129, 0
    %v329 = vsel %vm150, %v130, 0
    %v332 = vsel %vm150, %v144, 0
    %v335 = vsel %vm150, %v145, 0
    %v338 = vsel %vm150, %v146, 0
    %v341 = vsel %vm150, %v147, 0
    %vm343 = vcmask 1042432
    %v345 = vsel %vm343, %v149, 0
    %347 = vmatprep.subr.mxu0 0.0
    %348 = vmatpush1.msra.mxu0 0.0
    %349 = vmatprep.subr.mxu0 0.0
    %350 = vmatpush1.msra.mxu0 0.0
    %351 = vmatprep.subr.mxu0 0.0
    %352 = vmatpush1.msra.mxu0 0.0
    %353 = vmatprep.subr.mxu0 0.0
    %354 = vmatpush1.msra.mxu0 0.0
    %355 = vmatprep.subr.mxu0 0.0
    %356 = vmatpush1.msra.mxu0 0.0
    %357 = vmatprep.subr.mxu0 0.0
    %358 = vmatpush1.msra.mxu0 0.0
    %359 = vmatprep.subr.mxu0 0.0
    %360 = vmatpush1.msra.mxu0 0.0
    %361 = vmatprep.subr.mxu0 0.0
    %362 = vmatpush1.msra.mxu0 0.0
    %363 = vmatprep.subr.mxu0 0.0
    %364 = vmatpush1.msra.mxu0 0.0
    %365 = vmatprep.subr.mxu0 0.0
    %366 = vmatpush1.msra.mxu0 0.0
    %367 = vmatprep.subr.mxu0 0.0
    %368 = vmatpush1.msra.mxu0 0.0
    %369 = vmatprep.subr.mxu0 0.0
    %370 = vmatpush1.msra.mxu0 0.0
    %371 = vmatprep.subr.mxu0 0.0
    %372 = vmatpush1.msra.mxu0 0.0
    %373 = vmatprep.subr.mxu0 0.0
    %374 = vmatpush1.msra.mxu0 0.0
    %375 = vmatprep.subr.mxu0 0.0
    %376 = vmatpush1.msra.mxu0 0.0
    %377 = vmatprep.subr.mxu0 0.0
    %378 = vmatpush1.msra.mxu0 %v345
    %379 = vmatprep.subr.mxu0 0.0
    %380 = vmatpush2.msra.mxu0 0.0
    %381 = vmatprep.subr.mxu0 0.0
    %382 = vmatpush2.msra.mxu0 0.0
    %383 = vmatprep.subr.mxu0 0.0
    %384 = vmatpush2.msra.mxu0 0.0
    %385 = vmatprep.subr.mxu0 0.0
    %386 = vmatpush2.msra.mxu0 0.0
    %387 = vmatprep.subr.mxu0 0.0
    %388 = vmatpush2.msra.mxu0 0.0
    %389 = vmatprep.subr.mxu0 0.0
    %390 = vmatpush2.msra.mxu0 0.0
    %391 = vmatprep.subr.mxu0 0.0
    %392 = vmatpush2.msra.mxu0 0.0
    %393 = vmatprep.subr.mxu0 0.0
    %394 = vmatpush2.msra.mxu0 0.0
    %395 = vmatprep.subr.mxu0 0.0
    %396 = vmatpush2.msra.mxu0 0.0
    %397 = vmatprep.subr.mxu0 0.0
    %398 = vmatpush2.msra.mxu0 0.0
    %399 = vmatprep.subr.mxu0 0.0
    %400 = vmatpush2.msra.mxu0 0.0
    %401 = vmatprep.subr.mxu0 0.0
    %402 = vmatpush2.msra.mxu0 0.0
    %403 = vmatprep.subr.mxu0 0.0
    %404 = vmatpush2.msra.mxu0 0.0
    %405 = vmatprep.subr.mxu0 0.0
    %406 = vmatpush2.msra.mxu0 0.0
    %407 = vmatprep.subr.mxu0 0.0
    %408 = vmatpush2.msra.mxu0 0.0
    %409 = vmatprep.subr.mxu0 0.0
    %410 = vmatpush2.msra.mxu0 0.0
    %411 = vmatprep.mubr.f32.mxu0 0.0
    %412 = vmatmul.mubr.f32.gmra.mxu0 %v152
    %v413 = vpop.f32.mrf.mxu0
    %v414 = vadd.f32 0.0, %v413
    %v415 = vpop.f32.mrf.mxu0
    %416 = vmatprep.mubr.f32.mxu0 0.0
    %417 = vmatmul.mubr.f32.gmra.mxu0 %v155
    %v418 = vpop.f32.mrf.mxu0
    %v419 = vadd.f32 0.0, %v418
    %v420 = vpop.f32.mrf.mxu0
    %421 = vmatprep.mubr.f32.mxu0 0.0
    %422 = vmatmul.mubr.f32.gmra.mxu0 %v158
    %v423 = vpop.f32.mrf.mxu0
    %v424 = vadd.f32 0.0, %v423
    %v425 = vpop.f32.mrf.mxu0
    %426 = vmatprep.mubr.f32.mxu0 0.0
    %427 = vmatmul.mubr.f32.gmra.mxu0 %v161
    %v428 = vpop.f32.mrf.mxu0
    %v429 = vadd.f32 0.0, %v428
    %v430 = vpop.f32.mrf.mxu0
    %431 = vmatprep.mubr.f32.mxu0 0.0
    %432 = vmatmul.mubr.f32.gmra.mxu0 %v164
    %v433 = vpop.f32.mrf.mxu0
    %v434 = vadd.f32 0.0, %v433
    %v435 = vpop.f32.mrf.mxu0
    %436 = vmatprep.mubr.f32.mxu0 0.0
    %437 = vmatmul.mubr.f32.gmra.mxu0 %v167
    %v438 = vpop.f32.mrf.mxu0
    %v439 = vadd.f32 0.0, %v438
    %v440 = vpop.f32.mrf.mxu0
    %441 = vmatprep.mubr.f32.mxu0 0.0
    %442 = vmatmul.mubr.f32.gmra.mxu0 %v170
    %v443 = vpop.f32.mrf.mxu0
    %v444 = vadd.f32 0.0, %v443
    %v445 = vpop.f32.mrf.mxu0
    %446 = vmatprep.mubr.f32.mxu0 0.0
    %447 = vmatmul.mubr.f32.gmra.mxu0 %v173
    %v448 = vpop.f32.mrf.mxu0
    %v449 = vadd.f32 0.0, %v448
    %v450 = vpop.f32.mrf.mxu0
    %451 = vmatprep.mubr.f32.mxu0 0.0
    %452 = vmatmul.mubr.f32.gmra.mxu0 %v176
    %v453 = vpop.f32.mrf.mxu0
    %v454 = vadd.f32 0.0, %v453
    %v455 = vpop.f32.mrf.mxu0
    %456 = vmatprep.mubr.f32.mxu0 0.0
    %457 = vmatmul.mubr.f32.gmra.mxu0 %v179
    %v458 = vpop.f32.mrf.mxu0
    %v459 = vadd.f32 0.0, %v458
    %v460 = vpop.f32.mrf.mxu0
    %461 = vmatprep.mubr.f32.mxu0 0.0
    %462 = vmatmul.mubr.f32.gmra.mxu0 %v182
    %v463 = vpop.f32.mrf.mxu0
    %v464 = vadd.f32 0.0, %v463
    %v465 = vpop.f32.mrf.mxu0
    %466 = vmatprep.mubr.f32.mxu0 0.0
    %467 = vmatmul.mubr.f32.gmra.mxu0 %v185
    %v468 = vpop.f32.mrf.mxu0
    %v469 = vadd.f32 0.0, %v468
    %v470 = vpop.f32.mrf.mxu0
    %471 = vmatprep.mubr.f32.mxu0 0.0
    %472 = vmatmul.mubr.f32.gmra.mxu0 %v188
    %v473 = vpop.f32.mrf.mxu0
    %v474 = vadd.f32 0.0, %v473
    %v475 = vpop.f32.mrf.mxu0
    %476 = vmatprep.mubr.f32.mxu0 0.0
    %477 = vmatmul.mubr.f32.gmra.mxu0 %v191
    %v478 = vpop.f32.mrf.mxu0
    %v479 = vadd.f32 0.0, %v478
    %v480 = vpop.f32.mrf.mxu0
    %481 = vmatprep.mubr.f32.mxu0 0.0
    %482 = vmatmul.mubr.f32.gmra.mxu0 %v194
    %v483 = vpop.f32.mrf.mxu0
    %v484 = vadd.f32 0.0, %v483
    %v485 = vpop.f32.mrf.mxu0
    %486 = vmatprep.mubr.f32.mxu0 0.0
    %487 = vmatmul.mubr.f32.gmra.mxu0 %v197
    %v488 = vpop.f32.mrf.mxu0
    %v489 = vadd.f32 0.0, %v488
    %v490 = vpop.f32.mrf.mxu0
    %491 = vmatprep.mubr.f32.mxu0 0.0
    %492 = vmatmul.mubr.f32.gmra.mxu0 %v200
    %v493 = vpop.f32.mrf.mxu0
    %v494 = vadd.f32 0.0, %v493
    %v495 = vpop.f32.mrf.mxu0
    %496 = vmatprep.mubr.f32.mxu0 0.0
    %497 = vmatmul.mubr.f32.gmra.mxu0 %v203
    %v498 = vpop.f32.mrf.mxu0
    %v499 = vadd.f32 0.0, %v498
    %v500 = vpop.f32.mrf.mxu0
    %501 = vmatprep.mubr.f32.mxu0 0.0
    %502 = vmatmul.mubr.f32.gmra.mxu0 %v206
    %v503 = vpop.f32.mrf.mxu0
    %v504 = vadd.f32 0.0, %v503
    %v505 = vpop.f32.mrf.mxu0
    %506 = vmatprep.mubr.f32.mxu0 0.0
    %507 = vmatmul.mubr.f32.gmra.mxu0 %v209
    %v508 = vpop.f32.mrf.mxu0
    %v509 = vadd.f32 0.0, %v508
    %v510 = vpop.f32.mrf.mxu0
    %511 = vmatprep.mubr.f32.mxu0 0.0
    %512 = vmatmul.mubr.f32.gmra.mxu0 %v212
    %v513 = vpop.f32.mrf.mxu0
    %v514 = vadd.f32 0.0, %v513
    %v515 = vpop.f32.mrf.mxu0
    %516 = vmatprep.mubr.f32.mxu0 0.0
    %517 = vmatmul.mubr.f32.gmra.mxu0 %v215
    %v518 = vpop.f32.mrf.mxu0
    %v519 = vadd.f32 0.0, %v518
    %v520 = vpop.f32.mrf.mxu0
    %521 = vmatprep.mubr.f32.mxu0 0.0
    %522 = vmatmul.mubr.f32.gmra.mxu0 %v218
    %v523 = vpop.f32.mrf.mxu0
    %v524 = vadd.f32 0.0, %v523
    %v525 = vpop.f32.mrf.mxu0
    %526 = vmatprep.mubr.f32.mxu0 0.0
    %527 = vmatmul.mubr.f32.gmra.mxu0 %v221
    %v528 = vpop.f32.mrf.mxu0
    %v529 = vadd.f32 0.0, %v528
    %v530 = vpop.f32.mrf.mxu0
    %531 = vmatprep.mubr.f32.mxu0 0.0
    %532 = vmatmul.mubr.f32.gmra.mxu0 %v224
    %v533 = vpop.f32.mrf.mxu0
    %v534 = vadd.f32 0.0, %v533
    %v535 = vpop.f32.mrf.mxu0
    %536 = vmatprep.mubr.f32.mxu0 0.0
    %537 = vmatmul.mubr.f32.gmra.mxu0 %v227
    %v538 = vpop.f32.mrf.mxu0
    %v539 = vadd.f32 0.0, %v538
    %v540 = vpop.f32.mrf.mxu0
    %541 = vmatprep.mubr.f32.mxu0 0.0
    %542 = vmatmul.mubr.f32.gmra.mxu0 %v230
    %v543 = vpop.f32.mrf.mxu0
    %v544 = vadd.f32 0.0, %v543
    %v545 = vpop.f32.mrf.mxu0
    %546 = vmatprep.mubr.f32.mxu0 0.0
    %547 = vmatmul.mubr.f32.gmra.mxu0 %v233
    %v548 = vpop.f32.mrf.mxu0
    %v549 = vadd.f32 0.0, %v548
    %v550 = vpop.f32.mrf.mxu0
    %551 = vmatprep.mubr.f32.mxu0 0.0
    %552 = vmatmul.mubr.f32.gmra.mxu0 %v236
    %v553 = vpop.f32.mrf.mxu0
    %v554 = vadd.f32 0.0, %v553
    %v555 = vpop.f32.mrf.mxu0
    %556 = vmatprep.mubr.f32.mxu0 0.0
    %557 = vmatmul.mubr.f32.gmra.mxu0 %v239
    %v558 = vpop.f32.mrf.mxu0
    %v559 = vadd.f32 0.0, %v558
    %v560 = vpop.f32.mrf.mxu0
    %561 = vmatprep.mubr.f32.mxu0 0.0
    %562 = vmatmul.mubr.f32.gmra.mxu0 %v242
    %v563 = vpop.f32.mrf.mxu0
    %v564 = vadd.f32 0.0, %v563
    %v565 = vpop.f32.mrf.mxu0
    %566 = vmatprep.mubr.f32.mxu0 0.0
    %567 = vmatmul.mubr.f32.gmra.mxu0 %v245
    %v568 = vpop.f32.mrf.mxu0
    %v569 = vadd.f32 0.0, %v568
    %v570 = vpop.f32.mrf.mxu0
    %571 = vmatprep.mubr.f32.mxu0 0.0
    %572 = vmatmul.mubr.f32.gmra.mxu0 %v248
    %v573 = vpop.f32.mrf.mxu0
    %v574 = vadd.f32 0.0, %v573
    %v575 = vpop.f32.mrf.mxu0
    %576 = vmatprep.mubr.f32.mxu0 0.0
    %577 = vmatmul.mubr.f32.gmra.mxu0 %v251
    %v578 = vpop.f32.mrf.mxu0
    %v579 = vadd.f32 0.0, %v578
    %v580 = vpop.f32.mrf.mxu0
    %581 = vmatprep.mubr.f32.mxu0 0.0
    %582 = vmatmul.mubr.f32.gmra.mxu0 %v254
    %v583 = vpop.f32.mrf.mxu0
    %v584 = vadd.f32 0.0, %v583
    %v585 = vpop.f32.mrf.mxu0
    %586 = vmatprep.mubr.f32.mxu0 0.0
    %587 = vmatmul.mubr.f32.gmra.mxu0 %v257
    %v588 = vpop.f32.mrf.mxu0
    %v589 = vadd.f32 0.0, %v588
    %v590 = vpop.f32.mrf.mxu0
    %591 = vmatprep.mubr.f32.mxu0 0.0
    %592 = vmatmul.mubr.f32.gmra.mxu0 %v260
    %v593 = vpop.f32.mrf.mxu0
    %v594 = vadd.f32 0.0, %v593
    %v595 = vpop.f32.mrf.mxu0
    %596 = vmatprep.mubr.f32.mxu0 0.0
    %597 = vmatmul.mubr.f32.gmra.mxu0 %v263
    %v598 = vpop.f32.mrf.mxu0
    %v599 = vadd.f32 0.0, %v598
    %v600 = vpop.f32.mrf.mxu0
    %601 = vmatprep.mubr.f32.mxu0 0.0
    %602 = vmatmul.mubr.f32.gmra.mxu0 %v266
    %v603 = vpop.f32.mrf.mxu0
    %v604 = vadd.f32 0.0, %v603
    %v605 = vpop.f32.mrf.mxu0
    %606 = vmatprep.mubr.f32.mxu0 0.0
    %607 = vmatmul.mubr.f32.gmra.mxu0 %v269
    %v608 = vpop.f32.mrf.mxu0
    %v609 = vadd.f32 0.0, %v608
    %v610 = vpop.f32.mrf.mxu0
    %611 = vmatprep.mubr.f32.mxu0 0.0
    %612 = vmatmul.mubr.f32.gmra.mxu0 %v272
    %v613 = vpop.f32.mrf.mxu0
    %v614 = vadd.f32 0.0, %v613
    %v615 = vpop.f32.mrf.mxu0
    %616 = vmatprep.mubr.f32.mxu0 0.0
    %617 = vmatmul.mubr.f32.gmra.mxu0 %v275
    %v618 = vpop.f32.mrf.mxu0
    %v619 = vadd.f32 0.0, %v618
    %v620 = vpop.f32.mrf.mxu0
    %621 = vmatprep.mubr.f32.mxu0 0.0
    %622 = vmatmul.mubr.f32.gmra.mxu0 %v278
    %v623 = vpop.f32.mrf.mxu0
    %v624 = vadd.f32 0.0, %v623
    %v625 = vpop.f32.mrf.mxu0
    %626 = vmatprep.mubr.f32.mxu0 0.0
    %627 = vmatmul.mubr.f32.gmra.mxu0 %v281
    %v628 = vpop.f32.mrf.mxu0
    %v629 = vadd.f32 0.0, %v628
    %v630 = vpop.f32.mrf.mxu0
    %631 = vmatprep.mubr.f32.mxu0 0.0
    %632 = vmatmul.mubr.f32.gmra.mxu0 %v284
    %v633 = vpop.f32.mrf.mxu0
    %v634 = vadd.f32 0.0, %v633
    %v635 = vpop.f32.mrf.mxu0
    %636 = vmatprep.mubr.f32.mxu0 0.0
    %637 = vmatmul.mubr.f32.gmra.mxu0 %v287
    %v638 = vpop.f32.mrf.mxu0
    %v639 = vadd.f32 0.0, %v638
    %v640 = vpop.f32.mrf.mxu0
    %641 = vmatprep.mubr.f32.mxu0 0.0
    %642 = vmatmul.mubr.f32.gmra.mxu0 %v290
    %v643 = vpop.f32.mrf.mxu0
    %v644 = vadd.f32 0.0, %v643
    %v645 = vpop.f32.mrf.mxu0
    %646 = vmatprep.mubr.f32.mxu0 0.0
    %647 = vmatmul.mubr.f32.gmra.mxu0 %v293
    %v648 = vpop.f32.mrf.mxu0
    %v649 = vadd.f32 0.0, %v648
    %v650 = vpop.f32.mrf.mxu0
    %651 = vmatprep.mubr.f32.mxu0 0.0
    %652 = vmatmul.mubr.f32.gmra.mxu0 %v296
    %v653 = vpop.f32.mrf.mxu0
    %v654 = vadd.f32 0.0, %v653
    %v655 = vpop.f32.mrf.mxu0
    %656 = vmatprep.mubr.f32.mxu0 0.0
    %657 = vmatmul.mubr.f32.gmra.mxu0 %v299
    %v658 = vpop.f32.mrf.mxu0
    %v659 = vadd.f32 0.0, %v658
    %v660 = vpop.f32.mrf.mxu0
    %661 = vmatprep.mubr.f32.mxu0 0.0
    %662 = vmatmul.mubr.f32.gmra.mxu0 %v302
    %v663 = vpop.f32.mrf.mxu0
    %v664 = vadd.f32 0.0, %v663
    %v665 = vpop.f32.mrf.mxu0
    %666 = vmatprep.mubr.f32.mxu0 0.0
    %667 = vmatmul.mubr.f32.gmra.mxu0 %v305
    %v668 = vpop.f32.mrf.mxu0
    %v669 = vadd.f32 0.0, %v668
    %v670 = vpop.f32.mrf.mxu0
    %671 = vmatprep.mubr.f32.mxu0 0.0
    %672 = vmatmul.mubr.f32.gmra.mxu0 %v308
    %v673 = vpop.f32.mrf.mxu0
    %v674 = vadd.f32 0.0, %v673
    %v675 = vpop.f32.mrf.mxu0
    %676 = vmatprep.mubr.f32.mxu0 0.0
    %677 = vmatmul.mubr.f32.gmra.mxu0 %v311
    %v678 = vpop.f32.mrf.mxu0
    %v679 = vadd.f32 0.0, %v678
    %v680 = vpop.f32.mrf.mxu0
    %681 = vmatprep.mubr.f32.mxu0 0.0
    %682 = vmatmul.mubr.f32.gmra.mxu0 %v314
    %v683 = vpop.f32.mrf.mxu0
    %v684 = vadd.f32 0.0, %v683
    %v685 = vpop.f32.mrf.mxu0
    %686 = vmatprep.mubr.f32.mxu0 0.0
    %687 = vmatmul.mubr.f32.gmra.mxu0 %v317
    %v688 = vpop.f32.mrf.mxu0
    %v689 = vadd.f32 0.0, %v688
    %v690 = vpop.f32.mrf.mxu0
    %691 = vmatprep.mubr.f32.mxu0 0.0
    %692 = vmatmul.mubr.f32.gmra.mxu0 %v320
    %v693 = vpop.f32.mrf.mxu0
    %v694 = vadd.f32 0.0, %v693
    %v695 = vpop.f32.mrf.mxu0
    %696 = vmatprep.mubr.f32.mxu0 0.0
    %697 = vmatmul.mubr.f32.gmra.mxu0 %v323
    %v698 = vpop.f32.mrf.mxu0
    %v699 = vadd.f32 0.0, %v698
    %v700 = vpop.f32.mrf.mxu0
    %701 = vmatprep.mubr.f32.mxu0 0.0
    %702 = vmatmul.mubr.f32.gmra.mxu0 %v326
    %v703 = vpop.f32.mrf.mxu0
    %v704 = vadd.f32 0.0, %v703
    %v705 = vpop.f32.mrf.mxu0
    %706 = vmatprep.mubr.f32.mxu0 0.0
    %707 = vmatmul.mubr.f32.gmra.mxu0 %v329
    %v708 = vpop.f32.mrf.mxu0
    %v709 = vadd.f32 0.0, %v708
    %v710 = vpop.f32.mrf.mxu0
    %711 = vmatprep.mubr.f32.mxu0 0.0
    %712 = vmatmul.mubr.f32.gmra.mxu0 %v332
    %v713 = vpop.f32.mrf.mxu0
    %v714 = vadd.f32 0.0, %v713
    %v715 = vpop.f32.mrf.mxu0
    %716 = vmatprep.mubr.f32.mxu0 0.0
    %717 = vmatmul.mubr.f32.gmra.mxu0 %v335
    %v718 = vpop.f32.mrf.mxu0
    %v719 = vadd.f32 0.0, %v718
    %v720 = vpop.f32.mrf.mxu0
    %721 = vmatprep.mubr.f32.mxu0 0.0
    %722 = vmatmul.mubr.f32.gmra.mxu0 %v338
    %v723 = vpop.f32.mrf.mxu0
    %v724 = vadd.f32 0.0, %v723
    %v725 = vpop.f32.mrf.mxu0
    %726 = vmatprep.mubr.f32.mxu0 0.0
    %727 = vmatmul.mubr.f32.gmra.mxu0 %v341
    %v728 = vpop.f32.mrf.mxu0
    %v729 = vadd.f32 0.0, %v728
    %v730 = vpop.f32.mrf.mxu0
    %731 = vdwg.mxu0
    %v733 = vsel %vm150, %v52, 0
    %v736 = vsel %vm150, %v53, 0
    %v739 = vsel %vm150, %v54, 0
    %v742 = vsel %vm150, %v55, 0
    %v745 = vsel %vm150, %v72, 0
    %v748 = vsel %vm150, %v73, 0
    %v751 = vsel %vm150, %v74, 0
    %v754 = vsel %vm150, %v75, 0
    %v757 = vsel %vm150, %v92, 0
    %v760 = vsel %vm150, %v93, 0
    %v763 = vsel %vm150, %v94, 0
    %v766 = vsel %vm150, %v95, 0
    %v769 = vsel %vm150, %v112, 0
    %v772 = vsel %vm150, %v113, 0
    %v775 = vsel %vm150, %v114, 0
    %v778 = vsel %vm150, %v115, 0
    %v781 = vsel %vm343, %v131, 0
    %783 = vmatprep.subr.mxu0 0.0
    %784 = vmatpush1.msra.mxu0 0.0
    %785 = vmatprep.subr.mxu0 0.0
    %786 = vmatpush1.msra.mxu0 0.0
    %787 = vmatprep.subr.mxu0 0.0
    %788 = vmatpush1.msra.mxu0 0.0
    %789 = vmatprep.subr.mxu0 0.0
    %790 = vmatpush1.msra.mxu0 0.0
    %791 = vmatprep.subr.mxu0 0.0
    %792 = vmatpush1.msra.mxu0 0.0
    %793 = vmatprep.subr.mxu0 0.0
    %794 = vmatpush1.msra.mxu0 0.0
    %795 = vmatprep.subr.mxu0 0.0
    %796 = vmatpush1.msra.mxu0 0.0
    %797 = vmatprep.subr.mxu0 0.0
    %798 = vmatpush1.msra.mxu0 0.0
    %799 = vmatprep.subr.mxu0 0.0
    %800 = vmatpush1.msra.mxu0 0.0
    %801 = vmatprep.subr.mxu0 0.0
    %802 = vmatpush1.msra.mxu0 0.0
    %803 = vmatprep.subr.mxu0 0.0
    %804 = vmatpush1.msra.mxu0 0.0
    %805 = vmatprep.subr.mxu0 0.0
    %806 = vmatpush1.msra.mxu0 0.0
    %807 = vmatprep.subr.mxu0 0.0
    %808 = vmatpush1.msra.mxu0 0.0
    %809 = vmatprep.subr.mxu0 0.0
    %810 = vmatpush1.msra.mxu0 0.0
    %811 = vmatprep.subr.mxu0 0.0
    %812 = vmatpush1.msra.mxu0 0.0
    %813 = vmatprep.subr.mxu0 0.0
    %814 = vmatpush1.msra.mxu0 %v781
    %815 = vmatprep.subr.mxu0 0.0
    %816 = vmatpush2.msra.mxu0 0.0
    %817 = vmatprep.subr.mxu0 0.0
    %818 = vmatpush2.msra.mxu0 0.0
    %819 = vmatprep.subr.mxu0 0.0
    %820 = vmatpush2.msra.mxu0 0.0
    %821 = vmatprep.subr.mxu0 0.0
    %822 = vmatpush2.msra.mxu0 0.0
    %823 = vmatprep.subr.mxu0 0.0
    %824 = vmatpush2.msra.mxu0 0.0
    %825 = vmatprep.subr.mxu0 0.0
    %826 = vmatpush2.msra.mxu0 0.0
    %827 = vmatprep.subr.mxu0 0.0
    %828 = vmatpush2.msra.mxu0 0.0
    %829 = vmatprep.subr.mxu0 0.0
    %830 = vmatpush2.msra.mxu0 0.0
    %831 = vmatprep.subr.mxu0 0.0
    %832 = vmatpush2.msra.mxu0 0.0
    %833 = vmatprep.subr.mxu0 0.0
    %834 = vmatpush2.msra.mxu0 0.0
    %835 = vmatprep.subr.mxu0 0.0
    %836 = vmatpush2.msra.mxu0 0.0
    %837 = vmatprep.subr.mxu0 0.0
    %838 = vmatpush2.msra.mxu0 0.0
    %839 = vmatprep.subr.mxu0 0.0
    %840 = vmatpush2.msra.mxu0 0.0
    %841 = vmatprep.subr.mxu0 0.0
    %842 = vmatpush2.msra.mxu0 0.0
    %843 = vmatprep.subr.mxu0 0.0
    %844 = vmatpush2.msra.mxu0 0.0
    %845 = vmatprep.subr.mxu0 0.0
    %846 = vmatpush2.msra.mxu0 0.0
    %847 = vmatprep.mubr.f32.mxu0 0.0
    %848 = vmatmul.mubr.f32.gmra.mxu0 %v733
    %v849 = vpop.f32.mrf.mxu0
    %v850 = vadd.f32 %v414, %v849
    %v851 = vpop.f32.mrf.mxu0
    %852 = vmatprep.mubr.f32.mxu0 0.0
    %853 = vmatmul.mubr.f32.gmra.mxu0 %v736
    %v854 = vpop.f32.mrf.mxu0
    %v855 = vadd.f32 %v419, %v854
    %v856 = vpop.f32.mrf.mxu0
    %857 = vmatprep.mubr.f32.mxu0 0.0
    %858 = vmatmul.mubr.f32.gmra.mxu0 %v739
    %v859 = vpop.f32.mrf.mxu0
    %v860 = vadd.f32 %v424, %v859
    %v861 = vpop.f32.mrf.mxu0
    %862 = vmatprep.mubr.f32.mxu0 0.0
    %863 = vmatmul.mubr.f32.gmra.mxu0 %v742
    %v864 = vpop.f32.mrf.mxu0
    %v865 = vadd.f32 %v429, %v864
    %v866 = vpop.f32.mrf.mxu0
    %867 = vmatprep.mubr.f32.mxu0 0.0
    %868 = vmatmul.mubr.f32.gmra.mxu0 %v152
    %v869 = vpop.f32.mrf.mxu0
    %v870 = vadd.f32 %v434, %v869
    %v871 = vpop.f32.mrf.mxu0
    %872 = vmatprep.mubr.f32.mxu0 0.0
    %873 = vmatmul.mubr.f32.gmra.mxu0 %v155
    %v874 = vpop.f32.mrf.mxu0
    %v875 = vadd.f32 %v439, %v874
    %v876 = vpop.f32.mrf.mxu0
    %877 = vmatprep.mubr.f32.mxu0 0.0
    %878 = vmatmul.mubr.f32.gmra.mxu0 %v158
    %v879 = vpop.f32.mrf.mxu0
    %v880 = vadd.f32 %v444, %v879
    %v881 = vpop.f32.mrf.mxu0
    %882 = vmatprep.mubr.f32.mxu0 0.0
    %883 = vmatmul.mubr.f32.gmra.mxu0 %v161
    %v884 = vpop.f32.mrf.mxu0
    %v885 = vadd.f32 %v449, %v884
    %v886 = vpop.f32.mrf.mxu0
    %887 = vmatprep.mubr.f32.mxu0 0.0
    %888 = vmatmul.mubr.f32.gmra.mxu0 %v164
    %v889 = vpop.f32.mrf.mxu0
    %v890 = vadd.f32 %v454, %v889
    %v891 = vpop.f32.mrf.mxu0
    %892 = vmatprep.mubr.f32.mxu0 0.0
    %893 = vmatmul.mubr.f32.gmra.mxu0 %v167
    %v894 = vpop.f32.mrf.mxu0
    %v895 = vadd.f32 %v459, %v894
    %v896 = vpop.f32.mrf.mxu0
    %897 = vmatprep.mubr.f32.mxu0 0.0
    %898 = vmatmul.mubr.f32.gmra.mxu0 %v170
    %v899 = vpop.f32.mrf.mxu0
    %v900 = vadd.f32 %v464, %v899
    %v901 = vpop.f32.mrf.mxu0
    %902 = vmatprep.mubr.f32.mxu0 0.0
    %903 = vmatmul.mubr.f32.gmra.mxu0 %v173
    %v904 = vpop.f32.mrf.mxu0
    %v905 = vadd.f32 %v469, %v904
    %v906 = vpop.f32.mrf.mxu0
    %907 = vmatprep.mubr.f32.mxu0 0.0
    %908 = vmatmul.mubr.f32.gmra.mxu0 %v176
    %v909 = vpop.f32.mrf.mxu0
    %v910 = vadd.f32 %v474, %v909
    %v911 = vpop.f32.mrf.mxu0
    %912 = vmatprep.mubr.f32.mxu0 0.0
    %913 = vmatmul.mubr.f32.gmra.mxu0 %v179
    %v914 = vpop.f32.mrf.mxu0
    %v915 = vadd.f32 %v479, %v914
    %v916 = vpop.f32.mrf.mxu0
    %917 = vmatprep.mubr.f32.mxu0 0.0
    %918 = vmatmul.mubr.f32.gmra.mxu0 %v182
    %v919 = vpop.f32.mrf.mxu0
    %v920 = vadd.f32 %v484, %v919
    %v921 = vpop.f32.mrf.mxu0
    %922 = vmatprep.mubr.f32.mxu0 0.0
    %923 = vmatmul.mubr.f32.gmra.mxu0 %v185
    %v924 = vpop.f32.mrf.mxu0
    %v925 = vadd.f32 %v489, %v924
    %v926 = vpop.f32.mrf.mxu0
    %927 = vmatprep.mubr.f32.mxu0 0.0
    %928 = vmatmul.mubr.f32.gmra.mxu0 %v745
    %v929 = vpop.f32.mrf.mxu0
    %v930 = vadd.f32 %v494, %v929
    %v931 = vpop.f32.mrf.mxu0
    %932 = vmatprep.mubr.f32.mxu0 0.0
    %933 = vmatmul.mubr.f32.gmra.mxu0 %v748
    %v934 = vpop.f32.mrf.mxu0
    %v935 = vadd.f32 %v499, %v934
    %v936 = vpop.f32.mrf.mxu0
    %937 = vmatprep.mubr.f32.mxu0 0.0
    %938 = vmatmul.mubr.f32.gmra.mxu0 %v751
    %v939 = vpop.f32.mrf.mxu0
    %v940 = vadd.f32 %v504, %v939
    %v941 = vpop.f32.mrf.mxu0
    %942 = vmatprep.mubr.f32.mxu0 0.0
    %943 = vmatmul.mubr.f32.gmra.mxu0 %v754
    %v944 = vpop.f32.mrf.mxu0
    %v945 = vadd.f32 %v509, %v944
    %v946 = vpop.f32.mrf.mxu0
    %947 = vmatprep.mubr.f32.mxu0 0.0
    %948 = vmatmul.mubr.f32.gmra.mxu0 %v200
    %v949 = vpop.f32.mrf.mxu0
    %v950 = vadd.f32 %v514, %v949
    %v951 = vpop.f32.mrf.mxu0
    %952 = vmatprep.mubr.f32.mxu0 0.0
    %953 = vmatmul.mubr.f32.gmra.mxu0 %v203
    %v954 = vpop.f32.mrf.mxu0
    %v955 = vadd.f32 %v519, %v954
    %v956 = vpop.f32.mrf.mxu0
    %957 = vmatprep.mubr.f32.mxu0 0.0
    %958 = vmatmul.mubr.f32.gmra.mxu0 %v206
    %v959 = vpop.f32.mrf.mxu0
    %v960 = vadd.f32 %v524, %v959
    %v961 = vpop.f32.mrf.mxu0
    %962 = vmatprep.mubr.f32.mxu0 0.0
    %963 = vmatmul.mubr.f32.gmra.mxu0 %v209
    %v964 = vpop.f32.mrf.mxu0
    %v965 = vadd.f32 %v529, %v964
    %v966 = vpop.f32.mrf.mxu0
    %967 = vmatprep.mubr.f32.mxu0 0.0
    %968 = vmatmul.mubr.f32.gmra.mxu0 %v212
    %v969 = vpop.f32.mrf.mxu0
    %v970 = vadd.f32 %v534, %v969
    %v971 = vpop.f32.mrf.mxu0
    %972 = vmatprep.mubr.f32.mxu0 0.0
    %973 = vmatmul.mubr.f32.gmra.mxu0 %v215
    %v974 = vpop.f32.mrf.mxu0
    %v975 = vadd.f32 %v539, %v974
    %v976 = vpop.f32.mrf.mxu0
    %977 = vmatprep.mubr.f32.mxu0 0.0
    %978 = vmatmul.mubr.f32.gmra.mxu0 %v218
    %v979 = vpop.f32.mrf.mxu0
    %v980 = vadd.f32 %v544, %v979
    %v981 = vpop.f32.mrf.mxu0
    %982 = vmatprep.mubr.f32.mxu0 0.0
    %983 = vmatmul.mubr.f32.gmra.mxu0 %v221
    %v984 = vpop.f32.mrf.mxu0
    %v985 = vadd.f32 %v549, %v984
    %v986 = vpop.f32.mrf.mxu0
    %987 = vmatprep.mubr.f32.mxu0 0.0
    %988 = vmatmul.mubr.f32.gmra.mxu0 %v224
    %v989 = vpop.f32.mrf.mxu0
    %v990 = vadd.f32 %v554, %v989
    %v991 = vpop.f32.mrf.mxu0
    %992 = vmatprep.mubr.f32.mxu0 0.0
    %993 = vmatmul.mubr.f32.gmra.mxu0 %v227
    %v994 = vpop.f32.mrf.mxu0
    %v995 = vadd.f32 %v559, %v994
    %v996 = vpop.f32.mrf.mxu0
    %997 = vmatprep.mubr.f32.mxu0 0.0
    %998 = vmatmul.mubr.f32.gmra.mxu0 %v230
    %v999 = vpop.f32.mrf.mxu0
    %v1000 = vadd.f32 %v564, %v999
    %v1001 = vpop.f32.mrf.mxu0
    %1002 = vmatprep.mubr.f32.mxu0 0.0
    %1003 = vmatmul.mubr.f32.gmra.mxu0 %v233
    %v1004 = vpop.f32.mrf.mxu0
    %v1005 = vadd.f32 %v569, %v1004
    %v1006 = vpop.f32.mrf.mxu0
    %1007 = vmatprep.mubr.f32.mxu0 0.0
    %1008 = vmatmul.mubr.f32.gmra.mxu0 %v757
    %v1009 = vpop.f32.mrf.mxu0
    %v1010 = vadd.f32 %v574, %v1009
    %v1011 = vpop.f32.mrf.mxu0
    %1012 = vmatprep.mubr.f32.mxu0 0.0
    %1013 = vmatmul.mubr.f32.gmra.mxu0 %v760
    %v1014 = vpop.f32.mrf.mxu0
    %v1015 = vadd.f32 %v579, %v1014
    %v1016 = vpop.f32.mrf.mxu0
    %1017 = vmatprep.mubr.f32.mxu0 0.0
    %1018 = vmatmul.mubr.f32.gmra.mxu0 %v763
    %v1019 = vpop.f32.mrf.mxu0
    %v1020 = vadd.f32 %v584, %v1019
    %v1021 = vpop.f32.mrf.mxu0
    %1022 = vmatprep.mubr.f32.mxu0 0.0
    %1023 = vmatmul.mubr.f32.gmra.mxu0 %v766
    %v1024 = vpop.f32.mrf.mxu0
    %v1025 = vadd.f32 %v589, %v1024
    %v1026 = vpop.f32.mrf.mxu0
    %1027 = vmatprep.mubr.f32.mxu0 0.0
    %1028 = vmatmul.mubr.f32.gmra.mxu0 %v248
    %v1029 = vpop.f32.mrf.mxu0
    %v1030 = vadd.f32 %v594, %v1029
    %v1031 = vpop.f32.mrf.mxu0
    %1032 = vmatprep.mubr.f32.mxu0 0.0
    %1033 = vmatmul.mubr.f32.gmra.mxu0 %v251
    %v1034 = vpop.f32.mrf.mxu0
    %v1035 = vadd.f32 %v599, %v1034
    %v1036 = vpop.f32.mrf.mxu0
    %1037 = vmatprep.mubr.f32.mxu0 0.0
    %1038 = vmatmul.mubr.f32.gmra.mxu0 %v254
    %v1039 = vpop.f32.mrf.mxu0
    %v1040 = vadd.f32 %v604, %v1039
    %v1041 = vpop.f32.mrf.mxu0
    %1042 = vmatprep.mubr.f32.mxu0 0.0
    %1043 = vmatmul.mubr.f32.gmra.mxu0 %v257
    %v1044 = vpop.f32.mrf.mxu0
    %v1045 = vadd.f32 %v609, %v1044
    %v1046 = vpop.f32.mrf.mxu0
    %1047 = vmatprep.mubr.f32.mxu0 0.0
    %1048 = vmatmul.mubr.f32.gmra.mxu0 %v260
    %v1049 = vpop.f32.mrf.mxu0
    %v1050 = vadd.f32 %v614, %v1049
    %v1051 = vpop.f32.mrf.mxu0
    %1052 = vmatprep.mubr.f32.mxu0 0.0
    %1053 = vmatmul.mubr.f32.gmra.mxu0 %v263
    %v1054 = vpop.f32.mrf.mxu0
    %v1055 = vadd.f32 %v619, %v1054
    %v1056 = vpop.f32.mrf.mxu0
    %1057 = vmatprep.mubr.f32.mxu0 0.0
    %1058 = vmatmul.mubr.f32.gmra.mxu0 %v266
    %v1059 = vpop.f32.mrf.mxu0
    %v1060 = vadd.f32 %v624, %v1059
    %v1061 = vpop.f32.mrf.mxu0
    %1062 = vmatprep.mubr.f32.mxu0 0.0
    %1063 = vmatmul.mubr.f32.gmra.mxu0 %v269
    %v1064 = vpop.f32.mrf.mxu0
    %v1065 = vadd.f32 %v629, %v1064
    %v1066 = vpop.f32.mrf.mxu0
    %1067 = vmatprep.mubr.f32.mxu0 0.0
    %1068 = vmatmul.mubr.f32.gmra.mxu0 %v272
    %v1069 = vpop.f32.mrf.mxu0
    %v1070 = vadd.f32 %v634, %v1069
    %v1071 = vpop.f32.mrf.mxu0
    %1072 = vmatprep.mubr.f32.mxu0 0.0
    %1073 = vmatmul.mubr.f32.gmra.mxu0 %v275
    %v1074 = vpop.f32.mrf.mxu0
    %v1075 = vadd.f32 %v639, %v1074
    %v1076 = vpop.f32.mrf.mxu0
    %1077 = vmatprep.mubr.f32.mxu0 0.0
    %1078 = vmatmul.mubr.f32.gmra.mxu0 %v278
    %v1079 = vpop.f32.mrf.mxu0
    %v1080 = vadd.f32 %v644, %v1079
    %v1081 = vpop.f32.mrf.mxu0
    %1082 = vmatprep.mubr.f32.mxu0 0.0
    %1083 = vmatmul.mubr.f32.gmra.mxu0 %v281
    %v1084 = vpop.f32.mrf.mxu0
    %v1085 = vadd.f32 %v649, %v1084
    %v1086 = vpop.f32.mrf.mxu0
    %1087 = vmatprep.mubr.f32.mxu0 0.0
    %1088 = vmatmul.mubr.f32.gmra.mxu0 %v769
    %v1089 = vpop.f32.mrf.mxu0
    %v1090 = vadd.f32 %v654, %v1089
    %v1091 = vpop.f32.mrf.mxu0
    %1092 = vmatprep.mubr.f32.mxu0 0.0
    %1093 = vmatmul.mubr.f32.gmra.mxu0 %v772
    %v1094 = vpop.f32.mrf.mxu0
    %v1095 = vadd.f32 %v659, %v1094
    %v1096 = vpop.f32.mrf.mxu0
    %1097 = vmatprep.mubr.f32.mxu0 0.0
    %1098 = vmatmul.mubr.f32.gmra.mxu0 %v775
    %v1099 = vpop.f32.mrf.mxu0
    %v1100 = vadd.f32 %v664, %v1099
    %v1101 = vpop.f32.mrf.mxu0
    %1102 = vmatprep.mubr.f32.mxu0 0.0
    %1103 = vmatmul.mubr.f32.gmra.mxu0 %v778
    %v1104 = vpop.f32.mrf.mxu0
    %v1105 = vadd.f32 %v669, %v1104
    %v1106 = vpop.f32.mrf.mxu0
    %1107 = vmatprep.mubr.f32.mxu0 0.0
    %1108 = vmatmul.mubr.f32.gmra.mxu0 %v296
    %v1109 = vpop.f32.mrf.mxu0
    %v1110 = vadd.f32 %v674, %v1109
    %v1111 = vpop.f32.mrf.mxu0
    %1112 = vmatprep.mubr.f32.mxu0 0.0
    %1113 = vmatmul.mubr.f32.gmra.mxu0 %v299
    %v1114 = vpop.f32.mrf.mxu0
    %v1115 = vadd.f32 %v679, %v1114
    %v1116 = vpop.f32.mrf.mxu0
    %1117 = vmatprep.mubr.f32.mxu0 0.0
    %1118 = vmatmul.mubr.f32.gmra.mxu0 %v302
    %v1119 = vpop.f32.mrf.mxu0
    %v1120 = vadd.f32 %v684, %v1119
    %v1121 = vpop.f32.mrf.mxu0
    %1122 = vmatprep.mubr.f32.mxu0 0.0
    %1123 = vmatmul.mubr.f32.gmra.mxu0 %v305
    %v1124 = vpop.f32.mrf.mxu0
    %v1125 = vadd.f32 %v689, %v1124
    %v1126 = vpop.f32.mrf.mxu0
    %1127 = vmatprep.mubr.f32.mxu0 0.0
    %1128 = vmatmul.mubr.f32.gmra.mxu0 %v308
    %v1129 = vpop.f32.mrf.mxu0
    %v1130 = vadd.f32 %v694, %v1129
    %v1131 = vpop.f32.mrf.mxu0
    %1132 = vmatprep.mubr.f32.mxu0 0.0
    %1133 = vmatmul.mubr.f32.gmra.mxu0 %v311
    %v1134 = vpop.f32.mrf.mxu0
    %v1135 = vadd.f32 %v699, %v1134
    %v1136 = vpop.f32.mrf.mxu0
    %1137 = vmatprep.mubr.f32.mxu0 0.0
    %1138 = vmatmul.mubr.f32.gmra.mxu0 %v314
    %v1139 = vpop.f32.mrf.mxu0
    %v1140 = vadd.f32 %v704, %v1139
    %v1141 = vpop.f32.mrf.mxu0
    %1142 = vmatprep.mubr.f32.mxu0 0.0
    %1143 = vmatmul.mubr.f32.gmra.mxu0 %v317
    %v1144 = vpop.f32.mrf.mxu0
    %v1145 = vadd.f32 %v709, %v1144
    %v1146 = vpop.f32.mrf.mxu0
    %1147 = vmatprep.mubr.f32.mxu0 0.0
    %1148 = vmatmul.mubr.f32.gmra.mxu0 %v320
    %v1149 = vpop.f32.mrf.mxu0
    %v1150 = vadd.f32 %v714, %v1149
    %v1151 = vpop.f32.mrf.mxu0
    %1152 = vmatprep.mubr.f32.mxu0 0.0
    %1153 = vmatmul.mubr.f32.gmra.mxu0 %v323
    %v1154 = vpop.f32.mrf.mxu0
    %v1155 = vadd.f32 %v719, %v1154
    %v1156 = vpop.f32.mrf.mxu0
    %1157 = vmatprep.mubr.f32.mxu0 0.0
    %1158 = vmatmul.mubr.f32.gmra.mxu0 %v326
    %v1159 = vpop.f32.mrf.mxu0
    %v1160 = vadd.f32 %v724, %v1159
    %v1161 = vpop.f32.mrf.mxu0
    %1162 = vmatprep.mubr.f32.mxu0 0.0
    %1163 = vmatmul.mubr.f32.gmra.mxu0 %v329
    %v1164 = vpop.f32.mrf.mxu0
    %v1165 = vadd.f32 %v729, %v1164
    %v1166 = vpop.f32.mrf.mxu0
    %1167 = vdwg.mxu0
    %v1168 = vld [vmem:[%s56 + $0x4] sm:$0xff]
    %v1169 = vld [vmem:[%s56 + $0x14] sm:$0xff]
    %v1170 = vld [vmem:[%s56 + $0x24] sm:$0xff]
    %v1171 = vld [vmem:[%s56 + $0x34] sm:$0xff]
    %v1172 = vld [vmem:[%s76 + $0x4] sm:$0xff]
    %v1173 = vld [vmem:[%s76 + $0x14] sm:$0xff]
    %v1174 = vld [vmem:[%s76 + $0x24] sm:$0xff]
    %v1175 = vld [vmem:[%s76 + $0x34] sm:$0xff]
    %v1176 = vld [vmem:[%s96 + $0x4] sm:$0xff]
    %v1177 = vld [vmem:[%s96 + $0x14] sm:$0xff]
    %v1178 = vld [vmem:[%s96 + $0x24] sm:$0xff]
    %v1179 = vld [vmem:[%s96 + $0x34] sm:$0xff]
    %v1180 = vld [vmem:[%s116 + $0x4] sm:$0xff]
    %v1181 = vld [vmem:[%s116 + $0x14] sm:$0xff]
    %v1182 = vld [vmem:[%s116 + $0x24] sm:$0xff]
    %v1183 = vld [vmem:[%s116 + $0x34] sm:$0xff]
    %s1184 = scalar_lea.vmem %s1, 8
    %v1185 = vld [vmem:[%s1184] sm:$0x7]
    %v1187 = vsel %vm150, %v1168, 0
    %v1190 = vsel %vm150, %v1169, 0
    %v1193 = vsel %vm150, %v1170, 0
    %v1196 = vsel %vm150, %v1171, 0
    %v1199 = vsel %vm150, %v1172, 0
    %v1202 = vsel %vm150, %v1173, 0
    %v1205 = vsel %vm150, %v1174, 0
    %v1208 = vsel %vm150, %v1175, 0
    %v1211 = vsel %vm150, %v1176, 0
    %v1214 = vsel %vm150, %v1177, 0
    %v1217 = vsel %vm150, %v1178, 0
    %v1220 = vsel %vm150, %v1179, 0
    %v1223 = vsel %vm150, %v1180, 0
    %v1226 = vsel %vm150, %v1181, 0
    %v1229 = vsel %vm150, %v1182, 0
    %v1232 = vsel %vm150, %v1183, 0
    %v1235 = vsel %vm343, %v1185, 0
    %1237 = vmatprep.subr.mxu0 0.0
    %1238 = vmatpush1.msra.mxu0 0.0
    %1239 = vmatprep.subr.mxu0 0.0
    %1240 = vmatpush1.msra.mxu0 0.0
    %1241 = vmatprep.subr.mxu0 0.0
    %1242 = vmatpush1.msra.mxu0 0.0
    %1243 = vmatprep.subr.mxu0 0.0
    %1244 = vmatpush1.msra.mxu0 0.0
    %1245 = vmatprep.subr.mxu0 0.0
    %1246 = vmatpush1.msra.mxu0 0.0
    %1247 = vmatprep.subr.mxu0 0.0
    %1248 = vmatpush1.msra.mxu0 0.0
    %1249 = vmatprep.subr.mxu0 0.0
    %1250 = vmatpush1.msra.mxu0 0.0
    %1251 = vmatprep.subr.mxu0 0.0
    %1252 = vmatpush1.msra.mxu0 0.0
    %1253 = vmatprep.subr.mxu0 0.0
    %1254 = vmatpush1.msra.mxu0 0.0
    %1255 = vmatprep.subr.mxu0 0.0
    %1256 = vmatpush1.msra.mxu0 0.0
    %1257 = vmatprep.subr.mxu0 0.0
    %1258 = vmatpush1.msra.mxu0 0.0
    %1259 = vmatprep.subr.mxu0 0.0
    %1260 = vmatpush1.msra.mxu0 0.0
    %1261 = vmatprep.subr.mxu0 0.0
    %1262 = vmatpush1.msra.mxu0 0.0
    %1263 = vmatprep.subr.mxu0 0.0
    %1264 = vmatpush1.msra.mxu0 0.0
    %1265 = vmatprep.subr.mxu0 0.0
    %1266 = vmatpush1.msra.mxu0 0.0
    %1267 = vmatprep.subr.mxu0 0.0
    %1268 = vmatpush1.msra.mxu0 %v1235
    %1269 = vmatprep.subr.mxu0 0.0
    %1270 = vmatpush2.msra.mxu0 0.0
    %1271 = vmatprep.subr.mxu0 0.0
    %1272 = vmatpush2.msra.mxu0 0.0
    %1273 = vmatprep.subr.mxu0 0.0
    %1274 = vmatpush2.msra.mxu0 0.0
    %1275 = vmatprep.subr.mxu0 0.0
    %1276 = vmatpush2.msra.mxu0 0.0
    %1277 = vmatprep.subr.mxu0 0.0
    %1278 = vmatpush2.msra.mxu0 0.0
    %1279 = vmatprep.subr.mxu0 0.0
    %1280 = vmatpush2.msra.mxu0 0.0
    %1281 = vmatprep.subr.mxu0 0.0
    %1282 = vmatpush2.msra.mxu0 0.0
    %1283 = vmatprep.subr.mxu0 0.0
    %1284 = vmatpush2.msra.mxu0 0.0
    %1285 = vmatprep.subr.mxu0 0.0
    %1286 = vmatpush2.msra.mxu0 0.0
    %1287 = vmatprep.subr.mxu0 0.0
    %1288 = vmatpush2.msra.mxu0 0.0
    %1289 = vmatprep.subr.mxu0 0.0
    %1290 = vmatpush2.msra.mxu0 0.0
    %1291 = vmatprep.subr.mxu0 0.0
    %1292 = vmatpush2.msra.mxu0 0.0
    %1293 = vmatprep.subr.mxu0 0.0
    %1294 = vmatpush2.msra.mxu0 0.0
    %1295 = vmatprep.subr.mxu0 0.0
    %1296 = vmatpush2.msra.mxu0 0.0
    %1297 = vmatprep.subr.mxu0 0.0
    %1298 = vmatpush2.msra.mxu0 0.0
    %1299 = vmatprep.subr.mxu0 0.0
    %1300 = vmatpush2.msra.mxu0 0.0
    %1301 = vmatprep.mubr.f32.mxu0 0.0
    %1302 = vmatmul.mubr.f32.gmra.mxu0 %v164
    %v1303 = vpop.f32.mrf.mxu0
    %v1304 = vadd.f32 0.0, %v1303
    %v1305 = vpop.f32.mrf.mxu0
    %1306 = vmatprep.mubr.f32.mxu0 0.0
    %1307 = vmatmul.mubr.f32.gmra.mxu0 %v167
    %v1308 = vpop.f32.mrf.mxu0
    %v1309 = vadd.f32 0.0, %v1308
    %v1310 = vpop.f32.mrf.mxu0
    %1311 = vmatprep.mubr.f32.mxu0 0.0
    %1312 = vmatmul.mubr.f32.gmra.mxu0 %v170
    %v1313 = vpop.f32.mrf.mxu0
    %v1314 = vadd.f32 0.0, %v1313
    %v1315 = vpop.f32.mrf.mxu0
    %1316 = vmatprep.mubr.f32.mxu0 0.0
    %1317 = vmatmul.mubr.f32.gmra.mxu0 %v173
    %v1318 = vpop.f32.mrf.mxu0
    %v1319 = vadd.f32 0.0, %v1318
    %v1320 = vpop.f32.mrf.mxu0
    %1321 = vmatprep.mubr.f32.mxu0 0.0
    %1322 = vmatmul.mubr.f32.gmra.mxu0 %v176
    %v1323 = vpop.f32.mrf.mxu0
    %v1324 = vadd.f32 0.0, %v1323
    %v1325 = vpop.f32.mrf.mxu0
    %1326 = vmatprep.mubr.f32.mxu0 0.0
    %1327 = vmatmul.mubr.f32.gmra.mxu0 %v179
    %v1328 = vpop.f32.mrf.mxu0
    %v1329 = vadd.f32 0.0, %v1328
    %v1330 = vpop.f32.mrf.mxu0
    %1331 = vmatprep.mubr.f32.mxu0 0.0
    %1332 = vmatmul.mubr.f32.gmra.mxu0 %v182
    %v1333 = vpop.f32.mrf.mxu0
    %v1334 = vadd.f32 0.0, %v1333
    %v1335 = vpop.f32.mrf.mxu0
    %1336 = vmatprep.mubr.f32.mxu0 0.0
    %1337 = vmatmul.mubr.f32.gmra.mxu0 %v185
    %v1338 = vpop.f32.mrf.mxu0
    %v1339 = vadd.f32 0.0, %v1338
    %v1340 = vpop.f32.mrf.mxu0
    %1341 = vmatprep.mubr.f32.mxu0 0.0
    %1342 = vmatmul.mubr.f32.gmra.mxu0 %v188
    %v1343 = vpop.f32.mrf.mxu0
    %v1344 = vadd.f32 0.0, %v1343
    %v1345 = vpop.f32.mrf.mxu0
    %1346 = vmatprep.mubr.f32.mxu0 0.0
    %1347 = vmatmul.mubr.f32.gmra.mxu0 %v191
    %v1348 = vpop.f32.mrf.mxu0
    %v1349 = vadd.f32 0.0, %v1348
    %v1350 = vpop.f32.mrf.mxu0
    %1351 = vmatprep.mubr.f32.mxu0 0.0
    %1352 = vmatmul.mubr.f32.gmra.mxu0 %v194
    %v1353 = vpop.f32.mrf.mxu0
    %v1354 = vadd.f32 0.0, %v1353
    %v1355 = vpop.f32.mrf.mxu0
    %1356 = vmatprep.mubr.f32.mxu0 0.0
    %1357 = vmatmul.mubr.f32.gmra.mxu0 %v197
    %v1358 = vpop.f32.mrf.mxu0
    %v1359 = vadd.f32 0.0, %v1358
    %v1360 = vpop.f32.mrf.mxu0
    %1361 = vmatprep.mubr.f32.mxu0 0.0
    %1362 = vmatmul.mubr.f32.gmra.mxu0 %v1187
    %v1363 = vpop.f32.mrf.mxu0
    %v1364 = vadd.f32 0.0, %v1363
    %v1365 = vpop.f32.mrf.mxu0
    %1366 = vmatprep.mubr.f32.mxu0 0.0
    %1367 = vmatmul.mubr.f32.gmra.mxu0 %v1190
    %v1368 = vpop.f32.mrf.mxu0
    %v1369 = vadd.f32 0.0, %v1368
    %v1370 = vpop.f32.mrf.mxu0
    %1371 = vmatprep.mubr.f32.mxu0 0.0
    %1372 = vmatmul.mubr.f32.gmra.mxu0 %v1193
    %v1373 = vpop.f32.mrf.mxu0
    %v1374 = vadd.f32 0.0, %v1373
    %v1375 = vpop.f32.mrf.mxu0
    %1376 = vmatprep.mubr.f32.mxu0 0.0
    %1377 = vmatmul.mubr.f32.gmra.mxu0 %v1196
    %v1378 = vpop.f32.mrf.mxu0
    %v1379 = vadd.f32 0.0, %v1378
    %v1380 = vpop.f32.mrf.mxu0
    %1381 = vmatprep.mubr.f32.mxu0 0.0
    %1382 = vmatmul.mubr.f32.gmra.mxu0 %v212
    %v1383 = vpop.f32.mrf.mxu0
    %v1384 = vadd.f32 0.0, %v1383
    %v1385 = vpop.f32.mrf.mxu0
    %1386 = vmatprep.mubr.f32.mxu0 0.0
    %1387 = vmatmul.mubr.f32.gmra.mxu0 %v215
    %v1388 = vpop.f32.mrf.mxu0
    %v1389 = vadd.f32 0.0, %v1388
    %v1390 = vpop.f32.mrf.mxu0
    %1391 = vmatprep.mubr.f32.mxu0 0.0
    %1392 = vmatmul.mubr.f32.gmra.mxu0 %v218
    %v1393 = vpop.f32.mrf.mxu0
    %v1394 = vadd.f32 0.0, %v1393
    %v1395 = vpop.f32.mrf.mxu0
    %1396 = vmatprep.mubr.f32.mxu0 0.0
    %1397 = vmatmul.mubr.f32.gmra.mxu0 %v221
    %v1398 = vpop.f32.mrf.mxu0
    %v1399 = vadd.f32 0.0, %v1398
    %v1400 = vpop.f32.mrf.mxu0
    %1401 = vmatprep.mubr.f32.mxu0 0.0
    %1402 = vmatmul.mubr.f32.gmra.mxu0 %v224
    %v1403 = vpop.f32.mrf.mxu0
    %v1404 = vadd.f32 0.0, %v1403
    %v1405 = vpop.f32.mrf.mxu0
    %1406 = vmatprep.mubr.f32.mxu0 0.0
    %1407 = vmatmul.mubr.f32.gmra.mxu0 %v227
    %v1408 = vpop.f32.mrf.mxu0
    %v1409 = vadd.f32 0.0, %v1408
    %v1410 = vpop.f32.mrf.mxu0
    %1411 = vmatprep.mubr.f32.mxu0 0.0
    %1412 = vmatmul.mubr.f32.gmra.mxu0 %v230
    %v1413 = vpop.f32.mrf.mxu0
    %v1414 = vadd.f32 0.0, %v1413
    %v1415 = vpop.f32.mrf.mxu0
    %1416 = vmatprep.mubr.f32.mxu0 0.0
    %1417 = vmatmul.mubr.f32.gmra.mxu0 %v233
    %v1418 = vpop.f32.mrf.mxu0
    %v1419 = vadd.f32 0.0, %v1418
    %v1420 = vpop.f32.mrf.mxu0
    %1421 = vmatprep.mubr.f32.mxu0 0.0
    %1422 = vmatmul.mubr.f32.gmra.mxu0 %v236
    %v1423 = vpop.f32.mrf.mxu0
    %v1424 = vadd.f32 0.0, %v1423
    %v1425 = vpop.f32.mrf.mxu0
    %1426 = vmatprep.mubr.f32.mxu0 0.0
    %1427 = vmatmul.mubr.f32.gmra.mxu0 %v239
    %v1428 = vpop.f32.mrf.mxu0
    %v1429 = vadd.f32 0.0, %v1428
    %v1430 = vpop.f32.mrf.mxu0
    %1431 = vmatprep.mubr.f32.mxu0 0.0
    %1432 = vmatmul.mubr.f32.gmra.mxu0 %v242
    %v1433 = vpop.f32.mrf.mxu0
    %v1434 = vadd.f32 0.0, %v1433
    %v1435 = vpop.f32.mrf.mxu0
    %1436 = vmatprep.mubr.f32.mxu0 0.0
    %1437 = vmatmul.mubr.f32.gmra.mxu0 %v245
    %v1438 = vpop.f32.mrf.mxu0
    %v1439 = vadd.f32 0.0, %v1438
    %v1440 = vpop.f32.mrf.mxu0
    %1441 = vmatprep.mubr.f32.mxu0 0.0
    %1442 = vmatmul.mubr.f32.gmra.mxu0 %v1199
    %v1443 = vpop.f32.mrf.mxu0
    %v1444 = vadd.f32 0.0, %v1443
    %v1445 = vpop.f32.mrf.mxu0
    %1446 = vmatprep.mubr.f32.mxu0 0.0
    %1447 = vmatmul.mubr.f32.gmra.mxu0 %v1202
    %v1448 = vpop.f32.mrf.mxu0
    %v1449 = vadd.f32 0.0, %v1448
    %v1450 = vpop.f32.mrf.mxu0
    %1451 = vmatprep.mubr.f32.mxu0 0.0
    %1452 = vmatmul.mubr.f32.gmra.mxu0 %v1205
    %v1453 = vpop.f32.mrf.mxu0
    %v1454 = vadd.f32 0.0, %v1453
    %v1455 = vpop.f32.mrf.mxu0
    %1456 = vmatprep.mubr.f32.mxu0 0.0
    %1457 = vmatmul.mubr.f32.gmra.mxu0 %v1208
    %v1458 = vpop.f32.mrf.mxu0
    %v1459 = vadd.f32 0.0, %v1458
    %v1460 = vpop.f32.mrf.mxu0
    %1461 = vmatprep.mubr.f32.mxu0 0.0
    %1462 = vmatmul.mubr.f32.gmra.mxu0 %v260
    %v1463 = vpop.f32.mrf.mxu0
    %v1464 = vadd.f32 0.0, %v1463
    %v1465 = vpop.f32.mrf.mxu0
    %1466 = vmatprep.mubr.f32.mxu0 0.0
    %1467 = vmatmul.mubr.f32.gmra.mxu0 %v263
    %v1468 = vpop.f32.mrf.mxu0
    %v1469 = vadd.f32 0.0, %v1468
    %v1470 = vpop.f32.mrf.mxu0
    %1471 = vmatprep.mubr.f32.mxu0 0.0
    %1472 = vmatmul.mubr.f32.gmra.mxu0 %v266
    %v1473 = vpop.f32.mrf.mxu0
    %v1474 = vadd.f32 0.0, %v1473
    %v1475 = vpop.f32.mrf.mxu0
    %1476 = vmatprep.mubr.f32.mxu0 0.0
    %1477 = vmatmul.mubr.f32.gmra.mxu0 %v269
    %v1478 = vpop.f32.mrf.mxu0
    %v1479 = vadd.f32 0.0, %v1478
    %v1480 = vpop.f32.mrf.mxu0
    %1481 = vmatprep.mubr.f32.mxu0 0.0
    %1482 = vmatmul.mubr.f32.gmra.mxu0 %v272
    %v1483 = vpop.f32.mrf.mxu0
    %v1484 = vadd.f32 0.0, %v1483
    %v1485 = vpop.f32.mrf.mxu0
    %1486 = vmatprep.mubr.f32.mxu0 0.0
    %1487 = vmatmul.mubr.f32.gmra.mxu0 %v275
    %v1488 = vpop.f32.mrf.mxu0
    %v1489 = vadd.f32 0.0, %v1488
    %v1490 = vpop.f32.mrf.mxu0
    %1491 = vmatprep.mubr.f32.mxu0 0.0
    %1492 = vmatmul.mubr.f32.gmra.mxu0 %v278
    %v1493 = vpop.f32.mrf.mxu0
    %v1494 = vadd.f32 0.0, %v1493
    %v1495 = vpop.f32.mrf.mxu0
    %1496 = vmatprep.mubr.f32.mxu0 0.0
    %1497 = vmatmul.mubr.f32.gmra.mxu0 %v281
    %v1498 = vpop.f32.mrf.mxu0
    %v1499 = vadd.f32 0.0, %v1498
    %v1500 = vpop.f32.mrf.mxu0
    %1501 = vmatprep.mubr.f32.mxu0 0.0
    %1502 = vmatmul.mubr.f32.gmra.mxu0 %v284
    %v1503 = vpop.f32.mrf.mxu0
    %v1504 = vadd.f32 0.0, %v1503
    %v1505 = vpop.f32.mrf.mxu0
    %1506 = vmatprep.mubr.f32.mxu0 0.0
    %1507 = vmatmul.mubr.f32.gmra.mxu0 %v287
    %v1508 = vpop.f32.mrf.mxu0
    %v1509 = vadd.f32 0.0, %v1508
    %v1510 = vpop.f32.mrf.mxu0
    %1511 = vmatprep.mubr.f32.mxu0 0.0
    %1512 = vmatmul.mubr.f32.gmra.mxu0 %v290
    %v1513 = vpop.f32.mrf.mxu0
    %v1514 = vadd.f32 0.0, %v1513
    %v1515 = vpop.f32.mrf.mxu0
    %1516 = vmatprep.mubr.f32.mxu0 0.0
    %1517 = vmatmul.mubr.f32.gmra.mxu0 %v293
    %v1518 = vpop.f32.mrf.mxu0
    %v1519 = vadd.f32 0.0, %v1518
    %v1520 = vpop.f32.mrf.mxu0
    %1521 = vmatprep.mubr.f32.mxu0 0.0
    %1522 = vmatmul.mubr.f32.gmra.mxu0 %v1211
    %v1523 = vpop.f32.mrf.mxu0
    %v1524 = vadd.f32 0.0, %v1523
    %v1525 = vpop.f32.mrf.mxu0
    %1526 = vmatprep.mubr.f32.mxu0 0.0
    %1527 = vmatmul.mubr.f32.gmra.mxu0 %v1214
    %v1528 = vpop.f32.mrf.mxu0
    %v1529 = vadd.f32 0.0, %v1528
    %v1530 = vpop.f32.mrf.mxu0
    %1531 = vmatprep.mubr.f32.mxu0 0.0
    %1532 = vmatmul.mubr.f32.gmra.mxu0 %v1217
    %v1533 = vpop.f32.mrf.mxu0
    %v1534 = vadd.f32 0.0, %v1533
    %v1535 = vpop.f32.mrf.mxu0
    %1536 = vmatprep.mubr.f32.mxu0 0.0
    %1537 = vmatmul.mubr.f32.gmra.mxu0 %v1220
    %v1538 = vpop.f32.mrf.mxu0
    %v1539 = vadd.f32 0.0, %v1538
    %v1540 = vpop.f32.mrf.mxu0
    %1541 = vmatprep.mubr.f32.mxu0 0.0
    %1542 = vmatmul.mubr.f32.gmra.mxu0 %v308
    %v1543 = vpop.f32.mrf.mxu0
    %v1544 = vadd.f32 0.0, %v1543
    %v1545 = vpop.f32.mrf.mxu0
    %1546 = vmatprep.mubr.f32.mxu0 0.0
    %1547 = vmatmul.mubr.f32.gmra.mxu0 %v311
    %v1548 = vpop.f32.mrf.mxu0
    %v1549 = vadd.f32 0.0, %v1548
    %v1550 = vpop.f32.mrf.mxu0
    %1551 = vmatprep.mubr.f32.mxu0 0.0
    %1552 = vmatmul.mubr.f32.gmra.mxu0 %v314
    %v1553 = vpop.f32.mrf.mxu0
    %v1554 = vadd.f32 0.0, %v1553
    %v1555 = vpop.f32.mrf.mxu0
    %1556 = vmatprep.mubr.f32.mxu0 0.0
    %1557 = vmatmul.mubr.f32.gmra.mxu0 %v317
    %v1558 = vpop.f32.mrf.mxu0
    %v1559 = vadd.f32 0.0, %v1558
    %v1560 = vpop.f32.mrf.mxu0
    %1561 = vmatprep.mubr.f32.mxu0 0.0
    %1562 = vmatmul.mubr.f32.gmra.mxu0 %v320
    %v1563 = vpop.f32.mrf.mxu0
    %v1564 = vadd.f32 0.0, %v1563
    %v1565 = vpop.f32.mrf.mxu0
    %1566 = vmatprep.mubr.f32.mxu0 0.0
    %1567 = vmatmul.mubr.f32.gmra.mxu0 %v323
    %v1568 = vpop.f32.mrf.mxu0
    %v1569 = vadd.f32 0.0, %v1568
    %v1570 = vpop.f32.mrf.mxu0
    %1571 = vmatprep.mubr.f32.mxu0 0.0
    %1572 = vmatmul.mubr.f32.gmra.mxu0 %v326
    %v1573 = vpop.f32.mrf.mxu0
    %v1574 = vadd.f32 0.0, %v1573
    %v1575 = vpop.f32.mrf.mxu0
    %1576 = vmatprep.mubr.f32.mxu0 0.0
    %1577 = vmatmul.mubr.f32.gmra.mxu0 %v329
    %v1578 = vpop.f32.mrf.mxu0
    %v1579 = vadd.f32 0.0, %v1578
    %v1580 = vpop.f32.mrf.mxu0
    %1581 = vmatprep.mubr.f32.mxu0 0.0
    %1582 = vmatmul.mubr.f32.gmra.mxu0 %v332
    %v1583 = vpop.f32.mrf.mxu0
    %v1584 = vadd.f32 0.0, %v1583
    %v1585 = vpop.f32.mrf.mxu0
    %1586 = vmatprep.mubr.f32.mxu0 0.0
    %1587 = vmatmul.mubr.f32.gmra.mxu0 %v335
    %v1588 = vpop.f32.mrf.mxu0
    %v1589 = vadd.f32 0.0, %v1588
    %v1590 = vpop.f32.mrf.mxu0
    %1591 = vmatprep.mubr.f32.mxu0 0.0
    %1592 = vmatmul.mubr.f32.gmra.mxu0 %v338
    %v1593 = vpop.f32.mrf.mxu0
    %v1594 = vadd.f32 0.0, %v1593
    %v1595 = vpop.f32.mrf.mxu0
    %1596 = vmatprep.mubr.f32.mxu0 0.0
    %1597 = vmatmul.mubr.f32.gmra.mxu0 %v341
    %v1598 = vpop.f32.mrf.mxu0
    %v1599 = vadd.f32 0.0, %v1598
    %v1600 = vpop.f32.mrf.mxu0
    %1601 = vmatprep.mubr.f32.mxu0 0.0
    %1602 = vmatmul.mubr.f32.gmra.mxu0 %v1223
    %v1603 = vpop.f32.mrf.mxu0
    %v1604 = vadd.f32 0.0, %v1603
    %v1605 = vpop.f32.mrf.mxu0
    %1606 = vmatprep.mubr.f32.mxu0 0.0
    %1607 = vmatmul.mubr.f32.gmra.mxu0 %v1226
    %v1608 = vpop.f32.mrf.mxu0
    %v1609 = vadd.f32 0.0, %v1608
    %v1610 = vpop.f32.mrf.mxu0
    %1611 = vmatprep.mubr.f32.mxu0 0.0
    %1612 = vmatmul.mubr.f32.gmra.mxu0 %v1229
    %v1613 = vpop.f32.mrf.mxu0
    %v1614 = vadd.f32 0.0, %v1613
    %v1615 = vpop.f32.mrf.mxu0
    %1616 = vmatprep.mubr.f32.mxu0 0.0
    %1617 = vmatmul.mubr.f32.gmra.mxu0 %v1232
    %v1618 = vpop.f32.mrf.mxu0
    %v1619 = vadd.f32 0.0, %v1618
    %v1620 = vpop.f32.mrf.mxu0
    %1621 = vdwg.mxu0
    %v1622 = vadd.f32 %v850, %v1304
    %v1623 = vadd.f32 %v855, %v1309
    %v1624 = vadd.f32 %v860, %v1314
    %v1625 = vadd.f32 %v865, %v1319
    %v1626 = vadd.f32 %v870, %v1324
    %v1627 = vadd.f32 %v875, %v1329
    %v1628 = vadd.f32 %v880, %v1334
    %v1629 = vadd.f32 %v885, %v1339
    %v1630 = vadd.f32 %v890, %v1344
    %v1631 = vadd.f32 %v895, %v1349
    %v1632 = vadd.f32 %v900, %v1354
    %v1633 = vadd.f32 %v905, %v1359
    %v1634 = vadd.f32 %v910, %v1364
    %v1635 = vadd.f32 %v915, %v1369
    %v1636 = vadd.f32 %v920, %v1374
    %v1637 = vadd.f32 %v925, %v1379
    %v1638 = vadd.f32 %v930, %v1384
    %v1639 = vadd.f32 %v935, %v1389
    %v1640 = vadd.f32 %v940, %v1394
    %v1641 = vadd.f32 %v945, %v1399
    %v1642 = vadd.f32 %v950, %v1404
    %v1643 = vadd.f32 %v955, %v1409
    %v1644 = vadd.f32 %v960, %v1414
    %v1645 = vadd.f32 %v965, %v1419
    %v1646 = vadd.f32 %v970, %v1424
    %v1647 = vadd.f32 %v975, %v1429
    %v1648 = vadd.f32 %v980, %v1434
    %v1649 = vadd.f32 %v985, %v1439
    %v1650 = vadd.f32 %v990, %v1444
    %v1651 = vadd.f32 %v995, %v1449
    %v1652 = vadd.f32 %v1000, %v1454
    %v1653 = vadd.f32 %v1005, %v1459
    %v1654 = vadd.f32 %v1010, %v1464
    %v1655 = vadd.f32 %v1015, %v1469
    %v1656 = vadd.f32 %v1020, %v1474
    %v1657 = vadd.f32 %v1025, %v1479
    %v1658 = vadd.f32 %v1030, %v1484
    %v1659 = vadd.f32 %v1035, %v1489
    %v1660 = vadd.f32 %v1040, %v1494
    %v1661 = vadd.f32 %v1045, %v1499
    %v1662 = vadd.f32 %v1050, %v1504
    %v1663 = vadd.f32 %v1055, %v1509
    %v1664 = vadd.f32 %v1060, %v1514
    %v1665 = vadd.f32 %v1065, %v1519
    %v1666 = vadd.f32 %v1070, %v1524
    %v1667 = vadd.f32 %v1075, %v1529
    %v1668 = vadd.f32 %v1080, %v1534
    %v1669 = vadd.f32 %v1085, %v1539
    %v1670 = vadd.f32 %v1090, %v1544
    %v1671 = vadd.f32 %v1095, %v1549
    %v1672 = vadd.f32 %v1100, %v1554
    %v1673 = vadd.f32 %v1105, %v1559
    %v1674 = vadd.f32 %v1110, %v1564
    %v1675 = vadd.f32 %v1115, %v1569
    %v1676 = vadd.f32 %v1120, %v1574
    %v1677 = vadd.f32 %v1125, %v1579
    %v1678 = vadd.f32 %v1130, %v1584
    %v1679 = vadd.f32 %v1135, %v1589
    %v1680 = vadd.f32 %v1140, %v1594
    %v1681 = vadd.f32 %v1145, %v1599
    %v1682 = vadd.f32 %v1150, %v1604
    %v1683 = vadd.f32 %v1155, %v1609
    %v1684 = vadd.f32 %v1160, %v1614
    %v1685 = vadd.f32 %v1165, %v1619
    %s1686 = scalar_lea.vmem %s0, 1456
    %v1687 = vld [vmem:[%s1686] sm:$0xff]
    %v1688 = vld [vmem:[%s1686 + $0x10] sm:$0xff]
    %v1689 = vld [vmem:[%s1686 + $0x20] sm:$0xff]
    %v1690 = vld [vmem:[%s1686 + $0x30] sm:$0xff]
    %s1691 = scalar_lea.vmem %s0, 1168
    %v1692 = vld [vmem:[%s1691 + $0x2] sm:$0xff]
    %v1693 = vld [vmem:[%s1691 + $0x12] sm:$0xff]
    %v1694 = vld [vmem:[%s1691 + $0x22] sm:$0xff]
    %v1695 = vld [vmem:[%s1691 + $0x32] sm:$0xff]
    %s1696 = scalar_lea.vmem %s0, 1264
    %v1697 = vld [vmem:[%s1696 + $0x2] sm:$0xff]
    %v1698 = vld [vmem:[%s1696 + $0x12] sm:$0xff]
    %v1699 = vld [vmem:[%s1696 + $0x22] sm:$0xff]
    %v1700 = vld [vmem:[%s1696 + $0x32] sm:$0xff]
    %s1701 = scalar_lea.vmem %s0, 1360
    %v1702 = vld [vmem:[%s1701 + $0x2] sm:$0xff]
    %v1703 = vld [vmem:[%s1701 + $0x12] sm:$0xff]
    %v1704 = vld [vmem:[%s1701 + $0x22] sm:$0xff]
    %v1705 = vld [vmem:[%s1701 + $0x32] sm:$0xff]
    %s1706 = scalar_lea.vmem %s1, 12
    %v1707 = vld [vmem:[%s1706] sm:$0x7]
    %v1709 = vsel %vm150, %v1687, 0
    %v1712 = vsel %vm150, %v1688, 0
    %v1715 = vsel %vm150, %v1689, 0
    %v1718 = vsel %vm150, %v1690, 0
    %v1721 = vsel %vm150, %v1692, 0
    %v1724 = vsel %vm150, %v1693, 0
    %v1727 = vsel %vm150, %v1694, 0
    %v1730 = vsel %vm150, %v1695, 0
    %v1733 = vsel %vm150, %v1697, 0
    %v1736 = vsel %vm150, %v1698, 0
    %v1739 = vsel %vm150, %v1699, 0
    %v1742 = vsel %vm150, %v1700, 0
    %v1745 = vsel %vm150, %v1702, 0
    %v1748 = vsel %vm150, %v1703, 0
    %v1751 = vsel %vm150, %v1704, 0
    %v1754 = vsel %vm150, %v1705, 0
    %v1757 = vsel %vm343, %v1707, 0
    %1759 = vmatprep.subr.mxu0 0.0
    %1760 = vmatpush1.msra.mxu0 0.0
    %1761 = vmatprep.subr.mxu0 0.0
    %1762 = vmatpush1.msra.mxu0 0.0
    %1763 = vmatprep.subr.mxu0 0.0
    %1764 = vmatpush1.msra.mxu0 0.0
    %1765 = vmatprep.subr.mxu0 0.0
    %1766 = vmatpush1.msra.mxu0 0.0
    %1767 = vmatprep.subr.mxu0 0.0
    %1768 = vmatpush1.msra.mxu0 0.0
    %1769 = vmatprep.subr.mxu0 0.0
    %1770 = vmatpush1.msra.mxu0 0.0
    %1771 = vmatprep.subr.mxu0 0.0
    %1772 = vmatpush1.msra.mxu0 0.0
    %1773 = vmatprep.subr.mxu0 0.0
    %1774 = vmatpush1.msra.mxu0 0.0
    %1775 = vmatprep.subr.mxu0 0.0
    %1776 = vmatpush1.msra.mxu0 0.0
    %1777 = vmatprep.subr.mxu0 0.0
    %1778 = vmatpush1.msra.mxu0 0.0
    %1779 = vmatprep.subr.mxu0 0.0
    %1780 = vmatpush1.msra.mxu0 0.0
    %1781 = vmatprep.subr.mxu0 0.0
    %1782 = vmatpush1.msra.mxu0 0.0
    %1783 = vmatprep.subr.mxu0 0.0
    %1784 = vmatpush1.msra.mxu0 0.0
    %1785 = vmatprep.subr.mxu0 0.0
    %1786 = vmatpush1.msra.mxu0 0.0
    %1787 = vmatprep.subr.mxu0 0.0
    %1788 = vmatpush1.msra.mxu0 0.0
    %1789 = vmatprep.subr.mxu0 0.0
    %1790 = vmatpush1.msra.mxu0 %v1757
    %1791 = vmatprep.subr.mxu0 0.0
    %1792 = vmatpush2.msra.mxu0 0.0
    %1793 = vmatprep.subr.mxu0 0.0
    %1794 = vmatpush2.msra.mxu0 0.0
    %1795 = vmatprep.subr.mxu0 0.0
    %1796 = vmatpush2.msra.mxu0 0.0
    %1797 = vmatprep.subr.mxu0 0.0
    %1798 = vmatpush2.msra.mxu0 0.0
    %1799 = vmatprep.subr.mxu0 0.0
    %1800 = vmatpush2.msra.mxu0 0.0
    %1801 = vmatprep.subr.mxu0 0.0
    %1802 = vmatpush2.msra.mxu0 0.0
    %1803 = vmatprep.subr.mxu0 0.0
    %1804 = vmatpush2.msra.mxu0 0.0
    %1805 = vmatprep.subr.mxu0 0.0
    %1806 = vmatpush2.msra.mxu0 0.0
    %1807 = vmatprep.subr.mxu0 0.0
    %1808 = vmatpush2.msra.mxu0 0.0
    %1809 = vmatprep.subr.mxu0 0.0
    %1810 = vmatpush2.msra.mxu0 0.0
    %1811 = vmatprep.subr.mxu0 0.0
    %1812 = vmatpush2.msra.mxu0 0.0
    %1813 = vmatprep.subr.mxu0 0.0
    %1814 = vmatpush2.msra.mxu0 0.0
    %1815 = vmatprep.subr.mxu0 0.0
    %1816 = vmatpush2.msra.mxu0 0.0
    %1817 = vmatprep.subr.mxu0 0.0
    %1818 = vmatpush2.msra.mxu0 0.0
    %1819 = vmatprep.subr.mxu0 0.0
    %1820 = vmatpush2.msra.mxu0 0.0
    %1821 = vmatprep.subr.mxu0 0.0
    %1822 = vmatpush2.msra.mxu0 0.0
    %1823 = vmatprep.mubr.f32.mxu0 0.0
    %1824 = vmatmul.mubr.f32.gmra.mxu0 %v745
    %v1825 = vpop.f32.mrf.mxu0
    %v1826 = vadd.f32 0.0, %v1825
    %v1827 = vpop.f32.mrf.mxu0
    %1828 = vmatprep.mubr.f32.mxu0 0.0
    %1829 = vmatmul.mubr.f32.gmra.mxu0 %v748
    %v1830 = vpop.f32.mrf.mxu0
    %v1831 = vadd.f32 0.0, %v1830
    %v1832 = vpop.f32.mrf.mxu0
    %1833 = vmatprep.mubr.f32.mxu0 0.0
    %1834 = vmatmul.mubr.f32.gmra.mxu0 %v751
    %v1835 = vpop.f32.mrf.mxu0
    %v1836 = vadd.f32 0.0, %v1835
    %v1837 = vpop.f32.mrf.mxu0
    %1838 = vmatprep.mubr.f32.mxu0 0.0
    %1839 = vmatmul.mubr.f32.gmra.mxu0 %v754
    %v1840 = vpop.f32.mrf.mxu0
    %v1841 = vadd.f32 0.0, %v1840
    %v1842 = vpop.f32.mrf.mxu0
    %1843 = vmatprep.mubr.f32.mxu0 0.0
    %1844 = vmatmul.mubr.f32.gmra.mxu0 %v200
    %v1845 = vpop.f32.mrf.mxu0
    %v1846 = vadd.f32 0.0, %v1845
    %v1847 = vpop.f32.mrf.mxu0
    %1848 = vmatprep.mubr.f32.mxu0 0.0
    %1849 = vmatmul.mubr.f32.gmra.mxu0 %v203
    %v1850 = vpop.f32.mrf.mxu0
    %v1851 = vadd.f32 0.0, %v1850
    %v1852 = vpop.f32.mrf.mxu0
    %1853 = vmatprep.mubr.f32.mxu0 0.0
    %1854 = vmatmul.mubr.f32.gmra.mxu0 %v206
    %v1855 = vpop.f32.mrf.mxu0
    %v1856 = vadd.f32 0.0, %v1855
    %v1857 = vpop.f32.mrf.mxu0
    %1858 = vmatprep.mubr.f32.mxu0 0.0
    %1859 = vmatmul.mubr.f32.gmra.mxu0 %v209
    %v1860 = vpop.f32.mrf.mxu0
    %v1861 = vadd.f32 0.0, %v1860
    %v1862 = vpop.f32.mrf.mxu0
    %1863 = vmatprep.mubr.f32.mxu0 0.0
    %1864 = vmatmul.mubr.f32.gmra.mxu0 %v212
    %v1865 = vpop.f32.mrf.mxu0
    %v1866 = vadd.f32 0.0, %v1865
    %v1867 = vpop.f32.mrf.mxu0
    %1868 = vmatprep.mubr.f32.mxu0 0.0
    %1869 = vmatmul.mubr.f32.gmra.mxu0 %v215
    %v1870 = vpop.f32.mrf.mxu0
    %v1871 = vadd.f32 0.0, %v1870
    %v1872 = vpop.f32.mrf.mxu0
    %1873 = vmatprep.mubr.f32.mxu0 0.0
    %1874 = vmatmul.mubr.f32.gmra.mxu0 %v218
    %v1875 = vpop.f32.mrf.mxu0
    %v1876 = vadd.f32 0.0, %v1875
    %v1877 = vpop.f32.mrf.mxu0
    %1878 = vmatprep.mubr.f32.mxu0 0.0
    %1879 = vmatmul.mubr.f32.gmra.mxu0 %v221
    %v1880 = vpop.f32.mrf.mxu0
    %v1881 = vadd.f32 0.0, %v1880
    %v1882 = vpop.f32.mrf.mxu0
    %1883 = vmatprep.mubr.f32.mxu0 0.0
    %1884 = vmatmul.mubr.f32.gmra.mxu0 %v224
    %v1885 = vpop.f32.mrf.mxu0
    %v1886 = vadd.f32 0.0, %v1885
    %v1887 = vpop.f32.mrf.mxu0
    %1888 = vmatprep.mubr.f32.mxu0 0.0
    %1889 = vmatmul.mubr.f32.gmra.mxu0 %v227
    %v1890 = vpop.f32.mrf.mxu0
    %v1891 = vadd.f32 0.0, %v1890
    %v1892 = vpop.f32.mrf.mxu0
    %1893 = vmatprep.mubr.f32.mxu0 0.0
    %1894 = vmatmul.mubr.f32.gmra.mxu0 %v230
    %v1895 = vpop.f32.mrf.mxu0
    %v1896 = vadd.f32 0.0, %v1895
    %v1897 = vpop.f32.mrf.mxu0
    %1898 = vmatprep.mubr.f32.mxu0 0.0
    %1899 = vmatmul.mubr.f32.gmra.mxu0 %v233
    %v1900 = vpop.f32.mrf.mxu0
    %v1901 = vadd.f32 0.0, %v1900
    %v1902 = vpop.f32.mrf.mxu0
    %1903 = vmatprep.mubr.f32.mxu0 0.0
    %1904 = vmatmul.mubr.f32.gmra.mxu0 %v757
    %v1905 = vpop.f32.mrf.mxu0
    %v1906 = vadd.f32 0.0, %v1905
    %v1907 = vpop.f32.mrf.mxu0
    %1908 = vmatprep.mubr.f32.mxu0 0.0
    %1909 = vmatmul.mubr.f32.gmra.mxu0 %v760
    %v1910 = vpop.f32.mrf.mxu0
    %v1911 = vadd.f32 0.0, %v1910
    %v1912 = vpop.f32.mrf.mxu0
    %1913 = vmatprep.mubr.f32.mxu0 0.0
    %1914 = vmatmul.mubr.f32.gmra.mxu0 %v763
    %v1915 = vpop.f32.mrf.mxu0
    %v1916 = vadd.f32 0.0, %v1915
    %v1917 = vpop.f32.mrf.mxu0
    %1918 = vmatprep.mubr.f32.mxu0 0.0
    %1919 = vmatmul.mubr.f32.gmra.mxu0 %v766
    %v1920 = vpop.f32.mrf.mxu0
    %v1921 = vadd.f32 0.0, %v1920
    %v1922 = vpop.f32.mrf.mxu0
    %1923 = vmatprep.mubr.f32.mxu0 0.0
    %1924 = vmatmul.mubr.f32.gmra.mxu0 %v248
    %v1925 = vpop.f32.mrf.mxu0
    %v1926 = vadd.f32 0.0, %v1925
    %v1927 = vpop.f32.mrf.mxu0
    %1928 = vmatprep.mubr.f32.mxu0 0.0
    %1929 = vmatmul.mubr.f32.gmra.mxu0 %v251
    %v1930 = vpop.f32.mrf.mxu0
    %v1931 = vadd.f32 0.0, %v1930
    %v1932 = vpop.f32.mrf.mxu0
    %1933 = vmatprep.mubr.f32.mxu0 0.0
    %1934 = vmatmul.mubr.f32.gmra.mxu0 %v254
    %v1935 = vpop.f32.mrf.mxu0
    %v1936 = vadd.f32 0.0, %v1935
    %v1937 = vpop.f32.mrf.mxu0
    %1938 = vmatprep.mubr.f32.mxu0 0.0
    %1939 = vmatmul.mubr.f32.gmra.mxu0 %v257
    %v1940 = vpop.f32.mrf.mxu0
    %v1941 = vadd.f32 0.0, %v1940
    %v1942 = vpop.f32.mrf.mxu0
    %1943 = vmatprep.mubr.f32.mxu0 0.0
    %1944 = vmatmul.mubr.f32.gmra.mxu0 %v260
    %v1945 = vpop.f32.mrf.mxu0
    %v1946 = vadd.f32 0.0, %v1945
    %v1947 = vpop.f32.mrf.mxu0
    %1948 = vmatprep.mubr.f32.mxu0 0.0
    %1949 = vmatmul.mubr.f32.gmra.mxu0 %v263
    %v1950 = vpop.f32.mrf.mxu0
    %v1951 = vadd.f32 0.0, %v1950
    %v1952 = vpop.f32.mrf.mxu0
    %1953 = vmatprep.mubr.f32.mxu0 0.0
    %1954 = vmatmul.mubr.f32.gmra.mxu0 %v266
    %v1955 = vpop.f32.mrf.mxu0
    %v1956 = vadd.f32 0.0, %v1955
    %v1957 = vpop.f32.mrf.mxu0
    %1958 = vmatprep.mubr.f32.mxu0 0.0
    %1959 = vmatmul.mubr.f32.gmra.mxu0 %v269
    %v1960 = vpop.f32.mrf.mxu0
    %v1961 = vadd.f32 0.0, %v1960
    %v1962 = vpop.f32.mrf.mxu0
    %1963 = vmatprep.mubr.f32.mxu0 0.0
    %1964 = vmatmul.mubr.f32.gmra.mxu0 %v272
    %v1965 = vpop.f32.mrf.mxu0
    %v1966 = vadd.f32 0.0, %v1965
    %v1967 = vpop.f32.mrf.mxu0
    %1968 = vmatprep.mubr.f32.mxu0 0.0
    %1969 = vmatmul.mubr.f32.gmra.mxu0 %v275
    %v1970 = vpop.f32.mrf.mxu0
    %v1971 = vadd.f32 0.0, %v1970
    %v1972 = vpop.f32.mrf.mxu0
    %1973 = vmatprep.mubr.f32.mxu0 0.0
    %1974 = vmatmul.mubr.f32.gmra.mxu0 %v278
    %v1975 = vpop.f32.mrf.mxu0
    %v1976 = vadd.f32 0.0, %v1975
    %v1977 = vpop.f32.mrf.mxu0
    %1978 = vmatprep.mubr.f32.mxu0 0.0
    %1979 = vmatmul.mubr.f32.gmra.mxu0 %v281
    %v1980 = vpop.f32.mrf.mxu0
    %v1981 = vadd.f32 0.0, %v1980
    %v1982 = vpop.f32.mrf.mxu0
    %1983 = vmatprep.mubr.f32.mxu0 0.0
    %1984 = vmatmul.mubr.f32.gmra.mxu0 %v769
    %v1985 = vpop.f32.mrf.mxu0
    %v1986 = vadd.f32 0.0, %v1985
    %v1987 = vpop.f32.mrf.mxu0
    %1988 = vmatprep.mubr.f32.mxu0 0.0
    %1989 = vmatmul.mubr.f32.gmra.mxu0 %v772
    %v1990 = vpop.f32.mrf.mxu0
    %v1991 = vadd.f32 0.0, %v1990
    %v1992 = vpop.f32.mrf.mxu0
    %1993 = vmatprep.mubr.f32.mxu0 0.0
    %1994 = vmatmul.mubr.f32.gmra.mxu0 %v775
    %v1995 = vpop.f32.mrf.mxu0
    %v1996 = vadd.f32 0.0, %v1995
    %v1997 = vpop.f32.mrf.mxu0
    %1998 = vmatprep.mubr.f32.mxu0 0.0
    %1999 = vmatmul.mubr.f32.gmra.mxu0 %v778
    %v2000 = vpop.f32.mrf.mxu0
    %v2001 = vadd.f32 0.0, %v2000
    %v2002 = vpop.f32.mrf.mxu0
    %2003 = vmatprep.mubr.f32.mxu0 0.0
    %2004 = vmatmul.mubr.f32.gmra.mxu0 %v296
    %v2005 = vpop.f32.mrf.mxu0
    %v2006 = vadd.f32 0.0, %v2005
    %v2007 = vpop.f32.mrf.mxu0
    %2008 = vmatprep.mubr.f32.mxu0 0.0
    %2009 = vmatmul.mubr.f32.gmra.mxu0 %v299
    %v2010 = vpop.f32.mrf.mxu0
    %v2011 = vadd.f32 0.0, %v2010
    %v2012 = vpop.f32.mrf.mxu0
    %2013 = vmatprep.mubr.f32.mxu0 0.0
    %2014 = vmatmul.mubr.f32.gmra.mxu0 %v302
    %v2015 = vpop.f32.mrf.mxu0
    %v2016 = vadd.f32 0.0, %v2015
    %v2017 = vpop.f32.mrf.mxu0
    %2018 = vmatprep.mubr.f32.mxu0 0.0
    %2019 = vmatmul.mubr.f32.gmra.mxu0 %v305
    %v2020 = vpop.f32.mrf.mxu0
    %v2021 = vadd.f32 0.0, %v2020
    %v2022 = vpop.f32.mrf.mxu0
    %2023 = vmatprep.mubr.f32.mxu0 0.0
    %2024 = vmatmul.mubr.f32.gmra.mxu0 %v308
    %v2025 = vpop.f32.mrf.mxu0
    %v2026 = vadd.f32 0.0, %v2025
    %v2027 = vpop.f32.mrf.mxu0
    %2028 = vmatprep.mubr.f32.mxu0 0.0
    %2029 = vmatmul.mubr.f32.gmra.mxu0 %v311
    %v2030 = vpop.f32.mrf.mxu0
    %v2031 = vadd.f32 0.0, %v2030
    %v2032 = vpop.f32.mrf.mxu0
    %2033 = vmatprep.mubr.f32.mxu0 0.0
    %2034 = vmatmul.mubr.f32.gmra.mxu0 %v314
    %v2035 = vpop.f32.mrf.mxu0
    %v2036 = vadd.f32 0.0, %v2035
    %v2037 = vpop.f32.mrf.mxu0
    %2038 = vmatprep.mubr.f32.mxu0 0.0
    %2039 = vmatmul.mubr.f32.gmra.mxu0 %v317
    %v2040 = vpop.f32.mrf.mxu0
    %v2041 = vadd.f32 0.0, %v2040
    %v2042 = vpop.f32.mrf.mxu0
    %2043 = vmatprep.mubr.f32.mxu0 0.0
    %2044 = vmatmul.mubr.f32.gmra.mxu0 %v320
    %v2045 = vpop.f32.mrf.mxu0
    %v2046 = vadd.f32 0.0, %v2045
    %v2047 = vpop.f32.mrf.mxu0
    %2048 = vmatprep.mubr.f32.mxu0 0.0
    %2049 = vmatmul.mubr.f32.gmra.mxu0 %v323
    %v2050 = vpop.f32.mrf.mxu0
    %v2051 = vadd.f32 0.0, %v2050
    %v2052 = vpop.f32.mrf.mxu0
    %2053 = vmatprep.mubr.f32.mxu0 0.0
    %2054 = vmatmul.mubr.f32.gmra.mxu0 %v326
    %v2055 = vpop.f32.mrf.mxu0
    %v2056 = vadd.f32 0.0, %v2055
    %v2057 = vpop.f32.mrf.mxu0
    %2058 = vmatprep.mubr.f32.mxu0 0.0
    %2059 = vmatmul.mubr.f32.gmra.mxu0 %v329
    %v2060 = vpop.f32.mrf.mxu0
    %v2061 = vadd.f32 0.0, %v2060
    %v2062 = vpop.f32.mrf.mxu0
    %2063 = vmatprep.mubr.f32.mxu0 0.0
    %2064 = vmatmul.mubr.f32.gmra.mxu0 %v1709
    %v2065 = vpop.f32.mrf.mxu0
    %v2066 = vadd.f32 0.0, %v2065
    %v2067 = vpop.f32.mrf.mxu0
    %2068 = vmatprep.mubr.f32.mxu0 0.0
    %2069 = vmatmul.mubr.f32.gmra.mxu0 %v1712
    %v2070 = vpop.f32.mrf.mxu0
    %v2071 = vadd.f32 0.0, %v2070
    %v2072 = vpop.f32.mrf.mxu0
    %2073 = vmatprep.mubr.f32.mxu0 0.0
    %2074 = vmatmul.mubr.f32.gmra.mxu0 %v1715
    %v2075 = vpop.f32.mrf.mxu0
    %v2076 = vadd.f32 0.0, %v2075
    %v2077 = vpop.f32.mrf.mxu0
    %2078 = vmatprep.mubr.f32.mxu0 0.0
    %2079 = vmatmul.mubr.f32.gmra.mxu0 %v1718
    %v2080 = vpop.f32.mrf.mxu0
    %v2081 = vadd.f32 0.0, %v2080
    %v2082 = vpop.f32.mrf.mxu0
    %2083 = vmatprep.mubr.f32.mxu0 0.0
    %2084 = vmatmul.mubr.f32.gmra.mxu0 %v1721
    %v2085 = vpop.f32.mrf.mxu0
    %v2086 = vadd.f32 0.0, %v2085
    %v2087 = vpop.f32.mrf.mxu0
    %2088 = vmatprep.mubr.f32.mxu0 0.0
    %2089 = vmatmul.mubr.f32.gmra.mxu0 %v1724
    %v2090 = vpop.f32.mrf.mxu0
    %v2091 = vadd.f32 0.0, %v2090
    %v2092 = vpop.f32.mrf.mxu0
    %2093 = vmatprep.mubr.f32.mxu0 0.0
    %2094 = vmatmul.mubr.f32.gmra.mxu0 %v1727
    %v2095 = vpop.f32.mrf.mxu0
    %v2096 = vadd.f32 0.0, %v2095
    %v2097 = vpop.f32.mrf.mxu0
    %2098 = vmatprep.mubr.f32.mxu0 0.0
    %2099 = vmatmul.mubr.f32.gmra.mxu0 %v1730
    %v2100 = vpop.f32.mrf.mxu0
    %v2101 = vadd.f32 0.0, %v2100
    %v2102 = vpop.f32.mrf.mxu0
    %2103 = vmatprep.mubr.f32.mxu0 0.0
    %2104 = vmatmul.mubr.f32.gmra.mxu0 %v1733
    %v2105 = vpop.f32.mrf.mxu0
    %v2106 = vadd.f32 0.0, %v2105
    %v2107 = vpop.f32.mrf.mxu0
    %2108 = vmatprep.mubr.f32.mxu0 0.0
    %2109 = vmatmul.mubr.f32.gmra.mxu0 %v1736
    %v2110 = vpop.f32.mrf.mxu0
    %v2111 = vadd.f32 0.0, %v2110
    %v2112 = vpop.f32.mrf.mxu0
    %2113 = vmatprep.mubr.f32.mxu0 0.0
    %2114 = vmatmul.mubr.f32.gmra.mxu0 %v1739
    %v2115 = vpop.f32.mrf.mxu0
    %v2116 = vadd.f32 0.0, %v2115
    %v2117 = vpop.f32.mrf.mxu0
    %2118 = vmatprep.mubr.f32.mxu0 0.0
    %2119 = vmatmul.mubr.f32.gmra.mxu0 %v1742
    %v2120 = vpop.f32.mrf.mxu0
    %v2121 = vadd.f32 0.0, %v2120
    %v2122 = vpop.f32.mrf.mxu0
    %2123 = vmatprep.mubr.f32.mxu0 0.0
    %2124 = vmatmul.mubr.f32.gmra.mxu0 %v1745
    %v2125 = vpop.f32.mrf.mxu0
    %v2126 = vadd.f32 0.0, %v2125
    %v2127 = vpop.f32.mrf.mxu0
    %2128 = vmatprep.mubr.f32.mxu0 0.0
    %2129 = vmatmul.mubr.f32.gmra.mxu0 %v1748
    %v2130 = vpop.f32.mrf.mxu0
    %v2131 = vadd.f32 0.0, %v2130
    %v2132 = vpop.f32.mrf.mxu0
    %2133 = vmatprep.mubr.f32.mxu0 0.0
    %2134 = vmatmul.mubr.f32.gmra.mxu0 %v1751
    %v2135 = vpop.f32.mrf.mxu0
    %v2136 = vadd.f32 0.0, %v2135
    %v2137 = vpop.f32.mrf.mxu0
    %2138 = vmatprep.mubr.f32.mxu0 0.0
    %2139 = vmatmul.mubr.f32.gmra.mxu0 %v1754
    %v2140 = vpop.f32.mrf.mxu0
    %v2141 = vadd.f32 0.0, %v2140
    %v2142 = vpop.f32.mrf.mxu0
    %2143 = vdwg.mxu0
    %v2144 = vadd.f32 %v1622, %v1826
    %v2145 = vadd.f32 %v1623, %v1831
    %v2146 = vadd.f32 %v1624, %v1836
    %v2147 = vadd.f32 %v1625, %v1841
    %v2148 = vadd.f32 %v1626, %v1846
    %v2149 = vadd.f32 %v1627, %v1851
    %v2150 = vadd.f32 %v1628, %v1856
    %v2151 = vadd.f32 %v1629, %v1861
    %v2152 = vadd.f32 %v1630, %v1866
    %v2153 = vadd.f32 %v1631, %v1871
    %v2154 = vadd.f32 %v1632, %v1876
    %v2155 = vadd.f32 %v1633, %v1881
    %v2156 = vadd.f32 %v1634, %v1886
    %v2157 = vadd.f32 %v1635, %v1891
    %v2158 = vadd.f32 %v1636, %v1896
    %v2159 = vadd.f32 %v1637, %v1901
    %v2160 = vadd.f32 %v1638, %v1906
    %v2161 = vadd.f32 %v1639, %v1911
    %v2162 = vadd.f32 %v1640, %v1916
    %v2163 = vadd.f32 %v1641, %v1921
    %v2164 = vadd.f32 %v1642, %v1926
    %v2165 = vadd.f32 %v1643, %v1931
    %v2166 = vadd.f32 %v1644, %v1936
    %v2167 = vadd.f32 %v1645, %v1941
    %v2168 = vadd.f32 %v1646, %v1946
    %v2169 = vadd.f32 %v1647, %v1951
    %v2170 = vadd.f32 %v1648, %v1956
    %v2171 = vadd.f32 %v1649, %v1961
    %v2172 = vadd.f32 %v1650, %v1966
    %v2173 = vadd.f32 %v1651, %v1971
    %v2174 = vadd.f32 %v1652, %v1976
    %v2175 = vadd.f32 %v1653, %v1981
    %v2176 = vadd.f32 %v1654, %v1986
    %v2177 = vadd.f32 %v1655, %v1991
    %v2178 = vadd.f32 %v1656, %v1996
    %v2179 = vadd.f32 %v1657, %v2001
    %v2180 = vadd.f32 %v1658, %v2006
    %v2181 = vadd.f32 %v1659, %v2011
    %v2182 = vadd.f32 %v1660, %v2016
    %v2183 = vadd.f32 %v1661, %v2021
    %v2184 = vadd.f32 %v1662, %v2026
    %v2185 = vadd.f32 %v1663, %v2031
    %v2186 = vadd.f32 %v1664, %v2036
    %v2187 = vadd.f32 %v1665, %v2041
    %v2188 = vadd.f32 %v1666, %v2046
    %v2189 = vadd.f32 %v1667, %v2051
    %v2190 = vadd.f32 %v1668, %v2056
    %v2191 = vadd.f32 %v1669, %v2061
    %v2192 = vadd.f32 %v1670, %v2066
    %v2193 = vadd.f32 %v1671, %v2071
    %v2194 = vadd.f32 %v1672, %v2076
    %v2195 = vadd.f32 %v1673, %v2081
    %v2196 = vadd.f32 %v1674, %v2086
    %v2197 = vadd.f32 %v1675, %v2091
    %v2198 = vadd.f32 %v1676, %v2096
    %v2199 = vadd.f32 %v1677, %v2101
    %v2200 = vadd.f32 %v1678, %v2106
    %v2201 = vadd.f32 %v1679, %v2111
    %v2202 = vadd.f32 %v1680, %v2116
    %v2203 = vadd.f32 %v1681, %v2121
    %v2204 = vadd.f32 %v1682, %v2126
    %v2205 = vadd.f32 %v1683, %v2131
    %v2206 = vadd.f32 %v1684, %v2136
    %v2207 = vadd.f32 %v1685, %v2141
    %v2208 = vld [vmem:[%s1686 + $0x2] sm:$0xff]
    %v2209 = vld [vmem:[%s1686 + $0x12] sm:$0xff]
    %v2210 = vld [vmem:[%s1686 + $0x22] sm:$0xff]
    %v2211 = vld [vmem:[%s1686 + $0x32] sm:$0xff]
    %s2212 = scalar_lea.vmem %s1, 16
    %v2213 = vld [vmem:[%s2212] sm:$0x7]
    %v2215 = vsel %vm150, %v2208, 0
    %v2218 = vsel %vm150, %v2209, 0
    %v2221 = vsel %vm150, %v2210, 0
    %v2224 = vsel %vm150, %v2211, 0
    %v2227 = vsel %vm343, %v2213, 0
    %2229 = vmatprep.subr.mxu0 0.0
    %2230 = vmatpush1.msra.mxu0 0.0
    %2231 = vmatprep.subr.mxu0 0.0
    %2232 = vmatpush1.msra.mxu0 0.0
    %2233 = vmatprep.subr.mxu0 0.0
    %2234 = vmatpush1.msra.mxu0 0.0
    %2235 = vmatprep.subr.mxu0 0.0
    %2236 = vmatpush1.msra.mxu0 0.0
    %2237 = vmatprep.subr.mxu0 0.0
    %2238 = vmatpush1.msra.mxu0 0.0
    %2239 = vmatprep.subr.mxu0 0.0
    %2240 = vmatpush1.msra.mxu0 0.0
    %2241 = vmatprep.subr.mxu0 0.0
    %2242 = vmatpush1.msra.mxu0 0.0
    %2243 = vmatprep.subr.mxu0 0.0
    %2244 = vmatpush1.msra.mxu0 0.0
    %2245 = vmatprep.subr.mxu0 0.0
    %2246 = vmatpush1.msra.mxu0 0.0
    %2247 = vmatprep.subr.mxu0 0.0
    %2248 = vmatpush1.msra.mxu0 0.0
    %2249 = vmatprep.subr.mxu0 0.0
    %2250 = vmatpush1.msra.mxu0 0.0
    %2251 = vmatprep.subr.mxu0 0.0
    %2252 = vmatpush1.msra.mxu0 0.0
    %2253 = vmatprep.subr.mxu0 0.0
    %2254 = vmatpush1.msra.mxu0 0.0
    %2255 = vmatprep.subr.mxu0 0.0
    %2256 = vmatpush1.msra.mxu0 0.0
    %2257 = vmatprep.subr.mxu0 0.0
    %2258 = vmatpush1.msra.mxu0 0.0
    %2259 = vmatprep.subr.mxu0 0.0
    %2260 = vmatpush1.msra.mxu0 %v2227
    %2261 = vmatprep.subr.mxu0 0.0
    %2262 = vmatpush2.msra.mxu0 0.0
    %2263 = vmatprep.subr.mxu0 0.0
    %2264 = vmatpush2.msra.mxu0 0.0
    %2265 = vmatprep.subr.mxu0 0.0
    %2266 = vmatpush2.msra.mxu0 0.0
    %2267 = vmatprep.subr.mxu0 0.0
    %2268 = vmatpush2.msra.mxu0 0.0
    %2269 = vmatprep.subr.mxu0 0.0
    %2270 = vmatpush2.msra.mxu0 0.0
    %2271 = vmatprep.subr.mxu0 0.0
    %2272 = vmatpush2.msra.mxu0 0.0
    %2273 = vmatprep.subr.mxu0 0.0
    %2274 = vmatpush2.msra.mxu0 0.0
    %2275 = vmatprep.subr.mxu0 0.0
    %2276 = vmatpush2.msra.mxu0 0.0
    %2277 = vmatprep.subr.mxu0 0.0
    %2278 = vmatpush2.msra.mxu0 0.0
    %2279 = vmatprep.subr.mxu0 0.0
    %2280 = vmatpush2.msra.mxu0 0.0
    %2281 = vmatprep.subr.mxu0 0.0
    %2282 = vmatpush2.msra.mxu0 0.0
    %2283 = vmatprep.subr.mxu0 0.0
    %2284 = vmatpush2.msra.mxu0 0.0
    %2285 = vmatprep.subr.mxu0 0.0
    %2286 = vmatpush2.msra.mxu0 0.0
    %2287 = vmatprep.subr.mxu0 0.0
    %2288 = vmatpush2.msra.mxu0 0.0
    %2289 = vmatprep.subr.mxu0 0.0
    %2290 = vmatpush2.msra.mxu0 0.0
    %2291 = vmatprep.subr.mxu0 0.0
    %2292 = vmatpush2.msra.mxu0 0.0
    %2293 = vmatprep.mubr.f32.mxu0 0.0
    %2294 = vmatmul.mubr.f32.gmra.mxu0 %v200
    %v2295 = vpop.f32.mrf.mxu0
    %v2296 = vadd.f32 0.0, %v2295
    %v2297 = vpop.f32.mrf.mxu0
    %2298 = vmatprep.mubr.f32.mxu0 0.0
    %2299 = vmatmul.mubr.f32.gmra.mxu0 %v203
    %v2300 = vpop.f32.mrf.mxu0
    %v2301 = vadd.f32 0.0, %v2300
    %v2302 = vpop.f32.mrf.mxu0
    %2303 = vmatprep.mubr.f32.mxu0 0.0
    %2304 = vmatmul.mubr.f32.gmra.mxu0 %v206
    %v2305 = vpop.f32.mrf.mxu0
    %v2306 = vadd.f32 0.0, %v2305
    %v2307 = vpop.f32.mrf.mxu0
    %2308 = vmatprep.mubr.f32.mxu0 0.0
    %2309 = vmatmul.mubr.f32.gmra.mxu0 %v209
    %v2310 = vpop.f32.mrf.mxu0
    %v2311 = vadd.f32 0.0, %v2310
    %v2312 = vpop.f32.mrf.mxu0
    %2313 = vmatprep.mubr.f32.mxu0 0.0
    %2314 = vmatmul.mubr.f32.gmra.mxu0 %v212
    %v2315 = vpop.f32.mrf.mxu0
    %v2316 = vadd.f32 0.0, %v2315
    %v2317 = vpop.f32.mrf.mxu0
    %2318 = vmatprep.mubr.f32.mxu0 0.0
    %2319 = vmatmul.mubr.f32.gmra.mxu0 %v215
    %v2320 = vpop.f32.mrf.mxu0
    %v2321 = vadd.f32 0.0, %v2320
    %v2322 = vpop.f32.mrf.mxu0
    %2323 = vmatprep.mubr.f32.mxu0 0.0
    %2324 = vmatmul.mubr.f32.gmra.mxu0 %v218
    %v2325 = vpop.f32.mrf.mxu0
    %v2326 = vadd.f32 0.0, %v2325
    %v2327 = vpop.f32.mrf.mxu0
    %2328 = vmatprep.mubr.f32.mxu0 0.0
    %2329 = vmatmul.mubr.f32.gmra.mxu0 %v221
    %v2330 = vpop.f32.mrf.mxu0
    %v2331 = vadd.f32 0.0, %v2330
    %v2332 = vpop.f32.mrf.mxu0
    %2333 = vmatprep.mubr.f32.mxu0 0.0
    %2334 = vmatmul.mubr.f32.gmra.mxu0 %v224
    %v2335 = vpop.f32.mrf.mxu0
    %v2336 = vadd.f32 0.0, %v2335
    %v2337 = vpop.f32.mrf.mxu0
    %2338 = vmatprep.mubr.f32.mxu0 0.0
    %2339 = vmatmul.mubr.f32.gmra.mxu0 %v227
    %v2340 = vpop.f32.mrf.mxu0
    %v2341 = vadd.f32 0.0, %v2340
    %v2342 = vpop.f32.mrf.mxu0
    %2343 = vmatprep.mubr.f32.mxu0 0.0
    %2344 = vmatmul.mubr.f32.gmra.mxu0 %v230
    %v2345 = vpop.f32.mrf.mxu0
    %v2346 = vadd.f32 0.0, %v2345
    %v2347 = vpop.f32.mrf.mxu0
    %2348 = vmatprep.mubr.f32.mxu0 0.0
    %2349 = vmatmul.mubr.f32.gmra.mxu0 %v233
    %v2350 = vpop.f32.mrf.mxu0
    %v2351 = vadd.f32 0.0, %v2350
    %v2352 = vpop.f32.mrf.mxu0
    %2353 = vmatprep.mubr.f32.mxu0 0.0
    %2354 = vmatmul.mubr.f32.gmra.mxu0 %v236
    %v2355 = vpop.f32.mrf.mxu0
    %v2356 = vadd.f32 0.0, %v2355
    %v2357 = vpop.f32.mrf.mxu0
    %2358 = vmatprep.mubr.f32.mxu0 0.0
    %2359 = vmatmul.mubr.f32.gmra.mxu0 %v239
    %v2360 = vpop.f32.mrf.mxu0
    %v2361 = vadd.f32 0.0, %v2360
    %v2362 = vpop.f32.mrf.mxu0
    %2363 = vmatprep.mubr.f32.mxu0 0.0
    %2364 = vmatmul.mubr.f32.gmra.mxu0 %v242
    %v2365 = vpop.f32.mrf.mxu0
    %v2366 = vadd.f32 0.0, %v2365
    %v2367 = vpop.f32.mrf.mxu0
    %2368 = vmatprep.mubr.f32.mxu0 0.0
    %2369 = vmatmul.mubr.f32.gmra.mxu0 %v245
    %v2370 = vpop.f32.mrf.mxu0
    %v2371 = vadd.f32 0.0, %v2370
    %v2372 = vpop.f32.mrf.mxu0
    %2373 = vmatprep.mubr.f32.mxu0 0.0
    %2374 = vmatmul.mubr.f32.gmra.mxu0 %v248
    %v2375 = vpop.f32.mrf.mxu0
    %v2376 = vadd.f32 0.0, %v2375
    %v2377 = vpop.f32.mrf.mxu0
    %2378 = vmatprep.mubr.f32.mxu0 0.0
    %2379 = vmatmul.mubr.f32.gmra.mxu0 %v251
    %v2380 = vpop.f32.mrf.mxu0
    %v2381 = vadd.f32 0.0, %v2380
    %v2382 = vpop.f32.mrf.mxu0
    %2383 = vmatprep.mubr.f32.mxu0 0.0
    %2384 = vmatmul.mubr.f32.gmra.mxu0 %v254
    %v2385 = vpop.f32.mrf.mxu0
    %v2386 = vadd.f32 0.0, %v2385
    %v2387 = vpop.f32.mrf.mxu0
    %2388 = vmatprep.mubr.f32.mxu0 0.0
    %2389 = vmatmul.mubr.f32.gmra.mxu0 %v257
    %v2390 = vpop.f32.mrf.mxu0
    %v2391 = vadd.f32 0.0, %v2390
    %v2392 = vpop.f32.mrf.mxu0
    %2393 = vmatprep.mubr.f32.mxu0 0.0
    %2394 = vmatmul.mubr.f32.gmra.mxu0 %v260
    %v2395 = vpop.f32.mrf.mxu0
    %v2396 = vadd.f32 0.0, %v2395
    %v2397 = vpop.f32.mrf.mxu0
    %2398 = vmatprep.mubr.f32.mxu0 0.0
    %2399 = vmatmul.mubr.f32.gmra.mxu0 %v263
    %v2400 = vpop.f32.mrf.mxu0
    %v2401 = vadd.f32 0.0, %v2400
    %v2402 = vpop.f32.mrf.mxu0
    %2403 = vmatprep.mubr.f32.mxu0 0.0
    %2404 = vmatmul.mubr.f32.gmra.mxu0 %v266
    %v2405 = vpop.f32.mrf.mxu0
    %v2406 = vadd.f32 0.0, %v2405
    %v2407 = vpop.f32.mrf.mxu0
    %2408 = vmatprep.mubr.f32.mxu0 0.0
    %2409 = vmatmul.mubr.f32.gmra.mxu0 %v269
    %v2410 = vpop.f32.mrf.mxu0
    %v2411 = vadd.f32 0.0, %v2410
    %v2412 = vpop.f32.mrf.mxu0
    %2413 = vmatprep.mubr.f32.mxu0 0.0
    %2414 = vmatmul.mubr.f32.gmra.mxu0 %v272
    %v2415 = vpop.f32.mrf.mxu0
    %v2416 = vadd.f32 0.0, %v2415
    %v2417 = vpop.f32.mrf.mxu0
    %2418 = vmatprep.mubr.f32.mxu0 0.0
    %2419 = vmatmul.mubr.f32.gmra.mxu0 %v275
    %v2420 = vpop.f32.mrf.mxu0
    %v2421 = vadd.f32 0.0, %v2420
    %v2422 = vpop.f32.mrf.mxu0
    %2423 = vmatprep.mubr.f32.mxu0 0.0
    %2424 = vmatmul.mubr.f32.gmra.mxu0 %v278
    %v2425 = vpop.f32.mrf.mxu0
    %v2426 = vadd.f32 0.0, %v2425
    %v2427 = vpop.f32.mrf.mxu0
    %2428 = vmatprep.mubr.f32.mxu0 0.0
    %2429 = vmatmul.mubr.f32.gmra.mxu0 %v281
    %v2430 = vpop.f32.mrf.mxu0
    %v2431 = vadd.f32 0.0, %v2430
    %v2432 = vpop.f32.mrf.mxu0
    %2433 = vmatprep.mubr.f32.mxu0 0.0
    %2434 = vmatmul.mubr.f32.gmra.mxu0 %v284
    %v2435 = vpop.f32.mrf.mxu0
    %v2436 = vadd.f32 0.0, %v2435
    %v2437 = vpop.f32.mrf.mxu0
    %2438 = vmatprep.mubr.f32.mxu0 0.0
    %2439 = vmatmul.mubr.f32.gmra.mxu0 %v287
    %v2440 = vpop.f32.mrf.mxu0
    %v2441 = vadd.f32 0.0, %v2440
    %v2442 = vpop.f32.mrf.mxu0
    %2443 = vmatprep.mubr.f32.mxu0 0.0
    %2444 = vmatmul.mubr.f32.gmra.mxu0 %v290
    %v2445 = vpop.f32.mrf.mxu0
    %v2446 = vadd.f32 0.0, %v2445
    %v2447 = vpop.f32.mrf.mxu0
    %2448 = vmatprep.mubr.f32.mxu0 0.0
    %2449 = vmatmul.mubr.f32.gmra.mxu0 %v293
    %v2450 = vpop.f32.mrf.mxu0
    %v2451 = vadd.f32 0.0, %v2450
    %v2452 = vpop.f32.mrf.mxu0
    %2453 = vmatprep.mubr.f32.mxu0 0.0
    %2454 = vmatmul.mubr.f32.gmra.mxu0 %v296
    %v2455 = vpop.f32.mrf.mxu0
    %v2456 = vadd.f32 0.0, %v2455
    %v2457 = vpop.f32.mrf.mxu0
    %2458 = vmatprep.mubr.f32.mxu0 0.0
    %2459 = vmatmul.mubr.f32.gmra.mxu0 %v299
    %v2460 = vpop.f32.mrf.mxu0
    %v2461 = vadd.f32 0.0, %v2460
    %v2462 = vpop.f32.mrf.mxu0
    %2463 = vmatprep.mubr.f32.mxu0 0.0
    %2464 = vmatmul.mubr.f32.gmra.mxu0 %v302
    %v2465 = vpop.f32.mrf.mxu0
    %v2466 = vadd.f32 0.0, %v2465
    %v2467 = vpop.f32.mrf.mxu0
    %2468 = vmatprep.mubr.f32.mxu0 0.0
    %2469 = vmatmul.mubr.f32.gmra.mxu0 %v305
    %v2470 = vpop.f32.mrf.mxu0
    %v2471 = vadd.f32 0.0, %v2470
    %v2472 = vpop.f32.mrf.mxu0
    %2473 = vmatprep.mubr.f32.mxu0 0.0
    %2474 = vmatmul.mubr.f32.gmra.mxu0 %v308
    %v2475 = vpop.f32.mrf.mxu0
    %v2476 = vadd.f32 0.0, %v2475
    %v2477 = vpop.f32.mrf.mxu0
    %2478 = vmatprep.mubr.f32.mxu0 0.0
    %2479 = vmatmul.mubr.f32.gmra.mxu0 %v311
    %v2480 = vpop.f32.mrf.mxu0
    %v2481 = vadd.f32 0.0, %v2480
    %v2482 = vpop.f32.mrf.mxu0
    %2483 = vmatprep.mubr.f32.mxu0 0.0
    %2484 = vmatmul.mubr.f32.gmra.mxu0 %v314
    %v2485 = vpop.f32.mrf.mxu0
    %v2486 = vadd.f32 0.0, %v2485
    %v2487 = vpop.f32.mrf.mxu0
    %2488 = vmatprep.mubr.f32.mxu0 0.0
    %2489 = vmatmul.mubr.f32.gmra.mxu0 %v317
    %v2490 = vpop.f32.mrf.mxu0
    %v2491 = vadd.f32 0.0, %v2490
    %v2492 = vpop.f32.mrf.mxu0
    %2493 = vmatprep.mubr.f32.mxu0 0.0
    %2494 = vmatmul.mubr.f32.gmra.mxu0 %v320
    %v2495 = vpop.f32.mrf.mxu0
    %v2496 = vadd.f32 0.0, %v2495
    %v2497 = vpop.f32.mrf.mxu0
    %2498 = vmatprep.mubr.f32.mxu0 0.0
    %2499 = vmatmul.mubr.f32.gmra.mxu0 %v323
    %v2500 = vpop.f32.mrf.mxu0
    %v2501 = vadd.f32 0.0, %v2500
    %v2502 = vpop.f32.mrf.mxu0
    %2503 = vmatprep.mubr.f32.mxu0 0.0
    %2504 = vmatmul.mubr.f32.gmra.mxu0 %v326
    %v2505 = vpop.f32.mrf.mxu0
    %v2506 = vadd.f32 0.0, %v2505
    %v2507 = vpop.f32.mrf.mxu0
    %2508 = vmatprep.mubr.f32.mxu0 0.0
    %2509 = vmatmul.mubr.f32.gmra.mxu0 %v329
    %v2510 = vpop.f32.mrf.mxu0
    %v2511 = vadd.f32 0.0, %v2510
    %v2512 = vpop.f32.mrf.mxu0
    %2513 = vmatprep.mubr.f32.mxu0 0.0
    %2514 = vmatmul.mubr.f32.gmra.mxu0 %v332
    %v2515 = vpop.f32.mrf.mxu0
    %v2516 = vadd.f32 0.0, %v2515
    %v2517 = vpop.f32.mrf.mxu0
    %2518 = vmatprep.mubr.f32.mxu0 0.0
    %2519 = vmatmul.mubr.f32.gmra.mxu0 %v335
    %v2520 = vpop.f32.mrf.mxu0
    %v2521 = vadd.f32 0.0, %v2520
    %v2522 = vpop.f32.mrf.mxu0
    %2523 = vmatprep.mubr.f32.mxu0 0.0
    %2524 = vmatmul.mubr.f32.gmra.mxu0 %v338
    %v2525 = vpop.f32.mrf.mxu0
    %v2526 = vadd.f32 0.0, %v2525
    %v2527 = vpop.f32.mrf.mxu0
    %2528 = vmatprep.mubr.f32.mxu0 0.0
    %2529 = vmatmul.mubr.f32.gmra.mxu0 %v341
    %v2530 = vpop.f32.mrf.mxu0
    %v2531 = vadd.f32 0.0, %v2530
    %v2532 = vpop.f32.mrf.mxu0
    %2533 = vmatprep.mubr.f32.mxu0 0.0
    %2534 = vmatmul.mubr.f32.gmra.mxu0 %v1721
    %v2535 = vpop.f32.mrf.mxu0
    %v2536 = vadd.f32 0.0, %v2535
    %v2537 = vpop.f32.mrf.mxu0
    %2538 = vmatprep.mubr.f32.mxu0 0.0
    %2539 = vmatmul.mubr.f32.gmra.mxu0 %v1724
    %v2540 = vpop.f32.mrf.mxu0
    %v2541 = vadd.f32 0.0, %v2540
    %v2542 = vpop.f32.mrf.mxu0
    %2543 = vmatprep.mubr.f32.mxu0 0.0
    %2544 = vmatmul.mubr.f32.gmra.mxu0 %v1727
    %v2545 = vpop.f32.mrf.mxu0
    %v2546 = vadd.f32 0.0, %v2545
    %v2547 = vpop.f32.mrf.mxu0
    %2548 = vmatprep.mubr.f32.mxu0 0.0
    %2549 = vmatmul.mubr.f32.gmra.mxu0 %v1730
    %v2550 = vpop.f32.mrf.mxu0
    %v2551 = vadd.f32 0.0, %v2550
    %v2552 = vpop.f32.mrf.mxu0
    %2553 = vmatprep.mubr.f32.mxu0 0.0
    %2554 = vmatmul.mubr.f32.gmra.mxu0 %v1733
    %v2555 = vpop.f32.mrf.mxu0
    %v2556 = vadd.f32 0.0, %v2555
    %v2557 = vpop.f32.mrf.mxu0
    %2558 = vmatprep.mubr.f32.mxu0 0.0
    %2559 = vmatmul.mubr.f32.gmra.mxu0 %v1736
    %v2560 = vpop.f32.mrf.mxu0
    %v2561 = vadd.f32 0.0, %v2560
    %v2562 = vpop.f32.mrf.mxu0
    %2563 = vmatprep.mubr.f32.mxu0 0.0
    %2564 = vmatmul.mubr.f32.gmra.mxu0 %v1739
    %v2565 = vpop.f32.mrf.mxu0
    %v2566 = vadd.f32 0.0, %v2565
    %v2567 = vpop.f32.mrf.mxu0
    %2568 = vmatprep.mubr.f32.mxu0 0.0
    %2569 = vmatmul.mubr.f32.gmra.mxu0 %v1742
    %v2570 = vpop.f32.mrf.mxu0
    %v2571 = vadd.f32 0.0, %v2570
    %v2572 = vpop.f32.mrf.mxu0
    %2573 = vmatprep.mubr.f32.mxu0 0.0
    %2574 = vmatmul.mubr.f32.gmra.mxu0 %v1745
    %v2575 = vpop.f32.mrf.mxu0
    %v2576 = vadd.f32 0.0, %v2575
    %v2577 = vpop.f32.mrf.mxu0
    %2578 = vmatprep.mubr.f32.mxu0 0.0
    %2579 = vmatmul.mubr.f32.gmra.mxu0 %v1748
    %v2580 = vpop.f32.mrf.mxu0
    %v2581 = vadd.f32 0.0, %v2580
    %v2582 = vpop.f32.mrf.mxu0
    %2583 = vmatprep.mubr.f32.mxu0 0.0
    %2584 = vmatmul.mubr.f32.gmra.mxu0 %v1751
    %v2585 = vpop.f32.mrf.mxu0
    %v2586 = vadd.f32 0.0, %v2585
    %v2587 = vpop.f32.mrf.mxu0
    %2588 = vmatprep.mubr.f32.mxu0 0.0
    %2589 = vmatmul.mubr.f32.gmra.mxu0 %v1754
    %v2590 = vpop.f32.mrf.mxu0
    %v2591 = vadd.f32 0.0, %v2590
    %v2592 = vpop.f32.mrf.mxu0
    %2593 = vmatprep.mubr.f32.mxu0 0.0
    %2594 = vmatmul.mubr.f32.gmra.mxu0 %v2215
    %v2595 = vpop.f32.mrf.mxu0
    %v2596 = vadd.f32 0.0, %v2595
    %v2597 = vpop.f32.mrf.mxu0
    %2598 = vmatprep.mubr.f32.mxu0 0.0
    %2599 = vmatmul.mubr.f32.gmra.mxu0 %v2218
    %v2600 = vpop.f32.mrf.mxu0
    %v2601 = vadd.f32 0.0, %v2600
    %v2602 = vpop.f32.mrf.mxu0
    %2603 = vmatprep.mubr.f32.mxu0 0.0
    %2604 = vmatmul.mubr.f32.gmra.mxu0 %v2221
    %v2605 = vpop.f32.mrf.mxu0
    %v2606 = vadd.f32 0.0, %v2605
    %v2607 = vpop.f32.mrf.mxu0
    %2608 = vmatprep.mubr.f32.mxu0 0.0
    %2609 = vmatmul.mubr.f32.gmra.mxu0 %v2224
    %v2610 = vpop.f32.mrf.mxu0
    %v2611 = vadd.f32 0.0, %v2610
    %v2612 = vpop.f32.mrf.mxu0
    %2613 = vdwg.mxu0
    %v2614 = vadd.f32 %v2144, %v2296
    %v2615 = vadd.f32 %v2145, %v2301
    %v2616 = vadd.f32 %v2146, %v2306
    %v2617 = vadd.f32 %v2147, %v2311
    %v2618 = vadd.f32 %v2148, %v2316
    %v2619 = vadd.f32 %v2149, %v2321
    %v2620 = vadd.f32 %v2150, %v2326
    %v2621 = vadd.f32 %v2151, %v2331
    %v2622 = vadd.f32 %v2152, %v2336
    %v2623 = vadd.f32 %v2153, %v2341
    %v2624 = vadd.f32 %v2154, %v2346
    %v2625 = vadd.f32 %v2155, %v2351
    %v2626 = vadd.f32 %v2156, %v2356
    %v2627 = vadd.f32 %v2157, %v2361
    %v2628 = vadd.f32 %v2158, %v2366
    %v2629 = vadd.f32 %v2159, %v2371
    %v2630 = vadd.f32 %v2160, %v2376
    %v2631 = vadd.f32 %v2161, %v2381
    %v2632 = vadd.f32 %v2162, %v2386
    %v2633 = vadd.f32 %v2163, %v2391
    %v2634 = vadd.f32 %v2164, %v2396
    %v2635 = vadd.f32 %v2165, %v2401
    %v2636 = vadd.f32 %v2166, %v2406
    %v2637 = vadd.f32 %v2167, %v2411
    %v2638 = vadd.f32 %v2168, %v2416
    %v2639 = vadd.f32 %v2169, %v2421
    %v2640 = vadd.f32 %v2170, %v2426
    %v2641 = vadd.f32 %v2171, %v2431
    %v2642 = vadd.f32 %v2172, %v2436
    %v2643 = vadd.f32 %v2173, %v2441
    %v2644 = vadd.f32 %v2174, %v2446
    %v2645 = vadd.f32 %v2175, %v2451
    %v2646 = vadd.f32 %v2176, %v2456
    %v2647 = vadd.f32 %v2177, %v2461
    %v2648 = vadd.f32 %v2178, %v2466
    %v2649 = vadd.f32 %v2179, %v2471
    %v2650 = vadd.f32 %v2180, %v2476
    %v2651 = vadd.f32 %v2181, %v2481
    %v2652 = vadd.f32 %v2182, %v2486
    %v2653 = vadd.f32 %v2183, %v2491
    %v2654 = vadd.f32 %v2184, %v2496
    %v2655 = vadd.f32 %v2185, %v2501
    %v2656 = vadd.f32 %v2186, %v2506
    %v2657 = vadd.f32 %v2187, %v2511
    %v2658 = vadd.f32 %v2188, %v2516
    %v2659 = vadd.f32 %v2189, %v2521
    %v2660 = vadd.f32 %v2190, %v2526
    %v2661 = vadd.f32 %v2191, %v2531
    %v2662 = vadd.f32 %v2192, %v2536
    %v2663 = vadd.f32 %v2193, %v2541
    %v2664 = vadd.f32 %v2194, %v2546
    %v2665 = vadd.f32 %v2195, %v2551
    %v2666 = vadd.f32 %v2196, %v2556
    %v2667 = vadd.f32 %v2197, %v2561
    %v2668 = vadd.f32 %v2198, %v2566
    %v2669 = vadd.f32 %v2199, %v2571
    %v2670 = vadd.f32 %v2200, %v2576
    %v2671 = vadd.f32 %v2201, %v2581
    %v2672 = vadd.f32 %v2202, %v2586
    %v2673 = vadd.f32 %v2203, %v2591
    %v2674 = vadd.f32 %v2204, %v2596
    %v2675 = vadd.f32 %v2205, %v2601
    %v2676 = vadd.f32 %v2206, %v2606
    %v2677 = vadd.f32 %v2207, %v2611
    %v2678 = vld [vmem:[%s1691 + $0x4] sm:$0xff]
    %v2679 = vld [vmem:[%s1691 + $0x14] sm:$0xff]
    %v2680 = vld [vmem:[%s1691 + $0x24] sm:$0xff]
    %v2681 = vld [vmem:[%s1691 + $0x34] sm:$0xff]
    %s2682 = scalar_lea.vmem %s1, 20
    %v2683 = vld [vmem:[%s2682] sm:$0x7]
    %v2685 = vsel %vm150, %v2678, 0
    %v2688 = vsel %vm150, %v2679, 0
    %v2691 = vsel %vm150, %v2680, 0
    %v2694 = vsel %vm150, %v2681, 0
    %v2697 = vsel %vm343, %v2683, 0
    %2699 = vmatprep.subr.mxu0 0.0
    %2700 = vmatpush1.msra.mxu0 0.0
    %2701 = vmatprep.subr.mxu0 0.0
    %2702 = vmatpush1.msra.mxu0 0.0
    %2703 = vmatprep.subr.mxu0 0.0
    %2704 = vmatpush1.msra.mxu0 0.0
    %2705 = vmatprep.subr.mxu0 0.0
    %2706 = vmatpush1.msra.mxu0 0.0
    %2707 = vmatprep.subr.mxu0 0.0
    %2708 = vmatpush1.msra.mxu0 0.0
    %2709 = vmatprep.subr.mxu0 0.0
    %2710 = vmatpush1.msra.mxu0 0.0
    %2711 = vmatprep.subr.mxu0 0.0
    %2712 = vmatpush1.msra.mxu0 0.0
    %2713 = vmatprep.subr.mxu0 0.0
    %2714 = vmatpush1.msra.mxu0 0.0
    %2715 = vmatprep.subr.mxu0 0.0
    %2716 = vmatpush1.msra.mxu0 0.0
    %2717 = vmatprep.subr.mxu0 0.0
    %2718 = vmatpush1.msra.mxu0 0.0
    %2719 = vmatprep.subr.mxu0 0.0
    %2720 = vmatpush1.msra.mxu0 0.0
    %2721 = vmatprep.subr.mxu0 0.0
    %2722 = vmatpush1.msra.mxu0 0.0
    %2723 = vmatprep.subr.mxu0 0.0
    %2724 = vmatpush1.msra.mxu0 0.0
    %2725 = vmatprep.subr.mxu0 0.0
    %2726 = vmatpush1.msra.mxu0 0.0
    %2727 = vmatprep.subr.mxu0 0.0
    %2728 = vmatpush1.msra.mxu0 0.0
    %2729 = vmatprep.subr.mxu0 0.0
    %2730 = vmatpush1.msra.mxu0 %v2697
    %2731 = vmatprep.subr.mxu0 0.0
    %2732 = vmatpush2.msra.mxu0 0.0
    %2733 = vmatprep.subr.mxu0 0.0
    %2734 = vmatpush2.msra.mxu0 0.0
    %2735 = vmatprep.subr.mxu0 0.0
    %2736 = vmatpush2.msra.mxu0 0.0
    %2737 = vmatprep.subr.mxu0 0.0
    %2738 = vmatpush2.msra.mxu0 0.0
    %2739 = vmatprep.subr.mxu0 0.0
    %2740 = vmatpush2.msra.mxu0 0.0
    %2741 = vmatprep.subr.mxu0 0.0
    %2742 = vmatpush2.msra.mxu0 0.0
    %2743 = vmatprep.subr.mxu0 0.0
    %2744 = vmatpush2.msra.mxu0 0.0
    %2745 = vmatprep.subr.mxu0 0.0
    %2746 = vmatpush2.msra.mxu0 0.0
    %2747 = vmatprep.subr.mxu0 0.0
    %2748 = vmatpush2.msra.mxu0 0.0
    %2749 = vmatprep.subr.mxu0 0.0
    %2750 = vmatpush2.msra.mxu0 0.0
    %2751 = vmatprep.subr.mxu0 0.0
    %2752 = vmatpush2.msra.mxu0 0.0
    %2753 = vmatprep.subr.mxu0 0.0
    %2754 = vmatpush2.msra.mxu0 0.0
    %2755 = vmatprep.subr.mxu0 0.0
    %2756 = vmatpush2.msra.mxu0 0.0
    %2757 = vmatprep.subr.mxu0 0.0
    %2758 = vmatpush2.msra.mxu0 0.0
    %2759 = vmatprep.subr.mxu0 0.0
    %2760 = vmatpush2.msra.mxu0 0.0
    %2761 = vmatprep.subr.mxu0 0.0
    %2762 = vmatpush2.msra.mxu0 0.0
    %2763 = vmatprep.mubr.f32.mxu0 0.0
    %2764 = vmatmul.mubr.f32.gmra.mxu0 %v212
    %v2765 = vpop.f32.mrf.mxu0
    %v2766 = vadd.f32 0.0, %v2765
    %v2767 = vpop.f32.mrf.mxu0
    %2768 = vmatprep.mubr.f32.mxu0 0.0
    %2769 = vmatmul.mubr.f32.gmra.mxu0 %v215
    %v2770 = vpop.f32.mrf.mxu0
    %v2771 = vadd.f32 0.0, %v2770
    %v2772 = vpop.f32.mrf.mxu0
    %2773 = vmatprep.mubr.f32.mxu0 0.0
    %2774 = vmatmul.mubr.f32.gmra.mxu0 %v218
    %v2775 = vpop.f32.mrf.mxu0
    %v2776 = vadd.f32 0.0, %v2775
    %v2777 = vpop.f32.mrf.mxu0
    %2778 = vmatprep.mubr.f32.mxu0 0.0
    %2779 = vmatmul.mubr.f32.gmra.mxu0 %v221
    %v2780 = vpop.f32.mrf.mxu0
    %v2781 = vadd.f32 0.0, %v2780
    %v2782 = vpop.f32.mrf.mxu0
    %2783 = vmatprep.mubr.f32.mxu0 0.0
    %2784 = vmatmul.mubr.f32.gmra.mxu0 %v224
    %v2785 = vpop.f32.mrf.mxu0
    %v2786 = vadd.f32 0.0, %v2785
    %v2787 = vpop.f32.mrf.mxu0
    %2788 = vmatprep.mubr.f32.mxu0 0.0
    %2789 = vmatmul.mubr.f32.gmra.mxu0 %v227
    %v2790 = vpop.f32.mrf.mxu0
    %v2791 = vadd.f32 0.0, %v2790
    %v2792 = vpop.f32.mrf.mxu0
    %2793 = vmatprep.mubr.f32.mxu0 0.0
    %2794 = vmatmul.mubr.f32.gmra.mxu0 %v230
    %v2795 = vpop.f32.mrf.mxu0
    %v2796 = vadd.f32 0.0, %v2795
    %v2797 = vpop.f32.mrf.mxu0
    %2798 = vmatprep.mubr.f32.mxu0 0.0
    %2799 = vmatmul.mubr.f32.gmra.mxu0 %v233
    %v2800 = vpop.f32.mrf.mxu0
    %v2801 = vadd.f32 0.0, %v2800
    %v2802 = vpop.f32.mrf.mxu0
    %2803 = vmatprep.mubr.f32.mxu0 0.0
    %2804 = vmatmul.mubr.f32.gmra.mxu0 %v236
    %v2805 = vpop.f32.mrf.mxu0
    %v2806 = vadd.f32 0.0, %v2805
    %v2807 = vpop.f32.mrf.mxu0
    %2808 = vmatprep.mubr.f32.mxu0 0.0
    %2809 = vmatmul.mubr.f32.gmra.mxu0 %v239
    %v2810 = vpop.f32.mrf.mxu0
    %v2811 = vadd.f32 0.0, %v2810
    %v2812 = vpop.f32.mrf.mxu0
    %2813 = vmatprep.mubr.f32.mxu0 0.0
    %2814 = vmatmul.mubr.f32.gmra.mxu0 %v242
    %v2815 = vpop.f32.mrf.mxu0
    %v2816 = vadd.f32 0.0, %v2815
    %v2817 = vpop.f32.mrf.mxu0
    %2818 = vmatprep.mubr.f32.mxu0 0.0
    %2819 = vmatmul.mubr.f32.gmra.mxu0 %v245
    %v2820 = vpop.f32.mrf.mxu0
    %v2821 = vadd.f32 0.0, %v2820
    %v2822 = vpop.f32.mrf.mxu0
    %2823 = vmatprep.mubr.f32.mxu0 0.0
    %2824 = vmatmul.mubr.f32.gmra.mxu0 %v1199
    %v2825 = vpop.f32.mrf.mxu0
    %v2826 = vadd.f32 0.0, %v2825
    %v2827 = vpop.f32.mrf.mxu0
    %2828 = vmatprep.mubr.f32.mxu0 0.0
    %2829 = vmatmul.mubr.f32.gmra.mxu0 %v1202
    %v2830 = vpop.f32.mrf.mxu0
    %v2831 = vadd.f32 0.0, %v2830
    %v2832 = vpop.f32.mrf.mxu0
    %2833 = vmatprep.mubr.f32.mxu0 0.0
    %2834 = vmatmul.mubr.f32.gmra.mxu0 %v1205
    %v2835 = vpop.f32.mrf.mxu0
    %v2836 = vadd.f32 0.0, %v2835
    %v2837 = vpop.f32.mrf.mxu0
    %2838 = vmatprep.mubr.f32.mxu0 0.0
    %2839 = vmatmul.mubr.f32.gmra.mxu0 %v1208
    %v2840 = vpop.f32.mrf.mxu0
    %v2841 = vadd.f32 0.0, %v2840
    %v2842 = vpop.f32.mrf.mxu0
    %2843 = vmatprep.mubr.f32.mxu0 0.0
    %2844 = vmatmul.mubr.f32.gmra.mxu0 %v260
    %v2845 = vpop.f32.mrf.mxu0
    %v2846 = vadd.f32 0.0, %v2845
    %v2847 = vpop.f32.mrf.mxu0
    %2848 = vmatprep.mubr.f32.mxu0 0.0
    %2849 = vmatmul.mubr.f32.gmra.mxu0 %v263
    %v2850 = vpop.f32.mrf.mxu0
    %v2851 = vadd.f32 0.0, %v2850
    %v2852 = vpop.f32.mrf.mxu0
    %2853 = vmatprep.mubr.f32.mxu0 0.0
    %2854 = vmatmul.mubr.f32.gmra.mxu0 %v266
    %v2855 = vpop.f32.mrf.mxu0
    %v2856 = vadd.f32 0.0, %v2855
    %v2857 = vpop.f32.mrf.mxu0
    %2858 = vmatprep.mubr.f32.mxu0 0.0
    %2859 = vmatmul.mubr.f32.gmra.mxu0 %v269
    %v2860 = vpop.f32.mrf.mxu0
    %v2861 = vadd.f32 0.0, %v2860
    %v2862 = vpop.f32.mrf.mxu0
    %2863 = vmatprep.mubr.f32.mxu0 0.0
    %2864 = vmatmul.mubr.f32.gmra.mxu0 %v272
    %v2865 = vpop.f32.mrf.mxu0
    %v2866 = vadd.f32 0.0, %v2865
    %v2867 = vpop.f32.mrf.mxu0
    %2868 = vmatprep.mubr.f32.mxu0 0.0
    %2869 = vmatmul.mubr.f32.gmra.mxu0 %v275
    %v2870 = vpop.f32.mrf.mxu0
    %v2871 = vadd.f32 0.0, %v2870
    %v2872 = vpop.f32.mrf.mxu0
    %2873 = vmatprep.mubr.f32.mxu0 0.0
    %2874 = vmatmul.mubr.f32.gmra.mxu0 %v278
    %v2875 = vpop.f32.mrf.mxu0
    %v2876 = vadd.f32 0.0, %v2875
    %v2877 = vpop.f32.mrf.mxu0
    %2878 = vmatprep.mubr.f32.mxu0 0.0
    %2879 = vmatmul.mubr.f32.gmra.mxu0 %v281
    %v2880 = vpop.f32.mrf.mxu0
    %v2881 = vadd.f32 0.0, %v2880
    %v2882 = vpop.f32.mrf.mxu0
    %2883 = vmatprep.mubr.f32.mxu0 0.0
    %2884 = vmatmul.mubr.f32.gmra.mxu0 %v284
    %v2885 = vpop.f32.mrf.mxu0
    %v2886 = vadd.f32 0.0, %v2885
    %v2887 = vpop.f32.mrf.mxu0
    %2888 = vmatprep.mubr.f32.mxu0 0.0
    %2889 = vmatmul.mubr.f32.gmra.mxu0 %v287
    %v2890 = vpop.f32.mrf.mxu0
    %v2891 = vadd.f32 0.0, %v2890
    %v2892 = vpop.f32.mrf.mxu0
    %2893 = vmatprep.mubr.f32.mxu0 0.0
    %2894 = vmatmul.mubr.f32.gmra.mxu0 %v290
    %v2895 = vpop.f32.mrf.mxu0
    %v2896 = vadd.f32 0.0, %v2895
    %v2897 = vpop.f32.mrf.mxu0
    %2898 = vmatprep.mubr.f32.mxu0 0.0
    %2899 = vmatmul.mubr.f32.gmra.mxu0 %v293
    %v2900 = vpop.f32.mrf.mxu0
    %v2901 = vadd.f32 0.0, %v2900
    %v2902 = vpop.f32.mrf.mxu0
    %2903 = vmatprep.mubr.f32.mxu0 0.0
    %2904 = vmatmul.mubr.f32.gmra.mxu0 %v1211
    %v2905 = vpop.f32.mrf.mxu0
    %v2906 = vadd.f32 0.0, %v2905
    %v2907 = vpop.f32.mrf.mxu0
    %2908 = vmatprep.mubr.f32.mxu0 0.0
    %2909 = vmatmul.mubr.f32.gmra.mxu0 %v1214
    %v2910 = vpop.f32.mrf.mxu0
    %v2911 = vadd.f32 0.0, %v2910
    %v2912 = vpop.f32.mrf.mxu0
    %2913 = vmatprep.mubr.f32.mxu0 0.0
    %2914 = vmatmul.mubr.f32.gmra.mxu0 %v1217
    %v2915 = vpop.f32.mrf.mxu0
    %v2916 = vadd.f32 0.0, %v2915
    %v2917 = vpop.f32.mrf.mxu0
    %2918 = vmatprep.mubr.f32.mxu0 0.0
    %2919 = vmatmul.mubr.f32.gmra.mxu0 %v1220
    %v2920 = vpop.f32.mrf.mxu0
    %v2921 = vadd.f32 0.0, %v2920
    %v2922 = vpop.f32.mrf.mxu0
    %2923 = vmatprep.mubr.f32.mxu0 0.0
    %2924 = vmatmul.mubr.f32.gmra.mxu0 %v308
    %v2925 = vpop.f32.mrf.mxu0
    %v2926 = vadd.f32 0.0, %v2925
    %v2927 = vpop.f32.mrf.mxu0
    %2928 = vmatprep.mubr.f32.mxu0 0.0
    %2929 = vmatmul.mubr.f32.gmra.mxu0 %v311
    %v2930 = vpop.f32.mrf.mxu0
    %v2931 = vadd.f32 0.0, %v2930
    %v2932 = vpop.f32.mrf.mxu0
    %2933 = vmatprep.mubr.f32.mxu0 0.0
    %2934 = vmatmul.mubr.f32.gmra.mxu0 %v314
    %v2935 = vpop.f32.mrf.mxu0
    %v2936 = vadd.f32 0.0, %v2935
    %v2937 = vpop.f32.mrf.mxu0
    %2938 = vmatprep.mubr.f32.mxu0 0.0
    %2939 = vmatmul.mubr.f32.gmra.mxu0 %v317
    %v2940 = vpop.f32.mrf.mxu0
    %v2941 = vadd.f32 0.0, %v2940
    %v2942 = vpop.f32.mrf.mxu0
    %2943 = vmatprep.mubr.f32.mxu0 0.0
    %2944 = vmatmul.mubr.f32.gmra.mxu0 %v320
    %v2945 = vpop.f32.mrf.mxu0
    %v2946 = vadd.f32 0.0, %v2945
    %v2947 = vpop.f32.mrf.mxu0
    %2948 = vmatprep.mubr.f32.mxu0 0.0
    %2949 = vmatmul.mubr.f32.gmra.mxu0 %v323
    %v2950 = vpop.f32.mrf.mxu0
    %v2951 = vadd.f32 0.0, %v2950
    %v2952 = vpop.f32.mrf.mxu0
    %2953 = vmatprep.mubr.f32.mxu0 0.0
    %2954 = vmatmul.mubr.f32.gmra.mxu0 %v326
    %v2955 = vpop.f32.mrf.mxu0
    %v2956 = vadd.f32 0.0, %v2955
    %v2957 = vpop.f32.mrf.mxu0
    %2958 = vmatprep.mubr.f32.mxu0 0.0
    %2959 = vmatmul.mubr.f32.gmra.mxu0 %v329
    %v2960 = vpop.f32.mrf.mxu0
    %v2961 = vadd.f32 0.0, %v2960
    %v2962 = vpop.f32.mrf.mxu0
    %2963 = vmatprep.mubr.f32.mxu0 0.0
    %2964 = vmatmul.mubr.f32.gmra.mxu0 %v332
    %v2965 = vpop.f32.mrf.mxu0
    %v2966 = vadd.f32 0.0, %v2965
    %v2967 = vpop.f32.mrf.mxu0
    %2968 = vmatprep.mubr.f32.mxu0 0.0
    %2969 = vmatmul.mubr.f32.gmra.mxu0 %v335
    %v2970 = vpop.f32.mrf.mxu0
    %v2971 = vadd.f32 0.0, %v2970
    %v2972 = vpop.f32.mrf.mxu0
    %2973 = vmatprep.mubr.f32.mxu0 0.0
    %2974 = vmatmul.mubr.f32.gmra.mxu0 %v338
    %v2975 = vpop.f32.mrf.mxu0
    %v2976 = vadd.f32 0.0, %v2975
    %v2977 = vpop.f32.mrf.mxu0
    %2978 = vmatprep.mubr.f32.mxu0 0.0
    %2979 = vmatmul.mubr.f32.gmra.mxu0 %v341
    %v2980 = vpop.f32.mrf.mxu0
    %v2981 = vadd.f32 0.0, %v2980
    %v2982 = vpop.f32.mrf.mxu0
    %2983 = vmatprep.mubr.f32.mxu0 0.0
    %2984 = vmatmul.mubr.f32.gmra.mxu0 %v1223
    %v2985 = vpop.f32.mrf.mxu0
    %v2986 = vadd.f32 0.0, %v2985
    %v2987 = vpop.f32.mrf.mxu0
    %2988 = vmatprep.mubr.f32.mxu0 0.0
    %2989 = vmatmul.mubr.f32.gmra.mxu0 %v1226
    %v2990 = vpop.f32.mrf.mxu0
    %v2991 = vadd.f32 0.0, %v2990
    %v2992 = vpop.f32.mrf.mxu0
    %2993 = vmatprep.mubr.f32.mxu0 0.0
    %2994 = vmatmul.mubr.f32.gmra.mxu0 %v1229
    %v2995 = vpop.f32.mrf.mxu0
    %v2996 = vadd.f32 0.0, %v2995
    %v2997 = vpop.f32.mrf.mxu0
    %2998 = vmatprep.mubr.f32.mxu0 0.0
    %2999 = vmatmul.mubr.f32.gmra.mxu0 %v1232
    %v3000 = vpop.f32.mrf.mxu0
    %v3001 = vadd.f32 0.0, %v3000
    %v3002 = vpop.f32.mrf.mxu0
    %3003 = vmatprep.mubr.f32.mxu0 0.0
    %3004 = vmatmul.mubr.f32.gmra.mxu0 %v1733
    %v3005 = vpop.f32.mrf.mxu0
    %v3006 = vadd.f32 0.0, %v3005
    %v3007 = vpop.f32.mrf.mxu0
    %3008 = vmatprep.mubr.f32.mxu0 0.0
    %3009 = vmatmul.mubr.f32.gmra.mxu0 %v1736
    %v3010 = vpop.f32.mrf.mxu0
    %v3011 = vadd.f32 0.0, %v3010
    %v3012 = vpop.f32.mrf.mxu0
    %3013 = vmatprep.mubr.f32.mxu0 0.0
    %3014 = vmatmul.mubr.f32.gmra.mxu0 %v1739
    %v3015 = vpop.f32.mrf.mxu0
    %v3016 = vadd.f32 0.0, %v3015
    %v3017 = vpop.f32.mrf.mxu0
    %3018 = vmatprep.mubr.f32.mxu0 0.0
    %3019 = vmatmul.mubr.f32.gmra.mxu0 %v1742
    %v3020 = vpop.f32.mrf.mxu0
    %v3021 = vadd.f32 0.0, %v3020
    %v3022 = vpop.f32.mrf.mxu0
    %3023 = vmatprep.mubr.f32.mxu0 0.0
    %3024 = vmatmul.mubr.f32.gmra.mxu0 %v1745
    %v3025 = vpop.f32.mrf.mxu0
    %v3026 = vadd.f32 0.0, %v3025
    %v3027 = vpop.f32.mrf.mxu0
    %3028 = vmatprep.mubr.f32.mxu0 0.0
    %3029 = vmatmul.mubr.f32.gmra.mxu0 %v1748
    %v3030 = vpop.f32.mrf.mxu0
    %v3031 = vadd.f32 0.0, %v3030
    %v3032 = vpop.f32.mrf.mxu0
    %3033 = vmatprep.mubr.f32.mxu0 0.0
    %3034 = vmatmul.mubr.f32.gmra.mxu0 %v1751
    %v3035 = vpop.f32.mrf.mxu0
    %v3036 = vadd.f32 0.0, %v3035
    %v3037 = vpop.f32.mrf.mxu0
    %3038 = vmatprep.mubr.f32.mxu0 0.0
    %3039 = vmatmul.mubr.f32.gmra.mxu0 %v1754
    %v3040 = vpop.f32.mrf.mxu0
    %v3041 = vadd.f32 0.0, %v3040
    %v3042 = vpop.f32.mrf.mxu0
    %3043 = vmatprep.mubr.f32.mxu0 0.0
    %3044 = vmatmul.mubr.f32.gmra.mxu0 %v2215
    %v3045 = vpop.f32.mrf.mxu0
    %v3046 = vadd.f32 0.0, %v3045
    %v3047 = vpop.f32.mrf.mxu0
    %3048 = vmatprep.mubr.f32.mxu0 0.0
    %3049 = vmatmul.mubr.f32.gmra.mxu0 %v2218
    %v3050 = vpop.f32.mrf.mxu0
    %v3051 = vadd.f32 0.0, %v3050
    %v3052 = vpop.f32.mrf.mxu0
    %3053 = vmatprep.mubr.f32.mxu0 0.0
    %3054 = vmatmul.mubr.f32.gmra.mxu0 %v2221
    %v3055 = vpop.f32.mrf.mxu0
    %v3056 = vadd.f32 0.0, %v3055
    %v3057 = vpop.f32.mrf.mxu0
    %3058 = vmatprep.mubr.f32.mxu0 0.0
    %3059 = vmatmul.mubr.f32.gmra.mxu0 %v2224
    %v3060 = vpop.f32.mrf.mxu0
    %v3061 = vadd.f32 0.0, %v3060
    %v3062 = vpop.f32.mrf.mxu0
    %3063 = vmatprep.mubr.f32.mxu0 0.0
    %3064 = vmatmul.mubr.f32.gmra.mxu0 %v2685
    %v3065 = vpop.f32.mrf.mxu0
    %v3066 = vadd.f32 0.0, %v3065
    %v3067 = vpop.f32.mrf.mxu0
    %3068 = vmatprep.mubr.f32.mxu0 0.0
    %3069 = vmatmul.mubr.f32.gmra.mxu0 %v2688
    %v3070 = vpop.f32.mrf.mxu0
    %v3071 = vadd.f32 0.0, %v3070
    %v3072 = vpop.f32.mrf.mxu0
    %3073 = vmatprep.mubr.f32.mxu0 0.0
    %3074 = vmatmul.mubr.f32.gmra.mxu0 %v2691
    %v3075 = vpop.f32.mrf.mxu0
    %v3076 = vadd.f32 0.0, %v3075
    %v3077 = vpop.f32.mrf.mxu0
    %3078 = vmatprep.mubr.f32.mxu0 0.0
    %3079 = vmatmul.mubr.f32.gmra.mxu0 %v2694
    %v3080 = vpop.f32.mrf.mxu0
    %v3081 = vadd.f32 0.0, %v3080
    %v3082 = vpop.f32.mrf.mxu0
    %3083 = vdwg.mxu0
    %v3084 = vadd.f32 %v2614, %v2766
    %v3085 = vadd.f32 %v2615, %v2771
    %v3086 = vadd.f32 %v2616, %v2776
    %v3087 = vadd.f32 %v2617, %v2781
    %v3088 = vadd.f32 %v2618, %v2786
    %v3089 = vadd.f32 %v2619, %v2791
    %v3090 = vadd.f32 %v2620, %v2796
    %v3091 = vadd.f32 %v2621, %v2801
    %v3092 = vadd.f32 %v2622, %v2806
    %v3093 = vadd.f32 %v2623, %v2811
    %v3094 = vadd.f32 %v2624, %v2816
    %v3095 = vadd.f32 %v2625, %v2821
    %v3096 = vadd.f32 %v2626, %v2826
    %v3097 = vadd.f32 %v2627, %v2831
    %v3098 = vadd.f32 %v2628, %v2836
    %v3099 = vadd.f32 %v2629, %v2841
    %v3100 = vadd.f32 %v2630, %v2846
    %v3101 = vadd.f32 %v2631, %v2851
    %v3102 = vadd.f32 %v2632, %v2856
    %v3103 = vadd.f32 %v2633, %v2861
    %v3104 = vadd.f32 %v2634, %v2866
    %v3105 = vadd.f32 %v2635, %v2871
    %v3106 = vadd.f32 %v2636, %v2876
    %v3107 = vadd.f32 %v2637, %v2881
    %v3108 = vadd.f32 %v2638, %v2886
    %v3109 = vadd.f32 %v2639, %v2891
    %v3110 = vadd.f32 %v2640, %v2896
    %v3111 = vadd.f32 %v2641, %v2901
    %v3112 = vadd.f32 %v2642, %v2906
    %v3113 = vadd.f32 %v2643, %v2911
    %v3114 = vadd.f32 %v2644, %v2916
    %v3115 = vadd.f32 %v2645, %v2921
    %v3116 = vadd.f32 %v2646, %v2926
    %v3117 = vadd.f32 %v2647, %v2931
    %v3118 = vadd.f32 %v2648, %v2936
    %v3119 = vadd.f32 %v2649, %v2941
    %v3120 = vadd.f32 %v2650, %v2946
    %v3121 = vadd.f32 %v2651, %v2951
    %v3122 = vadd.f32 %v2652, %v2956
    %v3123 = vadd.f32 %v2653, %v2961
    %v3124 = vadd.f32 %v2654, %v2966
    %v3125 = vadd.f32 %v2655, %v2971
    %v3126 = vadd.f32 %v2656, %v2976
    %v3127 = vadd.f32 %v2657, %v2981
    %v3128 = vadd.f32 %v2658, %v2986
    %v3129 = vadd.f32 %v2659, %v2991
    %v3130 = vadd.f32 %v2660, %v2996
    %v3131 = vadd.f32 %v2661, %v3001
    %v3132 = vadd.f32 %v2662, %v3006
    %v3133 = vadd.f32 %v2663, %v3011
    %v3134 = vadd.f32 %v2664, %v3016
    %v3135 = vadd.f32 %v2665, %v3021
    %v3136 = vadd.f32 %v2666, %v3026
    %v3137 = vadd.f32 %v2667, %v3031
    %v3138 = vadd.f32 %v2668, %v3036
    %v3139 = vadd.f32 %v2669, %v3041
    %v3140 = vadd.f32 %v2670, %v3046
    %v3141 = vadd.f32 %v2671, %v3051
    %v3142 = vadd.f32 %v2672, %v3056
    %v3143 = vadd.f32 %v2673, %v3061
    %v3144 = vadd.f32 %v2674, %v3066
    %v3145 = vadd.f32 %v2675, %v3071
    %v3146 = vadd.f32 %v2676, %v3076
    %v3147 = vadd.f32 %v2677, %v3081
    %s3148 = scalar_lea.vmem %s0, 320
    %v3149 = vld [vmem:[%s3148] sm:$0xff]
    %v3150 = vld [vmem:[%s3148 + $0x10] sm:$0xff]
    %v3151 = vld [vmem:[%s3148 + $0x20] sm:$0xff]
    %v3152 = vld [vmem:[%s3148 + $0x30] sm:$0xff]
    %s3153 = scalar_lea.vmem %s0, 32
    %v3154 = vld [vmem:[%s3153 + $0x2] sm:$0xff]
    %v3155 = vld [vmem:[%s3153 + $0x12] sm:$0xff]
    %v3156 = vld [vmem:[%s3153 + $0x22] sm:$0xff]
    %v3157 = vld [vmem:[%s3153 + $0x32] sm:$0xff]
    %s3158 = scalar_lea.vmem %s0, 128
    %v3159 = vld [vmem:[%s3158 + $0x2] sm:$0xff]
    %v3160 = vld [vmem:[%s3158 + $0x12] sm:$0xff]
    %v3161 = vld [vmem:[%s3158 + $0x22] sm:$0xff]
    %v3162 = vld [vmem:[%s3158 + $0x32] sm:$0xff]
    %s3163 = scalar_lea.vmem %s0, 224
    %v3164 = vld [vmem:[%s3163 + $0x2] sm:$0xff]
    %v3165 = vld [vmem:[%s3163 + $0x12] sm:$0xff]
    %v3166 = vld [vmem:[%s3163 + $0x22] sm:$0xff]
    %v3167 = vld [vmem:[%s3163 + $0x32] sm:$0xff]
    %s3168 = scalar_lea.vmem %s1, 24
    %v3169 = vld [vmem:[%s3168] sm:$0x7]
    %v3171 = vsel %vm150, %v3149, 0
    %v3174 = vsel %vm150, %v3150, 0
    %v3177 = vsel %vm150, %v3151, 0
    %v3180 = vsel %vm150, %v3152, 0
    %v3183 = vsel %vm150, %v3154, 0
    %v3186 = vsel %vm150, %v3155, 0
    %v3189 = vsel %vm150, %v3156, 0
    %v3192 = vsel %vm150, %v3157, 0
    %v3195 = vsel %vm150, %v3159, 0
    %v3198 = vsel %vm150, %v3160, 0
    %v3201 = vsel %vm150, %v3161, 0
    %v3204 = vsel %vm150, %v3162, 0
    %v3207 = vsel %vm150, %v3164, 0
    %v3210 = vsel %vm150, %v3165, 0
    %v3213 = vsel %vm150, %v3166, 0
    %v3216 = vsel %vm150, %v3167, 0
    %v3219 = vsel %vm343, %v3169, 0
    %3221 = vmatprep.subr.mxu0 0.0
    %3222 = vmatpush1.msra.mxu0 0.0
    %3223 = vmatprep.subr.mxu0 0.0
    %3224 = vmatpush1.msra.mxu0 0.0
    %3225 = vmatprep.subr.mxu0 0.0
    %3226 = vmatpush1.msra.mxu0 0.0
    %3227 = vmatprep.subr.mxu0 0.0
    %3228 = vmatpush1.msra.mxu0 0.0
    %3229 = vmatprep.subr.mxu0 0.0
    %3230 = vmatpush1.msra.mxu0 0.0
    %3231 = vmatprep.subr.mxu0 0.0
    %3232 = vmatpush1.msra.mxu0 0.0
    %3233 = vmatprep.subr.mxu0 0.0
    %3234 = vmatpush1.msra.mxu0 0.0
    %3235 = vmatprep.subr.mxu0 0.0
    %3236 = vmatpush1.msra.mxu0 0.0
    %3237 = vmatprep.subr.mxu0 0.0
    %3238 = vmatpush1.msra.mxu0 0.0
    %3239 = vmatprep.subr.mxu0 0.0
    %3240 = vmatpush1.msra.mxu0 0.0
    %3241 = vmatprep.subr.mxu0 0.0
    %3242 = vmatpush1.msra.mxu0 0.0
    %3243 = vmatprep.subr.mxu0 0.0
    %3244 = vmatpush1.msra.mxu0 0.0
    %3245 = vmatprep.subr.mxu0 0.0
    %3246 = vmatpush1.msra.mxu0 0.0
    %3247 = vmatprep.subr.mxu0 0.0
    %3248 = vmatpush1.msra.mxu0 0.0
    %3249 = vmatprep.subr.mxu0 0.0
    %3250 = vmatpush1.msra.mxu0 0.0
    %3251 = vmatprep.subr.mxu0 0.0
    %3252 = vmatpush1.msra.mxu0 %v3219
    %3253 = vmatprep.subr.mxu0 0.0
    %3254 = vmatpush2.msra.mxu0 0.0
    %3255 = vmatprep.subr.mxu0 0.0
    %3256 = vmatpush2.msra.mxu0 0.0
    %3257 = vmatprep.subr.mxu0 0.0
    %3258 = vmatpush2.msra.mxu0 0.0
    %3259 = vmatprep.subr.mxu0 0.0
    %3260 = vmatpush2.msra.mxu0 0.0
    %3261 = vmatprep.subr.mxu0 0.0
    %3262 = vmatpush2.msra.mxu0 0.0
    %3263 = vmatprep.subr.mxu0 0.0
    %3264 = vmatpush2.msra.mxu0 0.0
    %3265 = vmatprep.subr.mxu0 0.0
    %3266 = vmatpush2.msra.mxu0 0.0
    %3267 = vmatprep.subr.mxu0 0.0
    %3268 = vmatpush2.msra.mxu0 0.0
    %3269 = vmatprep.subr.mxu0 0.0
    %3270 = vmatpush2.msra.mxu0 0.0
    %3271 = vmatprep.subr.mxu0 0.0
    %3272 = vmatpush2.msra.mxu0 0.0
    %3273 = vmatprep.subr.mxu0 0.0
    %3274 = vmatpush2.msra.mxu0 0.0
    %3275 = vmatprep.subr.mxu0 0.0
    %3276 = vmatpush2.msra.mxu0 0.0
    %3277 = vmatprep.subr.mxu0 0.0
    %3278 = vmatpush2.msra.mxu0 0.0
    %3279 = vmatprep.subr.mxu0 0.0
    %3280 = vmatpush2.msra.mxu0 0.0
    %3281 = vmatprep.subr.mxu0 0.0
    %3282 = vmatpush2.msra.mxu0 0.0
    %3283 = vmatprep.subr.mxu0 0.0
    %3284 = vmatpush2.msra.mxu0 0.0
    %3285 = vmatprep.mubr.f32.mxu0 0.0
    %3286 = vmatmul.mubr.f32.gmra.mxu0 %v757
    %v3287 = vpop.f32.mrf.mxu0
    %v3288 = vadd.f32 0.0, %v3287
    %v3289 = vpop.f32.mrf.mxu0
    %3290 = vmatprep.mubr.f32.mxu0 0.0
    %3291 = vmatmul.mubr.f32.gmra.mxu0 %v760
    %v3292 = vpop.f32.mrf.mxu0
    %v3293 = vadd.f32 0.0, %v3292
    %v3294 = vpop.f32.mrf.mxu0
    %3295 = vmatprep.mubr.f32.mxu0 0.0
    %3296 = vmatmul.mubr.f32.gmra.mxu0 %v763
    %v3297 = vpop.f32.mrf.mxu0
    %v3298 = vadd.f32 0.0, %v3297
    %v3299 = vpop.f32.mrf.mxu0
    %3300 = vmatprep.mubr.f32.mxu0 0.0
    %3301 = vmatmul.mubr.f32.gmra.mxu0 %v766
    %v3302 = vpop.f32.mrf.mxu0
    %v3303 = vadd.f32 0.0, %v3302
    %v3304 = vpop.f32.mrf.mxu0
    %3305 = vmatprep.mubr.f32.mxu0 0.0
    %3306 = vmatmul.mubr.f32.gmra.mxu0 %v248
    %v3307 = vpop.f32.mrf.mxu0
    %v3308 = vadd.f32 0.0, %v3307
    %v3309 = vpop.f32.mrf.mxu0
    %3310 = vmatprep.mubr.f32.mxu0 0.0
    %3311 = vmatmul.mubr.f32.gmra.mxu0 %v251
    %v3312 = vpop.f32.mrf.mxu0
    %v3313 = vadd.f32 0.0, %v3312
    %v3314 = vpop.f32.mrf.mxu0
    %3315 = vmatprep.mubr.f32.mxu0 0.0
    %3316 = vmatmul.mubr.f32.gmra.mxu0 %v254
    %v3317 = vpop.f32.mrf.mxu0
    %v3318 = vadd.f32 0.0, %v3317
    %v3319 = vpop.f32.mrf.mxu0
    %3320 = vmatprep.mubr.f32.mxu0 0.0
    %3321 = vmatmul.mubr.f32.gmra.mxu0 %v257
    %v3322 = vpop.f32.mrf.mxu0
    %v3323 = vadd.f32 0.0, %v3322
    %v3324 = vpop.f32.mrf.mxu0
    %3325 = vmatprep.mubr.f32.mxu0 0.0
    %3326 = vmatmul.mubr.f32.gmra.mxu0 %v260
    %v3327 = vpop.f32.mrf.mxu0
    %v3328 = vadd.f32 0.0, %v3327
    %v3329 = vpop.f32.mrf.mxu0
    %3330 = vmatprep.mubr.f32.mxu0 0.0
    %3331 = vmatmul.mubr.f32.gmra.mxu0 %v263
    %v3332 = vpop.f32.mrf.mxu0
    %v3333 = vadd.f32 0.0, %v3332
    %v3334 = vpop.f32.mrf.mxu0
    %3335 = vmatprep.mubr.f32.mxu0 0.0
    %3336 = vmatmul.mubr.f32.gmra.mxu0 %v266
    %v3337 = vpop.f32.mrf.mxu0
    %v3338 = vadd.f32 0.0, %v3337
    %v3339 = vpop.f32.mrf.mxu0
    %3340 = vmatprep.mubr.f32.mxu0 0.0
    %3341 = vmatmul.mubr.f32.gmra.mxu0 %v269
    %v3342 = vpop.f32.mrf.mxu0
    %v3343 = vadd.f32 0.0, %v3342
    %v3344 = vpop.f32.mrf.mxu0
    %3345 = vmatprep.mubr.f32.mxu0 0.0
    %3346 = vmatmul.mubr.f32.gmra.mxu0 %v272
    %v3347 = vpop.f32.mrf.mxu0
    %v3348 = vadd.f32 0.0, %v3347
    %v3349 = vpop.f32.mrf.mxu0
    %3350 = vmatprep.mubr.f32.mxu0 0.0
    %3351 = vmatmul.mubr.f32.gmra.mxu0 %v275
    %v3352 = vpop.f32.mrf.mxu0
    %v3353 = vadd.f32 0.0, %v3352
    %v3354 = vpop.f32.mrf.mxu0
    %3355 = vmatprep.mubr.f32.mxu0 0.0
    %3356 = vmatmul.mubr.f32.gmra.mxu0 %v278
    %v3357 = vpop.f32.mrf.mxu0
    %v3358 = vadd.f32 0.0, %v3357
    %v3359 = vpop.f32.mrf.mxu0
    %3360 = vmatprep.mubr.f32.mxu0 0.0
    %3361 = vmatmul.mubr.f32.gmra.mxu0 %v281
    %v3362 = vpop.f32.mrf.mxu0
    %v3363 = vadd.f32 0.0, %v3362
    %v3364 = vpop.f32.mrf.mxu0
    %3365 = vmatprep.mubr.f32.mxu0 0.0
    %3366 = vmatmul.mubr.f32.gmra.mxu0 %v769
    %v3367 = vpop.f32.mrf.mxu0
    %v3368 = vadd.f32 0.0, %v3367
    %v3369 = vpop.f32.mrf.mxu0
    %3370 = vmatprep.mubr.f32.mxu0 0.0
    %3371 = vmatmul.mubr.f32.gmra.mxu0 %v772
    %v3372 = vpop.f32.mrf.mxu0
    %v3373 = vadd.f32 0.0, %v3372
    %v3374 = vpop.f32.mrf.mxu0
    %3375 = vmatprep.mubr.f32.mxu0 0.0
    %3376 = vmatmul.mubr.f32.gmra.mxu0 %v775
    %v3377 = vpop.f32.mrf.mxu0
    %v3378 = vadd.f32 0.0, %v3377
    %v3379 = vpop.f32.mrf.mxu0
    %3380 = vmatprep.mubr.f32.mxu0 0.0
    %3381 = vmatmul.mubr.f32.gmra.mxu0 %v778
    %v3382 = vpop.f32.mrf.mxu0
    %v3383 = vadd.f32 0.0, %v3382
    %v3384 = vpop.f32.mrf.mxu0
    %3385 = vmatprep.mubr.f32.mxu0 0.0
    %3386 = vmatmul.mubr.f32.gmra.mxu0 %v296
    %v3387 = vpop.f32.mrf.mxu0
    %v3388 = vadd.f32 0.0, %v3387
    %v3389 = vpop.f32.mrf.mxu0
    %3390 = vmatprep.mubr.f32.mxu0 0.0
    %3391 = vmatmul.mubr.f32.gmra.mxu0 %v299
    %v3392 = vpop.f32.mrf.mxu0
    %v3393 = vadd.f32 0.0, %v3392
    %v3394 = vpop.f32.mrf.mxu0
    %3395 = vmatprep.mubr.f32.mxu0 0.0
    %3396 = vmatmul.mubr.f32.gmra.mxu0 %v302
    %v3397 = vpop.f32.mrf.mxu0
    %v3398 = vadd.f32 0.0, %v3397
    %v3399 = vpop.f32.mrf.mxu0
    %3400 = vmatprep.mubr.f32.mxu0 0.0
    %3401 = vmatmul.mubr.f32.gmra.mxu0 %v305
    %v3402 = vpop.f32.mrf.mxu0
    %v3403 = vadd.f32 0.0, %v3402
    %v3404 = vpop.f32.mrf.mxu0
    %3405 = vmatprep.mubr.f32.mxu0 0.0
    %3406 = vmatmul.mubr.f32.gmra.mxu0 %v308
    %v3407 = vpop.f32.mrf.mxu0
    %v3408 = vadd.f32 0.0, %v3407
    %v3409 = vpop.f32.mrf.mxu0
    %3410 = vmatprep.mubr.f32.mxu0 0.0
    %3411 = vmatmul.mubr.f32.gmra.mxu0 %v311
    %v3412 = vpop.f32.mrf.mxu0
    %v3413 = vadd.f32 0.0, %v3412
    %v3414 = vpop.f32.mrf.mxu0
    %3415 = vmatprep.mubr.f32.mxu0 0.0
    %3416 = vmatmul.mubr.f32.gmra.mxu0 %v314
    %v3417 = vpop.f32.mrf.mxu0
    %v3418 = vadd.f32 0.0, %v3417
    %v3419 = vpop.f32.mrf.mxu0
    %3420 = vmatprep.mubr.f32.mxu0 0.0
    %3421 = vmatmul.mubr.f32.gmra.mxu0 %v317
    %v3422 = vpop.f32.mrf.mxu0
    %v3423 = vadd.f32 0.0, %v3422
    %v3424 = vpop.f32.mrf.mxu0
    %3425 = vmatprep.mubr.f32.mxu0 0.0
    %3426 = vmatmul.mubr.f32.gmra.mxu0 %v320
    %v3427 = vpop.f32.mrf.mxu0
    %v3428 = vadd.f32 0.0, %v3427
    %v3429 = vpop.f32.mrf.mxu0
    %3430 = vmatprep.mubr.f32.mxu0 0.0
    %3431 = vmatmul.mubr.f32.gmra.mxu0 %v323
    %v3432 = vpop.f32.mrf.mxu0
    %v3433 = vadd.f32 0.0, %v3432
    %v3434 = vpop.f32.mrf.mxu0
    %3435 = vmatprep.mubr.f32.mxu0 0.0
    %3436 = vmatmul.mubr.f32.gmra.mxu0 %v326
    %v3437 = vpop.f32.mrf.mxu0
    %v3438 = vadd.f32 0.0, %v3437
    %v3439 = vpop.f32.mrf.mxu0
    %3440 = vmatprep.mubr.f32.mxu0 0.0
    %3441 = vmatmul.mubr.f32.gmra.mxu0 %v329
    %v3442 = vpop.f32.mrf.mxu0
    %v3443 = vadd.f32 0.0, %v3442
    %v3444 = vpop.f32.mrf.mxu0
    %3445 = vmatprep.mubr.f32.mxu0 0.0
    %3446 = vmatmul.mubr.f32.gmra.mxu0 %v1709
    %v3447 = vpop.f32.mrf.mxu0
    %v3448 = vadd.f32 0.0, %v3447
    %v3449 = vpop.f32.mrf.mxu0
    %3450 = vmatprep.mubr.f32.mxu0 0.0
    %3451 = vmatmul.mubr.f32.gmra.mxu0 %v1712
    %v3452 = vpop.f32.mrf.mxu0
    %v3453 = vadd.f32 0.0, %v3452
    %v3454 = vpop.f32.mrf.mxu0
    %3455 = vmatprep.mubr.f32.mxu0 0.0
    %3456 = vmatmul.mubr.f32.gmra.mxu0 %v1715
    %v3457 = vpop.f32.mrf.mxu0
    %v3458 = vadd.f32 0.0, %v3457
    %v3459 = vpop.f32.mrf.mxu0
    %3460 = vmatprep.mubr.f32.mxu0 0.0
    %3461 = vmatmul.mubr.f32.gmra.mxu0 %v1718
    %v3462 = vpop.f32.mrf.mxu0
    %v3463 = vadd.f32 0.0, %v3462
    %v3464 = vpop.f32.mrf.mxu0
    %3465 = vmatprep.mubr.f32.mxu0 0.0
    %3466 = vmatmul.mubr.f32.gmra.mxu0 %v1721
    %v3467 = vpop.f32.mrf.mxu0
    %v3468 = vadd.f32 0.0, %v3467
    %v3469 = vpop.f32.mrf.mxu0
    %3470 = vmatprep.mubr.f32.mxu0 0.0
    %3471 = vmatmul.mubr.f32.gmra.mxu0 %v1724
    %v3472 = vpop.f32.mrf.mxu0
    %v3473 = vadd.f32 0.0, %v3472
    %v3474 = vpop.f32.mrf.mxu0
    %3475 = vmatprep.mubr.f32.mxu0 0.0
    %3476 = vmatmul.mubr.f32.gmra.mxu0 %v1727
    %v3477 = vpop.f32.mrf.mxu0
    %v3478 = vadd.f32 0.0, %v3477
    %v3479 = vpop.f32.mrf.mxu0
    %3480 = vmatprep.mubr.f32.mxu0 0.0
    %3481 = vmatmul.mubr.f32.gmra.mxu0 %v1730
    %v3482 = vpop.f32.mrf.mxu0
    %v3483 = vadd.f32 0.0, %v3482
    %v3484 = vpop.f32.mrf.mxu0
    %3485 = vmatprep.mubr.f32.mxu0 0.0
    %3486 = vmatmul.mubr.f32.gmra.mxu0 %v1733
    %v3487 = vpop.f32.mrf.mxu0
    %v3488 = vadd.f32 0.0, %v3487
    %v3489 = vpop.f32.mrf.mxu0
    %3490 = vmatprep.mubr.f32.mxu0 0.0
    %3491 = vmatmul.mubr.f32.gmra.mxu0 %v1736
    %v3492 = vpop.f32.mrf.mxu0
    %v3493 = vadd.f32 0.0, %v3492
    %v3494 = vpop.f32.mrf.mxu0
    %3495 = vmatprep.mubr.f32.mxu0 0.0
    %3496 = vmatmul.mubr.f32.gmra.mxu0 %v1739
    %v3497 = vpop.f32.mrf.mxu0
    %v3498 = vadd.f32 0.0, %v3497
    %v3499 = vpop.f32.mrf.mxu0
    %3500 = vmatprep.mubr.f32.mxu0 0.0
    %3501 = vmatmul.mubr.f32.gmra.mxu0 %v1742
    %v3502 = vpop.f32.mrf.mxu0
    %v3503 = vadd.f32 0.0, %v3502
    %v3504 = vpop.f32.mrf.mxu0
    %3505 = vmatprep.mubr.f32.mxu0 0.0
    %3506 = vmatmul.mubr.f32.gmra.mxu0 %v1745
    %v3507 = vpop.f32.mrf.mxu0
    %v3508 = vadd.f32 0.0, %v3507
    %v3509 = vpop.f32.mrf.mxu0
    %3510 = vmatprep.mubr.f32.mxu0 0.0
    %3511 = vmatmul.mubr.f32.gmra.mxu0 %v1748
    %v3512 = vpop.f32.mrf.mxu0
    %v3513 = vadd.f32 0.0, %v3512
    %v3514 = vpop.f32.mrf.mxu0
    %3515 = vmatprep.mubr.f32.mxu0 0.0
    %3516 = vmatmul.mubr.f32.gmra.mxu0 %v1751
    %v3517 = vpop.f32.mrf.mxu0
    %v3518 = vadd.f32 0.0, %v3517
    %v3519 = vpop.f32.mrf.mxu0
    %3520 = vmatprep.mubr.f32.mxu0 0.0
    %3521 = vmatmul.mubr.f32.gmra.mxu0 %v1754
    %v3522 = vpop.f32.mrf.mxu0
    %v3523 = vadd.f32 0.0, %v3522
    %v3524 = vpop.f32.mrf.mxu0
    %3525 = vmatprep.mubr.f32.mxu0 0.0
    %3526 = vmatmul.mubr.f32.gmra.mxu0 %v3171
    %v3527 = vpop.f32.mrf.mxu0
    %v3528 = vadd.f32 0.0, %v3527
    %v3529 = vpop.f32.mrf.mxu0
    %3530 = vmatprep.mubr.f32.mxu0 0.0
    %3531 = vmatmul.mubr.f32.gmra.mxu0 %v3174
    %v3532 = vpop.f32.mrf.mxu0
    %v3533 = vadd.f32 0.0, %v3532
    %v3534 = vpop.f32.mrf.mxu0
    %3535 = vmatprep.mubr.f32.mxu0 0.0
    %3536 = vmatmul.mubr.f32.gmra.mxu0 %v3177
    %v3537 = vpop.f32.mrf.mxu0
    %v3538 = vadd.f32 0.0, %v3537
    %v3539 = vpop.f32.mrf.mxu0
    %3540 = vmatprep.mubr.f32.mxu0 0.0
    %3541 = vmatmul.mubr.f32.gmra.mxu0 %v3180
    %v3542 = vpop.f32.mrf.mxu0
    %v3543 = vadd.f32 0.0, %v3542
    %v3544 = vpop.f32.mrf.mxu0
    %3545 = vmatprep.mubr.f32.mxu0 0.0
    %3546 = vmatmul.mubr.f32.gmra.mxu0 %v3183
    %v3547 = vpop.f32.mrf.mxu0
    %v3548 = vadd.f32 0.0, %v3547
    %v3549 = vpop.f32.mrf.mxu0
    %3550 = vmatprep.mubr.f32.mxu0 0.0
    %3551 = vmatmul.mubr.f32.gmra.mxu0 %v3186
    %v3552 = vpop.f32.mrf.mxu0
    %v3553 = vadd.f32 0.0, %v3552
    %v3554 = vpop.f32.mrf.mxu0
    %3555 = vmatprep.mubr.f32.mxu0 0.0
    %3556 = vmatmul.mubr.f32.gmra.mxu0 %v3189
    %v3557 = vpop.f32.mrf.mxu0
    %v3558 = vadd.f32 0.0, %v3557
    %v3559 = vpop.f32.mrf.mxu0
    %3560 = vmatprep.mubr.f32.mxu0 0.0
    %3561 = vmatmul.mubr.f32.gmra.mxu0 %v3192
    %v3562 = vpop.f32.mrf.mxu0
    %v3563 = vadd.f32 0.0, %v3562
    %v3564 = vpop.f32.mrf.mxu0
    %3565 = vmatprep.mubr.f32.mxu0 0.0
    %3566 = vmatmul.mubr.f32.gmra.mxu0 %v3195
    %v3567 = vpop.f32.mrf.mxu0
    %v3568 = vadd.f32 0.0, %v3567
    %v3569 = vpop.f32.mrf.mxu0
    %3570 = vmatprep.mubr.f32.mxu0 0.0
    %3571 = vmatmul.mubr.f32.gmra.mxu0 %v3198
    %v3572 = vpop.f32.mrf.mxu0
    %v3573 = vadd.f32 0.0, %v3572
    %v3574 = vpop.f32.mrf.mxu0
    %3575 = vmatprep.mubr.f32.mxu0 0.0
    %3576 = vmatmul.mubr.f32.gmra.mxu0 %v3201
    %v3577 = vpop.f32.mrf.mxu0
    %v3578 = vadd.f32 0.0, %v3577
    %v3579 = vpop.f32.mrf.mxu0
    %3580 = vmatprep.mubr.f32.mxu0 0.0
    %3581 = vmatmul.mubr.f32.gmra.mxu0 %v3204
    %v3582 = vpop.f32.mrf.mxu0
    %v3583 = vadd.f32 0.0, %v3582
    %v3584 = vpop.f32.mrf.mxu0
    %3585 = vmatprep.mubr.f32.mxu0 0.0
    %3586 = vmatmul.mubr.f32.gmra.mxu0 %v3207
    %v3587 = vpop.f32.mrf.mxu0
    %v3588 = vadd.f32 0.0, %v3587
    %v3589 = vpop.f32.mrf.mxu0
    %3590 = vmatprep.mubr.f32.mxu0 0.0
    %3591 = vmatmul.mubr.f32.gmra.mxu0 %v3210
    %v3592 = vpop.f32.mrf.mxu0
    %v3593 = vadd.f32 0.0, %v3592
    %v3594 = vpop.f32.mrf.mxu0
    %3595 = vmatprep.mubr.f32.mxu0 0.0
    %3596 = vmatmul.mubr.f32.gmra.mxu0 %v3213
    %v3597 = vpop.f32.mrf.mxu0
    %v3598 = vadd.f32 0.0, %v3597
    %v3599 = vpop.f32.mrf.mxu0
    %3600 = vmatprep.mubr.f32.mxu0 0.0
    %3601 = vmatmul.mubr.f32.gmra.mxu0 %v3216
    %v3602 = vpop.f32.mrf.mxu0
    %v3603 = vadd.f32 0.0, %v3602
    %v3604 = vpop.f32.mrf.mxu0
    %3605 = vdwg.mxu0
    %v3606 = vadd.f32 %v3084, %v3288
    %v3607 = vadd.f32 %v3085, %v3293
    %v3608 = vadd.f32 %v3086, %v3298
    %v3609 = vadd.f32 %v3087, %v3303
    %v3610 = vadd.f32 %v3088, %v3308
    %v3611 = vadd.f32 %v3089, %v3313
    %v3612 = vadd.f32 %v3090, %v3318
    %v3613 = vadd.f32 %v3091, %v3323
    %v3614 = vadd.f32 %v3092, %v3328
    %v3615 = vadd.f32 %v3093, %v3333
    %v3616 = vadd.f32 %v3094, %v3338
    %v3617 = vadd.f32 %v3095, %v3343
    %v3618 = vadd.f32 %v3096, %v3348
    %v3619 = vadd.f32 %v3097, %v3353
    %v3620 = vadd.f32 %v3098, %v3358
    %v3621 = vadd.f32 %v3099, %v3363
    %v3622 = vadd.f32 %v3100, %v3368
    %v3623 = vadd.f32 %v3101, %v3373
    %v3624 = vadd.f32 %v3102, %v3378
    %v3625 = vadd.f32 %v3103, %v3383
    %v3626 = vadd.f32 %v3104, %v3388
    %v3627 = vadd.f32 %v3105, %v3393
    %v3628 = vadd.f32 %v3106, %v3398
    %v3629 = vadd.f32 %v3107, %v3403
    %v3630 = vadd.f32 %v3108, %v3408
    %v3631 = vadd.f32 %v3109, %v3413
    %v3632 = vadd.f32 %v3110, %v3418
    %v3633 = vadd.f32 %v3111, %v3423
    %v3634 = vadd.f32 %v3112, %v3428
    %v3635 = vadd.f32 %v3113, %v3433
    %v3636 = vadd.f32 %v3114, %v3438
    %v3637 = vadd.f32 %v3115, %v3443
    %v3638 = vadd.f32 %v3116, %v3448
    %v3639 = vadd.f32 %v3117, %v3453
    %v3640 = vadd.f32 %v3118, %v3458
    %v3641 = vadd.f32 %v3119, %v3463
    %v3642 = vadd.f32 %v3120, %v3468
    %v3643 = vadd.f32 %v3121, %v3473
    %v3644 = vadd.f32 %v3122, %v3478
    %v3645 = vadd.f32 %v3123, %v3483
    %v3646 = vadd.f32 %v3124, %v3488
    %v3647 = vadd.f32 %v3125, %v3493
    %v3648 = vadd.f32 %v3126, %v3498
    %v3649 = vadd.f32 %v3127, %v3503
    %v3650 = vadd.f32 %v3128, %v3508
    %v3651 = vadd.f32 %v3129, %v3513
    %v3652 = vadd.f32 %v3130, %v3518
    %v3653 = vadd.f32 %v3131, %v3523
    %v3654 = vadd.f32 %v3132, %v3528
    %v3655 = vadd.f32 %v3133, %v3533
    %v3656 = vadd.f32 %v3134, %v3538
    %v3657 = vadd.f32 %v3135, %v3543
    %v3658 = vadd.f32 %v3136, %v3548
    %v3659 = vadd.f32 %v3137, %v3553
    %v3660 = vadd.f32 %v3138, %v3558
    %v3661 = vadd.f32 %v3139, %v3563
    %v3662 = vadd.f32 %v3140, %v3568
    %v3663 = vadd.f32 %v3141, %v3573
    %v3664 = vadd.f32 %v3142, %v3578
    %v3665 = vadd.f32 %v3143, %v3583
    %v3666 = vadd.f32 %v3144, %v3588
    %v3667 = vadd.f32 %v3145, %v3593
    %v3668 = vadd.f32 %v3146, %v3598
    %v3669 = vadd.f32 %v3147, %v3603
    %v3670 = vld [vmem:[%s3148 + $0x2] sm:$0xff]
    %v3671 = vld [vmem:[%s3148 + $0x12] sm:$0xff]
    %v3672 = vld [vmem:[%s3148 + $0x22] sm:$0xff]
    %v3673 = vld [vmem:[%s3148 + $0x32] sm:$0xff]
    %s3674 = scalar_lea.vmem %s1, 28
    %v3675 = vld [vmem:[%s3674] sm:$0x7]
    %v3677 = vsel %vm150, %v3670, 0
    %v3680 = vsel %vm150, %v3671, 0
    %v3683 = vsel %vm150, %v3672, 0
    %v3686 = vsel %vm150, %v3673, 0
    %v3689 = vsel %vm343, %v3675, 0
    %3691 = vmatprep.subr.mxu0 0.0
    %3692 = vmatpush1.msra.mxu0 0.0
    %3693 = vmatprep.subr.mxu0 0.0
    %3694 = vmatpush1.msra.mxu0 0.0
    %3695 = vmatprep.subr.mxu0 0.0
    %3696 = vmatpush1.msra.mxu0 0.0
    %3697 = vmatprep.subr.mxu0 0.0
    %3698 = vmatpush1.msra.mxu0 0.0
    %3699 = vmatprep.subr.mxu0 0.0
    %3700 = vmatpush1.msra.mxu0 0.0
    %3701 = vmatprep.subr.mxu0 0.0
    %3702 = vmatpush1.msra.mxu0 0.0
    %3703 = vmatprep.subr.mxu0 0.0
    %3704 = vmatpush1.msra.mxu0 0.0
    %3705 = vmatprep.subr.mxu0 0.0
    %3706 = vmatpush1.msra.mxu0 0.0
    %3707 = vmatprep.subr.mxu0 0.0
    %3708 = vmatpush1.msra.mxu0 0.0
    %3709 = vmatprep.subr.mxu0 0.0
    %3710 = vmatpush1.msra.mxu0 0.0
    %3711 = vmatprep.subr.mxu0 0.0
    %3712 = vmatpush1.msra.mxu0 0.0
    %3713 = vmatprep.subr.mxu0 0.0
    %3714 = vmatpush1.msra.mxu0 0.0
    %3715 = vmatprep.subr.mxu0 0.0
    %3716 = vmatpush1.msra.mxu0 0.0
    %3717 = vmatprep.subr.mxu0 0.0
    %3718 = vmatpush1.msra.mxu0 0.0
    %3719 = vmatprep.subr.mxu0 0.0
    %3720 = vmatpush1.msra.mxu0 0.0
    %3721 = vmatprep.subr.mxu0 0.0
    %3722 = vmatpush1.msra.mxu0 %v3689
    %3723 = vmatprep.subr.mxu0 0.0
    %3724 = vmatpush2.msra.mxu0 0.0
    %3725 = vmatprep.subr.mxu0 0.0
    %3726 = vmatpush2.msra.mxu0 0.0
    %3727 = vmatprep.subr.mxu0 0.0
    %3728 = vmatpush2.msra.mxu0 0.0
    %3729 = vmatprep.subr.mxu0 0.0
    %3730 = vmatpush2.msra.mxu0 0.0
    %3731 = vmatprep.subr.mxu0 0.0
    %3732 = vmatpush2.msra.mxu0 0.0
    %3733 = vmatprep.subr.mxu0 0.0
    %3734 = vmatpush2.msra.mxu0 0.0
    %3735 = vmatprep.subr.mxu0 0.0
    %3736 = vmatpush2.msra.mxu0 0.0
    %3737 = vmatprep.subr.mxu0 0.0
    %3738 = vmatpush2.msra.mxu0 0.0
    %3739 = vmatprep.subr.mxu0 0.0
    %3740 = vmatpush2.msra.mxu0 0.0
    %3741 = vmatprep.subr.mxu0 0.0
    %3742 = vmatpush2.msra.mxu0 0.0
    %3743 = vmatprep.subr.mxu0 0.0
    %3744 = vmatpush2.msra.mxu0 0.0
    %3745 = vmatprep.subr.mxu0 0.0
    %3746 = vmatpush2.msra.mxu0 0.0
    %3747 = vmatprep.subr.mxu0 0.0
    %3748 = vmatpush2.msra.mxu0 0.0
    %3749 = vmatprep.subr.mxu0 0.0
    %3750 = vmatpush2.msra.mxu0 0.0
    %3751 = vmatprep.subr.mxu0 0.0
    %3752 = vmatpush2.msra.mxu0 0.0
    %3753 = vmatprep.subr.mxu0 0.0
    %3754 = vmatpush2.msra.mxu0 0.0
    %3755 = vmatprep.mubr.f32.mxu0 0.0
    %3756 = vmatmul.mubr.f32.gmra.mxu0 %v248
    %v3757 = vpop.f32.mrf.mxu0
    %v3758 = vadd.f32 0.0, %v3757
    %v3759 = vpop.f32.mrf.mxu0
    %3760 = vmatprep.mubr.f32.mxu0 0.0
    %3761 = vmatmul.mubr.f32.gmra.mxu0 %v251
    %v3762 = vpop.f32.mrf.mxu0
    %v3763 = vadd.f32 0.0, %v3762
    %v3764 = vpop.f32.mrf.mxu0
    %3765 = vmatprep.mubr.f32.mxu0 0.0
    %3766 = vmatmul.mubr.f32.gmra.mxu0 %v254
    %v3767 = vpop.f32.mrf.mxu0
    %v3768 = vadd.f32 0.0, %v3767
    %v3769 = vpop.f32.mrf.mxu0
    %3770 = vmatprep.mubr.f32.mxu0 0.0
    %3771 = vmatmul.mubr.f32.gmra.mxu0 %v257
    %v3772 = vpop.f32.mrf.mxu0
    %v3773 = vadd.f32 0.0, %v3772
    %v3774 = vpop.f32.mrf.mxu0
    %3775 = vmatprep.mubr.f32.mxu0 0.0
    %3776 = vmatmul.mubr.f32.gmra.mxu0 %v260
    %v3777 = vpop.f32.mrf.mxu0
    %v3778 = vadd.f32 0.0, %v3777
    %v3779 = vpop.f32.mrf.mxu0
    %3780 = vmatprep.mubr.f32.mxu0 0.0
    %3781 = vmatmul.mubr.f32.gmra.mxu0 %v263
    %v3782 = vpop.f32.mrf.mxu0
    %v3783 = vadd.f32 0.0, %v3782
    %v3784 = vpop.f32.mrf.mxu0
    %3785 = vmatprep.mubr.f32.mxu0 0.0
    %3786 = vmatmul.mubr.f32.gmra.mxu0 %v266
    %v3787 = vpop.f32.mrf.mxu0
    %v3788 = vadd.f32 0.0, %v3787
    %v3789 = vpop.f32.mrf.mxu0
    %3790 = vmatprep.mubr.f32.mxu0 0.0
    %3791 = vmatmul.mubr.f32.gmra.mxu0 %v269
    %v3792 = vpop.f32.mrf.mxu0
    %v3793 = vadd.f32 0.0, %v3792
    %v3794 = vpop.f32.mrf.mxu0
    %3795 = vmatprep.mubr.f32.mxu0 0.0
    %3796 = vmatmul.mubr.f32.gmra.mxu0 %v272
    %v3797 = vpop.f32.mrf.mxu0
    %v3798 = vadd.f32 0.0, %v3797
    %v3799 = vpop.f32.mrf.mxu0
    %3800 = vmatprep.mubr.f32.mxu0 0.0
    %3801 = vmatmul.mubr.f32.gmra.mxu0 %v275
    %v3802 = vpop.f32.mrf.mxu0
    %v3803 = vadd.f32 0.0, %v3802
    %v3804 = vpop.f32.mrf.mxu0
    %3805 = vmatprep.mubr.f32.mxu0 0.0
    %3806 = vmatmul.mubr.f32.gmra.mxu0 %v278
    %v3807 = vpop.f32.mrf.mxu0
    %v3808 = vadd.f32 0.0, %v3807
    %v3809 = vpop.f32.mrf.mxu0
    %3810 = vmatprep.mubr.f32.mxu0 0.0
    %3811 = vmatmul.mubr.f32.gmra.mxu0 %v281
    %v3812 = vpop.f32.mrf.mxu0
    %v3813 = vadd.f32 0.0, %v3812
    %v3814 = vpop.f32.mrf.mxu0
    %3815 = vmatprep.mubr.f32.mxu0 0.0
    %3816 = vmatmul.mubr.f32.gmra.mxu0 %v284
    %v3817 = vpop.f32.mrf.mxu0
    %v3818 = vadd.f32 0.0, %v3817
    %v3819 = vpop.f32.mrf.mxu0
    %3820 = vmatprep.mubr.f32.mxu0 0.0
    %3821 = vmatmul.mubr.f32.gmra.mxu0 %v287
    %v3822 = vpop.f32.mrf.mxu0
    %v3823 = vadd.f32 0.0, %v3822
    %v3824 = vpop.f32.mrf.mxu0
    %3825 = vmatprep.mubr.f32.mxu0 0.0
    %3826 = vmatmul.mubr.f32.gmra.mxu0 %v290
    %v3827 = vpop.f32.mrf.mxu0
    %v3828 = vadd.f32 0.0, %v3827
    %v3829 = vpop.f32.mrf.mxu0
    %3830 = vmatprep.mubr.f32.mxu0 0.0
    %3831 = vmatmul.mubr.f32.gmra.mxu0 %v293
    %v3832 = vpop.f32.mrf.mxu0
    %v3833 = vadd.f32 0.0, %v3832
    %v3834 = vpop.f32.mrf.mxu0
    %3835 = vmatprep.mubr.f32.mxu0 0.0
    %3836 = vmatmul.mubr.f32.gmra.mxu0 %v296
    %v3837 = vpop.f32.mrf.mxu0
    %v3838 = vadd.f32 0.0, %v3837
    %v3839 = vpop.f32.mrf.mxu0
    %3840 = vmatprep.mubr.f32.mxu0 0.0
    %3841 = vmatmul.mubr.f32.gmra.mxu0 %v299
    %v3842 = vpop.f32.mrf.mxu0
    %v3843 = vadd.f32 0.0, %v3842
    %v3844 = vpop.f32.mrf.mxu0
    %3845 = vmatprep.mubr.f32.mxu0 0.0
    %3846 = vmatmul.mubr.f32.gmra.mxu0 %v302
    %v3847 = vpop.f32.mrf.mxu0
    %v3848 = vadd.f32 0.0, %v3847
    %v3849 = vpop.f32.mrf.mxu0
    %3850 = vmatprep.mubr.f32.mxu0 0.0
    %3851 = vmatmul.mubr.f32.gmra.mxu0 %v305
    %v3852 = vpop.f32.mrf.mxu0
    %v3853 = vadd.f32 0.0, %v3852
    %v3854 = vpop.f32.mrf.mxu0
    %3855 = vmatprep.mubr.f32.mxu0 0.0
    %3856 = vmatmul.mubr.f32.gmra.mxu0 %v308
    %v3857 = vpop.f32.mrf.mxu0
    %v3858 = vadd.f32 0.0, %v3857
    %v3859 = vpop.f32.mrf.mxu0
    %3860 = vmatprep.mubr.f32.mxu0 0.0
    %3861 = vmatmul.mubr.f32.gmra.mxu0 %v311
    %v3862 = vpop.f32.mrf.mxu0
    %v3863 = vadd.f32 0.0, %v3862
    %v3864 = vpop.f32.mrf.mxu0
    %3865 = vmatprep.mubr.f32.mxu0 0.0
    %3866 = vmatmul.mubr.f32.gmra.mxu0 %v314
    %v3867 = vpop.f32.mrf.mxu0
    %v3868 = vadd.f32 0.0, %v3867
    %v3869 = vpop.f32.mrf.mxu0
    %3870 = vmatprep.mubr.f32.mxu0 0.0
    %3871 = vmatmul.mubr.f32.gmra.mxu0 %v317
    %v3872 = vpop.f32.mrf.mxu0
    %v3873 = vadd.f32 0.0, %v3872
    %v3874 = vpop.f32.mrf.mxu0
    %3875 = vmatprep.mubr.f32.mxu0 0.0
    %3876 = vmatmul.mubr.f32.gmra.mxu0 %v320
    %v3877 = vpop.f32.mrf.mxu0
    %v3878 = vadd.f32 0.0, %v3877
    %v3879 = vpop.f32.mrf.mxu0
    %3880 = vmatprep.mubr.f32.mxu0 0.0
    %3881 = vmatmul.mubr.f32.gmra.mxu0 %v323
    %v3882 = vpop.f32.mrf.mxu0
    %v3883 = vadd.f32 0.0, %v3882
    %v3884 = vpop.f32.mrf.mxu0
    %3885 = vmatprep.mubr.f32.mxu0 0.0
    %3886 = vmatmul.mubr.f32.gmra.mxu0 %v326
    %v3887 = vpop.f32.mrf.mxu0
    %v3888 = vadd.f32 0.0, %v3887
    %v3889 = vpop.f32.mrf.mxu0
    %3890 = vmatprep.mubr.f32.mxu0 0.0
    %3891 = vmatmul.mubr.f32.gmra.mxu0 %v329
    %v3892 = vpop.f32.mrf.mxu0
    %v3893 = vadd.f32 0.0, %v3892
    %v3894 = vpop.f32.mrf.mxu0
    %3895 = vmatprep.mubr.f32.mxu0 0.0
    %3896 = vmatmul.mubr.f32.gmra.mxu0 %v332
    %v3897 = vpop.f32.mrf.mxu0
    %v3898 = vadd.f32 0.0, %v3897
    %v3899 = vpop.f32.mrf.mxu0
    %3900 = vmatprep.mubr.f32.mxu0 0.0
    %3901 = vmatmul.mubr.f32.gmra.mxu0 %v335
    %v3902 = vpop.f32.mrf.mxu0
    %v3903 = vadd.f32 0.0, %v3902
    %v3904 = vpop.f32.mrf.mxu0
    %3905 = vmatprep.mubr.f32.mxu0 0.0
    %3906 = vmatmul.mubr.f32.gmra.mxu0 %v338
    %v3907 = vpop.f32.mrf.mxu0
    %v3908 = vadd.f32 0.0, %v3907
    %v3909 = vpop.f32.mrf.mxu0
    %3910 = vmatprep.mubr.f32.mxu0 0.0
    %3911 = vmatmul.mubr.f32.gmra.mxu0 %v341
    %v3912 = vpop.f32.mrf.mxu0
    %v3913 = vadd.f32 0.0, %v3912
    %v3914 = vpop.f32.mrf.mxu0
    %3915 = vmatprep.mubr.f32.mxu0 0.0
    %3916 = vmatmul.mubr.f32.gmra.mxu0 %v1721
    %v3917 = vpop.f32.mrf.mxu0
    %v3918 = vadd.f32 0.0, %v3917
    %v3919 = vpop.f32.mrf.mxu0
    %3920 = vmatprep.mubr.f32.mxu0 0.0
    %3921 = vmatmul.mubr.f32.gmra.mxu0 %v1724
    %v3922 = vpop.f32.mrf.mxu0
    %v3923 = vadd.f32 0.0, %v3922
    %v3924 = vpop.f32.mrf.mxu0
    %3925 = vmatprep.mubr.f32.mxu0 0.0
    %3926 = vmatmul.mubr.f32.gmra.mxu0 %v1727
    %v3927 = vpop.f32.mrf.mxu0
    %v3928 = vadd.f32 0.0, %v3927
    %v3929 = vpop.f32.mrf.mxu0
    %3930 = vmatprep.mubr.f32.mxu0 0.0
    %3931 = vmatmul.mubr.f32.gmra.mxu0 %v1730
    %v3932 = vpop.f32.mrf.mxu0
    %v3933 = vadd.f32 0.0, %v3932
    %v3934 = vpop.f32.mrf.mxu0
    %3935 = vmatprep.mubr.f32.mxu0 0.0
    %3936 = vmatmul.mubr.f32.gmra.mxu0 %v1733
    %v3937 = vpop.f32.mrf.mxu0
    %v3938 = vadd.f32 0.0, %v3937
    %v3939 = vpop.f32.mrf.mxu0
    %3940 = vmatprep.mubr.f32.mxu0 0.0
    %3941 = vmatmul.mubr.f32.gmra.mxu0 %v1736
    %v3942 = vpop.f32.mrf.mxu0
    %v3943 = vadd.f32 0.0, %v3942
    %v3944 = vpop.f32.mrf.mxu0
    %3945 = vmatprep.mubr.f32.mxu0 0.0
    %3946 = vmatmul.mubr.f32.gmra.mxu0 %v1739
    %v3947 = vpop.f32.mrf.mxu0
    %v3948 = vadd.f32 0.0, %v3947
    %v3949 = vpop.f32.mrf.mxu0
    %3950 = vmatprep.mubr.f32.mxu0 0.0
    %3951 = vmatmul.mubr.f32.gmra.mxu0 %v1742
    %v3952 = vpop.f32.mrf.mxu0
    %v3953 = vadd.f32 0.0, %v3952
    %v3954 = vpop.f32.mrf.mxu0
    %3955 = vmatprep.mubr.f32.mxu0 0.0
    %3956 = vmatmul.mubr.f32.gmra.mxu0 %v1745
    %v3957 = vpop.f32.mrf.mxu0
    %v3958 = vadd.f32 0.0, %v3957
    %v3959 = vpop.f32.mrf.mxu0
    %3960 = vmatprep.mubr.f32.mxu0 0.0
    %3961 = vmatmul.mubr.f32.gmra.mxu0 %v1748
    %v3962 = vpop.f32.mrf.mxu0
    %v3963 = vadd.f32 0.0, %v3962
    %v3964 = vpop.f32.mrf.mxu0
    %3965 = vmatprep.mubr.f32.mxu0 0.0
    %3966 = vmatmul.mubr.f32.gmra.mxu0 %v1751
    %v3967 = vpop.f32.mrf.mxu0
    %v3968 = vadd.f32 0.0, %v3967
    %v3969 = vpop.f32.mrf.mxu0
    %3970 = vmatprep.mubr.f32.mxu0 0.0
    %3971 = vmatmul.mubr.f32.gmra.mxu0 %v1754
    %v3972 = vpop.f32.mrf.mxu0
    %v3973 = vadd.f32 0.0, %v3972
    %v3974 = vpop.f32.mrf.mxu0
    %3975 = vmatprep.mubr.f32.mxu0 0.0
    %3976 = vmatmul.mubr.f32.gmra.mxu0 %v2215
    %v3977 = vpop.f32.mrf.mxu0
    %v3978 = vadd.f32 0.0, %v3977
    %v3979 = vpop.f32.mrf.mxu0
    %3980 = vmatprep.mubr.f32.mxu0 0.0
    %3981 = vmatmul.mubr.f32.gmra.mxu0 %v2218
    %v3982 = vpop.f32.mrf.mxu0
    %v3983 = vadd.f32 0.0, %v3982
    %v3984 = vpop.f32.mrf.mxu0
    %3985 = vmatprep.mubr.f32.mxu0 0.0
    %3986 = vmatmul.mubr.f32.gmra.mxu0 %v2221
    %v3987 = vpop.f32.mrf.mxu0
    %v3988 = vadd.f32 0.0, %v3987
    %v3989 = vpop.f32.mrf.mxu0
    %3990 = vmatprep.mubr.f32.mxu0 0.0
    %3991 = vmatmul.mubr.f32.gmra.mxu0 %v2224
    %v3992 = vpop.f32.mrf.mxu0
    %v3993 = vadd.f32 0.0, %v3992
    %v3994 = vpop.f32.mrf.mxu0
    %3995 = vmatprep.mubr.f32.mxu0 0.0
    %3996 = vmatmul.mubr.f32.gmra.mxu0 %v3183
    %v3997 = vpop.f32.mrf.mxu0
    %v3998 = vadd.f32 0.0, %v3997
    %v3999 = vpop.f32.mrf.mxu0
    %4000 = vmatprep.mubr.f32.mxu0 0.0
    %4001 = vmatmul.mubr.f32.gmra.mxu0 %v3186
    %v4002 = vpop.f32.mrf.mxu0
    %v4003 = vadd.f32 0.0, %v4002
    %v4004 = vpop.f32.mrf.mxu0
    %4005 = vmatprep.mubr.f32.mxu0 0.0
    %4006 = vmatmul.mubr.f32.gmra.mxu0 %v3189
    %v4007 = vpop.f32.mrf.mxu0
    %v4008 = vadd.f32 0.0, %v4007
    %v4009 = vpop.f32.mrf.mxu0
    %4010 = vmatprep.mubr.f32.mxu0 0.0
    %4011 = vmatmul.mubr.f32.gmra.mxu0 %v3192
    %v4012 = vpop.f32.mrf.mxu0
    %v4013 = vadd.f32 0.0, %v4012
    %v4014 = vpop.f32.mrf.mxu0
    %4015 = vmatprep.mubr.f32.mxu0 0.0
    %4016 = vmatmul.mubr.f32.gmra.mxu0 %v3195
    %v4017 = vpop.f32.mrf.mxu0
    %v4018 = vadd.f32 0.0, %v4017
    %v4019 = vpop.f32.mrf.mxu0
    %4020 = vmatprep.mubr.f32.mxu0 0.0
    %4021 = vmatmul.mubr.f32.gmra.mxu0 %v3198
    %v4022 = vpop.f32.mrf.mxu0
    %v4023 = vadd.f32 0.0, %v4022
    %v4024 = vpop.f32.mrf.mxu0
    %4025 = vmatprep.mubr.f32.mxu0 0.0
    %4026 = vmatmul.mubr.f32.gmra.mxu0 %v3201
    %v4027 = vpop.f32.mrf.mxu0
    %v4028 = vadd.f32 0.0, %v4027
    %v4029 = vpop.f32.mrf.mxu0
    %4030 = vmatprep.mubr.f32.mxu0 0.0
    %4031 = vmatmul.mubr.f32.gmra.mxu0 %v3204
    %v4032 = vpop.f32.mrf.mxu0
    %v4033 = vadd.f32 0.0, %v4032
    %v4034 = vpop.f32.mrf.mxu0
    %4035 = vmatprep.mubr.f32.mxu0 0.0
    %4036 = vmatmul.mubr.f32.gmra.mxu0 %v3207
    %v4037 = vpop.f32.mrf.mxu0
    %v4038 = vadd.f32 0.0, %v4037
    %v4039 = vpop.f32.mrf.mxu0
    %4040 = vmatprep.mubr.f32.mxu0 0.0
    %4041 = vmatmul.mubr.f32.gmra.mxu0 %v3210
    %v4042 = vpop.f32.mrf.mxu0
    %v4043 = vadd.f32 0.0, %v4042
    %v4044 = vpop.f32.mrf.mxu0
    %4045 = vmatprep.mubr.f32.mxu0 0.0
    %4046 = vmatmul.mubr.f32.gmra.mxu0 %v3213
    %v4047 = vpop.f32.mrf.mxu0
    %v4048 = vadd.f32 0.0, %v4047
    %v4049 = vpop.f32.mrf.mxu0
    %4050 = vmatprep.mubr.f32.mxu0 0.0
    %4051 = vmatmul.mubr.f32.gmra.mxu0 %v3216
    %v4052 = vpop.f32.mrf.mxu0
    %v4053 = vadd.f32 0.0, %v4052
    %v4054 = vpop.f32.mrf.mxu0
    %4055 = vmatprep.mubr.f32.mxu0 0.0
    %4056 = vmatmul.mubr.f32.gmra.mxu0 %v3677
    %v4057 = vpop.f32.mrf.mxu0
    %v4058 = vadd.f32 0.0, %v4057
    %v4059 = vpop.f32.mrf.mxu0
    %4060 = vmatprep.mubr.f32.mxu0 0.0
    %4061 = vmatmul.mubr.f32.gmra.mxu0 %v3680
    %v4062 = vpop.f32.mrf.mxu0
    %v4063 = vadd.f32 0.0, %v4062
    %v4064 = vpop.f32.mrf.mxu0
    %4065 = vmatprep.mubr.f32.mxu0 0.0
    %4066 = vmatmul.mubr.f32.gmra.mxu0 %v3683
    %v4067 = vpop.f32.mrf.mxu0
    %v4068 = vadd.f32 0.0, %v4067
    %v4069 = vpop.f32.mrf.mxu0
    %4070 = vmatprep.mubr.f32.mxu0 0.0
    %4071 = vmatmul.mubr.f32.gmra.mxu0 %v3686
    %v4072 = vpop.f32.mrf.mxu0
    %v4073 = vadd.f32 0.0, %v4072
    %v4074 = vpop.f32.mrf.mxu0
    %4075 = vdwg.mxu0
    %v4076 = vadd.f32 %v3606, %v3758
    %v4077 = vadd.f32 %v3607, %v3763
    %v4078 = vadd.f32 %v3608, %v3768
    %v4079 = vadd.f32 %v3609, %v3773
    %v4080 = vadd.f32 %v3610, %v3778
    %v4081 = vadd.f32 %v3611, %v3783
    %v4082 = vadd.f32 %v3612, %v3788
    %v4083 = vadd.f32 %v3613, %v3793
    %v4084 = vadd.f32 %v3614, %v3798
    %v4085 = vadd.f32 %v3615, %v3803
    %v4086 = vadd.f32 %v3616, %v3808
    %v4087 = vadd.f32 %v3617, %v3813
    %v4088 = vadd.f32 %v3618, %v3818
    %v4089 = vadd.f32 %v3619, %v3823
    %v4090 = vadd.f32 %v3620, %v3828
    %v4091 = vadd.f32 %v3621, %v3833
    %v4092 = vadd.f32 %v3622, %v3838
    %v4093 = vadd.f32 %v3623, %v3843
    %v4094 = vadd.f32 %v3624, %v3848
    %v4095 = vadd.f32 %v3625, %v3853
    %v4096 = vadd.f32 %v3626, %v3858
    %v4097 = vadd.f32 %v3627, %v3863
    %v4098 = vadd.f32 %v3628, %v3868
    %v4099 = vadd.f32 %v3629, %v3873
    %v4100 = vadd.f32 %v3630, %v3878
    %v4101 = vadd.f32 %v3631, %v3883
    %v4102 = vadd.f32 %v3632, %v3888
    %v4103 = vadd.f32 %v3633, %v3893
    %v4104 = vadd.f32 %v3634, %v3898
    %v4105 = vadd.f32 %v3635, %v3903
    %v4106 = vadd.f32 %v3636, %v3908
    %v4107 = vadd.f32 %v3637, %v3913
    %v4108 = vadd.f32 %v3638, %v3918
    %v4109 = vadd.f32 %v3639, %v3923
    %v4110 = vadd.f32 %v3640, %v3928
    %v4111 = vadd.f32 %v3641, %v3933
    %v4112 = vadd.f32 %v3642, %v3938
    %v4113 = vadd.f32 %v3643, %v3943
    %v4114 = vadd.f32 %v3644, %v3948
    %v4115 = vadd.f32 %v3645, %v3953
    %v4116 = vadd.f32 %v3646, %v3958
    %v4117 = vadd.f32 %v3647, %v3963
    %v4118 = vadd.f32 %v3648, %v3968
    %v4119 = vadd.f32 %v3649, %v3973
    %v4120 = vadd.f32 %v3650, %v3978
    %v4121 = vadd.f32 %v3651, %v3983
    %v4122 = vadd.f32 %v3652, %v3988
    %v4123 = vadd.f32 %v3653, %v3993
    %v4124 = vadd.f32 %v3654, %v3998
    %v4125 = vadd.f32 %v3655, %v4003
    %v4126 = vadd.f32 %v3656, %v4008
    %v4127 = vadd.f32 %v3657, %v4013
    %v4128 = vadd.f32 %v3658, %v4018
    %v4129 = vadd.f32 %v3659, %v4023
    %v4130 = vadd.f32 %v3660, %v4028
    %v4131 = vadd.f32 %v3661, %v4033
    %v4132 = vadd.f32 %v3662, %v4038
    %v4133 = vadd.f32 %v3663, %v4043
    %v4134 = vadd.f32 %v3664, %v4048
    %v4135 = vadd.f32 %v3665, %v4053
    %v4136 = vadd.f32 %v3666, %v4058
    %v4137 = vadd.f32 %v3667, %v4063
    %v4138 = vadd.f32 %v3668, %v4068
    %v4139 = vadd.f32 %v3669, %v4073
    %v4140 = vld [vmem:[%s3153 + $0x4] sm:$0xff]
    %v4141 = vld [vmem:[%s3153 + $0x14] sm:$0xff]
    %v4142 = vld [vmem:[%s3153 + $0x24] sm:$0xff]
    %v4143 = vld [vmem:[%s3153 + $0x34] sm:$0xff]
    %s4144 = scalar_lea.vmem %s1, 32
    %v4145 = vld [vmem:[%s4144] sm:$0x7]
    %v4147 = vsel %vm150, %v4140, 0
    %v4150 = vsel %vm150, %v4141, 0
    %v4153 = vsel %vm150, %v4142, 0
    %v4156 = vsel %vm150, %v4143, 0
    %v4159 = vsel %vm343, %v4145, 0
    %4161 = vmatprep.subr.mxu0 0.0
    %4162 = vmatpush1.msra.mxu0 0.0
    %4163 = vmatprep.subr.mxu0 0.0
    %4164 = vmatpush1.msra.mxu0 0.0
    %4165 = vmatprep.subr.mxu0 0.0
    %4166 = vmatpush1.msra.mxu0 0.0
    %4167 = vmatprep.subr.mxu0 0.0
    %4168 = vmatpush1.msra.mxu0 0.0
    %4169 = vmatprep.subr.mxu0 0.0
    %4170 = vmatpush1.msra.mxu0 0.0
    %4171 = vmatprep.subr.mxu0 0.0
    %4172 = vmatpush1.msra.mxu0 0.0
    %4173 = vmatprep.subr.mxu0 0.0
    %4174 = vmatpush1.msra.mxu0 0.0
    %4175 = vmatprep.subr.mxu0 0.0
    %4176 = vmatpush1.msra.mxu0 0.0
    %4177 = vmatprep.subr.mxu0 0.0
    %4178 = vmatpush1.msra.mxu0 0.0
    %4179 = vmatprep.subr.mxu0 0.0
    %4180 = vmatpush1.msra.mxu0 0.0
    %4181 = vmatprep.subr.mxu0 0.0
    %4182 = vmatpush1.msra.mxu0 0.0
    %4183 = vmatprep.subr.mxu0 0.0
    %4184 = vmatpush1.msra.mxu0 0.0
    %4185 = vmatprep.subr.mxu0 0.0
    %4186 = vmatpush1.msra.mxu0 0.0
    %4187 = vmatprep.subr.mxu0 0.0
    %4188 = vmatpush1.msra.mxu0 0.0
    %4189 = vmatprep.subr.mxu0 0.0
    %4190 = vmatpush1.msra.mxu0 0.0
    %4191 = vmatprep.subr.mxu0 0.0
    %4192 = vmatpush1.msra.mxu0 %v4159
    %4193 = vmatprep.subr.mxu0 0.0
    %4194 = vmatpush2.msra.mxu0 0.0
    %4195 = vmatprep.subr.mxu0 0.0
    %4196 = vmatpush2.msra.mxu0 0.0
    %4197 = vmatprep.subr.mxu0 0.0
    %4198 = vmatpush2.msra.mxu0 0.0
    %4199 = vmatprep.subr.mxu0 0.0
    %4200 = vmatpush2.msra.mxu0 0.0
    %4201 = vmatprep.subr.mxu0 0.0
    %4202 = vmatpush2.msra.mxu0 0.0
    %4203 = vmatprep.subr.mxu0 0.0
    %4204 = vmatpush2.msra.mxu0 0.0
    %4205 = vmatprep.subr.mxu0 0.0
    %4206 = vmatpush2.msra.mxu0 0.0
    %4207 = vmatprep.subr.mxu0 0.0
    %4208 = vmatpush2.msra.mxu0 0.0
    %4209 = vmatprep.subr.mxu0 0.0
    %4210 = vmatpush2.msra.mxu0 0.0
    %4211 = vmatprep.subr.mxu0 0.0
    %4212 = vmatpush2.msra.mxu0 0.0
    %4213 = vmatprep.subr.mxu0 0.0
    %4214 = vmatpush2.msra.mxu0 0.0
    %4215 = vmatprep.subr.mxu0 0.0
    %4216 = vmatpush2.msra.mxu0 0.0
    %4217 = vmatprep.subr.mxu0 0.0
    %4218 = vmatpush2.msra.mxu0 0.0
    %4219 = vmatprep.subr.mxu0 0.0
    %4220 = vmatpush2.msra.mxu0 0.0
    %4221 = vmatprep.subr.mxu0 0.0
    %4222 = vmatpush2.msra.mxu0 0.0
    %4223 = vmatprep.subr.mxu0 0.0
    %4224 = vmatpush2.msra.mxu0 0.0
    %4225 = vmatprep.mubr.f32.mxu0 0.0
    %4226 = vmatmul.mubr.f32.gmra.mxu0 %v260
    %v4227 = vpop.f32.mrf.mxu0
    %v4228 = vadd.f32 0.0, %v4227
    %v4229 = vpop.f32.mrf.mxu0
    %4230 = vmatprep.mubr.f32.mxu0 0.0
    %4231 = vmatmul.mubr.f32.gmra.mxu0 %v263
    %v4232 = vpop.f32.mrf.mxu0
    %v4233 = vadd.f32 0.0, %v4232
    %v4234 = vpop.f32.mrf.mxu0
    %4235 = vmatprep.mubr.f32.mxu0 0.0
    %4236 = vmatmul.mubr.f32.gmra.mxu0 %v266
    %v4237 = vpop.f32.mrf.mxu0
    %v4238 = vadd.f32 0.0, %v4237
    %v4239 = vpop.f32.mrf.mxu0
    %4240 = vmatprep.mubr.f32.mxu0 0.0
    %4241 = vmatmul.mubr.f32.gmra.mxu0 %v269
    %v4242 = vpop.f32.mrf.mxu0
    %v4243 = vadd.f32 0.0, %v4242
    %v4244 = vpop.f32.mrf.mxu0
    %4245 = vmatprep.mubr.f32.mxu0 0.0
    %4246 = vmatmul.mubr.f32.gmra.mxu0 %v272
    %v4247 = vpop.f32.mrf.mxu0
    %v4248 = vadd.f32 0.0, %v4247
    %v4249 = vpop.f32.mrf.mxu0
    %4250 = vmatprep.mubr.f32.mxu0 0.0
    %4251 = vmatmul.mubr.f32.gmra.mxu0 %v275
    %v4252 = vpop.f32.mrf.mxu0
    %v4253 = vadd.f32 0.0, %v4252
    %v4254 = vpop.f32.mrf.mxu0
    %4255 = vmatprep.mubr.f32.mxu0 0.0
    %4256 = vmatmul.mubr.f32.gmra.mxu0 %v278
    %v4257 = vpop.f32.mrf.mxu0
    %v4258 = vadd.f32 0.0, %v4257
    %v4259 = vpop.f32.mrf.mxu0
    %4260 = vmatprep.mubr.f32.mxu0 0.0
    %4261 = vmatmul.mubr.f32.gmra.mxu0 %v281
    %v4262 = vpop.f32.mrf.mxu0
    %v4263 = vadd.f32 0.0, %v4262
    %v4264 = vpop.f32.mrf.mxu0
    %4265 = vmatprep.mubr.f32.mxu0 0.0
    %4266 = vmatmul.mubr.f32.gmra.mxu0 %v284
    %v4267 = vpop.f32.mrf.mxu0
    %v4268 = vadd.f32 0.0, %v4267
    %v4269 = vpop.f32.mrf.mxu0
    %4270 = vmatprep.mubr.f32.mxu0 0.0
    %4271 = vmatmul.mubr.f32.gmra.mxu0 %v287
    %v4272 = vpop.f32.mrf.mxu0
    %v4273 = vadd.f32 0.0, %v4272
    %v4274 = vpop.f32.mrf.mxu0
    %4275 = vmatprep.mubr.f32.mxu0 0.0
    %4276 = vmatmul.mubr.f32.gmra.mxu0 %v290
    %v4277 = vpop.f32.mrf.mxu0
    %v4278 = vadd.f32 0.0, %v4277
    %v4279 = vpop.f32.mrf.mxu0
    %4280 = vmatprep.mubr.f32.mxu0 0.0
    %4281 = vmatmul.mubr.f32.gmra.mxu0 %v293
    %v4282 = vpop.f32.mrf.mxu0
    %v4283 = vadd.f32 0.0, %v4282
    %v4284 = vpop.f32.mrf.mxu0
    %4285 = vmatprep.mubr.f32.mxu0 0.0
    %4286 = vmatmul.mubr.f32.gmra.mxu0 %v1211
    %v4287 = vpop.f32.mrf.mxu0
    %v4288 = vadd.f32 0.0, %v4287
    %v4289 = vpop.f32.mrf.mxu0
    %4290 = vmatprep.mubr.f32.mxu0 0.0
    %4291 = vmatmul.mubr.f32.gmra.mxu0 %v1214
    %v4292 = vpop.f32.mrf.mxu0
    %v4293 = vadd.f32 0.0, %v4292
    %v4294 = vpop.f32.mrf.mxu0
    %4295 = vmatprep.mubr.f32.mxu0 0.0
    %4296 = vmatmul.mubr.f32.gmra.mxu0 %v1217
    %v4297 = vpop.f32.mrf.mxu0
    %v4298 = vadd.f32 0.0, %v4297
    %v4299 = vpop.f32.mrf.mxu0
    %4300 = vmatprep.mubr.f32.mxu0 0.0
    %4301 = vmatmul.mubr.f32.gmra.mxu0 %v1220
    %v4302 = vpop.f32.mrf.mxu0
    %v4303 = vadd.f32 0.0, %v4302
    %v4304 = vpop.f32.mrf.mxu0
    %4305 = vmatprep.mubr.f32.mxu0 0.0
    %4306 = vmatmul.mubr.f32.gmra.mxu0 %v308
    %v4307 = vpop.f32.mrf.mxu0
    %v4308 = vadd.f32 0.0, %v4307
    %v4309 = vpop.f32.mrf.mxu0
    %4310 = vmatprep.mubr.f32.mxu0 0.0
    %4311 = vmatmul.mubr.f32.gmra.mxu0 %v311
    %v4312 = vpop.f32.mrf.mxu0
    %v4313 = vadd.f32 0.0, %v4312
    %v4314 = vpop.f32.mrf.mxu0
    %4315 = vmatprep.mubr.f32.mxu0 0.0
    %4316 = vmatmul.mubr.f32.gmra.mxu0 %v314
    %v4317 = vpop.f32.mrf.mxu0
    %v4318 = vadd.f32 0.0, %v4317
    %v4319 = vpop.f32.mrf.mxu0
    %4320 = vmatprep.mubr.f32.mxu0 0.0
    %4321 = vmatmul.mubr.f32.gmra.mxu0 %v317
    %v4322 = vpop.f32.mrf.mxu0
    %v4323 = vadd.f32 0.0, %v4322
    %v4324 = vpop.f32.mrf.mxu0
    %4325 = vmatprep.mubr.f32.mxu0 0.0
    %4326 = vmatmul.mubr.f32.gmra.mxu0 %v320
    %v4327 = vpop.f32.mrf.mxu0
    %v4328 = vadd.f32 0.0, %v4327
    %v4329 = vpop.f32.mrf.mxu0
    %4330 = vmatprep.mubr.f32.mxu0 0.0
    %4331 = vmatmul.mubr.f32.gmra.mxu0 %v323
    %v4332 = vpop.f32.mrf.mxu0
    %v4333 = vadd.f32 0.0, %v4332
    %v4334 = vpop.f32.mrf.mxu0
    %4335 = vmatprep.mubr.f32.mxu0 0.0
    %4336 = vmatmul.mubr.f32.gmra.mxu0 %v326
    %v4337 = vpop.f32.mrf.mxu0
    %v4338 = vadd.f32 0.0, %v4337
    %v4339 = vpop.f32.mrf.mxu0
    %4340 = vmatprep.mubr.f32.mxu0 0.0
    %4341 = vmatmul.mubr.f32.gmra.mxu0 %v329
    %v4342 = vpop.f32.mrf.mxu0
    %v4343 = vadd.f32 0.0, %v4342
    %v4344 = vpop.f32.mrf.mxu0
    %4345 = vmatprep.mubr.f32.mxu0 0.0
    %4346 = vmatmul.mubr.f32.gmra.mxu0 %v332
    %v4347 = vpop.f32.mrf.mxu0
    %v4348 = vadd.f32 0.0, %v4347
    %v4349 = vpop.f32.mrf.mxu0
    %4350 = vmatprep.mubr.f32.mxu0 0.0
    %4351 = vmatmul.mubr.f32.gmra.mxu0 %v335
    %v4352 = vpop.f32.mrf.mxu0
    %v4353 = vadd.f32 0.0, %v4352
    %v4354 = vpop.f32.mrf.mxu0
    %4355 = vmatprep.mubr.f32.mxu0 0.0
    %4356 = vmatmul.mubr.f32.gmra.mxu0 %v338
    %v4357 = vpop.f32.mrf.mxu0
    %v4358 = vadd.f32 0.0, %v4357
    %v4359 = vpop.f32.mrf.mxu0
    %4360 = vmatprep.mubr.f32.mxu0 0.0
    %4361 = vmatmul.mubr.f32.gmra.mxu0 %v341
    %v4362 = vpop.f32.mrf.mxu0
    %v4363 = vadd.f32 0.0, %v4362
    %v4364 = vpop.f32.mrf.mxu0
    %4365 = vmatprep.mubr.f32.mxu0 0.0
    %4366 = vmatmul.mubr.f32.gmra.mxu0 %v1223
    %v4367 = vpop.f32.mrf.mxu0
    %v4368 = vadd.f32 0.0, %v4367
    %v4369 = vpop.f32.mrf.mxu0
    %4370 = vmatprep.mubr.f32.mxu0 0.0
    %4371 = vmatmul.mubr.f32.gmra.mxu0 %v1226
    %v4372 = vpop.f32.mrf.mxu0
    %v4373 = vadd.f32 0.0, %v4372
    %v4374 = vpop.f32.mrf.mxu0
    %4375 = vmatprep.mubr.f32.mxu0 0.0
    %4376 = vmatmul.mubr.f32.gmra.mxu0 %v1229
    %v4377 = vpop.f32.mrf.mxu0
    %v4378 = vadd.f32 0.0, %v4377
    %v4379 = vpop.f32.mrf.mxu0
    %4380 = vmatprep.mubr.f32.mxu0 0.0
    %4381 = vmatmul.mubr.f32.gmra.mxu0 %v1232
    %v4382 = vpop.f32.mrf.mxu0
    %v4383 = vadd.f32 0.0, %v4382
    %v4384 = vpop.f32.mrf.mxu0
    %4385 = vmatprep.mubr.f32.mxu0 0.0
    %4386 = vmatmul.mubr.f32.gmra.mxu0 %v1733
    %v4387 = vpop.f32.mrf.mxu0
    %v4388 = vadd.f32 0.0, %v4387
    %v4389 = vpop.f32.mrf.mxu0
    %4390 = vmatprep.mubr.f32.mxu0 0.0
    %4391 = vmatmul.mubr.f32.gmra.mxu0 %v1736
    %v4392 = vpop.f32.mrf.mxu0
    %v4393 = vadd.f32 0.0, %v4392
    %v4394 = vpop.f32.mrf.mxu0
    %4395 = vmatprep.mubr.f32.mxu0 0.0
    %4396 = vmatmul.mubr.f32.gmra.mxu0 %v1739
    %v4397 = vpop.f32.mrf.mxu0
    %v4398 = vadd.f32 0.0, %v4397
    %v4399 = vpop.f32.mrf.mxu0
    %4400 = vmatprep.mubr.f32.mxu0 0.0
    %4401 = vmatmul.mubr.f32.gmra.mxu0 %v1742
    %v4402 = vpop.f32.mrf.mxu0
    %v4403 = vadd.f32 0.0, %v4402
    %v4404 = vpop.f32.mrf.mxu0
    %4405 = vmatprep.mubr.f32.mxu0 0.0
    %4406 = vmatmul.mubr.f32.gmra.mxu0 %v1745
    %v4407 = vpop.f32.mrf.mxu0
    %v4408 = vadd.f32 0.0, %v4407
    %v4409 = vpop.f32.mrf.mxu0
    %4410 = vmatprep.mubr.f32.mxu0 0.0
    %4411 = vmatmul.mubr.f32.gmra.mxu0 %v1748
    %v4412 = vpop.f32.mrf.mxu0
    %v4413 = vadd.f32 0.0, %v4412
    %v4414 = vpop.f32.mrf.mxu0
    %4415 = vmatprep.mubr.f32.mxu0 0.0
    %4416 = vmatmul.mubr.f32.gmra.mxu0 %v1751
    %v4417 = vpop.f32.mrf.mxu0
    %v4418 = vadd.f32 0.0, %v4417
    %v4419 = vpop.f32.mrf.mxu0
    %4420 = vmatprep.mubr.f32.mxu0 0.0
    %4421 = vmatmul.mubr.f32.gmra.mxu0 %v1754
    %v4422 = vpop.f32.mrf.mxu0
    %v4423 = vadd.f32 0.0, %v4422
    %v4424 = vpop.f32.mrf.mxu0
    %4425 = vmatprep.mubr.f32.mxu0 0.0
    %4426 = vmatmul.mubr.f32.gmra.mxu0 %v2215
    %v4427 = vpop.f32.mrf.mxu0
    %v4428 = vadd.f32 0.0, %v4427
    %v4429 = vpop.f32.mrf.mxu0
    %4430 = vmatprep.mubr.f32.mxu0 0.0
    %4431 = vmatmul.mubr.f32.gmra.mxu0 %v2218
    %v4432 = vpop.f32.mrf.mxu0
    %v4433 = vadd.f32 0.0, %v4432
    %v4434 = vpop.f32.mrf.mxu0
    %4435 = vmatprep.mubr.f32.mxu0 0.0
    %4436 = vmatmul.mubr.f32.gmra.mxu0 %v2221
    %v4437 = vpop.f32.mrf.mxu0
    %v4438 = vadd.f32 0.0, %v4437
    %v4439 = vpop.f32.mrf.mxu0
    %4440 = vmatprep.mubr.f32.mxu0 0.0
    %4441 = vmatmul.mubr.f32.gmra.mxu0 %v2224
    %v4442 = vpop.f32.mrf.mxu0
    %v4443 = vadd.f32 0.0, %v4442
    %v4444 = vpop.f32.mrf.mxu0
    %4445 = vmatprep.mubr.f32.mxu0 0.0
    %4446 = vmatmul.mubr.f32.gmra.mxu0 %v2685
    %v4447 = vpop.f32.mrf.mxu0
    %v4448 = vadd.f32 0.0, %v4447
    %v4449 = vpop.f32.mrf.mxu0
    %4450 = vmatprep.mubr.f32.mxu0 0.0
    %4451 = vmatmul.mubr.f32.gmra.mxu0 %v2688
    %v4452 = vpop.f32.mrf.mxu0
    %v4453 = vadd.f32 0.0, %v4452
    %v4454 = vpop.f32.mrf.mxu0
    %4455 = vmatprep.mubr.f32.mxu0 0.0
    %4456 = vmatmul.mubr.f32.gmra.mxu0 %v2691
    %v4457 = vpop.f32.mrf.mxu0
    %v4458 = vadd.f32 0.0, %v4457
    %v4459 = vpop.f32.mrf.mxu0
    %4460 = vmatprep.mubr.f32.mxu0 0.0
    %4461 = vmatmul.mubr.f32.gmra.mxu0 %v2694
    %v4462 = vpop.f32.mrf.mxu0
    %v4463 = vadd.f32 0.0, %v4462
    %v4464 = vpop.f32.mrf.mxu0
    %4465 = vmatprep.mubr.f32.mxu0 0.0
    %4466 = vmatmul.mubr.f32.gmra.mxu0 %v3195
    %v4467 = vpop.f32.mrf.mxu0
    %v4468 = vadd.f32 0.0, %v4467
    %v4469 = vpop.f32.mrf.mxu0
    %4470 = vmatprep.mubr.f32.mxu0 0.0
    %4471 = vmatmul.mubr.f32.gmra.mxu0 %v3198
    %v4472 = vpop.f32.mrf.mxu0
    %v4473 = vadd.f32 0.0, %v4472
    %v4474 = vpop.f32.mrf.mxu0
    %4475 = vmatprep.mubr.f32.mxu0 0.0
    %4476 = vmatmul.mubr.f32.gmra.mxu0 %v3201
    %v4477 = vpop.f32.mrf.mxu0
    %v4478 = vadd.f32 0.0, %v4477
    %v4479 = vpop.f32.mrf.mxu0
    %4480 = vmatprep.mubr.f32.mxu0 0.0
    %4481 = vmatmul.mubr.f32.gmra.mxu0 %v3204
    %v4482 = vpop.f32.mrf.mxu0
    %v4483 = vadd.f32 0.0, %v4482
    %v4484 = vpop.f32.mrf.mxu0
    %4485 = vmatprep.mubr.f32.mxu0 0.0
    %4486 = vmatmul.mubr.f32.gmra.mxu0 %v3207
    %v4487 = vpop.f32.mrf.mxu0
    %v4488 = vadd.f32 0.0, %v4487
    %v4489 = vpop.f32.mrf.mxu0
    %4490 = vmatprep.mubr.f32.mxu0 0.0
    %4491 = vmatmul.mubr.f32.gmra.mxu0 %v3210
    %v4492 = vpop.f32.mrf.mxu0
    %v4493 = vadd.f32 0.0, %v4492
    %v4494 = vpop.f32.mrf.mxu0
    %4495 = vmatprep.mubr.f32.mxu0 0.0
    %4496 = vmatmul.mubr.f32.gmra.mxu0 %v3213
    %v4497 = vpop.f32.mrf.mxu0
    %v4498 = vadd.f32 0.0, %v4497
    %v4499 = vpop.f32.mrf.mxu0
    %4500 = vmatprep.mubr.f32.mxu0 0.0
    %4501 = vmatmul.mubr.f32.gmra.mxu0 %v3216
    %v4502 = vpop.f32.mrf.mxu0
    %v4503 = vadd.f32 0.0, %v4502
    %v4504 = vpop.f32.mrf.mxu0
    %4505 = vmatprep.mubr.f32.mxu0 0.0
    %4506 = vmatmul.mubr.f32.gmra.mxu0 %v3677
    %v4507 = vpop.f32.mrf.mxu0
    %v4508 = vadd.f32 0.0, %v4507
    %v4509 = vpop.f32.mrf.mxu0
    %4510 = vmatprep.mubr.f32.mxu0 0.0
    %4511 = vmatmul.mubr.f32.gmra.mxu0 %v3680
    %v4512 = vpop.f32.mrf.mxu0
    %v4513 = vadd.f32 0.0, %v4512
    %v4514 = vpop.f32.mrf.mxu0
    %4515 = vmatprep.mubr.f32.mxu0 0.0
    %4516 = vmatmul.mubr.f32.gmra.mxu0 %v3683
    %v4517 = vpop.f32.mrf.mxu0
    %v4518 = vadd.f32 0.0, %v4517
    %v4519 = vpop.f32.mrf.mxu0
    %4520 = vmatprep.mubr.f32.mxu0 0.0
    %4521 = vmatmul.mubr.f32.gmra.mxu0 %v3686
    %v4522 = vpop.f32.mrf.mxu0
    %v4523 = vadd.f32 0.0, %v4522
    %v4524 = vpop.f32.mrf.mxu0
    %4525 = vmatprep.mubr.f32.mxu0 0.0
    %4526 = vmatmul.mubr.f32.gmra.mxu0 %v4147
    %v4527 = vpop.f32.mrf.mxu0
    %v4528 = vadd.f32 0.0, %v4527
    %v4529 = vpop.f32.mrf.mxu0
    %4530 = vmatprep.mubr.f32.mxu0 0.0
    %4531 = vmatmul.mubr.f32.gmra.mxu0 %v4150
    %v4532 = vpop.f32.mrf.mxu0
    %v4533 = vadd.f32 0.0, %v4532
    %v4534 = vpop.f32.mrf.mxu0
    %4535 = vmatprep.mubr.f32.mxu0 0.0
    %4536 = vmatmul.mubr.f32.gmra.mxu0 %v4153
    %v4537 = vpop.f32.mrf.mxu0
    %v4538 = vadd.f32 0.0, %v4537
    %v4539 = vpop.f32.mrf.mxu0
    %4540 = vmatprep.mubr.f32.mxu0 0.0
    %4541 = vmatmul.mubr.f32.gmra.mxu0 %v4156
    %v4542 = vpop.f32.mrf.mxu0
    %v4543 = vadd.f32 0.0, %v4542
    %v4544 = vpop.f32.mrf.mxu0
    %4545 = vdwg.mxu0
    %v4546 = vadd.f32 %v4076, %v4228
    %v4547 = vadd.f32 %v4077, %v4233
    %v4548 = vadd.f32 %v4078, %v4238
    %v4549 = vadd.f32 %v4079, %v4243
    %v4550 = vadd.f32 %v4080, %v4248
    %v4551 = vadd.f32 %v4081, %v4253
    %v4552 = vadd.f32 %v4082, %v4258
    %v4553 = vadd.f32 %v4083, %v4263
    %v4554 = vadd.f32 %v4084, %v4268
    %v4555 = vadd.f32 %v4085, %v4273
    %v4556 = vadd.f32 %v4086, %v4278
    %v4557 = vadd.f32 %v4087, %v4283
    %v4558 = vadd.f32 %v4088, %v4288
    %v4559 = vadd.f32 %v4089, %v4293
    %v4560 = vadd.f32 %v4090, %v4298
    %v4561 = vadd.f32 %v4091, %v4303
    %v4562 = vadd.f32 %v4092, %v4308
    %v4563 = vadd.f32 %v4093, %v4313
    %v4564 = vadd.f32 %v4094, %v4318
    %v4565 = vadd.f32 %v4095, %v4323
    %v4566 = vadd.f32 %v4096, %v4328
    %v4567 = vadd.f32 %v4097, %v4333
    %v4568 = vadd.f32 %v4098, %v4338
    %v4569 = vadd.f32 %v4099, %v4343
    %v4570 = vadd.f32 %v4100, %v4348
    %v4571 = vadd.f32 %v4101, %v4353
    %v4572 = vadd.f32 %v4102, %v4358
    %v4573 = vadd.f32 %v4103, %v4363
    %v4574 = vadd.f32 %v4104, %v4368
    %v4575 = vadd.f32 %v4105, %v4373
    %v4576 = vadd.f32 %v4106, %v4378
    %v4577 = vadd.f32 %v4107, %v4383
    %v4578 = vadd.f32 %v4108, %v4388
    %v4579 = vadd.f32 %v4109, %v4393
    %v4580 = vadd.f32 %v4110, %v4398
    %v4581 = vadd.f32 %v4111, %v4403
    %v4582 = vadd.f32 %v4112, %v4408
    %v4583 = vadd.f32 %v4113, %v4413
    %v4584 = vadd.f32 %v4114, %v4418
    %v4585 = vadd.f32 %v4115, %v4423
    %v4586 = vadd.f32 %v4116, %v4428
    %v4587 = vadd.f32 %v4117, %v4433
    %v4588 = vadd.f32 %v4118, %v4438
    %v4589 = vadd.f32 %v4119, %v4443
    %v4590 = vadd.f32 %v4120, %v4448
    %v4591 = vadd.f32 %v4121, %v4453
    %v4592 = vadd.f32 %v4122, %v4458
    %v4593 = vadd.f32 %v4123, %v4463
    %v4594 = vadd.f32 %v4124, %v4468
    %v4595 = vadd.f32 %v4125, %v4473
    %v4596 = vadd.f32 %v4126, %v4478
    %v4597 = vadd.f32 %v4127, %v4483
    %v4598 = vadd.f32 %v4128, %v4488
    %v4599 = vadd.f32 %v4129, %v4493
    %v4600 = vadd.f32 %v4130, %v4498
    %v4601 = vadd.f32 %v4131, %v4503
    %v4602 = vadd.f32 %v4132, %v4508
    %v4603 = vadd.f32 %v4133, %v4513
    %v4604 = vadd.f32 %v4134, %v4518
    %v4605 = vadd.f32 %v4135, %v4523
    %v4606 = vadd.f32 %v4136, %v4528
    %v4607 = vadd.f32 %v4137, %v4533
    %v4608 = vadd.f32 %v4138, %v4538
    %v4609 = vadd.f32 %v4139, %v4543
    %v4610 = vld [vmem:[%s2] sm:$0x1]
    %v4612 = vlaneseq
    %v4613 = vshrl.u32 %v4612, 7
    %v4614 = vsub.s32 0, %v4613
    %v4615 = vrot.slane %v4610, %v4614
    %v4617 = vmul.f32 %v4546, %v4615
    %v4618 = vmul.f32 %v4547, %v4615
    %v4619 = vmul.f32 %v4548, %v4615
    %v4620 = vmul.f32 %v4549, %v4615
    %v4621 = vmul.f32 %v4550, %v4615
    %v4622 = vmul.f32 %v4551, %v4615
    %v4623 = vmul.f32 %v4552, %v4615
    %v4624 = vmul.f32 %v4553, %v4615
    %v4625 = vmul.f32 %v4554, %v4615
    %v4626 = vmul.f32 %v4555, %v4615
    %v4627 = vmul.f32 %v4556, %v4615
    %v4628 = vmul.f32 %v4557, %v4615
    %v4629 = vmul.f32 %v4558, %v4615
    %v4630 = vmul.f32 %v4559, %v4615
    %v4631 = vmul.f32 %v4560, %v4615
    %v4632 = vmul.f32 %v4561, %v4615
    %v4633 = vmul.f32 %v4562, %v4615
    %v4634 = vmul.f32 %v4563, %v4615
    %v4635 = vmul.f32 %v4564, %v4615
    %v4636 = vmul.f32 %v4565, %v4615
    %v4637 = vmul.f32 %v4566, %v4615
    %v4638 = vmul.f32 %v4567, %v4615
    %v4639 = vmul.f32 %v4568, %v4615
    %v4640 = vmul.f32 %v4569, %v4615
    %v4641 = vmul.f32 %v4570, %v4615
    %v4642 = vmul.f32 %v4571, %v4615
    %v4643 = vmul.f32 %v4572, %v4615
    %v4644 = vmul.f32 %v4573, %v4615
    %v4645 = vmul.f32 %v4574, %v4615
    %v4646 = vmul.f32 %v4575, %v4615
    %v4647 = vmul.f32 %v4576, %v4615
    %v4648 = vmul.f32 %v4577, %v4615
    %v4649 = vmul.f32 %v4578, %v4615
    %v4650 = vmul.f32 %v4579, %v4615
    %v4651 = vmul.f32 %v4580, %v4615
    %v4652 = vmul.f32 %v4581, %v4615
    %v4653 = vmul.f32 %v4582, %v4615
    %v4654 = vmul.f32 %v4583, %v4615
    %v4655 = vmul.f32 %v4584, %v4615
    %v4656 = vmul.f32 %v4585, %v4615
    %v4657 = vmul.f32 %v4586, %v4615
    %v4658 = vmul.f32 %v4587, %v4615
    %v4659 = vmul.f32 %v4588, %v4615
    %v4660 = vmul.f32 %v4589, %v4615
    %v4661 = vmul.f32 %v4590, %v4615
    %v4662 = vmul.f32 %v4591, %v4615
    %v4663 = vmul.f32 %v4592, %v4615
    %v4664 = vmul.f32 %v4593, %v4615
    %v4665 = vmul.f32 %v4594, %v4615
    %v4666 = vmul.f32 %v4595, %v4615
    %v4667 = vmul.f32 %v4596, %v4615
    %v4668 = vmul.f32 %v4597, %v4615
    %v4669 = vmul.f32 %v4598, %v4615
    %v4670 = vmul.f32 %v4599, %v4615
    %v4671 = vmul.f32 %v4600, %v4615
    %v4672 = vmul.f32 %v4601, %v4615
    %v4673 = vmul.f32 %v4602, %v4615
    %v4674 = vmul.f32 %v4603, %v4615
    %v4675 = vmul.f32 %v4604, %v4615
    %v4676 = vmul.f32 %v4605, %v4615
    %v4677 = vmul.f32 %v4606, %v4615
    %v4678 = vmul.f32 %v4607, %v4615
    %v4679 = vmul.f32 %v4608, %v4615
    %v4680 = vmul.f32 %v4609, %v4615
    %v4681 = vld [vmem:[%s3] sm:$0x1]
    %v4683 = vlaneseq
    %v4684 = vshrl.u32 %v4683, 7
    %v4685 = vsub.s32 0, %v4684
    %v4686 = vrot.slane %v4681, %v4685
    %v4688 = vadd.f32 %v4617, %v4686
    %v4689 = vadd.f32 %v4618, %v4686
    %v4690 = vadd.f32 %v4619, %v4686
    %v4691 = vadd.f32 %v4620, %v4686
    %v4692 = vadd.f32 %v4621, %v4686
    %v4693 = vadd.f32 %v4622, %v4686
    %v4694 = vadd.f32 %v4623, %v4686
    %v4695 = vadd.f32 %v4624, %v4686
    %v4696 = vadd.f32 %v4625, %v4686
    %v4697 = vadd.f32 %v4626, %v4686
    %v4698 = vadd.f32 %v4627, %v4686
    %v4699 = vadd.f32 %v4628, %v4686
    %v4700 = vadd.f32 %v4629, %v4686
    %v4701 = vadd.f32 %v4630, %v4686
    %v4702 = vadd.f32 %v4631, %v4686
    %v4703 = vadd.f32 %v4632, %v4686
    %v4704 = vadd.f32 %v4633, %v4686
    %v4705 = vadd.f32 %v4634, %v4686
    %v4706 = vadd.f32 %v4635, %v4686
    %v4707 = vadd.f32 %v4636, %v4686
    %v4708 = vadd.f32 %v4637, %v4686
    %v4709 = vadd.f32 %v4638, %v4686
    %v4710 = vadd.f32 %v4639, %v4686
    %v4711 = vadd.f32 %v4640, %v4686
    %v4712 = vadd.f32 %v4641, %v4686
    %v4713 = vadd.f32 %v4642, %v4686
    %v4714 = vadd.f32 %v4643, %v4686
    %v4715 = vadd.f32 %v4644, %v4686
    %v4716 = vadd.f32 %v4645, %v4686
    %v4717 = vadd.f32 %v4646, %v4686
    %v4718 = vadd.f32 %v4647, %v4686
    %v4719 = vadd.f32 %v4648, %v4686
    %v4720 = vadd.f32 %v4649, %v4686
    %v4721 = vadd.f32 %v4650, %v4686
    %v4722 = vadd.f32 %v4651, %v4686
    %v4723 = vadd.f32 %v4652, %v4686
    %v4724 = vadd.f32 %v4653, %v4686
    %v4725 = vadd.f32 %v4654, %v4686
    %v4726 = vadd.f32 %v4655, %v4686
    %v4727 = vadd.f32 %v4656, %v4686
    %v4728 = vadd.f32 %v4657, %v4686
    %v4729 = vadd.f32 %v4658, %v4686
    %v4730 = vadd.f32 %v4659, %v4686
    %v4731 = vadd.f32 %v4660, %v4686
    %v4732 = vadd.f32 %v4661, %v4686
    %v4733 = vadd.f32 %v4662, %v4686
    %v4734 = vadd.f32 %v4663, %v4686
    %v4735 = vadd.f32 %v4664, %v4686
    %v4736 = vadd.f32 %v4665, %v4686
    %v4737 = vadd.f32 %v4666, %v4686
    %v4738 = vadd.f32 %v4667, %v4686
    %v4739 = vadd.f32 %v4668, %v4686
    %v4740 = vadd.f32 %v4669, %v4686
    %v4741 = vadd.f32 %v4670, %v4686
    %v4742 = vadd.f32 %v4671, %v4686
    %v4743 = vadd.f32 %v4672, %v4686
    %v4744 = vadd.f32 %v4673, %v4686
    %v4745 = vadd.f32 %v4674, %v4686
    %v4746 = vadd.f32 %v4675, %v4686
    %v4747 = vadd.f32 %v4676, %v4686
    %v4748 = vadd.f32 %v4677, %v4686
    %v4749 = vadd.f32 %v4678, %v4686
    %v4750 = vadd.f32 %v4679, %v4686
    %v4751 = vadd.f32 %v4680, %v4686
    %v4752 = vmax.f32 %v4688, 0.0
    %v4753 = vmax.f32 %v4689, 0.0
    %v4754 = vmax.f32 %v4690, 0.0
    %v4755 = vmax.f32 %v4691, 0.0
    %v4756 = vmax.f32 %v4692, 0.0
    %v4757 = vmax.f32 %v4693, 0.0
    %v4758 = vmax.f32 %v4694, 0.0
    %v4759 = vmax.f32 %v4695, 0.0
    %v4760 = vmax.f32 %v4696, 0.0
    %v4761 = vmax.f32 %v4697, 0.0
    %v4762 = vmax.f32 %v4698, 0.0
    %v4763 = vmax.f32 %v4699, 0.0
    %v4764 = vmax.f32 %v4700, 0.0
    %v4765 = vmax.f32 %v4701, 0.0
    %v4766 = vmax.f32 %v4702, 0.0
    %v4767 = vmax.f32 %v4703, 0.0
    %v4768 = vmax.f32 %v4704, 0.0
    %v4769 = vmax.f32 %v4705, 0.0
    %v4770 = vmax.f32 %v4706, 0.0
    %v4771 = vmax.f32 %v4707, 0.0
    %v4772 = vmax.f32 %v4708, 0.0
    %v4773 = vmax.f32 %v4709, 0.0
    %v4774 = vmax.f32 %v4710, 0.0
    %v4775 = vmax.f32 %v4711, 0.0
    %v4776 = vmax.f32 %v4712, 0.0
    %v4777 = vmax.f32 %v4713, 0.0
    %v4778 = vmax.f32 %v4714, 0.0
    %v4779 = vmax.f32 %v4715, 0.0
    %v4780 = vmax.f32 %v4716, 0.0
    %v4781 = vmax.f32 %v4717, 0.0
    %v4782 = vmax.f32 %v4718, 0.0
    %v4783 = vmax.f32 %v4719, 0.0
    %v4784 = vmax.f32 %v4720, 0.0
    %v4785 = vmax.f32 %v4721, 0.0
    %v4786 = vmax.f32 %v4722, 0.0
    %v4787 = vmax.f32 %v4723, 0.0
    %v4788 = vmax.f32 %v4724, 0.0
    %v4789 = vmax.f32 %v4725, 0.0
    %v4790 = vmax.f32 %v4726, 0.0
    %v4791 = vmax.f32 %v4727, 0.0
    %v4792 = vmax.f32 %v4728, 0.0
    %v4793 = vmax.f32 %v4729, 0.0
    %v4794 = vmax.f32 %v4730, 0.0
    %v4795 = vmax.f32 %v4731, 0.0
    %v4796 = vmax.f32 %v4732, 0.0
    %v4797 = vmax.f32 %v4733, 0.0
    %v4798 = vmax.f32 %v4734, 0.0
    %v4799 = vmax.f32 %v4735, 0.0
    %v4800 = vmax.f32 %v4736, 0.0
    %v4801 = vmax.f32 %v4737, 0.0
    %v4802 = vmax.f32 %v4738, 0.0
    %v4803 = vmax.f32 %v4739, 0.0
    %v4804 = vmax.f32 %v4740, 0.0
    %v4805 = vmax.f32 %v4741, 0.0
    %v4806 = vmax.f32 %v4742, 0.0
    %v4807 = vmax.f32 %v4743, 0.0
    %v4808 = vmax.f32 %v4744, 0.0
    %v4809 = vmax.f32 %v4745, 0.0
    %v4810 = vmax.f32 %v4746, 0.0
    %v4811 = vmax.f32 %v4747, 0.0
    %v4812 = vmax.f32 %v4748, 0.0
    %v4813 = vmax.f32 %v4749, 0.0
    %v4814 = vmax.f32 %v4750, 0.0
    %v4815 = vmax.f32 %v4751, 0.0
    %vm4816 = vcmask 31744
    %4817 = vst.msk [vmem:[#allocation2] sm:$0xff] %vm4816, 0.0
    %vm4818 = vcmask 27648
    %4819 = vst.msk [vmem:[#allocation2 + $0x8] sm:$0xf] %vm4818, 0.0
    %4820 = vst.msk [vmem:[#allocation2 + $0x10] sm:$0xff] %vm4816, 0.0
    %4821 = vst.msk [vmem:[#allocation2 + $0x18] sm:$0xf] %vm4818, 0.0
    %4822 = vst.msk [vmem:[#allocation2 + $0x20] sm:$0xff] %vm4816, 0.0
    %4823 = vst.msk [vmem:[#allocation2 + $0x28] sm:$0xf] %vm4818, 0.0
    %4824 = vst.msk [vmem:[#allocation2 + $0x30] sm:$0xff] %vm4816, 0.0
    %4825 = vst.msk [vmem:[#allocation2 + $0x38] sm:$0xf] %vm4818, 0.0
    %4826 = vst.msk [vmem:[#allocation2 + $0x40] sm:$0xff] %vm4816, 0.0
    %4827 = vst.msk [vmem:[#allocation2 + $0x48] sm:$0xf] %vm4818, 0.0
    %4828 = vst.msk [vmem:[#allocation2 + $0x50] sm:$0xff] %vm4816, 0.0
    %4829 = vst.msk [vmem:[#allocation2 + $0x58] sm:$0xf] %vm4818, 0.0
    %4830 = vst.msk [vmem:[#allocation2 + $0x60] sm:$0xff] %vm4816, 0.0
    %4831 = vst.msk [vmem:[#allocation2 + $0x68] sm:$0xf] %vm4818, 0.0
    %4832 = vst.msk [vmem:[#allocation2 + $0x70] sm:$0xff] %vm4816, 0.0
    %4833 = vst.msk [vmem:[#allocation2 + $0x78] sm:$0xf] %vm4818, 0.0
    %4834 = vst.msk [vmem:[#allocation2 + $0x80] sm:$0xff] %vm4816, 0.0
    %4835 = vst.msk [vmem:[#allocation2 + $0x88] sm:$0xf] %vm4818, 0.0
    %4836 = vst.msk [vmem:[#allocation2 + $0x90] sm:$0xff] %vm4816, 0.0
    %4837 = vst.msk [vmem:[#allocation2 + $0x98] sm:$0xf] %vm4818, 0.0
    %4838 = vst.msk [vmem:[#allocation2 + $0xa0] sm:$0xff] %vm4816, 0.0
    %4839 = vst.msk [vmem:[#allocation2 + $0xa8] sm:$0xf] %vm4818, 0.0
    %4840 = vst.msk [vmem:[#allocation2 + $0xb0] sm:$0xff] %vm4816, 0.0
    %4841 = vst.msk [vmem:[#allocation2 + $0xb8] sm:$0xf] %vm4818, 0.0
    %4842 = vst.msk [vmem:[#allocation2 + $0xc0] sm:$0xff] %vm4816, 0.0
    %4843 = vst.msk [vmem:[#allocation2 + $0xc8] sm:$0xf] %vm4818, 0.0
    %4844 = vst.msk [vmem:[#allocation2 + $0xd0] sm:$0xff] %vm4816, 0.0
    %4845 = vst.msk [vmem:[#allocation2 + $0xd8] sm:$0xf] %vm4818, 0.0
    %4846 = vst.msk [vmem:[#allocation2 + $0xe0] sm:$0xff] %vm4816, 0.0
    %4847 = vst.msk [vmem:[#allocation2 + $0xe8] sm:$0xf] %vm4818, 0.0
    %4848 = vst.msk [vmem:[#allocation2 + $0xf0] sm:$0xff] %vm4816, 0.0
    %4849 = vst.msk [vmem:[#allocation2 + $0xf8] sm:$0xf] %vm4818, 0.0
    %4850 = vst.msk [vmem:[#allocation2 + $0x100] sm:$0xff] %vm4816, 0.0
    %4851 = vst.msk [vmem:[#allocation2 + $0x108] sm:$0xf] %vm4818, 0.0
    %4852 = vst.msk [vmem:[#allocation2 + $0x110] sm:$0xff] %vm4816, 0.0
    %4853 = vst.msk [vmem:[#allocation2 + $0x118] sm:$0xf] %vm4818, 0.0
    %4854 = vst.msk [vmem:[#allocation2 + $0x120] sm:$0xff] %vm4816, 0.0
    %4855 = vst.msk [vmem:[#allocation2 + $0x128] sm:$0xf] %vm4818, 0.0
    %4856 = vst.msk [vmem:[#allocation2 + $0x130] sm:$0xff] %vm4816, 0.0
    %4857 = vst.msk [vmem:[#allocation2 + $0x138] sm:$0xf] %vm4818, 0.0
    %4858 = vst.msk [vmem:[#allocation2 + $0x140] sm:$0xff] %vm4816, 0.0
    %4859 = vst.msk [vmem:[#allocation2 + $0x148] sm:$0xf] %vm4818, 0.0
    %4860 = vst.msk [vmem:[#allocation2 + $0x150] sm:$0xff] %vm4816, 0.0
    %4861 = vst.msk [vmem:[#allocation2 + $0x158] sm:$0xf] %vm4818, 0.0
    %4862 = vst.msk [vmem:[#allocation2 + $0x160] sm:$0xff] %vm4816, 0.0
    %4863 = vst.msk [vmem:[#allocation2 + $0x168] sm:$0xf] %vm4818, 0.0
    %4864 = vst.msk [vmem:[#allocation2 + $0x170] sm:$0xff] %vm4816, 0.0
    %4865 = vst.msk [vmem:[#allocation2 + $0x178] sm:$0xf] %vm4818, 0.0
    %v4866 = vmax.f32 %v4752, %v4756
    %v4867 = vmax.f32 %v4753, %v4757
    %v4868 = vmax.f32 %v4754, %v4758
    %v4869 = vmax.f32 %v4755, %v4759
    %v4870 = vmax.f32 %v4866, %v4768
    %v4871 = vmax.f32 %v4867, %v4769
    %v4872 = vmax.f32 %v4868, %v4770
    %v4873 = vmax.f32 %v4869, %v4771
    %v4874 = vmax.f32 %v4870, %v4772
    %v4875 = vmax.f32 %v4871, %v4773
    %v4876 = vmax.f32 %v4872, %v4774
    %v4877 = vmax.f32 %v4873, %v4775
    %s4878 = scalar_lea.vmem [#allocation2], 16
    %4879 = vst.msk [vmem:[%s4878 + $0x2] sm:$0xff] %vm4816, %v4874
    %s4880 = scalar_lea.vmem [#allocation2], 32
    %4881 = vst.msk [vmem:[%s4880 + $0x2] sm:$0xff] %vm4816, %v4875
    %s4882 = scalar_lea.vmem [#allocation2], 48
    %4883 = vst.msk [vmem:[%s4882 + $0x2] sm:$0xff] %vm4816, %v4876
    %s4884 = scalar_lea.vmem [#allocation2], 64
    %4885 = vst.msk [vmem:[%s4884 + $0x2] sm:$0xff] %vm4816, %v4877
    %v4886 = vmax.f32 %v4760, %v4764
    %v4887 = vmax.f32 %v4761, %v4765
    %v4888 = vmax.f32 %v4762, %v4766
    %v4889 = vmax.f32 %v4763, %v4767
    %v4890 = vmax.f32 %v4886, %v4776
    %v4891 = vmax.f32 %v4887, %v4777
    %v4892 = vmax.f32 %v4888, %v4778
    %v4893 = vmax.f32 %v4889, %v4779
    %v4894 = vmax.f32 %v4890, %v4780
    %v4895 = vmax.f32 %v4891, %v4781
    %v4896 = vmax.f32 %v4892, %v4782
    %v4897 = vmax.f32 %v4893, %v4783
    %s4898 = scalar_lea.vmem [#allocation2], 112
    %4899 = vst.msk [vmem:[%s4898 + $0x2] sm:$0xff] %vm4816, %v4894
    %s4900 = scalar_lea.vmem [#allocation2], 128
    %4901 = vst.msk [vmem:[%s4900 + $0x2] sm:$0xff] %vm4816, %v4895
    %s4902 = scalar_lea.vmem [#allocation2], 144
    %4903 = vst.msk [vmem:[%s4902 + $0x2] sm:$0xff] %vm4816, %v4896
    %s4904 = scalar_lea.vmem [#allocation2], 160
    %4905 = vst.msk [vmem:[%s4904 + $0x2] sm:$0xff] %vm4816, %v4897
    %v4906 = vmax.f32 %v4784, %v4788
    %v4907 = vmax.f32 %v4785, %v4789
    %v4908 = vmax.f32 %v4786, %v4790
    %v4909 = vmax.f32 %v4787, %v4791
    %v4910 = vmax.f32 %v4906, %v4800
    %v4911 = vmax.f32 %v4907, %v4801
    %v4912 = vmax.f32 %v4908, %v4802
    %v4913 = vmax.f32 %v4909, %v4803
    %v4914 = vmax.f32 %v4910, %v4804
    %v4915 = vmax.f32 %v4911, %v4805
    %v4916 = vmax.f32 %v4912, %v4806
    %v4917 = vmax.f32 %v4913, %v4807
    %s4918 = scalar_lea.vmem [#allocation2], 208
    %4919 = vst.msk [vmem:[%s4918 + $0x2] sm:$0xff] %vm4816, %v4914
    %s4920 = scalar_lea.vmem [#allocation2], 224
    %4921 = vst.msk [vmem:[%s4920 + $0x2] sm:$0xff] %vm4816, %v4915
    %s4922 = scalar_lea.vmem [#allocation2], 240
    %4923 = vst.msk [vmem:[%s4922 + $0x2] sm:$0xff] %vm4816, %v4916
    %s4924 = scalar_lea.vmem [#allocation2], 256
    %4925 = vst.msk [vmem:[%s4924 + $0x2] sm:$0xff] %vm4816, %v4917
    %v4926 = vmax.f32 %v4792, %v4796
    %v4927 = vmax.f32 %v4793, %v4797
    %v4928 = vmax.f32 %v4794, %v4798
    %v4929 = vmax.f32 %v4795, %v4799
    %v4930 = vmax.f32 %v4926, %v4808
    %v4931 = vmax.f32 %v4927, %v4809
    %v4932 = vmax.f32 %v4928, %v4810
    %v4933 = vmax.f32 %v4929, %v4811
    %v4934 = vmax.f32 %v4930, %v4812
    %v4935 = vmax.f32 %v4931, %v4813
    %v4936 = vmax.f32 %v4932, %v4814
    %v4937 = vmax.f32 %v4933, %v4815
    %s4938 = scalar_lea.vmem [#allocation2], 304
    %4939 = vst.msk [vmem:[%s4938 + $0x2] sm:$0xff] %vm4816, %v4934
    %s4940 = scalar_lea.vmem [#allocation2], 320
    %4941 = vst.msk [vmem:[%s4940 + $0x2] sm:$0xff] %vm4816, %v4935
    %s4942 = scalar_lea.vmem [#allocation2], 336
    %4943 = vst.msk [vmem:[%s4942 + $0x2] sm:$0xff] %vm4816, %v4936
    %s4944 = scalar_lea.vmem [#allocation2], 352
    %4945 = vst.msk [vmem:[%s4944 + $0x2] sm:$0xff] %vm4816, %v4937
    %s4946 = scalar_lea.vmem [#allocation2], 288
    %v4947 = vld [vmem:[%s4946] sm:$0xff]
    %v4948 = vld [vmem:[%s4946 + $0x10] sm:$0xff]
    %v4949 = vld [vmem:[%s4946 + $0x20] sm:$0xff]
    %v4950 = vld [vmem:[%s4946 + $0x30] sm:$0xff]
    %s4951 = scalar_lea.vmem [#allocation2], 192
    %v4952 = vld [vmem:[%s4951 + $0x2] sm:$0xff]
    %v4953 = vld [vmem:[%s4951 + $0x12] sm:$0xff]
    %v4954 = vld [vmem:[%s4951 + $0x22] sm:$0xff]
    %v4955 = vld [vmem:[%s4951 + $0x32] sm:$0xff]
    %v4956 = vld [vmem:[%s4898] sm:$0xff]
    %v4957 = vld [vmem:[%s4898 + $0x10] sm:$0xff]
    %v4958 = vld [vmem:[%s4898 + $0x20] sm:$0xff]
    %v4959 = vld [vmem:[%s4898 + $0x30] sm:$0xff]
    %v4960 = vld [vmem:[%s4878 + $0x2] sm:$0xff]
    %v4961 = vld [vmem:[%s4878 + $0x12] sm:$0xff]
    %v4962 = vld [vmem:[%s4878 + $0x22] sm:$0xff]
    %v4963 = vld [vmem:[%s4878 + $0x32] sm:$0xff]
    %v4964 = vld [vmem:[%s4] sm:$0xf]
    %v4965 = vld [vmem:[%s4946 + $0x2] sm:$0xff]
    %v4966 = vld [vmem:[%s4946 + $0x12] sm:$0xff]
    %v4967 = vld [vmem:[%s4946 + $0x22] sm:$0xff]
    %v4968 = vld [vmem:[%s4946 + $0x32] sm:$0xff]
    %v4969 = vld [vmem:[%s4898 + $0x2] sm:$0xff]
    %v4970 = vld [vmem:[%s4898 + $0x12] sm:$0xff]
    %v4971 = vld [vmem:[%s4898 + $0x22] sm:$0xff]
    %v4972 = vld [vmem:[%s4898 + $0x32] sm:$0xff]
    %s4973 = scalar_lea.vmem %s4, 4
    %v4974 = vld [vmem:[%s4973] sm:$0xf]
    %v4976 = vsel %vm4816, %v4952, 0
    %v4979 = vsel %vm4816, %v4953, 0
    %v4982 = vsel %vm4816, %v4954, 0
    %v4985 = vsel %vm4816, %v4955, 0
    %v4988 = vsel %vm4816, %v4965, 0
    %v4991 = vsel %vm4816, %v4966, 0
    %v4994 = vsel %vm4816, %v4967, 0
    %v4997 = vsel %vm4816, %v4968, 0
    %v5000 = vsel %vm4816, %v4960, 0
    %v5003 = vsel %vm4816, %v4961, 0
    %v5006 = vsel %vm4816, %v4962, 0
    %v5009 = vsel %vm4816, %v4963, 0
    %v5012 = vsel %vm4816, %v4969, 0
    %v5015 = vsel %vm4816, %v4970, 0
    %v5018 = vsel %vm4816, %v4971, 0
    %v5021 = vsel %vm4816, %v4972, 0
    %vm5023 = vcmask 1043456
    %v5025 = vsel %vm5023, %v4974, 0
    %5027 = vmatprep.subr.mxu0 0.0
    %5028 = vmatpush1.msra.mxu0 0.0
    %5029 = vmatprep.subr.mxu0 0.0
    %5030 = vmatpush1.msra.mxu0 0.0
    %5031 = vmatprep.subr.mxu0 0.0
    %5032 = vmatpush1.msra.mxu0 0.0
    %5033 = vmatprep.subr.mxu0 0.0
    %5034 = vmatpush1.msra.mxu0 0.0
    %5035 = vmatprep.subr.mxu0 0.0
    %5036 = vmatpush1.msra.mxu0 0.0
    %5037 = vmatprep.subr.mxu0 0.0
    %5038 = vmatpush1.msra.mxu0 0.0
    %5039 = vmatprep.subr.mxu0 0.0
    %5040 = vmatpush1.msra.mxu0 0.0
    %5041 = vmatprep.subr.mxu0 0.0
    %5042 = vmatpush1.msra.mxu0 0.0
    %5043 = vmatprep.subr.mxu0 0.0
    %5044 = vmatpush1.msra.mxu0 0.0
    %5045 = vmatprep.subr.mxu0 0.0
    %5046 = vmatpush1.msra.mxu0 0.0
    %5047 = vmatprep.subr.mxu0 0.0
    %5048 = vmatpush1.msra.mxu0 0.0
    %5049 = vmatprep.subr.mxu0 0.0
    %5050 = vmatpush1.msra.mxu0 0.0
    %5051 = vmatprep.subr.mxu0 0.0
    %5052 = vmatpush1.msra.mxu0 0.0
    %5053 = vmatprep.subr.mxu0 0.0
    %5054 = vmatpush1.msra.mxu0 0.0
    %5055 = vmatprep.subr.mxu0 0.0
    %5056 = vmatpush1.msra.mxu0 0.0
    %5057 = vmatprep.subr.mxu0 0.0
    %5058 = vmatpush1.msra.mxu0 %v5025
    %5059 = vmatprep.subr.mxu0 0.0
    %5060 = vmatpush2.msra.mxu0 0.0
    %5061 = vmatprep.subr.mxu0 0.0
    %5062 = vmatpush2.msra.mxu0 0.0
    %5063 = vmatprep.subr.mxu0 0.0
    %5064 = vmatpush2.msra.mxu0 0.0
    %5065 = vmatprep.subr.mxu0 0.0
    %5066 = vmatpush2.msra.mxu0 0.0
    %5067 = vmatprep.subr.mxu0 0.0
    %5068 = vmatpush2.msra.mxu0 0.0
    %5069 = vmatprep.subr.mxu0 0.0
    %5070 = vmatpush2.msra.mxu0 0.0
    %5071 = vmatprep.subr.mxu0 0.0
    %5072 = vmatpush2.msra.mxu0 0.0
    %5073 = vmatprep.subr.mxu0 0.0
    %5074 = vmatpush2.msra.mxu0 0.0
    %5075 = vmatprep.subr.mxu0 0.0
    %5076 = vmatpush2.msra.mxu0 0.0
    %5077 = vmatprep.subr.mxu0 0.0
    %5078 = vmatpush2.msra.mxu0 0.0
    %5079 = vmatprep.subr.mxu0 0.0
    %5080 = vmatpush2.msra.mxu0 0.0
    %5081 = vmatprep.subr.mxu0 0.0
    %5082 = vmatpush2.msra.mxu0 0.0
    %5083 = vmatprep.subr.mxu0 0.0
    %5084 = vmatpush2.msra.mxu0 0.0
    %5085 = vmatprep.subr.mxu0 0.0
    %5086 = vmatpush2.msra.mxu0 0.0
    %5087 = vmatprep.subr.mxu0 0.0
    %5088 = vmatpush2.msra.mxu0 0.0
    %5089 = vmatprep.subr.mxu0 0.0
    %5090 = vmatpush2.msra.mxu0 0.0
    %5091 = vmatprep.mubr.f32.mxu0 0.0
    %5092 = vmatmul.mubr.f32.gmra.mxu0 %v4976
    %v5093 = vpop.f32.mrf.mxu0
    %v5094 = vadd.f32 0.0, %v5093
    %v5095 = vpop.f32.mrf.mxu0
    %5096 = vmatprep.mubr.f32.mxu0 0.0
    %5097 = vmatmul.mubr.f32.gmra.mxu0 %v4979
    %v5098 = vpop.f32.mrf.mxu0
    %v5099 = vadd.f32 0.0, %v5098
    %v5100 = vpop.f32.mrf.mxu0
    %5101 = vmatprep.mubr.f32.mxu0 0.0
    %5102 = vmatmul.mubr.f32.gmra.mxu0 %v4982
    %v5103 = vpop.f32.mrf.mxu0
    %v5104 = vadd.f32 0.0, %v5103
    %v5105 = vpop.f32.mrf.mxu0
    %5106 = vmatprep.mubr.f32.mxu0 0.0
    %5107 = vmatmul.mubr.f32.gmra.mxu0 %v4985
    %v5108 = vpop.f32.mrf.mxu0
    %v5109 = vadd.f32 0.0, %v5108
    %v5110 = vpop.f32.mrf.mxu0
    %5111 = vmatprep.mubr.f32.mxu0 0.0
    %5112 = vmatmul.mubr.f32.gmra.mxu0 %v4988
    %v5113 = vpop.f32.mrf.mxu0
    %v5114 = vadd.f32 0.0, %v5113
    %v5115 = vpop.f32.mrf.mxu0
    %5116 = vmatprep.mubr.f32.mxu0 0.0
    %5117 = vmatmul.mubr.f32.gmra.mxu0 %v4991
    %v5118 = vpop.f32.mrf.mxu0
    %v5119 = vadd.f32 0.0, %v5118
    %v5120 = vpop.f32.mrf.mxu0
    %5121 = vmatprep.mubr.f32.mxu0 0.0
    %5122 = vmatmul.mubr.f32.gmra.mxu0 %v4994
    %v5123 = vpop.f32.mrf.mxu0
    %v5124 = vadd.f32 0.0, %v5123
    %v5125 = vpop.f32.mrf.mxu0
    %5126 = vmatprep.mubr.f32.mxu0 0.0
    %5127 = vmatmul.mubr.f32.gmra.mxu0 %v4997
    %v5128 = vpop.f32.mrf.mxu0
    %v5129 = vadd.f32 0.0, %v5128
    %v5130 = vpop.f32.mrf.mxu0
    %5131 = vmatprep.mubr.f32.mxu0 0.0
    %5132 = vmatmul.mubr.f32.gmra.mxu0 %v5000
    %v5133 = vpop.f32.mrf.mxu0
    %v5134 = vadd.f32 0.0, %v5133
    %v5135 = vpop.f32.mrf.mxu0
    %5136 = vmatprep.mubr.f32.mxu0 0.0
    %5137 = vmatmul.mubr.f32.gmra.mxu0 %v5003
    %v5138 = vpop.f32.mrf.mxu0
    %v5139 = vadd.f32 0.0, %v5138
    %v5140 = vpop.f32.mrf.mxu0
    %5141 = vmatprep.mubr.f32.mxu0 0.0
    %5142 = vmatmul.mubr.f32.gmra.mxu0 %v5006
    %v5143 = vpop.f32.mrf.mxu0
    %v5144 = vadd.f32 0.0, %v5143
    %v5145 = vpop.f32.mrf.mxu0
    %5146 = vmatprep.mubr.f32.mxu0 0.0
    %5147 = vmatmul.mubr.f32.gmra.mxu0 %v5009
    %v5148 = vpop.f32.mrf.mxu0
    %v5149 = vadd.f32 0.0, %v5148
    %v5150 = vpop.f32.mrf.mxu0
    %5151 = vmatprep.mubr.f32.mxu0 0.0
    %5152 = vmatmul.mubr.f32.gmra.mxu0 %v5012
    %v5153 = vpop.f32.mrf.mxu0
    %v5154 = vadd.f32 0.0, %v5153
    %v5155 = vpop.f32.mrf.mxu0
    %5156 = vmatprep.mubr.f32.mxu0 0.0
    %5157 = vmatmul.mubr.f32.gmra.mxu0 %v5015
    %v5158 = vpop.f32.mrf.mxu0
    %v5159 = vadd.f32 0.0, %v5158
    %v5160 = vpop.f32.mrf.mxu0
    %5161 = vmatprep.mubr.f32.mxu0 0.0
    %5162 = vmatmul.mubr.f32.gmra.mxu0 %v5018
    %v5163 = vpop.f32.mrf.mxu0
    %v5164 = vadd.f32 0.0, %v5163
    %v5165 = vpop.f32.mrf.mxu0
    %5166 = vmatprep.mubr.f32.mxu0 0.0
    %5167 = vmatmul.mubr.f32.gmra.mxu0 %v5021
    %v5168 = vpop.f32.mrf.mxu0
    %v5169 = vadd.f32 0.0, %v5168
    %v5170 = vpop.f32.mrf.mxu0
    %5171 = vdwg.mxu0
    %v5173 = vsel %vm4816, %v4947, 0
    %v5176 = vsel %vm4816, %v4948, 0
    %v5179 = vsel %vm4816, %v4949, 0
    %v5182 = vsel %vm4816, %v4950, 0
    %v5185 = vsel %vm4816, %v4956, 0
    %v5188 = vsel %vm4816, %v4957, 0
    %v5191 = vsel %vm4816, %v4958, 0
    %v5194 = vsel %vm4816, %v4959, 0
    %v5197 = vsel %vm5023, %v4964, 0
    %5199 = vmatprep.subr.mxu0 0.0
    %5200 = vmatpush1.msra.mxu0 0.0
    %5201 = vmatprep.subr.mxu0 0.0
    %5202 = vmatpush1.msra.mxu0 0.0
    %5203 = vmatprep.subr.mxu0 0.0
    %5204 = vmatpush1.msra.mxu0 0.0
    %5205 = vmatprep.subr.mxu0 0.0
    %5206 = vmatpush1.msra.mxu0 0.0
    %5207 = vmatprep.subr.mxu0 0.0
    %5208 = vmatpush1.msra.mxu0 0.0
    %5209 = vmatprep.subr.mxu0 0.0
    %5210 = vmatpush1.msra.mxu0 0.0
    %5211 = vmatprep.subr.mxu0 0.0
    %5212 = vmatpush1.msra.mxu0 0.0
    %5213 = vmatprep.subr.mxu0 0.0
    %5214 = vmatpush1.msra.mxu0 0.0
    %5215 = vmatprep.subr.mxu0 0.0
    %5216 = vmatpush1.msra.mxu0 0.0
    %5217 = vmatprep.subr.mxu0 0.0
    %5218 = vmatpush1.msra.mxu0 0.0
    %5219 = vmatprep.subr.mxu0 0.0
    %5220 = vmatpush1.msra.mxu0 0.0
    %5221 = vmatprep.subr.mxu0 0.0
    %5222 = vmatpush1.msra.mxu0 0.0
    %5223 = vmatprep.subr.mxu0 0.0
    %5224 = vmatpush1.msra.mxu0 0.0
    %5225 = vmatprep.subr.mxu0 0.0
    %5226 = vmatpush1.msra.mxu0 0.0
    %5227 = vmatprep.subr.mxu0 0.0
    %5228 = vmatpush1.msra.mxu0 0.0
    %5229 = vmatprep.subr.mxu0 0.0
    %5230 = vmatpush1.msra.mxu0 %v5197
    %5231 = vmatprep.subr.mxu0 0.0
    %5232 = vmatpush2.msra.mxu0 0.0
    %5233 = vmatprep.subr.mxu0 0.0
    %5234 = vmatpush2.msra.mxu0 0.0
    %5235 = vmatprep.subr.mxu0 0.0
    %5236 = vmatpush2.msra.mxu0 0.0
    %5237 = vmatprep.subr.mxu0 0.0
    %5238 = vmatpush2.msra.mxu0 0.0
    %5239 = vmatprep.subr.mxu0 0.0
    %5240 = vmatpush2.msra.mxu0 0.0
    %5241 = vmatprep.subr.mxu0 0.0
    %5242 = vmatpush2.msra.mxu0 0.0
    %5243 = vmatprep.subr.mxu0 0.0
    %5244 = vmatpush2.msra.mxu0 0.0
    %5245 = vmatprep.subr.mxu0 0.0
    %5246 = vmatpush2.msra.mxu0 0.0
    %5247 = vmatprep.subr.mxu0 0.0
    %5248 = vmatpush2.msra.mxu0 0.0
    %5249 = vmatprep.subr.mxu0 0.0
    %5250 = vmatpush2.msra.mxu0 0.0
    %5251 = vmatprep.subr.mxu0 0.0
    %5252 = vmatpush2.msra.mxu0 0.0
    %5253 = vmatprep.subr.mxu0 0.0
    %5254 = vmatpush2.msra.mxu0 0.0
    %5255 = vmatprep.subr.mxu0 0.0
    %5256 = vmatpush2.msra.mxu0 0.0
    %5257 = vmatprep.subr.mxu0 0.0
    %5258 = vmatpush2.msra.mxu0 0.0
    %5259 = vmatprep.subr.mxu0 0.0
    %5260 = vmatpush2.msra.mxu0 0.0
    %5261 = vmatprep.subr.mxu0 0.0
    %5262 = vmatpush2.msra.mxu0 0.0
    %5263 = vmatprep.mubr.f32.mxu0 0.0
    %5264 = vmatmul.mubr.f32.gmra.mxu0 %v5173
    %v5265 = vpop.f32.mrf.mxu0
    %v5266 = vadd.f32 %v5094, %v5265
    %v5267 = vpop.f32.mrf.mxu0
    %5268 = vmatprep.mubr.f32.mxu0 0.0
    %5269 = vmatmul.mubr.f32.gmra.mxu0 %v5176
    %v5270 = vpop.f32.mrf.mxu0
    %v5271 = vadd.f32 %v5099, %v5270
    %v5272 = vpop.f32.mrf.mxu0
    %5273 = vmatprep.mubr.f32.mxu0 0.0
    %5274 = vmatmul.mubr.f32.gmra.mxu0 %v5179
    %v5275 = vpop.f32.mrf.mxu0
    %v5276 = vadd.f32 %v5104, %v5275
    %v5277 = vpop.f32.mrf.mxu0
    %5278 = vmatprep.mubr.f32.mxu0 0.0
    %5279 = vmatmul.mubr.f32.gmra.mxu0 %v5182
    %v5280 = vpop.f32.mrf.mxu0
    %v5281 = vadd.f32 %v5109, %v5280
    %v5282 = vpop.f32.mrf.mxu0
    %5283 = vmatprep.mubr.f32.mxu0 0.0
    %5284 = vmatmul.mubr.f32.gmra.mxu0 %v4976
    %v5285 = vpop.f32.mrf.mxu0
    %v5286 = vadd.f32 %v5114, %v5285
    %v5287 = vpop.f32.mrf.mxu0
    %5288 = vmatprep.mubr.f32.mxu0 0.0
    %5289 = vmatmul.mubr.f32.gmra.mxu0 %v4979
    %v5290 = vpop.f32.mrf.mxu0
    %v5291 = vadd.f32 %v5119, %v5290
    %v5292 = vpop.f32.mrf.mxu0
    %5293 = vmatprep.mubr.f32.mxu0 0.0
    %5294 = vmatmul.mubr.f32.gmra.mxu0 %v4982
    %v5295 = vpop.f32.mrf.mxu0
    %v5296 = vadd.f32 %v5124, %v5295
    %v5297 = vpop.f32.mrf.mxu0
    %5298 = vmatprep.mubr.f32.mxu0 0.0
    %5299 = vmatmul.mubr.f32.gmra.mxu0 %v4985
    %v5300 = vpop.f32.mrf.mxu0
    %v5301 = vadd.f32 %v5129, %v5300
    %v5302 = vpop.f32.mrf.mxu0
    %5303 = vmatprep.mubr.f32.mxu0 0.0
    %5304 = vmatmul.mubr.f32.gmra.mxu0 %v5185
    %v5305 = vpop.f32.mrf.mxu0
    %v5306 = vadd.f32 %v5134, %v5305
    %v5307 = vpop.f32.mrf.mxu0
    %5308 = vmatprep.mubr.f32.mxu0 0.0
    %5309 = vmatmul.mubr.f32.gmra.mxu0 %v5188
    %v5310 = vpop.f32.mrf.mxu0
    %v5311 = vadd.f32 %v5139, %v5310
    %v5312 = vpop.f32.mrf.mxu0
    %5313 = vmatprep.mubr.f32.mxu0 0.0
    %5314 = vmatmul.mubr.f32.gmra.mxu0 %v5191
    %v5315 = vpop.f32.mrf.mxu0
    %v5316 = vadd.f32 %v5144, %v5315
    %v5317 = vpop.f32.mrf.mxu0
    %5318 = vmatprep.mubr.f32.mxu0 0.0
    %5319 = vmatmul.mubr.f32.gmra.mxu0 %v5194
    %v5320 = vpop.f32.mrf.mxu0
    %v5321 = vadd.f32 %v5149, %v5320
    %v5322 = vpop.f32.mrf.mxu0
    %5323 = vmatprep.mubr.f32.mxu0 0.0
    %5324 = vmatmul.mubr.f32.gmra.mxu0 %v5000
    %v5325 = vpop.f32.mrf.mxu0
    %v5326 = vadd.f32 %v5154, %v5325
    %v5327 = vpop.f32.mrf.mxu0
    %5328 = vmatprep.mubr.f32.mxu0 0.0
    %5329 = vmatmul.mubr.f32.gmra.mxu0 %v5003
    %v5330 = vpop.f32.mrf.mxu0
    %v5331 = vadd.f32 %v5159, %v5330
    %v5332 = vpop.f32.mrf.mxu0
    %5333 = vmatprep.mubr.f32.mxu0 0.0
    %5334 = vmatmul.mubr.f32.gmra.mxu0 %v5006
    %v5335 = vpop.f32.mrf.mxu0
    %v5336 = vadd.f32 %v5164, %v5335
    %v5337 = vpop.f32.mrf.mxu0
    %5338 = vmatprep.mubr.f32.mxu0 0.0
    %5339 = vmatmul.mubr.f32.gmra.mxu0 %v5009
    %v5340 = vpop.f32.mrf.mxu0
    %v5341 = vadd.f32 %v5169, %v5340
    %v5342 = vpop.f32.mrf.mxu0
    %5343 = vdwg.mxu0
    %v5344 = vld [vmem:[%s4951 + $0x4] sm:$0xff]
    %v5345 = vld [vmem:[%s4951 + $0x14] sm:$0xff]
    %v5346 = vld [vmem:[%s4951 + $0x24] sm:$0xff]
    %v5347 = vld [vmem:[%s4951 + $0x34] sm:$0xff]
    %v5348 = vld [vmem:[%s4878 + $0x4] sm:$0xff]
    %v5349 = vld [vmem:[%s4878 + $0x14] sm:$0xff]
    %v5350 = vld [vmem:[%s4878 + $0x24] sm:$0xff]
    %v5351 = vld [vmem:[%s4878 + $0x34] sm:$0xff]
    %s5352 = scalar_lea.vmem %s4, 8
    %v5353 = vld [vmem:[%s5352] sm:$0xf]
    %v5355 = vsel %vm4816, %v5344, 0
    %v5358 = vsel %vm4816, %v5345, 0
    %v5361 = vsel %vm4816, %v5346, 0
    %v5364 = vsel %vm4816, %v5347, 0
    %v5367 = vsel %vm4816, %v5348, 0
    %v5370 = vsel %vm4816, %v5349, 0
    %v5373 = vsel %vm4816, %v5350, 0
    %v5376 = vsel %vm4816, %v5351, 0
    %v5379 = vsel %vm5023, %v5353, 0
    %5381 = vmatprep.subr.mxu0 0.0
    %5382 = vmatpush1.msra.mxu0 0.0
    %5383 = vmatprep.subr.mxu0 0.0
    %5384 = vmatpush1.msra.mxu0 0.0
    %5385 = vmatprep.subr.mxu0 0.0
    %5386 = vmatpush1.msra.mxu0 0.0
    %5387 = vmatprep.subr.mxu0 0.0
    %5388 = vmatpush1.msra.mxu0 0.0
    %5389 = vmatprep.subr.mxu0 0.0
    %5390 = vmatpush1.msra.mxu0 0.0
    %5391 = vmatprep.subr.mxu0 0.0
    %5392 = vmatpush1.msra.mxu0 0.0
    %5393 = vmatprep.subr.mxu0 0.0
    %5394 = vmatpush1.msra.mxu0 0.0
    %5395 = vmatprep.subr.mxu0 0.0
    %5396 = vmatpush1.msra.mxu0 0.0
    %5397 = vmatprep.subr.mxu0 0.0
    %5398 = vmatpush1.msra.mxu0 0.0
    %5399 = vmatprep.subr.mxu0 0.0
    %5400 = vmatpush1.msra.mxu0 0.0
    %5401 = vmatprep.subr.mxu0 0.0
    %5402 = vmatpush1.msra.mxu0 0.0
    %5403 = vmatprep.subr.mxu0 0.0
    %5404 = vmatpush1.msra.mxu0 0.0
    %5405 = vmatprep.subr.mxu0 0.0
    %5406 = vmatpush1.msra.mxu0 0.0
    %5407 = vmatprep.subr.mxu0 0.0
    %5408 = vmatpush1.msra.mxu0 0.0
    %5409 = vmatprep.subr.mxu0 0.0
    %5410 = vmatpush1.msra.mxu0 0.0
    %5411 = vmatprep.subr.mxu0 0.0
    %5412 = vmatpush1.msra.mxu0 %v5379
    %5413 = vmatprep.subr.mxu0 0.0
    %5414 = vmatpush2.msra.mxu0 0.0
    %5415 = vmatprep.subr.mxu0 0.0
    %5416 = vmatpush2.msra.mxu0 0.0
    %5417 = vmatprep.subr.mxu0 0.0
    %5418 = vmatpush2.msra.mxu0 0.0
    %5419 = vmatprep.subr.mxu0 0.0
    %5420 = vmatpush2.msra.mxu0 0.0
    %5421 = vmatprep.subr.mxu0 0.0
    %5422 = vmatpush2.msra.mxu0 0.0
    %5423 = vmatprep.subr.mxu0 0.0
    %5424 = vmatpush2.msra.mxu0 0.0
    %5425 = vmatprep.subr.mxu0 0.0
    %5426 = vmatpush2.msra.mxu0 0.0
    %5427 = vmatprep.subr.mxu0 0.0
    %5428 = vmatpush2.msra.mxu0 0.0
    %5429 = vmatprep.subr.mxu0 0.0
    %5430 = vmatpush2.msra.mxu0 0.0
    %5431 = vmatprep.subr.mxu0 0.0
    %5432 = vmatpush2.msra.mxu0 0.0
    %5433 = vmatprep.subr.mxu0 0.0
    %5434 = vmatpush2.msra.mxu0 0.0
    %5435 = vmatprep.subr.mxu0 0.0
    %5436 = vmatpush2.msra.mxu0 0.0
    %5437 = vmatprep.subr.mxu0 0.0
    %5438 = vmatpush2.msra.mxu0 0.0
    %5439 = vmatprep.subr.mxu0 0.0
    %5440 = vmatpush2.msra.mxu0 0.0
    %5441 = vmatprep.subr.mxu0 0.0
    %5442 = vmatpush2.msra.mxu0 0.0
    %5443 = vmatprep.subr.mxu0 0.0
    %5444 = vmatpush2.msra.mxu0 0.0
    %5445 = vmatprep.mubr.f32.mxu0 0.0
    %5446 = vmatmul.mubr.f32.gmra.mxu0 %v4988
    %v5447 = vpop.f32.mrf.mxu0
    %v5448 = vadd.f32 0.0, %v5447
    %v5449 = vpop.f32.mrf.mxu0
    %5450 = vmatprep.mubr.f32.mxu0 0.0
    %5451 = vmatmul.mubr.f32.gmra.mxu0 %v4991
    %v5452 = vpop.f32.mrf.mxu0
    %v5453 = vadd.f32 0.0, %v5452
    %v5454 = vpop.f32.mrf.mxu0
    %5455 = vmatprep.mubr.f32.mxu0 0.0
    %5456 = vmatmul.mubr.f32.gmra.mxu0 %v4994
    %v5457 = vpop.f32.mrf.mxu0
    %v5458 = vadd.f32 0.0, %v5457
    %v5459 = vpop.f32.mrf.mxu0
    %5460 = vmatprep.mubr.f32.mxu0 0.0
    %5461 = vmatmul.mubr.f32.gmra.mxu0 %v4997
    %v5462 = vpop.f32.mrf.mxu0
    %v5463 = vadd.f32 0.0, %v5462
    %v5464 = vpop.f32.mrf.mxu0
    %5465 = vmatprep.mubr.f32.mxu0 0.0
    %5466 = vmatmul.mubr.f32.gmra.mxu0 %v5355
    %v5467 = vpop.f32.mrf.mxu0
    %v5468 = vadd.f32 0.0, %v5467
    %v5469 = vpop.f32.mrf.mxu0
    %5470 = vmatprep.mubr.f32.mxu0 0.0
    %5471 = vmatmul.mubr.f32.gmra.mxu0 %v5358
    %v5472 = vpop.f32.mrf.mxu0
    %v5473 = vadd.f32 0.0, %v5472
    %v5474 = vpop.f32.mrf.mxu0
    %5475 = vmatprep.mubr.f32.mxu0 0.0
    %5476 = vmatmul.mubr.f32.gmra.mxu0 %v5361
    %v5477 = vpop.f32.mrf.mxu0
    %v5478 = vadd.f32 0.0, %v5477
    %v5479 = vpop.f32.mrf.mxu0
    %5480 = vmatprep.mubr.f32.mxu0 0.0
    %5481 = vmatmul.mubr.f32.gmra.mxu0 %v5364
    %v5482 = vpop.f32.mrf.mxu0
    %v5483 = vadd.f32 0.0, %v5482
    %v5484 = vpop.f32.mrf.mxu0
    %5485 = vmatprep.mubr.f32.mxu0 0.0
    %5486 = vmatmul.mubr.f32.gmra.mxu0 %v5012
    %v5487 = vpop.f32.mrf.mxu0
    %v5488 = vadd.f32 0.0, %v5487
    %v5489 = vpop.f32.mrf.mxu0
    %5490 = vmatprep.mubr.f32.mxu0 0.0
    %5491 = vmatmul.mubr.f32.gmra.mxu0 %v5015
    %v5492 = vpop.f32.mrf.mxu0
    %v5493 = vadd.f32 0.0, %v5492
    %v5494 = vpop.f32.mrf.mxu0
    %5495 = vmatprep.mubr.f32.mxu0 0.0
    %5496 = vmatmul.mubr.f32.gmra.mxu0 %v5018
    %v5497 = vpop.f32.mrf.mxu0
    %v5498 = vadd.f32 0.0, %v5497
    %v5499 = vpop.f32.mrf.mxu0
    %5500 = vmatprep.mubr.f32.mxu0 0.0
    %5501 = vmatmul.mubr.f32.gmra.mxu0 %v5021
    %v5502 = vpop.f32.mrf.mxu0
    %v5503 = vadd.f32 0.0, %v5502
    %v5504 = vpop.f32.mrf.mxu0
    %5505 = vmatprep.mubr.f32.mxu0 0.0
    %5506 = vmatmul.mubr.f32.gmra.mxu0 %v5367
    %v5507 = vpop.f32.mrf.mxu0
    %v5508 = vadd.f32 0.0, %v5507
    %v5509 = vpop.f32.mrf.mxu0
    %5510 = vmatprep.mubr.f32.mxu0 0.0
    %5511 = vmatmul.mubr.f32.gmra.mxu0 %v5370
    %v5512 = vpop.f32.mrf.mxu0
    %v5513 = vadd.f32 0.0, %v5512
    %v5514 = vpop.f32.mrf.mxu0
    %5515 = vmatprep.mubr.f32.mxu0 0.0
    %5516 = vmatmul.mubr.f32.gmra.mxu0 %v5373
    %v5517 = vpop.f32.mrf.mxu0
    %v5518 = vadd.f32 0.0, %v5517
    %v5519 = vpop.f32.mrf.mxu0
    %5520 = vmatprep.mubr.f32.mxu0 0.0
    %5521 = vmatmul.mubr.f32.gmra.mxu0 %v5376
    %v5522 = vpop.f32.mrf.mxu0
    %v5523 = vadd.f32 0.0, %v5522
    %v5524 = vpop.f32.mrf.mxu0
    %5525 = vdwg.mxu0
    %v5526 = vadd.f32 %v5266, %v5448
    %v5527 = vadd.f32 %v5271, %v5453
    %v5528 = vadd.f32 %v5276, %v5458
    %v5529 = vadd.f32 %v5281, %v5463
    %v5530 = vadd.f32 %v5286, %v5468
    %v5531 = vadd.f32 %v5291, %v5473
    %v5532 = vadd.f32 %v5296, %v5478
    %v5533 = vadd.f32 %v5301, %v5483
    %v5534 = vadd.f32 %v5306, %v5488
    %v5535 = vadd.f32 %v5311, %v5493
    %v5536 = vadd.f32 %v5316, %v5498
    %v5537 = vadd.f32 %v5321, %v5503
    %v5538 = vadd.f32 %v5326, %v5508
    %v5539 = vadd.f32 %v5331, %v5513
    %v5540 = vadd.f32 %v5336, %v5518
    %v5541 = vadd.f32 %v5341, %v5523
    %v5542 = vld [vmem:[%s4938] sm:$0xff]
    %v5543 = vld [vmem:[%s4938 + $0x10] sm:$0xff]
    %v5544 = vld [vmem:[%s4938 + $0x20] sm:$0xff]
    %v5545 = vld [vmem:[%s4938 + $0x30] sm:$0xff]
    %v5546 = vld [vmem:[%s4918 + $0x2] sm:$0xff]
    %v5547 = vld [vmem:[%s4918 + $0x12] sm:$0xff]
    %v5548 = vld [vmem:[%s4918 + $0x22] sm:$0xff]
    %v5549 = vld [vmem:[%s4918 + $0x32] sm:$0xff]
    %s5550 = scalar_lea.vmem %s4, 12
    %v5551 = vld [vmem:[%s5550] sm:$0xf]
    %v5553 = vsel %vm4816, %v5542, 0
    %v5556 = vsel %vm4816, %v5543, 0
    %v5559 = vsel %vm4816, %v5544, 0
    %v5562 = vsel %vm4816, %v5545, 0
    %v5565 = vsel %vm4816, %v5546, 0
    %v5568 = vsel %vm4816, %v5547, 0
    %v5571 = vsel %vm4816, %v5548, 0
    %v5574 = vsel %vm4816, %v5549, 0
    %v5577 = vsel %vm5023, %v5551, 0
    %5579 = vmatprep.subr.mxu0 0.0
    %5580 = vmatpush1.msra.mxu0 0.0
    %5581 = vmatprep.subr.mxu0 0.0
    %5582 = vmatpush1.msra.mxu0 0.0
    %5583 = vmatprep.subr.mxu0 0.0
    %5584 = vmatpush1.msra.mxu0 0.0
    %5585 = vmatprep.subr.mxu0 0.0
    %5586 = vmatpush1.msra.mxu0 0.0
    %5587 = vmatprep.subr.mxu0 0.0
    %5588 = vmatpush1.msra.mxu0 0.0
    %5589 = vmatprep.subr.mxu0 0.0
    %5590 = vmatpush1.msra.mxu0 0.0
    %5591 = vmatprep.subr.mxu0 0.0
    %5592 = vmatpush1.msra.mxu0 0.0
    %5593 = vmatprep.subr.mxu0 0.0
    %5594 = vmatpush1.msra.mxu0 0.0
    %5595 = vmatprep.subr.mxu0 0.0
    %5596 = vmatpush1.msra.mxu0 0.0
    %5597 = vmatprep.subr.mxu0 0.0
    %5598 = vmatpush1.msra.mxu0 0.0
    %5599 = vmatprep.subr.mxu0 0.0
    %5600 = vmatpush1.msra.mxu0 0.0
    %5601 = vmatprep.subr.mxu0 0.0
    %5602 = vmatpush1.msra.mxu0 0.0
    %5603 = vmatprep.subr.mxu0 0.0
    %5604 = vmatpush1.msra.mxu0 0.0
    %5605 = vmatprep.subr.mxu0 0.0
    %5606 = vmatpush1.msra.mxu0 0.0
    %5607 = vmatprep.subr.mxu0 0.0
    %5608 = vmatpush1.msra.mxu0 0.0
    %5609 = vmatprep.subr.mxu0 0.0
    %5610 = vmatpush1.msra.mxu0 %v5577
    %5611 = vmatprep.subr.mxu0 0.0
    %5612 = vmatpush2.msra.mxu0 0.0
    %5613 = vmatprep.subr.mxu0 0.0
    %5614 = vmatpush2.msra.mxu0 0.0
    %5615 = vmatprep.subr.mxu0 0.0
    %5616 = vmatpush2.msra.mxu0 0.0
    %5617 = vmatprep.subr.mxu0 0.0
    %5618 = vmatpush2.msra.mxu0 0.0
    %5619 = vmatprep.subr.mxu0 0.0
    %5620 = vmatpush2.msra.mxu0 0.0
    %5621 = vmatprep.subr.mxu0 0.0
    %5622 = vmatpush2.msra.mxu0 0.0
    %5623 = vmatprep.subr.mxu0 0.0
    %5624 = vmatpush2.msra.mxu0 0.0
    %5625 = vmatprep.subr.mxu0 0.0
    %5626 = vmatpush2.msra.mxu0 0.0
    %5627 = vmatprep.subr.mxu0 0.0
    %5628 = vmatpush2.msra.mxu0 0.0
    %5629 = vmatprep.subr.mxu0 0.0
    %5630 = vmatpush2.msra.mxu0 0.0
    %5631 = vmatprep.subr.mxu0 0.0
    %5632 = vmatpush2.msra.mxu0 0.0
    %5633 = vmatprep.subr.mxu0 0.0
    %5634 = vmatpush2.msra.mxu0 0.0
    %5635 = vmatprep.subr.mxu0 0.0
    %5636 = vmatpush2.msra.mxu0 0.0
    %5637 = vmatprep.subr.mxu0 0.0
    %5638 = vmatpush2.msra.mxu0 0.0
    %5639 = vmatprep.subr.mxu0 0.0
    %5640 = vmatpush2.msra.mxu0 0.0
    %5641 = vmatprep.subr.mxu0 0.0
    %5642 = vmatpush2.msra.mxu0 0.0
    %5643 = vmatprep.mubr.f32.mxu0 0.0
    %5644 = vmatmul.mubr.f32.gmra.mxu0 %v5185
    %v5645 = vpop.f32.mrf.mxu0
    %v5646 = vadd.f32 0.0, %v5645
    %v5647 = vpop.f32.mrf.mxu0
    %5648 = vmatprep.mubr.f32.mxu0 0.0
    %5649 = vmatmul.mubr.f32.gmra.mxu0 %v5188
    %v5650 = vpop.f32.mrf.mxu0
    %v5651 = vadd.f32 0.0, %v5650
    %v5652 = vpop.f32.mrf.mxu0
    %5653 = vmatprep.mubr.f32.mxu0 0.0
    %5654 = vmatmul.mubr.f32.gmra.mxu0 %v5191
    %v5655 = vpop.f32.mrf.mxu0
    %v5656 = vadd.f32 0.0, %v5655
    %v5657 = vpop.f32.mrf.mxu0
    %5658 = vmatprep.mubr.f32.mxu0 0.0
    %5659 = vmatmul.mubr.f32.gmra.mxu0 %v5194
    %v5660 = vpop.f32.mrf.mxu0
    %v5661 = vadd.f32 0.0, %v5660
    %v5662 = vpop.f32.mrf.mxu0
    %5663 = vmatprep.mubr.f32.mxu0 0.0
    %5664 = vmatmul.mubr.f32.gmra.mxu0 %v5000
    %v5665 = vpop.f32.mrf.mxu0
    %v5666 = vadd.f32 0.0, %v5665
    %v5667 = vpop.f32.mrf.mxu0
    %5668 = vmatprep.mubr.f32.mxu0 0.0
    %5669 = vmatmul.mubr.f32.gmra.mxu0 %v5003
    %v5670 = vpop.f32.mrf.mxu0
    %v5671 = vadd.f32 0.0, %v5670
    %v5672 = vpop.f32.mrf.mxu0
    %5673 = vmatprep.mubr.f32.mxu0 0.0
    %5674 = vmatmul.mubr.f32.gmra.mxu0 %v5006
    %v5675 = vpop.f32.mrf.mxu0
    %v5676 = vadd.f32 0.0, %v5675
    %v5677 = vpop.f32.mrf.mxu0
    %5678 = vmatprep.mubr.f32.mxu0 0.0
    %5679 = vmatmul.mubr.f32.gmra.mxu0 %v5009
    %v5680 = vpop.f32.mrf.mxu0
    %v5681 = vadd.f32 0.0, %v5680
    %v5682 = vpop.f32.mrf.mxu0
    %5683 = vmatprep.mubr.f32.mxu0 0.0
    %5684 = vmatmul.mubr.f32.gmra.mxu0 %v5553
    %v5685 = vpop.f32.mrf.mxu0
    %v5686 = vadd.f32 0.0, %v5685
    %v5687 = vpop.f32.mrf.mxu0
    %5688 = vmatprep.mubr.f32.mxu0 0.0
    %5689 = vmatmul.mubr.f32.gmra.mxu0 %v5556
    %v5690 = vpop.f32.mrf.mxu0
    %v5691 = vadd.f32 0.0, %v5690
    %v5692 = vpop.f32.mrf.mxu0
    %5693 = vmatprep.mubr.f32.mxu0 0.0
    %5694 = vmatmul.mubr.f32.gmra.mxu0 %v5559
    %v5695 = vpop.f32.mrf.mxu0
    %v5696 = vadd.f32 0.0, %v5695
    %v5697 = vpop.f32.mrf.mxu0
    %5698 = vmatprep.mubr.f32.mxu0 0.0
    %5699 = vmatmul.mubr.f32.gmra.mxu0 %v5562
    %v5700 = vpop.f32.mrf.mxu0
    %v5701 = vadd.f32 0.0, %v5700
    %v5702 = vpop.f32.mrf.mxu0
    %5703 = vmatprep.mubr.f32.mxu0 0.0
    %5704 = vmatmul.mubr.f32.gmra.mxu0 %v5565
    %v5705 = vpop.f32.mrf.mxu0
    %v5706 = vadd.f32 0.0, %v5705
    %v5707 = vpop.f32.mrf.mxu0
    %5708 = vmatprep.mubr.f32.mxu0 0.0
    %5709 = vmatmul.mubr.f32.gmra.mxu0 %v5568
    %v5710 = vpop.f32.mrf.mxu0
    %v5711 = vadd.f32 0.0, %v5710
    %v5712 = vpop.f32.mrf.mxu0
    %5713 = vmatprep.mubr.f32.mxu0 0.0
    %5714 = vmatmul.mubr.f32.gmra.mxu0 %v5571
    %v5715 = vpop.f32.mrf.mxu0
    %v5716 = vadd.f32 0.0, %v5715
    %v5717 = vpop.f32.mrf.mxu0
    %5718 = vmatprep.mubr.f32.mxu0 0.0
    %5719 = vmatmul.mubr.f32.gmra.mxu0 %v5574
    %v5720 = vpop.f32.mrf.mxu0
    %v5721 = vadd.f32 0.0, %v5720
    %v5722 = vpop.f32.mrf.mxu0
    %5723 = vdwg.mxu0
    %v5724 = vadd.f32 %v5526, %v5646
    %v5725 = vadd.f32 %v5527, %v5651
    %v5726 = vadd.f32 %v5528, %v5656
    %v5727 = vadd.f32 %v5529, %v5661
    %v5728 = vadd.f32 %v5530, %v5666
    %v5729 = vadd.f32 %v5531, %v5671
    %v5730 = vadd.f32 %v5532, %v5676
    %v5731 = vadd.f32 %v5533, %v5681
    %v5732 = vadd.f32 %v5534, %v5686
    %v5733 = vadd.f32 %v5535, %v5691
    %v5734 = vadd.f32 %v5536, %v5696
    %v5735 = vadd.f32 %v5537, %v5701
    %v5736 = vadd.f32 %v5538, %v5706
    %v5737 = vadd.f32 %v5539, %v5711
    %v5738 = vadd.f32 %v5540, %v5716
    %v5739 = vadd.f32 %v5541, %v5721
    %v5740 = vld [vmem:[%s4938 + $0x2] sm:$0xff]
    %v5741 = vld [vmem:[%s4938 + $0x12] sm:$0xff]
    %v5742 = vld [vmem:[%s4938 + $0x22] sm:$0xff]
    %v5743 = vld [vmem:[%s4938 + $0x32] sm:$0xff]
    %s5744 = scalar_lea.vmem %s4, 16
    %v5745 = vld [vmem:[%s5744] sm:$0xf]
    %v5747 = vsel %vm4816, %v5740, 0
    %v5750 = vsel %vm4816, %v5741, 0
    %v5753 = vsel %vm4816, %v5742, 0
    %v5756 = vsel %vm4816, %v5743, 0
    %v5759 = vsel %vm5023, %v5745, 0
    %5761 = vmatprep.subr.mxu0 0.0
    %5762 = vmatpush1.msra.mxu0 0.0
    %5763 = vmatprep.subr.mxu0 0.0
    %5764 = vmatpush1.msra.mxu0 0.0
    %5765 = vmatprep.subr.mxu0 0.0
    %5766 = vmatpush1.msra.mxu0 0.0
    %5767 = vmatprep.subr.mxu0 0.0
    %5768 = vmatpush1.msra.mxu0 0.0
    %5769 = vmatprep.subr.mxu0 0.0
    %5770 = vmatpush1.msra.mxu0 0.0
    %5771 = vmatprep.subr.mxu0 0.0
    %5772 = vmatpush1.msra.mxu0 0.0
    %5773 = vmatprep.subr.mxu0 0.0
    %5774 = vmatpush1.msra.mxu0 0.0
    %5775 = vmatprep.subr.mxu0 0.0
    %5776 = vmatpush1.msra.mxu0 0.0
    %5777 = vmatprep.subr.mxu0 0.0
    %5778 = vmatpush1.msra.mxu0 0.0
    %5779 = vmatprep.subr.mxu0 0.0
    %5780 = vmatpush1.msra.mxu0 0.0
    %5781 = vmatprep.subr.mxu0 0.0
    %5782 = vmatpush1.msra.mxu0 0.0
    %5783 = vmatprep.subr.mxu0 0.0
    %5784 = vmatpush1.msra.mxu0 0.0
    %5785 = vmatprep.subr.mxu0 0.0
    %5786 = vmatpush1.msra.mxu0 0.0
    %5787 = vmatprep.subr.mxu0 0.0
    %5788 = vmatpush1.msra.mxu0 0.0
    %5789 = vmatprep.subr.mxu0 0.0
    %5790 = vmatpush1.msra.mxu0 0.0
    %5791 = vmatprep.subr.mxu0 0.0
    %5792 = vmatpush1.msra.mxu0 %v5759
    %5793 = vmatprep.subr.mxu0 0.0
    %5794 = vmatpush2.msra.mxu0 0.0
    %5795 = vmatprep.subr.mxu0 0.0
    %5796 = vmatpush2.msra.mxu0 0.0
    %5797 = vmatprep.subr.mxu0 0.0
    %5798 = vmatpush2.msra.mxu0 0.0
    %5799 = vmatprep.subr.mxu0 0.0
    %5800 = vmatpush2.msra.mxu0 0.0
    %5801 = vmatprep.subr.mxu0 0.0
    %5802 = vmatpush2.msra.mxu0 0.0
    %5803 = vmatprep.subr.mxu0 0.0
    %5804 = vmatpush2.msra.mxu0 0.0
    %5805 = vmatprep.subr.mxu0 0.0
    %5806 = vmatpush2.msra.mxu0 0.0
    %5807 = vmatprep.subr.mxu0 0.0
    %5808 = vmatpush2.msra.mxu0 0.0
    %5809 = vmatprep.subr.mxu0 0.0
    %5810 = vmatpush2.msra.mxu0 0.0
    %5811 = vmatprep.subr.mxu0 0.0
    %5812 = vmatpush2.msra.mxu0 0.0
    %5813 = vmatprep.subr.mxu0 0.0
    %5814 = vmatpush2.msra.mxu0 0.0
    %5815 = vmatprep.subr.mxu0 0.0
    %5816 = vmatpush2.msra.mxu0 0.0
    %5817 = vmatprep.subr.mxu0 0.0
    %5818 = vmatpush2.msra.mxu0 0.0
    %5819 = vmatprep.subr.mxu0 0.0
    %5820 = vmatpush2.msra.mxu0 0.0
    %5821 = vmatprep.subr.mxu0 0.0
    %5822 = vmatpush2.msra.mxu0 0.0
    %5823 = vmatprep.subr.mxu0 0.0
    %5824 = vmatpush2.msra.mxu0 0.0
    %5825 = vmatprep.mubr.f32.mxu0 0.0
    %5826 = vmatmul.mubr.f32.gmra.mxu0 %v5000
    %v5827 = vpop.f32.mrf.mxu0
    %v5828 = vadd.f32 0.0, %v5827
    %v5829 = vpop.f32.mrf.mxu0
    %5830 = vmatprep.mubr.f32.mxu0 0.0
    %5831 = vmatmul.mubr.f32.gmra.mxu0 %v5003
    %v5832 = vpop.f32.mrf.mxu0
    %v5833 = vadd.f32 0.0, %v5832
    %v5834 = vpop.f32.mrf.mxu0
    %5835 = vmatprep.mubr.f32.mxu0 0.0
    %5836 = vmatmul.mubr.f32.gmra.mxu0 %v5006
    %v5837 = vpop.f32.mrf.mxu0
    %v5838 = vadd.f32 0.0, %v5837
    %v5839 = vpop.f32.mrf.mxu0
    %5840 = vmatprep.mubr.f32.mxu0 0.0
    %5841 = vmatmul.mubr.f32.gmra.mxu0 %v5009
    %v5842 = vpop.f32.mrf.mxu0
    %v5843 = vadd.f32 0.0, %v5842
    %v5844 = vpop.f32.mrf.mxu0
    %5845 = vmatprep.mubr.f32.mxu0 0.0
    %5846 = vmatmul.mubr.f32.gmra.mxu0 %v5012
    %v5847 = vpop.f32.mrf.mxu0
    %v5848 = vadd.f32 0.0, %v5847
    %v5849 = vpop.f32.mrf.mxu0
    %5850 = vmatprep.mubr.f32.mxu0 0.0
    %5851 = vmatmul.mubr.f32.gmra.mxu0 %v5015
    %v5852 = vpop.f32.mrf.mxu0
    %v5853 = vadd.f32 0.0, %v5852
    %v5854 = vpop.f32.mrf.mxu0
    %5855 = vmatprep.mubr.f32.mxu0 0.0
    %5856 = vmatmul.mubr.f32.gmra.mxu0 %v5018
    %v5857 = vpop.f32.mrf.mxu0
    %v5858 = vadd.f32 0.0, %v5857
    %v5859 = vpop.f32.mrf.mxu0
    %5860 = vmatprep.mubr.f32.mxu0 0.0
    %5861 = vmatmul.mubr.f32.gmra.mxu0 %v5021
    %v5862 = vpop.f32.mrf.mxu0
    %v5863 = vadd.f32 0.0, %v5862
    %v5864 = vpop.f32.mrf.mxu0
    %5865 = vmatprep.mubr.f32.mxu0 0.0
    %5866 = vmatmul.mubr.f32.gmra.mxu0 %v5565
    %v5867 = vpop.f32.mrf.mxu0
    %v5868 = vadd.f32 0.0, %v5867
    %v5869 = vpop.f32.mrf.mxu0
    %5870 = vmatprep.mubr.f32.mxu0 0.0
    %5871 = vmatmul.mubr.f32.gmra.mxu0 %v5568
    %v5872 = vpop.f32.mrf.mxu0
    %v5873 = vadd.f32 0.0, %v5872
    %v5874 = vpop.f32.mrf.mxu0
    %5875 = vmatprep.mubr.f32.mxu0 0.0
    %5876 = vmatmul.mubr.f32.gmra.mxu0 %v5571
    %v5877 = vpop.f32.mrf.mxu0
    %v5878 = vadd.f32 0.0, %v5877
    %v5879 = vpop.f32.mrf.mxu0
    %5880 = vmatprep.mubr.f32.mxu0 0.0
    %5881 = vmatmul.mubr.f32.gmra.mxu0 %v5574
    %v5882 = vpop.f32.mrf.mxu0
    %v5883 = vadd.f32 0.0, %v5882
    %v5884 = vpop.f32.mrf.mxu0
    %5885 = vmatprep.mubr.f32.mxu0 0.0
    %5886 = vmatmul.mubr.f32.gmra.mxu0 %v5747
    %v5887 = vpop.f32.mrf.mxu0
    %v5888 = vadd.f32 0.0, %v5887
    %v5889 = vpop.f32.mrf.mxu0
    %5890 = vmatprep.mubr.f32.mxu0 0.0
    %5891 = vmatmul.mubr.f32.gmra.mxu0 %v5750
    %v5892 = vpop.f32.mrf.mxu0
    %v5893 = vadd.f32 0.0, %v5892
    %v5894 = vpop.f32.mrf.mxu0
    %5895 = vmatprep.mubr.f32.mxu0 0.0
    %5896 = vmatmul.mubr.f32.gmra.mxu0 %v5753
    %v5897 = vpop.f32.mrf.mxu0
    %v5898 = vadd.f32 0.0, %v5897
    %v5899 = vpop.f32.mrf.mxu0
    %5900 = vmatprep.mubr.f32.mxu0 0.0
    %5901 = vmatmul.mubr.f32.gmra.mxu0 %v5756
    %v5902 = vpop.f32.mrf.mxu0
    %v5903 = vadd.f32 0.0, %v5902
    %v5904 = vpop.f32.mrf.mxu0
    %5905 = vdwg.mxu0
    %v5906 = vadd.f32 %v5724, %v5828
    %v5907 = vadd.f32 %v5725, %v5833
    %v5908 = vadd.f32 %v5726, %v5838
    %v5909 = vadd.f32 %v5727, %v5843
    %v5910 = vadd.f32 %v5728, %v5848
    %v5911 = vadd.f32 %v5729, %v5853
    %v5912 = vadd.f32 %v5730, %v5858
    %v5913 = vadd.f32 %v5731, %v5863
    %v5914 = vadd.f32 %v5732, %v5868
    %v5915 = vadd.f32 %v5733, %v5873
    %v5916 = vadd.f32 %v5734, %v5878
    %v5917 = vadd.f32 %v5735, %v5883
    %v5918 = vadd.f32 %v5736, %v5888
    %v5919 = vadd.f32 %v5737, %v5893
    %v5920 = vadd.f32 %v5738, %v5898
    %v5921 = vadd.f32 %v5739, %v5903
    %v5922 = vld [vmem:[%s4918 + $0x4] sm:$0xff]
    %v5923 = vld [vmem:[%s4918 + $0x14] sm:$0xff]
    %v5924 = vld [vmem:[%s4918 + $0x24] sm:$0xff]
    %v5925 = vld [vmem:[%s4918 + $0x34] sm:$0xff]
    %s5926 = scalar_lea.vmem %s4, 20
    %v5927 = vld [vmem:[%s5926] sm:$0xf]
    %v5929 = vsel %vm4816, %v5922, 0
    %v5932 = vsel %vm4816, %v5923, 0
    %v5935 = vsel %vm4816, %v5924, 0
    %v5938 = vsel %vm4816, %v5925, 0
    %v5941 = vsel %vm5023, %v5927, 0
    %5943 = vmatprep.subr.mxu0 0.0
    %5944 = vmatpush1.msra.mxu0 0.0
    %5945 = vmatprep.subr.mxu0 0.0
    %5946 = vmatpush1.msra.mxu0 0.0
    %5947 = vmatprep.subr.mxu0 0.0
    %5948 = vmatpush1.msra.mxu0 0.0
    %5949 = vmatprep.subr.mxu0 0.0
    %5950 = vmatpush1.msra.mxu0 0.0
    %5951 = vmatprep.subr.mxu0 0.0
    %5952 = vmatpush1.msra.mxu0 0.0
    %5953 = vmatprep.subr.mxu0 0.0
    %5954 = vmatpush1.msra.mxu0 0.0
    %5955 = vmatprep.subr.mxu0 0.0
    %5956 = vmatpush1.msra.mxu0 0.0
    %5957 = vmatprep.subr.mxu0 0.0
    %5958 = vmatpush1.msra.mxu0 0.0
    %5959 = vmatprep.subr.mxu0 0.0
    %5960 = vmatpush1.msra.mxu0 0.0
    %5961 = vmatprep.subr.mxu0 0.0
    %5962 = vmatpush1.msra.mxu0 0.0
    %5963 = vmatprep.subr.mxu0 0.0
    %5964 = vmatpush1.msra.mxu0 0.0
    %5965 = vmatprep.subr.mxu0 0.0
    %5966 = vmatpush1.msra.mxu0 0.0
    %5967 = vmatprep.subr.mxu0 0.0
    %5968 = vmatpush1.msra.mxu0 0.0
    %5969 = vmatprep.subr.mxu0 0.0
    %5970 = vmatpush1.msra.mxu0 0.0
    %5971 = vmatprep.subr.mxu0 0.0
    %5972 = vmatpush1.msra.mxu0 0.0
    %5973 = vmatprep.subr.mxu0 0.0
    %5974 = vmatpush1.msra.mxu0 %v5941
    %5975 = vmatprep.subr.mxu0 0.0
    %5976 = vmatpush2.msra.mxu0 0.0
    %5977 = vmatprep.subr.mxu0 0.0
    %5978 = vmatpush2.msra.mxu0 0.0
    %5979 = vmatprep.subr.mxu0 0.0
    %5980 = vmatpush2.msra.mxu0 0.0
    %5981 = vmatprep.subr.mxu0 0.0
    %5982 = vmatpush2.msra.mxu0 0.0
    %5983 = vmatprep.subr.mxu0 0.0
    %5984 = vmatpush2.msra.mxu0 0.0
    %5985 = vmatprep.subr.mxu0 0.0
    %5986 = vmatpush2.msra.mxu0 0.0
    %5987 = vmatprep.subr.mxu0 0.0
    %5988 = vmatpush2.msra.mxu0 0.0
    %5989 = vmatprep.subr.mxu0 0.0
    %5990 = vmatpush2.msra.mxu0 0.0
    %5991 = vmatprep.subr.mxu0 0.0
    %5992 = vmatpush2.msra.mxu0 0.0
    %5993 = vmatprep.subr.mxu0 0.0
    %5994 = vmatpush2.msra.mxu0 0.0
    %5995 = vmatprep.subr.mxu0 0.0
    %5996 = vmatpush2.msra.mxu0 0.0
    %5997 = vmatprep.subr.mxu0 0.0
    %5998 = vmatpush2.msra.mxu0 0.0
    %5999 = vmatprep.subr.mxu0 0.0
    %6000 = vmatpush2.msra.mxu0 0.0
    %6001 = vmatprep.subr.mxu0 0.0
    %6002 = vmatpush2.msra.mxu0 0.0
    %6003 = vmatprep.subr.mxu0 0.0
    %6004 = vmatpush2.msra.mxu0 0.0
    %6005 = vmatprep.subr.mxu0 0.0
    %6006 = vmatpush2.msra.mxu0 0.0
    %6007 = vmatprep.mubr.f32.mxu0 0.0
    %6008 = vmatmul.mubr.f32.gmra.mxu0 %v5012
    %v6009 = vpop.f32.mrf.mxu0
    %v6010 = vadd.f32 0.0, %v6009
    %v6011 = vpop.f32.mrf.mxu0
    %6012 = vmatprep.mubr.f32.mxu0 0.0
    %6013 = vmatmul.mubr.f32.gmra.mxu0 %v5015
    %v6014 = vpop.f32.mrf.mxu0
    %v6015 = vadd.f32 0.0, %v6014
    %v6016 = vpop.f32.mrf.mxu0
    %6017 = vmatprep.mubr.f32.mxu0 0.0
    %6018 = vmatmul.mubr.f32.gmra.mxu0 %v5018
    %v6019 = vpop.f32.mrf.mxu0
    %v6020 = vadd.f32 0.0, %v6019
    %v6021 = vpop.f32.mrf.mxu0
    %6022 = vmatprep.mubr.f32.mxu0 0.0
    %6023 = vmatmul.mubr.f32.gmra.mxu0 %v5021
    %v6024 = vpop.f32.mrf.mxu0
    %v6025 = vadd.f32 0.0, %v6024
    %v6026 = vpop.f32.mrf.mxu0
    %6027 = vmatprep.mubr.f32.mxu0 0.0
    %6028 = vmatmul.mubr.f32.gmra.mxu0 %v5367
    %v6029 = vpop.f32.mrf.mxu0
    %v6030 = vadd.f32 0.0, %v6029
    %v6031 = vpop.f32.mrf.mxu0
    %6032 = vmatprep.mubr.f32.mxu0 0.0
    %6033 = vmatmul.mubr.f32.gmra.mxu0 %v5370
    %v6034 = vpop.f32.mrf.mxu0
    %v6035 = vadd.f32 0.0, %v6034
    %v6036 = vpop.f32.mrf.mxu0
    %6037 = vmatprep.mubr.f32.mxu0 0.0
    %6038 = vmatmul.mubr.f32.gmra.mxu0 %v5373
    %v6039 = vpop.f32.mrf.mxu0
    %v6040 = vadd.f32 0.0, %v6039
    %v6041 = vpop.f32.mrf.mxu0
    %6042 = vmatprep.mubr.f32.mxu0 0.0
    %6043 = vmatmul.mubr.f32.gmra.mxu0 %v5376
    %v6044 = vpop.f32.mrf.mxu0
    %v6045 = vadd.f32 0.0, %v6044
    %v6046 = vpop.f32.mrf.mxu0
    %6047 = vmatprep.mubr.f32.mxu0 0.0
    %6048 = vmatmul.mubr.f32.gmra.mxu0 %v5747
    %v6049 = vpop.f32.mrf.mxu0
    %v6050 = vadd.f32 0.0, %v6049
    %v6051 = vpop.f32.mrf.mxu0
    %6052 = vmatprep.mubr.f32.mxu0 0.0
    %6053 = vmatmul.mubr.f32.gmra.mxu0 %v5750
    %v6054 = vpop.f32.mrf.mxu0
    %v6055 = vadd.f32 0.0, %v6054
    %v6056 = vpop.f32.mrf.mxu0
    %6057 = vmatprep.mubr.f32.mxu0 0.0
    %6058 = vmatmul.mubr.f32.gmra.mxu0 %v5753
    %v6059 = vpop.f32.mrf.mxu0
    %v6060 = vadd.f32 0.0, %v6059
    %v6061 = vpop.f32.mrf.mxu0
    %6062 = vmatprep.mubr.f32.mxu0 0.0
    %6063 = vmatmul.mubr.f32.gmra.mxu0 %v5756
    %v6064 = vpop.f32.mrf.mxu0
    %v6065 = vadd.f32 0.0, %v6064
    %v6066 = vpop.f32.mrf.mxu0
    %6067 = vmatprep.mubr.f32.mxu0 0.0
    %6068 = vmatmul.mubr.f32.gmra.mxu0 %v5929
    %v6069 = vpop.f32.mrf.mxu0
    %v6070 = vadd.f32 0.0, %v6069
    %v6071 = vpop.f32.mrf.mxu0
    %6072 = vmatprep.mubr.f32.mxu0 0.0
    %6073 = vmatmul.mubr.f32.gmra.mxu0 %v5932
    %v6074 = vpop.f32.mrf.mxu0
    %v6075 = vadd.f32 0.0, %v6074
    %v6076 = vpop.f32.mrf.mxu0
    %6077 = vmatprep.mubr.f32.mxu0 0.0
    %6078 = vmatmul.mubr.f32.gmra.mxu0 %v5935
    %v6079 = vpop.f32.mrf.mxu0
    %v6080 = vadd.f32 0.0, %v6079
    %v6081 = vpop.f32.mrf.mxu0
    %6082 = vmatprep.mubr.f32.mxu0 0.0
    %6083 = vmatmul.mubr.f32.gmra.mxu0 %v5938
    %v6084 = vpop.f32.mrf.mxu0
    %v6085 = vadd.f32 0.0, %v6084
    %v6086 = vpop.f32.mrf.mxu0
    %6087 = vdwg.mxu0
    %v6088 = vadd.f32 %v5906, %v6010
    %v6089 = vadd.f32 %v5907, %v6015
    %v6090 = vadd.f32 %v5908, %v6020
    %v6091 = vadd.f32 %v5909, %v6025
    %v6092 = vadd.f32 %v5910, %v6030
    %v6093 = vadd.f32 %v5911, %v6035
    %v6094 = vadd.f32 %v5912, %v6040
    %v6095 = vadd.f32 %v5913, %v6045
    %v6096 = vadd.f32 %v5914, %v6050
    %v6097 = vadd.f32 %v5915, %v6055
    %v6098 = vadd.f32 %v5916, %v6060
    %v6099 = vadd.f32 %v5917, %v6065
    %v6100 = vadd.f32 %v5918, %v6070
    %v6101 = vadd.f32 %v5919, %v6075
    %v6102 = vadd.f32 %v5920, %v6080
    %v6103 = vadd.f32 %v5921, %v6085
    %v6104 = vld [vmem:[%s4900] sm:$0xff]
    %v6105 = vld [vmem:[%s4900 + $0x10] sm:$0xff]
    %v6106 = vld [vmem:[%s4900 + $0x20] sm:$0xff]
    %v6107 = vld [vmem:[%s4900 + $0x30] sm:$0xff]
    %v6108 = vld [vmem:[%s4880 + $0x2] sm:$0xff]
    %v6109 = vld [vmem:[%s4880 + $0x12] sm:$0xff]
    %v6110 = vld [vmem:[%s4880 + $0x22] sm:$0xff]
    %v6111 = vld [vmem:[%s4880 + $0x32] sm:$0xff]
    %s6112 = scalar_lea.vmem %s4, 24
    %v6113 = vld [vmem:[%s6112] sm:$0xf]
    %v6115 = vsel %vm4816, %v6104, 0
    %v6118 = vsel %vm4816, %v6105, 0
    %v6121 = vsel %vm4816, %v6106, 0
    %v6124 = vsel %vm4816, %v6107, 0
    %v6127 = vsel %vm4816, %v6108, 0
    %v6130 = vsel %vm4816, %v6109, 0
    %v6133 = vsel %vm4816, %v6110, 0
    %v6136 = vsel %vm4816, %v6111, 0
    %v6139 = vsel %vm5023, %v6113, 0
    %6141 = vmatprep.subr.mxu0 0.0
    %6142 = vmatpush1.msra.mxu0 0.0
    %6143 = vmatprep.subr.mxu0 0.0
    %6144 = vmatpush1.msra.mxu0 0.0
    %6145 = vmatprep.subr.mxu0 0.0
    %6146 = vmatpush1.msra.mxu0 0.0
    %6147 = vmatprep.subr.mxu0 0.0
    %6148 = vmatpush1.msra.mxu0 0.0
    %6149 = vmatprep.subr.mxu0 0.0
    %6150 = vmatpush1.msra.mxu0 0.0
    %6151 = vmatprep.subr.mxu0 0.0
    %6152 = vmatpush1.msra.mxu0 0.0
    %6153 = vmatprep.subr.mxu0 0.0
    %6154 = vmatpush1.msra.mxu0 0.0
    %6155 = vmatprep.subr.mxu0 0.0
    %6156 = vmatpush1.msra.mxu0 0.0
    %6157 = vmatprep.subr.mxu0 0.0
    %6158 = vmatpush1.msra.mxu0 0.0
    %6159 = vmatprep.subr.mxu0 0.0
    %6160 = vmatpush1.msra.mxu0 0.0
    %6161 = vmatprep.subr.mxu0 0.0
    %6162 = vmatpush1.msra.mxu0 0.0
    %6163 = vmatprep.subr.mxu0 0.0
    %6164 = vmatpush1.msra.mxu0 0.0
    %6165 = vmatprep.subr.mxu0 0.0
    %6166 = vmatpush1.msra.mxu0 0.0
    %6167 = vmatprep.subr.mxu0 0.0
    %6168 = vmatpush1.msra.mxu0 0.0
    %6169 = vmatprep.subr.mxu0 0.0
    %6170 = vmatpush1.msra.mxu0 0.0
    %6171 = vmatprep.subr.mxu0 0.0
    %6172 = vmatpush1.msra.mxu0 %v6139
    %6173 = vmatprep.subr.mxu0 0.0
    %6174 = vmatpush2.msra.mxu0 0.0
    %6175 = vmatprep.subr.mxu0 0.0
    %6176 = vmatpush2.msra.mxu0 0.0
    %6177 = vmatprep.subr.mxu0 0.0
    %6178 = vmatpush2.msra.mxu0 0.0
    %6179 = vmatprep.subr.mxu0 0.0
    %6180 = vmatpush2.msra.mxu0 0.0
    %6181 = vmatprep.subr.mxu0 0.0
    %6182 = vmatpush2.msra.mxu0 0.0
    %6183 = vmatprep.subr.mxu0 0.0
    %6184 = vmatpush2.msra.mxu0 0.0
    %6185 = vmatprep.subr.mxu0 0.0
    %6186 = vmatpush2.msra.mxu0 0.0
    %6187 = vmatprep.subr.mxu0 0.0
    %6188 = vmatpush2.msra.mxu0 0.0
    %6189 = vmatprep.subr.mxu0 0.0
    %6190 = vmatpush2.msra.mxu0 0.0
    %6191 = vmatprep.subr.mxu0 0.0
    %6192 = vmatpush2.msra.mxu0 0.0
    %6193 = vmatprep.subr.mxu0 0.0
    %6194 = vmatpush2.msra.mxu0 0.0
    %6195 = vmatprep.subr.mxu0 0.0
    %6196 = vmatpush2.msra.mxu0 0.0
    %6197 = vmatprep.subr.mxu0 0.0
    %6198 = vmatpush2.msra.mxu0 0.0
    %6199 = vmatprep.subr.mxu0 0.0
    %6200 = vmatpush2.msra.mxu0 0.0
    %6201 = vmatprep.subr.mxu0 0.0
    %6202 = vmatpush2.msra.mxu0 0.0
    %6203 = vmatprep.subr.mxu0 0.0
    %6204 = vmatpush2.msra.mxu0 0.0
    %6205 = vmatprep.mubr.f32.mxu0 0.0
    %6206 = vmatmul.mubr.f32.gmra.mxu0 %v5553
    %v6207 = vpop.f32.mrf.mxu0
    %v6208 = vadd.f32 0.0, %v6207
    %v6209 = vpop.f32.mrf.mxu0
    %6210 = vmatprep.mubr.f32.mxu0 0.0
    %6211 = vmatmul.mubr.f32.gmra.mxu0 %v5556
    %v6212 = vpop.f32.mrf.mxu0
    %v6213 = vadd.f32 0.0, %v6212
    %v6214 = vpop.f32.mrf.mxu0
    %6215 = vmatprep.mubr.f32.mxu0 0.0
    %6216 = vmatmul.mubr.f32.gmra.mxu0 %v5559
    %v6217 = vpop.f32.mrf.mxu0
    %v6218 = vadd.f32 0.0, %v6217
    %v6219 = vpop.f32.mrf.mxu0
    %6220 = vmatprep.mubr.f32.mxu0 0.0
    %6221 = vmatmul.mubr.f32.gmra.mxu0 %v5562
    %v6222 = vpop.f32.mrf.mxu0
    %v6223 = vadd.f32 0.0, %v6222
    %v6224 = vpop.f32.mrf.mxu0
    %6225 = vmatprep.mubr.f32.mxu0 0.0
    %6226 = vmatmul.mubr.f32.gmra.mxu0 %v5565
    %v6227 = vpop.f32.mrf.mxu0
    %v6228 = vadd.f32 0.0, %v6227
    %v6229 = vpop.f32.mrf.mxu0
    %6230 = vmatprep.mubr.f32.mxu0 0.0
    %6231 = vmatmul.mubr.f32.gmra.mxu0 %v5568
    %v6232 = vpop.f32.mrf.mxu0
    %v6233 = vadd.f32 0.0, %v6232
    %v6234 = vpop.f32.mrf.mxu0
    %6235 = vmatprep.mubr.f32.mxu0 0.0
    %6236 = vmatmul.mubr.f32.gmra.mxu0 %v5571
    %v6237 = vpop.f32.mrf.mxu0
    %v6238 = vadd.f32 0.0, %v6237
    %v6239 = vpop.f32.mrf.mxu0
    %6240 = vmatprep.mubr.f32.mxu0 0.0
    %6241 = vmatmul.mubr.f32.gmra.mxu0 %v5574
    %v6242 = vpop.f32.mrf.mxu0
    %v6243 = vadd.f32 0.0, %v6242
    %v6244 = vpop.f32.mrf.mxu0
    %6245 = vmatprep.mubr.f32.mxu0 0.0
    %6246 = vmatmul.mubr.f32.gmra.mxu0 %v6115
    %v6247 = vpop.f32.mrf.mxu0
    %v6248 = vadd.f32 0.0, %v6247
    %v6249 = vpop.f32.mrf.mxu0
    %6250 = vmatprep.mubr.f32.mxu0 0.0
    %6251 = vmatmul.mubr.f32.gmra.mxu0 %v6118
    %v6252 = vpop.f32.mrf.mxu0
    %v6253 = vadd.f32 0.0, %v6252
    %v6254 = vpop.f32.mrf.mxu0
    %6255 = vmatprep.mubr.f32.mxu0 0.0
    %6256 = vmatmul.mubr.f32.gmra.mxu0 %v6121
    %v6257 = vpop.f32.mrf.mxu0
    %v6258 = vadd.f32 0.0, %v6257
    %v6259 = vpop.f32.mrf.mxu0
    %6260 = vmatprep.mubr.f32.mxu0 0.0
    %6261 = vmatmul.mubr.f32.gmra.mxu0 %v6124
    %v6262 = vpop.f32.mrf.mxu0
    %v6263 = vadd.f32 0.0, %v6262
    %v6264 = vpop.f32.mrf.mxu0
    %6265 = vmatprep.mubr.f32.mxu0 0.0
    %6266 = vmatmul.mubr.f32.gmra.mxu0 %v6127
    %v6267 = vpop.f32.mrf.mxu0
    %v6268 = vadd.f32 0.0, %v6267
    %v6269 = vpop.f32.mrf.mxu0
    %6270 = vmatprep.mubr.f32.mxu0 0.0
    %6271 = vmatmul.mubr.f32.gmra.mxu0 %v6130
    %v6272 = vpop.f32.mrf.mxu0
    %v6273 = vadd.f32 0.0, %v6272
    %v6274 = vpop.f32.mrf.mxu0
    %6275 = vmatprep.mubr.f32.mxu0 0.0
    %6276 = vmatmul.mubr.f32.gmra.mxu0 %v6133
    %v6277 = vpop.f32.mrf.mxu0
    %v6278 = vadd.f32 0.0, %v6277
    %v6279 = vpop.f32.mrf.mxu0
    %6280 = vmatprep.mubr.f32.mxu0 0.0
    %6281 = vmatmul.mubr.f32.gmra.mxu0 %v6136
    %v6282 = vpop.f32.mrf.mxu0
    %v6283 = vadd.f32 0.0, %v6282
    %v6284 = vpop.f32.mrf.mxu0
    %6285 = vdwg.mxu0
    %v6286 = vadd.f32 %v6088, %v6208
    %v6287 = vadd.f32 %v6089, %v6213
    %v6288 = vadd.f32 %v6090, %v6218
    %v6289 = vadd.f32 %v6091, %v6223
    %v6290 = vadd.f32 %v6092, %v6228
    %v6291 = vadd.f32 %v6093, %v6233
    %v6292 = vadd.f32 %v6094, %v6238
    %v6293 = vadd.f32 %v6095, %v6243
    %v6294 = vadd.f32 %v6096, %v6248
    %v6295 = vadd.f32 %v6097, %v6253
    %v6296 = vadd.f32 %v6098, %v6258
    %v6297 = vadd.f32 %v6099, %v6263
    %v6298 = vadd.f32 %v6100, %v6268
    %v6299 = vadd.f32 %v6101, %v6273
    %v6300 = vadd.f32 %v6102, %v6278
    %v6301 = vadd.f32 %v6103, %v6283
    %v6302 = vld [vmem:[%s4900 + $0x2] sm:$0xff]
    %v6303 = vld [vmem:[%s4900 + $0x12] sm:$0xff]
    %v6304 = vld [vmem:[%s4900 + $0x22] sm:$0xff]
    %v6305 = vld [vmem:[%s4900 + $0x32] sm:$0xff]
    %s6306 = scalar_lea.vmem %s4, 28
    %v6307 = vld [vmem:[%s6306] sm:$0xf]
    %v6309 = vsel %vm4816, %v6302, 0
    %v6312 = vsel %vm4816, %v6303, 0
    %v6315 = vsel %vm4816, %v6304, 0
    %v6318 = vsel %vm4816, %v6305, 0
    %v6321 = vsel %vm5023, %v6307, 0
    %6323 = vmatprep.subr.mxu0 0.0
    %6324 = vmatpush1.msra.mxu0 0.0
    %6325 = vmatprep.subr.mxu0 0.0
    %6326 = vmatpush1.msra.mxu0 0.0
    %6327 = vmatprep.subr.mxu0 0.0
    %6328 = vmatpush1.msra.mxu0 0.0
    %6329 = vmatprep.subr.mxu0 0.0
    %6330 = vmatpush1.msra.mxu0 0.0
    %6331 = vmatprep.subr.mxu0 0.0
    %6332 = vmatpush1.msra.mxu0 0.0
    %6333 = vmatprep.subr.mxu0 0.0
    %6334 = vmatpush1.msra.mxu0 0.0
    %6335 = vmatprep.subr.mxu0 0.0
    %6336 = vmatpush1.msra.mxu0 0.0
    %6337 = vmatprep.subr.mxu0 0.0
    %6338 = vmatpush1.msra.mxu0 0.0
    %6339 = vmatprep.subr.mxu0 0.0
    %6340 = vmatpush1.msra.mxu0 0.0
    %6341 = vmatprep.subr.mxu0 0.0
    %6342 = vmatpush1.msra.mxu0 0.0
    %6343 = vmatprep.subr.mxu0 0.0
    %6344 = vmatpush1.msra.mxu0 0.0
    %6345 = vmatprep.subr.mxu0 0.0
    %6346 = vmatpush1.msra.mxu0 0.0
    %6347 = vmatprep.subr.mxu0 0.0
    %6348 = vmatpush1.msra.mxu0 0.0
    %6349 = vmatprep.subr.mxu0 0.0
    %6350 = vmatpush1.msra.mxu0 0.0
    %6351 = vmatprep.subr.mxu0 0.0
    %6352 = vmatpush1.msra.mxu0 0.0
    %6353 = vmatprep.subr.mxu0 0.0
    %6354 = vmatpush1.msra.mxu0 %v6321
    %6355 = vmatprep.subr.mxu0 0.0
    %6356 = vmatpush2.msra.mxu0 0.0
    %6357 = vmatprep.subr.mxu0 0.0
    %6358 = vmatpush2.msra.mxu0 0.0
    %6359 = vmatprep.subr.mxu0 0.0
    %6360 = vmatpush2.msra.mxu0 0.0
    %6361 = vmatprep.subr.mxu0 0.0
    %6362 = vmatpush2.msra.mxu0 0.0
    %6363 = vmatprep.subr.mxu0 0.0
    %6364 = vmatpush2.msra.mxu0 0.0
    %6365 = vmatprep.subr.mxu0 0.0
    %6366 = vmatpush2.msra.mxu0 0.0
    %6367 = vmatprep.subr.mxu0 0.0
    %6368 = vmatpush2.msra.mxu0 0.0
    %6369 = vmatprep.subr.mxu0 0.0
    %6370 = vmatpush2.msra.mxu0 0.0
    %6371 = vmatprep.subr.mxu0 0.0
    %6372 = vmatpush2.msra.mxu0 0.0
    %6373 = vmatprep.subr.mxu0 0.0
    %6374 = vmatpush2.msra.mxu0 0.0
    %6375 = vmatprep.subr.mxu0 0.0
    %6376 = vmatpush2.msra.mxu0 0.0
    %6377 = vmatprep.subr.mxu0 0.0
    %6378 = vmatpush2.msra.mxu0 0.0
    %6379 = vmatprep.subr.mxu0 0.0
    %6380 = vmatpush2.msra.mxu0 0.0
    %6381 = vmatprep.subr.mxu0 0.0
    %6382 = vmatpush2.msra.mxu0 0.0
    %6383 = vmatprep.subr.mxu0 0.0
    %6384 = vmatpush2.msra.mxu0 0.0
    %6385 = vmatprep.subr.mxu0 0.0
    %6386 = vmatpush2.msra.mxu0 0.0
    %6387 = vmatprep.mubr.f32.mxu0 0.0
    %6388 = vmatmul.mubr.f32.gmra.mxu0 %v5565
    %v6389 = vpop.f32.mrf.mxu0
    %v6390 = vadd.f32 0.0, %v6389
    %v6391 = vpop.f32.mrf.mxu0
    %6392 = vmatprep.mubr.f32.mxu0 0.0
    %6393 = vmatmul.mubr.f32.gmra.mxu0 %v5568
    %v6394 = vpop.f32.mrf.mxu0
    %v6395 = vadd.f32 0.0, %v6394
    %v6396 = vpop.f32.mrf.mxu0
    %6397 = vmatprep.mubr.f32.mxu0 0.0
    %6398 = vmatmul.mubr.f32.gmra.mxu0 %v5571
    %v6399 = vpop.f32.mrf.mxu0
    %v6400 = vadd.f32 0.0, %v6399
    %v6401 = vpop.f32.mrf.mxu0
    %6402 = vmatprep.mubr.f32.mxu0 0.0
    %6403 = vmatmul.mubr.f32.gmra.mxu0 %v5574
    %v6404 = vpop.f32.mrf.mxu0
    %v6405 = vadd.f32 0.0, %v6404
    %v6406 = vpop.f32.mrf.mxu0
    %6407 = vmatprep.mubr.f32.mxu0 0.0
    %6408 = vmatmul.mubr.f32.gmra.mxu0 %v5747
    %v6409 = vpop.f32.mrf.mxu0
    %v6410 = vadd.f32 0.0, %v6409
    %v6411 = vpop.f32.mrf.mxu0
    %6412 = vmatprep.mubr.f32.mxu0 0.0
    %6413 = vmatmul.mubr.f32.gmra.mxu0 %v5750
    %v6414 = vpop.f32.mrf.mxu0
    %v6415 = vadd.f32 0.0, %v6414
    %v6416 = vpop.f32.mrf.mxu0
    %6417 = vmatprep.mubr.f32.mxu0 0.0
    %6418 = vmatmul.mubr.f32.gmra.mxu0 %v5753
    %v6419 = vpop.f32.mrf.mxu0
    %v6420 = vadd.f32 0.0, %v6419
    %v6421 = vpop.f32.mrf.mxu0
    %6422 = vmatprep.mubr.f32.mxu0 0.0
    %6423 = vmatmul.mubr.f32.gmra.mxu0 %v5756
    %v6424 = vpop.f32.mrf.mxu0
    %v6425 = vadd.f32 0.0, %v6424
    %v6426 = vpop.f32.mrf.mxu0
    %6427 = vmatprep.mubr.f32.mxu0 0.0
    %6428 = vmatmul.mubr.f32.gmra.mxu0 %v6127
    %v6429 = vpop.f32.mrf.mxu0
    %v6430 = vadd.f32 0.0, %v6429
    %v6431 = vpop.f32.mrf.mxu0
    %6432 = vmatprep.mubr.f32.mxu0 0.0
    %6433 = vmatmul.mubr.f32.gmra.mxu0 %v6130
    %v6434 = vpop.f32.mrf.mxu0
    %v6435 = vadd.f32 0.0, %v6434
    %v6436 = vpop.f32.mrf.mxu0
    %6437 = vmatprep.mubr.f32.mxu0 0.0
    %6438 = vmatmul.mubr.f32.gmra.mxu0 %v6133
    %v6439 = vpop.f32.mrf.mxu0
    %v6440 = vadd.f32 0.0, %v6439
    %v6441 = vpop.f32.mrf.mxu0
    %6442 = vmatprep.mubr.f32.mxu0 0.0
    %6443 = vmatmul.mubr.f32.gmra.mxu0 %v6136
    %v6444 = vpop.f32.mrf.mxu0
    %v6445 = vadd.f32 0.0, %v6444
    %v6446 = vpop.f32.mrf.mxu0
    %6447 = vmatprep.mubr.f32.mxu0 0.0
    %6448 = vmatmul.mubr.f32.gmra.mxu0 %v6309
    %v6449 = vpop.f32.mrf.mxu0
    %v6450 = vadd.f32 0.0, %v6449
    %v6451 = vpop.f32.mrf.mxu0
    %6452 = vmatprep.mubr.f32.mxu0 0.0
    %6453 = vmatmul.mubr.f32.gmra.mxu0 %v6312
    %v6454 = vpop.f32.mrf.mxu0
    %v6455 = vadd.f32 0.0, %v6454
    %v6456 = vpop.f32.mrf.mxu0
    %6457 = vmatprep.mubr.f32.mxu0 0.0
    %6458 = vmatmul.mubr.f32.gmra.mxu0 %v6315
    %v6459 = vpop.f32.mrf.mxu0
    %v6460 = vadd.f32 0.0, %v6459
    %v6461 = vpop.f32.mrf.mxu0
    %6462 = vmatprep.mubr.f32.mxu0 0.0
    %6463 = vmatmul.mubr.f32.gmra.mxu0 %v6318
    %v6464 = vpop.f32.mrf.mxu0
    %v6465 = vadd.f32 0.0, %v6464
    %v6466 = vpop.f32.mrf.mxu0
    %6467 = vdwg.mxu0
    %v6468 = vadd.f32 %v6286, %v6390
    %v6469 = vadd.f32 %v6287, %v6395
    %v6470 = vadd.f32 %v6288, %v6400
    %v6471 = vadd.f32 %v6289, %v6405
    %v6472 = vadd.f32 %v6290, %v6410
    %v6473 = vadd.f32 %v6291, %v6415
    %v6474 = vadd.f32 %v6292, %v6420
    %v6475 = vadd.f32 %v6293, %v6425
    %v6476 = vadd.f32 %v6294, %v6430
    %v6477 = vadd.f32 %v6295, %v6435
    %v6478 = vadd.f32 %v6296, %v6440
    %v6479 = vadd.f32 %v6297, %v6445
    %v6480 = vadd.f32 %v6298, %v6450
    %v6481 = vadd.f32 %v6299, %v6455
    %v6482 = vadd.f32 %v6300, %v6460
    %v6483 = vadd.f32 %v6301, %v6465
    %v6484 = vld [vmem:[%s4880 + $0x4] sm:$0xff]
    %v6485 = vld [vmem:[%s4880 + $0x14] sm:$0xff]
    %v6486 = vld [vmem:[%s4880 + $0x24] sm:$0xff]
    %v6487 = vld [vmem:[%s4880 + $0x34] sm:$0xff]
    %s6488 = scalar_lea.vmem %s4, 32
    %v6489 = vld [vmem:[%s6488] sm:$0xf]
    %v6491 = vsel %vm4816, %v6484, 0
    %v6494 = vsel %vm4816, %v6485, 0
    %v6497 = vsel %vm4816, %v6486, 0
    %v6500 = vsel %vm4816, %v6487, 0
    %v6503 = vsel %vm5023, %v6489, 0
    %6505 = vmatprep.subr.mxu0 0.0
    %6506 = vmatpush1.msra.mxu0 0.0
    %6507 = vmatprep.subr.mxu0 0.0
    %6508 = vmatpush1.msra.mxu0 0.0
    %6509 = vmatprep.subr.mxu0 0.0
    %6510 = vmatpush1.msra.mxu0 0.0
    %6511 = vmatprep.subr.mxu0 0.0
    %6512 = vmatpush1.msra.mxu0 0.0
    %6513 = vmatprep.subr.mxu0 0.0
    %6514 = vmatpush1.msra.mxu0 0.0
    %6515 = vmatprep.subr.mxu0 0.0
    %6516 = vmatpush1.msra.mxu0 0.0
    %6517 = vmatprep.subr.mxu0 0.0
    %6518 = vmatpush1.msra.mxu0 0.0
    %6519 = vmatprep.subr.mxu0 0.0
    %6520 = vmatpush1.msra.mxu0 0.0
    %6521 = vmatprep.subr.mxu0 0.0
    %6522 = vmatpush1.msra.mxu0 0.0
    %6523 = vmatprep.subr.mxu0 0.0
    %6524 = vmatpush1.msra.mxu0 0.0
    %6525 = vmatprep.subr.mxu0 0.0
    %6526 = vmatpush1.msra.mxu0 0.0
    %6527 = vmatprep.subr.mxu0 0.0
    %6528 = vmatpush1.msra.mxu0 0.0
    %6529 = vmatprep.subr.mxu0 0.0
    %6530 = vmatpush1.msra.mxu0 0.0
    %6531 = vmatprep.subr.mxu0 0.0
    %6532 = vmatpush1.msra.mxu0 0.0
    %6533 = vmatprep.subr.mxu0 0.0
    %6534 = vmatpush1.msra.mxu0 0.0
    %6535 = vmatprep.subr.mxu0 0.0
    %6536 = vmatpush1.msra.mxu0 %v6503
    %6537 = vmatprep.subr.mxu0 0.0
    %6538 = vmatpush2.msra.mxu0 0.0
    %6539 = vmatprep.subr.mxu0 0.0
    %6540 = vmatpush2.msra.mxu0 0.0
    %6541 = vmatprep.subr.mxu0 0.0
    %6542 = vmatpush2.msra.mxu0 0.0
    %6543 = vmatprep.subr.mxu0 0.0
    %6544 = vmatpush2.msra.mxu0 0.0
    %6545 = vmatprep.subr.mxu0 0.0
    %6546 = vmatpush2.msra.mxu0 0.0
    %6547 = vmatprep.subr.mxu0 0.0
    %6548 = vmatpush2.msra.mxu0 0.0
    %6549 = vmatprep.subr.mxu0 0.0
    %6550 = vmatpush2.msra.mxu0 0.0
    %6551 = vmatprep.subr.mxu0 0.0
    %6552 = vmatpush2.msra.mxu0 0.0
    %6553 = vmatprep.subr.mxu0 0.0
    %6554 = vmatpush2.msra.mxu0 0.0
    %6555 = vmatprep.subr.mxu0 0.0
    %6556 = vmatpush2.msra.mxu0 0.0
    %6557 = vmatprep.subr.mxu0 0.0
    %6558 = vmatpush2.msra.mxu0 0.0
    %6559 = vmatprep.subr.mxu0 0.0
    %6560 = vmatpush2.msra.mxu0 0.0
    %6561 = vmatprep.subr.mxu0 0.0
    %6562 = vmatpush2.msra.mxu0 0.0
    %6563 = vmatprep.subr.mxu0 0.0
    %6564 = vmatpush2.msra.mxu0 0.0
    %6565 = vmatprep.subr.mxu0 0.0
    %6566 = vmatpush2.msra.mxu0 0.0
    %6567 = vmatprep.subr.mxu0 0.0
    %6568 = vmatpush2.msra.mxu0 0.0
    %6569 = vmatprep.mubr.f32.mxu0 0.0
    %6570 = vmatmul.mubr.f32.gmra.mxu0 %v5747
    %v6571 = vpop.f32.mrf.mxu0
    %v6572 = vadd.f32 0.0, %v6571
    %v6573 = vpop.f32.mrf.mxu0
    %6574 = vmatprep.mubr.f32.mxu0 0.0
    %6575 = vmatmul.mubr.f32.gmra.mxu0 %v5750
    %v6576 = vpop.f32.mrf.mxu0
    %v6577 = vadd.f32 0.0, %v6576
    %v6578 = vpop.f32.mrf.mxu0
    %6579 = vmatprep.mubr.f32.mxu0 0.0
    %6580 = vmatmul.mubr.f32.gmra.mxu0 %v5753
    %v6581 = vpop.f32.mrf.mxu0
    %v6582 = vadd.f32 0.0, %v6581
    %v6583 = vpop.f32.mrf.mxu0
    %6584 = vmatprep.mubr.f32.mxu0 0.0
    %6585 = vmatmul.mubr.f32.gmra.mxu0 %v5756
    %v6586 = vpop.f32.mrf.mxu0
    %v6587 = vadd.f32 0.0, %v6586
    %v6588 = vpop.f32.mrf.mxu0
    %6589 = vmatprep.mubr.f32.mxu0 0.0
    %6590 = vmatmul.mubr.f32.gmra.mxu0 %v5929
    %v6591 = vpop.f32.mrf.mxu0
    %v6592 = vadd.f32 0.0, %v6591
    %v6593 = vpop.f32.mrf.mxu0
    %6594 = vmatprep.mubr.f32.mxu0 0.0
    %6595 = vmatmul.mubr.f32.gmra.mxu0 %v5932
    %v6596 = vpop.f32.mrf.mxu0
    %v6597 = vadd.f32 0.0, %v6596
    %v6598 = vpop.f32.mrf.mxu0
    %6599 = vmatprep.mubr.f32.mxu0 0.0
    %6600 = vmatmul.mubr.f32.gmra.mxu0 %v5935
    %v6601 = vpop.f32.mrf.mxu0
    %v6602 = vadd.f32 0.0, %v6601
    %v6603 = vpop.f32.mrf.mxu0
    %6604 = vmatprep.mubr.f32.mxu0 0.0
    %6605 = vmatmul.mubr.f32.gmra.mxu0 %v5938
    %v6606 = vpop.f32.mrf.mxu0
    %v6607 = vadd.f32 0.0, %v6606
    %v6608 = vpop.f32.mrf.mxu0
    %6609 = vmatprep.mubr.f32.mxu0 0.0
    %6610 = vmatmul.mubr.f32.gmra.mxu0 %v6309
    %v6611 = vpop.f32.mrf.mxu0
    %v6612 = vadd.f32 0.0, %v6611
    %v6613 = vpop.f32.mrf.mxu0
    %6614 = vmatprep.mubr.f32.mxu0 0.0
    %6615 = vmatmul.mubr.f32.gmra.mxu0 %v6312
    %v6616 = vpop.f32.mrf.mxu0
    %v6617 = vadd.f32 0.0, %v6616
    %v6618 = vpop.f32.mrf.mxu0
    %6619 = vmatprep.mubr.f32.mxu0 0.0
    %6620 = vmatmul.mubr.f32.gmra.mxu0 %v6315
    %v6621 = vpop.f32.mrf.mxu0
    %v6622 = vadd.f32 0.0, %v6621
    %v6623 = vpop.f32.mrf.mxu0
    %6624 = vmatprep.mubr.f32.mxu0 0.0
    %6625 = vmatmul.mubr.f32.gmra.mxu0 %v6318
    %v6626 = vpop.f32.mrf.mxu0
    %v6627 = vadd.f32 0.0, %v6626
    %v6628 = vpop.f32.mrf.mxu0
    %6629 = vmatprep.mubr.f32.mxu0 0.0
    %6630 = vmatmul.mubr.f32.gmra.mxu0 %v6491
    %v6631 = vpop.f32.mrf.mxu0
    %v6632 = vadd.f32 0.0, %v6631
    %v6633 = vpop.f32.mrf.mxu0
    %6634 = vmatprep.mubr.f32.mxu0 0.0
    %6635 = vmatmul.mubr.f32.gmra.mxu0 %v6494
    %v6636 = vpop.f32.mrf.mxu0
    %v6637 = vadd.f32 0.0, %v6636
    %v6638 = vpop.f32.mrf.mxu0
    %6639 = vmatprep.mubr.f32.mxu0 0.0
    %6640 = vmatmul.mubr.f32.gmra.mxu0 %v6497
    %v6641 = vpop.f32.mrf.mxu0
    %v6642 = vadd.f32 0.0, %v6641
    %v6643 = vpop.f32.mrf.mxu0
    %6644 = vmatprep.mubr.f32.mxu0 0.0
    %6645 = vmatmul.mubr.f32.gmra.mxu0 %v6500
    %v6646 = vpop.f32.mrf.mxu0
    %v6647 = vadd.f32 0.0, %v6646
    %v6648 = vpop.f32.mrf.mxu0
    %6649 = vdwg.mxu0
    %v6650 = vadd.f32 %v6468, %v6572
    %v6651 = vadd.f32 %v6469, %v6577
    %v6652 = vadd.f32 %v6470, %v6582
    %v6653 = vadd.f32 %v6471, %v6587
    %v6654 = vadd.f32 %v6472, %v6592
    %v6655 = vadd.f32 %v6473, %v6597
    %v6656 = vadd.f32 %v6474, %v6602
    %v6657 = vadd.f32 %v6475, %v6607
    %v6658 = vadd.f32 %v6476, %v6612
    %v6659 = vadd.f32 %v6477, %v6617
    %v6660 = vadd.f32 %v6478, %v6622
    %v6661 = vadd.f32 %v6479, %v6627
    %v6662 = vadd.f32 %v6480, %v6632
    %v6663 = vadd.f32 %v6481, %v6637
    %v6664 = vadd.f32 %v6482, %v6642
    %v6665 = vadd.f32 %v6483, %v6647
    %v6666 = vld [vmem:[%s5] sm:$0x1]
    %v6668 = vlaneseq
    %v6669 = vshrl.u32 %v6668, 7
    %v6670 = vsub.s32 0, %v6669
    %v6671 = vrot.slane %v6666, %v6670
    %v6673 = vmul.f32 %v6650, %v6671
    %v6674 = vmul.f32 %v6651, %v6671
    %v6675 = vmul.f32 %v6652, %v6671
    %v6676 = vmul.f32 %v6653, %v6671
    %v6677 = vmul.f32 %v6654, %v6671
    %v6678 = vmul.f32 %v6655, %v6671
    %v6679 = vmul.f32 %v6656, %v6671
    %v6680 = vmul.f32 %v6657, %v6671
    %v6681 = vmul.f32 %v6658, %v6671
    %v6682 = vmul.f32 %v6659, %v6671
    %v6683 = vmul.f32 %v6660, %v6671
    %v6684 = vmul.f32 %v6661, %v6671
    %v6685 = vmul.f32 %v6662, %v6671
    %v6686 = vmul.f32 %v6663, %v6671
    %v6687 = vmul.f32 %v6664, %v6671
    %v6688 = vmul.f32 %v6665, %v6671
    %v6689 = vld [vmem:[%s6] sm:$0x1]
    %v6691 = vlaneseq
    %v6692 = vshrl.u32 %v6691, 7
    %v6693 = vsub.s32 0, %v6692
    %v6694 = vrot.slane %v6689, %v6693
    %v6696 = vadd.f32 %v6673, %v6694
    %v6697 = vadd.f32 %v6674, %v6694
    %v6698 = vadd.f32 %v6675, %v6694
    %v6699 = vadd.f32 %v6676, %v6694
    %v6700 = vadd.f32 %v6677, %v6694
    %v6701 = vadd.f32 %v6678, %v6694
    %v6702 = vadd.f32 %v6679, %v6694
    %v6703 = vadd.f32 %v6680, %v6694
    %v6704 = vadd.f32 %v6681, %v6694
    %v6705 = vadd.f32 %v6682, %v6694
    %v6706 = vadd.f32 %v6683, %v6694
    %v6707 = vadd.f32 %v6684, %v6694
    %v6708 = vadd.f32 %v6685, %v6694
    %v6709 = vadd.f32 %v6686, %v6694
    %v6710 = vadd.f32 %v6687, %v6694
    %v6711 = vadd.f32 %v6688, %v6694
    %v6712 = vmax.f32 %v6696, 0.0
    %v6713 = vmax.f32 %v6697, 0.0
    %v6714 = vmax.f32 %v6698, 0.0
    %v6715 = vmax.f32 %v6699, 0.0
    %v6716 = vmax.f32 %v6700, 0.0
    %v6717 = vmax.f32 %v6701, 0.0
    %v6718 = vmax.f32 %v6702, 0.0
    %v6719 = vmax.f32 %v6703, 0.0
    %v6720 = vmax.f32 %v6704, 0.0
    %v6721 = vmax.f32 %v6705, 0.0
    %v6722 = vmax.f32 %v6706, 0.0
    %v6723 = vmax.f32 %v6707, 0.0
    %v6724 = vmax.f32 %v6708, 0.0
    %v6725 = vmax.f32 %v6709, 0.0
    %v6726 = vmax.f32 %v6710, 0.0
    %v6727 = vmax.f32 %v6711, 0.0
    %v6728 = vmax.f32 %v6712, %v6716
    %v6729 = vmax.f32 %v6713, %v6717
    %v6730 = vmax.f32 %v6714, %v6718
    %v6731 = vmax.f32 %v6715, %v6719
    %v6732 = vmax.f32 %v6728, %v6720
    %v6733 = vmax.f32 %v6729, %v6721
    %v6734 = vmax.f32 %v6730, %v6722
    %v6735 = vmax.f32 %v6731, %v6723
    %v6736 = vmax.f32 %v6732, %v6724
    %v6737 = vmax.f32 %v6733, %v6725
    %v6738 = vmax.f32 %v6734, %v6726
    %v6739 = vmax.f32 %v6735, %v6727
    %vm6740 = vcmask 58368
    %6741 = vst.msk [vmem:[#allocation3] sm:$0x3] %vm6740, %v6736
    %6743 = vrot.lane.b32.xlu0 %v6736, 8
    %v6744 = vpop.permute.xlu0 %6743
    %vm6746 = vcmask 126018
    %6747 = vst.msk [vmem:[#allocation3 - $0x2] sm:$0xc] %vm6746, %v6744
    %6748 = vrot.lane.b32.xlu0 %v6736, 16
    %v6749 = vpop.permute.xlu0 %6748
    %vm6751 = vcmask 193668
    %6752 = vst.msk [vmem:[#allocation3 - $0x4] sm:$0x30] %vm6751, %v6749
    %6753 = vrot.lane.b32.xlu0 %v6736, 24
    %v6754 = vpop.permute.xlu0 %6753
    %vm6756 = vcmask 261318
    %6757 = vst.msk [vmem:[#allocation3 - $0x6] sm:$0xc0] %vm6756, %v6754
    %6759 = vrot.lane.b32.xlu0 %v6737, 32
    %v6760 = vpop.permute.xlu0 %6759
    %vm6762 = vcmask 320768
    %6763 = vst.msk [vmem:[#allocation3] sm:$0x3] %vm6762, %v6760
    %6764 = vrot.lane.b32.xlu0 %v6737, 40
    %v6765 = vpop.permute.xlu0 %6764
    %vm6767 = vcmask 388418
    %6768 = vst.msk [vmem:[#allocation3 - $0x2] sm:$0xc] %vm6767, %v6765
    %6769 = vrot.lane.b32.xlu0 %v6737, 48
    %v6770 = vpop.permute.xlu0 %6769
    %vm6772 = vcmask 456068
    %6773 = vst.msk [vmem:[#allocation3 - $0x4] sm:$0x30] %vm6772, %v6770
    %6774 = vrot.lane.b32.xlu0 %v6737, 56
    %v6775 = vpop.permute.xlu0 %6774
    %vm6777 = vcmask 523718
    %6778 = vst.msk [vmem:[#allocation3 - $0x6] sm:$0xc0] %vm6777, %v6775
    %6780 = vrot.lane.b32.xlu0 %v6738, 64
    %v6781 = vpop.permute.xlu0 %6780
    %vm6783 = vcmask 583168
    %6784 = vst.msk [vmem:[#allocation3] sm:$0x3] %vm6783, %v6781
    %6785 = vrot.lane.b32.xlu0 %v6738, 72
    %v6786 = vpop.permute.xlu0 %6785
    %vm6788 = vcmask 650818
    %6789 = vst.msk [vmem:[#allocation3 - $0x2] sm:$0xc] %vm6788, %v6786
    %6790 = vrot.lane.b32.xlu0 %v6738, 80
    %v6791 = vpop.permute.xlu0 %6790
    %vm6793 = vcmask 718468
    %6794 = vst.msk [vmem:[#allocation3 - $0x4] sm:$0x30] %vm6793, %v6791
    %6795 = vrot.lane.b32.xlu0 %v6738, 88
    %v6796 = vpop.permute.xlu0 %6795
    %vm6798 = vcmask 786118
    %6799 = vst.msk [vmem:[#allocation3 - $0x6] sm:$0xc0] %vm6798, %v6796
    %6801 = vrot.lane.b32.xlu0 %v6739, 96
    %v6802 = vpop.permute.xlu0 %6801
    %vm6804 = vcmask 845568
    %6805 = vst.msk [vmem:[#allocation3] sm:$0x3] %vm6804, %v6802
    %6806 = vrot.lane.b32.xlu0 %v6739, 104
    %v6807 = vpop.permute.xlu0 %6806
    %vm6809 = vcmask 913218
    %6810 = vst.msk [vmem:[#allocation3 - $0x2] sm:$0xc] %vm6809, %v6807
    %6811 = vrot.lane.b32.xlu0 %v6739, 112
    %v6812 = vpop.permute.xlu0 %6811
    %vm6814 = vcmask 980868
    %6815 = vst.msk [vmem:[#allocation3 - $0x4] sm:$0x30] %vm6814, %v6812
    %6816 = vrot.lane.b32.xlu0 %v6739, 120
    %v6817 = vpop.permute.xlu0 %6816
    %vm6819 = vcmask 1048518
    %6820 = vst.msk [vmem:[#allocation3 - $0x6] sm:$0xc0] %vm6819, %v6817
    %v6821 = vld [vmem:[#allocation3] sm:$0x3]
    %v6822 = vld [vmem:[%s7] sm:$0xff]
    %v6823 = vld [vmem:[%s7 + $0x8] sm:$0xff]
    %v6824 = vld [vmem:[%s7 + $0x10] sm:$0xff]
    %v6825 = vld [vmem:[%s7 + $0x18] sm:$0xff]
    %v6826 = vld [vmem:[%s7 + $0x20] sm:$0xff]
    %v6827 = vld [vmem:[%s7 + $0x28] sm:$0xff]
    %v6828 = vld [vmem:[%s7 + $0x30] sm:$0xff]
    %v6829 = vld [vmem:[%s7 + $0x38] sm:$0xff]
    %v6830 = vld [vmem:[%s7 + $0x40] sm:$0xff]
    %v6831 = vld [vmem:[%s7 + $0x48] sm:$0xff]
    %v6832 = vld [vmem:[%s7 + $0x50] sm:$0xff]
    %v6833 = vld [vmem:[%s7 + $0x58] sm:$0xff]
    %v6834 = vld [vmem:[%s7 + $0x60] sm:$0xff]
    %v6835 = vld [vmem:[%s7 + $0x68] sm:$0xff]
    %v6836 = vld [vmem:[%s7 + $0x70] sm:$0xff]
    %v6837 = vld [vmem:[%s7 + $0x78] sm:$0xff]
    %6838 = vmatprep.subr.mxu0 0.0
    %6839 = vmatpush1.msra.mxu0 %v6837
    %6840 = vmatprep.subr.mxu0 0.0
    %6841 = vmatpush1.msra.mxu0 %v6836
    %6842 = vmatprep.subr.mxu0 0.0
    %6843 = vmatpush1.msra.mxu0 %v6835
    %6844 = vmatprep.subr.mxu0 0.0
    %6845 = vmatpush1.msra.mxu0 %v6834
    %6846 = vmatprep.subr.mxu0 0.0
    %6847 = vmatpush1.msra.mxu0 %v6833
    %6848 = vmatprep.subr.mxu0 0.0
    %6849 = vmatpush1.msra.mxu0 %v6832
    %6850 = vmatprep.subr.mxu0 0.0
    %6851 = vmatpush1.msra.mxu0 %v6831
    %6852 = vmatprep.subr.mxu0 0.0
    %6853 = vmatpush1.msra.mxu0 %v6830
    %6854 = vmatprep.subr.mxu0 0.0
    %6855 = vmatpush1.msra.mxu0 %v6829
    %6856 = vmatprep.subr.mxu0 0.0
    %6857 = vmatpush1.msra.mxu0 %v6828
    %6858 = vmatprep.subr.mxu0 0.0
    %6859 = vmatpush1.msra.mxu0 %v6827
    %6860 = vmatprep.subr.mxu0 0.0
    %6861 = vmatpush1.msra.mxu0 %v6826
    %6862 = vmatprep.subr.mxu0 0.0
    %6863 = vmatpush1.msra.mxu0 %v6825
    %6864 = vmatprep.subr.mxu0 0.0
    %6865 = vmatpush1.msra.mxu0 %v6824
    %6866 = vmatprep.subr.mxu0 0.0
    %6867 = vmatpush1.msra.mxu0 %v6823
    %6868 = vmatprep.subr.mxu0 0.0
    %6869 = vmatpush1.msra.mxu0 %v6822
    %6870 = vmatprep.subr.mxu0 0.0
    %6871 = vmatpush2.msra.mxu0 0.0
    %6872 = vmatprep.subr.mxu0 0.0
    %6873 = vmatpush2.msra.mxu0 0.0
    %6874 = vmatprep.subr.mxu0 0.0
    %6875 = vmatpush2.msra.mxu0 0.0
    %6876 = vmatprep.subr.mxu0 0.0
    %6877 = vmatpush2.msra.mxu0 0.0
    %6878 = vmatprep.subr.mxu0 0.0
    %6879 = vmatpush2.msra.mxu0 0.0
    %6880 = vmatprep.subr.mxu0 0.0
    %6881 = vmatpush2.msra.mxu0 0.0
    %6882 = vmatprep.subr.mxu0 0.0
    %6883 = vmatpush2.msra.mxu0 0.0
    %6884 = vmatprep.subr.mxu0 0.0
    %6885 = vmatpush2.msra.mxu0 0.0
    %6886 = vmatprep.subr.mxu0 0.0
    %6887 = vmatpush2.msra.mxu0 0.0
    %6888 = vmatprep.subr.mxu0 0.0
    %6889 = vmatpush2.msra.mxu0 0.0
    %6890 = vmatprep.subr.mxu0 0.0
    %6891 = vmatpush2.msra.mxu0 0.0
    %6892 = vmatprep.subr.mxu0 0.0
    %6893 = vmatpush2.msra.mxu0 0.0
    %6894 = vmatprep.subr.mxu0 0.0
    %6895 = vmatpush2.msra.mxu0 0.0
    %6896 = vmatprep.subr.mxu0 0.0
    %6897 = vmatpush2.msra.mxu0 0.0
    %6898 = vmatprep.subr.mxu0 0.0
    %6899 = vmatpush2.msra.mxu0 0.0
    %6900 = vmatprep.subr.mxu0 0.0
    %6901 = vmatpush2.msra.mxu0 0.0
    %6902 = vmatprep.mubr.f32.mxu0 0.0
    %6903 = vmatmul.mubr.f32.gmra.mxu0 %v6821
    %v6904 = vpop.f32.mrf.mxu0
    %v6905 = vadd.f32 0.0, %v6904
    %v6906 = vpop.f32.mrf.mxu0
    %6907 = vdwg.mxu0
    %v6908 = vld [vmem:[%s8] sm:$0x1]
    %v6910 = vlaneseq
    %v6911 = vshrl.u32 %v6910, 7
    %v6912 = vsub.s32 0, %v6911
    %v6913 = vrot.slane %v6908, %v6912
    %v6915 = vmul.f32 %v6905, %v6913
    %v6916 = vld [vmem:[%s9] sm:$0x1]
    %v6918 = vlaneseq
    %v6919 = vshrl.u32 %v6918, 7
    %v6920 = vsub.s32 0, %v6919
    %v6921 = vrot.slane %v6916, %v6920
    %v6923 = vadd.f32 %v6915, %v6921
    %v6924 = vmax.f32 %v6923, 0.0
    %v6925 = vld [vmem:[%s10] sm:$0xff]
    %v6926 = vld [vmem:[%s10 + $0x8] sm:$0xff]
    %v6927 = vld [vmem:[%s10 + $0x10] sm:$0xff]
    %v6928 = vld [vmem:[%s10 + $0x18] sm:$0xff]
    %vm6929 = vcmask 261120
    %v6931 = vsel %vm6929, %v6924, 0
    %6933 = vmatprep.subr.mxu0 0.0
    %6934 = vmatpush1.msra.mxu0 0.0
    %6935 = vmatprep.subr.mxu0 0.0
    %6936 = vmatpush1.msra.mxu0 0.0
    %6937 = vmatprep.subr.mxu0 0.0
    %6938 = vmatpush1.msra.mxu0 0.0
    %6939 = vmatprep.subr.mxu0 0.0
    %6940 = vmatpush1.msra.mxu0 0.0
    %6941 = vmatprep.subr.mxu0 0.0
    %6942 = vmatpush1.msra.mxu0 0.0
    %6943 = vmatprep.subr.mxu0 0.0
    %6944 = vmatpush1.msra.mxu0 0.0
    %6945 = vmatprep.subr.mxu0 0.0
    %6946 = vmatpush1.msra.mxu0 0.0
    %6947 = vmatprep.subr.mxu0 0.0
    %6948 = vmatpush1.msra.mxu0 0.0
    %6949 = vmatprep.subr.mxu0 0.0
    %6950 = vmatpush1.msra.mxu0 0.0
    %6951 = vmatprep.subr.mxu0 0.0
    %6952 = vmatpush1.msra.mxu0 0.0
    %6953 = vmatprep.subr.mxu0 0.0
    %6954 = vmatpush1.msra.mxu0 0.0
    %6955 = vmatprep.subr.mxu0 0.0
    %6956 = vmatpush1.msra.mxu0 0.0
    %6957 = vmatprep.subr.mxu0 0.0
    %6958 = vmatpush1.msra.mxu0 %v6928
    %6959 = vmatprep.subr.mxu0 0.0
    %6960 = vmatpush1.msra.mxu0 %v6927
    %6961 = vmatprep.subr.mxu0 0.0
    %6962 = vmatpush1.msra.mxu0 %v6926
    %6963 = vmatprep.subr.mxu0 0.0
    %6964 = vmatpush1.msra.mxu0 %v6925
    %6965 = vmatprep.subr.mxu0 0.0
    %6966 = vmatpush2.msra.mxu0 0.0
    %6967 = vmatprep.subr.mxu0 0.0
    %6968 = vmatpush2.msra.mxu0 0.0
    %6969 = vmatprep.subr.mxu0 0.0
    %6970 = vmatpush2.msra.mxu0 0.0
    %6971 = vmatprep.subr.mxu0 0.0
    %6972 = vmatpush2.msra.mxu0 0.0
    %6973 = vmatprep.subr.mxu0 0.0
    %6974 = vmatpush2.msra.mxu0 0.0
    %6975 = vmatprep.subr.mxu0 0.0
    %6976 = vmatpush2.msra.mxu0 0.0
    %6977 = vmatprep.subr.mxu0 0.0
    %6978 = vmatpush2.msra.mxu0 0.0
    %6979 = vmatprep.subr.mxu0 0.0
    %6980 = vmatpush2.msra.mxu0 0.0
    %6981 = vmatprep.subr.mxu0 0.0
    %6982 = vmatpush2.msra.mxu0 0.0
    %6983 = vmatprep.subr.mxu0 0.0
    %6984 = vmatpush2.msra.mxu0 0.0
    %6985 = vmatprep.subr.mxu0 0.0
    %6986 = vmatpush2.msra.mxu0 0.0
    %6987 = vmatprep.subr.mxu0 0.0
    %6988 = vmatpush2.msra.mxu0 0.0
    %6989 = vmatprep.subr.mxu0 0.0
    %6990 = vmatpush2.msra.mxu0 0.0
    %6991 = vmatprep.subr.mxu0 0.0
    %6992 = vmatpush2.msra.mxu0 0.0
    %6993 = vmatprep.subr.mxu0 0.0
    %6994 = vmatpush2.msra.mxu0 0.0
    %6995 = vmatprep.subr.mxu0 0.0
    %6996 = vmatpush2.msra.mxu0 0.0
    %6997 = vmatprep.mubr.f32.mxu0 0.0
    %6998 = vmatmul.mubr.f32.gmra.mxu0 %v6931
    %v6999 = vpop.f32.mrf.mxu0
    %v7000 = vadd.f32 0.0, %v6999
    %v7001 = vpop.f32.mrf.mxu0
    %7002 = vdwg.mxu0
    %v7003 = vld [vmem:[%s11] sm:$0x1]
    %v7005 = vlaneseq
    %v7006 = vshrl.u32 %v7005, 7
    %v7007 = vsub.s32 0, %v7006
    %v7008 = vrot.slane %v7003, %v7007
    %v7010 = vmul.f32 %v7000, %v7008
    %v7011 = vld [vmem:[%s12] sm:$0x1]
    %v7013 = vlaneseq
    %v7014 = vshrl.u32 %v7013, 7
    %v7015 = vsub.s32 0, %v7014
    %v7016 = vrot.slane %v7011, %v7015
    %v7018 = vadd.f32 %v7010, %v7016
    %v7019 = vmax.f32 %v7018, 0.0
    %v7020 = vld [vmem:[%s13] sm:$0xff]
    %v7021 = vld [vmem:[%s13 + $0x8] sm:$0xff]
    %v7022 = vld [vmem:[%s14] sm:$0x1]
    %v7024 = vlaneseq
    %v7025 = vshrl.u32 %v7024, 7
    %v7026 = vsub.s32 0, %v7025
    %v7027 = vrot.slane %v7022, %v7026
    %vm7029 = vcmask 130048
    %v7031 = vsel %vm7029, %v7019, 0
    %7033 = vmatprep.subr.mxu0 0.0
    %7034 = vmatpush1.msra.mxu0 0.0
    %7035 = vmatprep.subr.mxu0 0.0
    %7036 = vmatpush1.msra.mxu0 0.0
    %7037 = vmatprep.subr.mxu0 0.0
    %7038 = vmatpush1.msra.mxu0 0.0
    %7039 = vmatprep.subr.mxu0 0.0
    %7040 = vmatpush1.msra.mxu0 0.0
    %7041 = vmatprep.subr.mxu0 0.0
    %7042 = vmatpush1.msra.mxu0 0.0
    %7043 = vmatprep.subr.mxu0 0.0
    %7044 = vmatpush1.msra.mxu0 0.0
    %7045 = vmatprep.subr.mxu0 0.0
    %7046 = vmatpush1.msra.mxu0 0.0
    %7047 = vmatprep.subr.mxu0 0.0
    %7048 = vmatpush1.msra.mxu0 0.0
    %7049 = vmatprep.subr.mxu0 0.0
    %7050 = vmatpush1.msra.mxu0 0.0
    %7051 = vmatprep.subr.mxu0 0.0
    %7052 = vmatpush1.msra.mxu0 0.0
    %7053 = vmatprep.subr.mxu0 0.0
    %7054 = vmatpush1.msra.mxu0 0.0
    %7055 = vmatprep.subr.mxu0 0.0
    %7056 = vmatpush1.msra.mxu0 0.0
    %7057 = vmatprep.subr.mxu0 0.0
    %7058 = vmatpush1.msra.mxu0 0.0
    %7059 = vmatprep.subr.mxu0 0.0
    %7060 = vmatpush1.msra.mxu0 0.0
    %7061 = vmatprep.subr.mxu0 0.0
    %7062 = vmatpush1.msra.mxu0 %v7021
    %7063 = vmatprep.subr.mxu0 0.0
    %7064 = vmatpush1.msra.mxu0 %v7020
    %7065 = vmatprep.subr.mxu0 0.0
    %7066 = vmatpush2.msra.mxu0 0.0
    %7067 = vmatprep.subr.mxu0 0.0
    %7068 = vmatpush2.msra.mxu0 0.0
    %7069 = vmatprep.subr.mxu0 0.0
    %7070 = vmatpush2.msra.mxu0 0.0
    %7071 = vmatprep.subr.mxu0 0.0
    %7072 = vmatpush2.msra.mxu0 0.0
    %7073 = vmatprep.subr.mxu0 0.0
    %7074 = vmatpush2.msra.mxu0 0.0
    %7075 = vmatprep.subr.mxu0 0.0
    %7076 = vmatpush2.msra.mxu0 0.0
    %7077 = vmatprep.subr.mxu0 0.0
    %7078 = vmatpush2.msra.mxu0 0.0
    %7079 = vmatprep.subr.mxu0 0.0
    %7080 = vmatpush2.msra.mxu0 0.0
    %7081 = vmatprep.subr.mxu0 0.0
    %7082 = vmatpush2.msra.mxu0 0.0
    %7083 = vmatprep.subr.mxu0 0.0
    %7084 = vmatpush2.msra.mxu0 0.0
    %7085 = vmatprep.subr.mxu0 0.0
    %7086 = vmatpush2.msra.mxu0 0.0
    %7087 = vmatprep.subr.mxu0 0.0
    %7088 = vmatpush2.msra.mxu0 0.0
    %7089 = vmatprep.subr.mxu0 0.0
    %7090 = vmatpush2.msra.mxu0 0.0
    %7091 = vmatprep.subr.mxu0 0.0
    %7092 = vmatpush2.msra.mxu0 0.0
    %7093 = vmatprep.subr.mxu0 0.0
    %7094 = vmatpush2.msra.mxu0 0.0
    %7095 = vmatprep.subr.mxu0 0.0
    %7096 = vmatpush2.msra.mxu0 0.0
    %7097 = vmatprep.mubr.f32.mxu0 0.0
    %7098 = vmatmul.mubr.f32.gmra.mxu0 %v7031
    %v7099 = vpop.f32.mrf.mxu0
    %v7100 = vadd.f32 %v7027, %v7099
    %v7101 = vpop.f32.mrf.mxu0
    %7102 = vdwg.mxu0
    %vm7103 = vcmask 9216
    %7104 = vst.msk [vmem:[#allocation4] sm:$0x3] %vm7103, %v7100
    // Predicated region
    $region62: #{tpu_custom_call.1} parent=1 // pred_check
      _
    $region63: #{tpu_custom_call.1} parent=1 // pred_check_branch
      %7106 = sbr.rel (0) target = $region65
    $region64: #{tpu_custom_call.1} parent=1 // pred_region
      %s7108 = ssub.s32 32, 32
      %7109 = vsyncadd [#allocation5], %s7108
      %s7111 = sshll.u32 [#allocation4], 4
      %s7112 = int_to_ptr.vmem [resolvable:$true] %s7111
      %7114 = dma.vmem_to_hbm [thread:$0]  %s7112, 32, %s15, [#allocation5]
    $region65: #{tpu_custom_call.1} parent=1 // pred_fallthru
      _
    // Predicated region
    $region66: #{tpu_custom_call.1} parent=1 // pred_check
      _
    $region67: #{tpu_custom_call.1} parent=1 // pred_check_branch
      %7116 = sbr.rel (0) target = $region69
    $region68: #{tpu_custom_call.1} parent=1 // pred_region
      %7117 = dma.done [#allocation5], 32
    $region69: #{tpu_custom_call.1} parent=1 // pred_fallthru
      _
    %7118 = vsyncpa [#allocation5], 1

</llo_original>
